<compile_context>
chip_gen: v7x
topology: tpu7x:2x2x1
jax: 0.10.0
libtpu: 0.0.40
codegen_flags: <defaults>
</compile_context>

<pallas_src>
import functools

import jax
import jax.numpy as jnp
import numpy as np
from jax import lax
from jax.experimental import pallas as pl
from jax.experimental.pallas import tpu as pltpu


# ----------------------------------------------------------------------------
# helpers
# ----------------------------------------------------------------------------
def _silu(x):
    return x * jax.nn.sigmoid(x)


def _pad_hw_neg_inf(a, pad):
    """Pad an (H, W, C) map by `pad` with -inf on both spatial axes (once)."""
    H, W, C = a.shape
    pw = jnp.full((H, pad, C), -jnp.inf, a.dtype)
    a = jnp.concatenate([pw, a, pw], axis=1)                 # (H, W+2p, C)
    ph = jnp.full((pad, W + 2 * pad, C), -jnp.inf, a.dtype)
    return jnp.concatenate([ph, a, ph], axis=0)              # (H+2p, W+2p, C)


def _valid_maxpool5_hw(a):
    """One 'valid' 5x5 / stride-1 separable max-pool step on an (Hp, Wp, C) frame.

    No padding, no concatenation: 5 static slices + jnp.maximum per axis.
    Output shape is (Hp-4, Wp-4, C).
    """
    Hp, Wp, _ = a.shape
    a = functools.reduce(
        jnp.maximum,
        [lax.slice_in_dim(a, d, d + Hp - 4, axis=0) for d in range(5)])
    a = functools.reduce(
        jnp.maximum,
        [lax.slice_in_dim(a, d, d + Wp - 4, axis=1) for d in range(5)])
    return a


def _default_pool_dtype():
    """bf16 pooling on v6e/v7x (bf16 VALU), f32 on v5e and older."""
    try:
        kind = jax.devices()[0].device_kind.lower()
    except Exception:  # pragma: no cover
        return jnp.bfloat16
    if any(v in kind for v in ("v2", "v3", "v4", "v5")):
        return jnp.float32
    return jnp.bfloat16


# ----------------------------------------------------------------------------
# Pallas kernel: one batch element per grid step, whole image in VMEM.
# ----------------------------------------------------------------------------
def _fast_spp_kernel(x_ref, w1_ref, b1_ref, w2_ref, b2_ref, o_ref, *,
                     hid, pool_dtype):
    H, W, Cout = o_ref.shape[1], o_ref.shape[2], o_ref.shape[3]
    HW = H * W

    # 1x1 conv (BN scale pre-folded into w1) -> bias -> SiLU.  x is cast to
    # bf16 in-kernel (hidden under DMA/MXU), keeping HBM traffic at one f32 read.
    x = x_ref[0].astype(jnp.bfloat16)                     # (H, W, Cin)
    Cin = x.shape[-1]
    y = jnp.dot(x.reshape(HW, Cin), w1_ref[...],
                preferred_element_type=jnp.float32)       # bf16 MXU, f32 accum
    y1 = _silu(y + b1_ref[...]).astype(jnp.bfloat16)      # (HW, hid)

    # Mix matmul interleaved with the pooling cascade: MXU work overlaps the
    # VPU/XLU pooling; the chained += accumulates in the MRB on v7x.  The
    # channel concat of the PyTorch module is folded into w2 row-blocks.
    z = jnp.dot(y1, w2_ref[0:hid, :], preferred_element_type=jnp.float32)

    # Pre-pad ONCE by 6 with -inf; each stage is a "valid" 5x5 separable max
    # and the centre crop of stage k equals MaxPool2d(5,1,2) applied k times.
    frame = _pad_hw_neg_inf(y1.astype(pool_dtype).reshape(H, W, hid), 6)

    frame = _valid_maxpool5_hw(frame)                     # (H+8, W+8, hid)
    y2 = frame[4:4 + H, 4:4 + W, :].reshape(HW, hid)
    z = z + jnp.dot(y2.astype(jnp.bfloat16), w2_ref[hid:2 * hid, :],
                    preferred_element_type=jnp.float32)

    frame = _valid_maxpool5_hw(frame)                     # (H+4, W+4, hid)
    y3 = frame[2:2 + H, 2:2 + W, :].reshape(HW, hid)
    z = z + jnp.dot(y3.astype(jnp.bfloat16), w2_ref[2 * hid:3 * hid, :],
                    preferred_element_type=jnp.float32)

    frame = _valid_maxpool5_hw(frame)                     # (H, W, hid) == y4
    y4 = frame.reshape(HW, hid)
    z = z + jnp.dot(y4.astype(jnp.bfloat16), w2_ref[3 * hid:4 * hid, :],
                    preferred_element_type=jnp.float32)

    z = _silu(z + b2_ref[...])                            # (HW, Cout) f32
    o_ref[0] = z.reshape(H, W, Cout).astype(o_ref.dtype)


def _fast_spp_call(x_f32, w1e, b1f, w2e, b2f, *, pool_dtype, out_dtype,
                   single_buffer_consts):
    N, H, W, Cin = x_f32.shape
    hid = w1e.shape[1]
    Cout = w2e.shape[1]

    def const_spec(shape):
        if single_buffer_consts:
            # Grid-invariant operands: no need to double-buffer them.
            return pl.BlockSpec(shape, lambda n: (0, 0),
                                pipeline_mode=pl.Buffered(1))
        return pl.BlockSpec(shape, lambda n: (0, 0))

    kernel = functools.partial(_fast_spp_kernel, hid=hid, pool_dtype=pool_dtype)
    return pl.pallas_call(
        kernel,
        out_shape=jax.ShapeDtypeStruct((N, H, W, Cout), out_dtype),
        grid_spec=pltpu.PrefetchScalarGridSpec(
            num_scalar_prefetch=0,
            grid=(N,),
            in_specs=[
                pl.BlockSpec((1, H, W, Cin), lambda n: (n, 0, 0, 0)),
                const_spec((Cin, hid)),
                const_spec((1, hid)),
                const_spec((4 * hid, Cout)),
                const_spec((1, Cout)),
            ],
            out_specs=pl.BlockSpec((1, H, W, Cout), lambda n: (n, 0, 0, 0)),
        ),
        compiler_params=pltpu.CompilerParams(
            dimension_semantics=("parallel",),
            # Headroom below v7x's 64 MiB per-TC VMEM; plenty on v5e/v6e.
            vmem_limit_bytes=48 * 1024 * 1024,
        ),
    )(x_f32, w1e, b1f, w2e, b2f)


def fast_spp_pallas(x_nhwc, w1, s1, b1, w2, s2, b2, *,
                    out_dtype=jnp.bfloat16, pool_dtype=None):
    """x_nhwc: (N, H, W, Cin) float32.  Returns (N, H, W, Cout) in `out_dtype`."""
    if pool_dtype is None:
        pool_dtype = _default_pool_dtype()

    # Fold the BatchNorm scale into the conv weights once, outside the kernel;
    # weights go to bf16 for the MXU (accumulation stays f32).  x is NOT
    # pre-cast here: it stays f32 in HBM and is cast per tile inside the kernel.
    w1_eff = (w1 * s1).astype(jnp.bfloat16)               # (Cin, hid)
    w2_eff = (w2 * s2).astype(jnp.bfloat16)               # (4*hid, Cout)
    b1_f = b1.astype(jnp.float32)                         # (1, hid)
    b2_f = b2.astype(jnp.float32)                         # (1, Cout)
    x_f = x_nhwc.astype(jnp.float32)

    try:
        return _fast_spp_call(x_f, w1_eff, b1_f, w2_eff, b2_f,
                              pool_dtype=pool_dtype, out_dtype=out_dtype,
                              single_buffer_consts=True)
    except Exception:
        # Fallback for jax versions without BlockSpec(pipeline_mode=Buffered(1));
        # identical kernel, default (double-buffered) constant operands.
        return _fast_spp_call(x_f, w1_eff, b1_f, w2_eff, b2_f,
                              pool_dtype=pool_dtype, out_dtype=out_dtype,
                              single_buffer_consts=False)


# ----------------------------------------------------------------------------
# pure-JAX references (NHWC).  matmul_dtype=bf16 mirrors the kernel's dtype
# policy; matmul_dtype=f32 is the exact module semantics.
# ----------------------------------------------------------------------------
def fast_spp_ref(x_nhwc, w1, s1, b1, w2, s2, b2, *, matmul_dtype=jnp.bfloat16):
    hid = w1.shape[1]
    w1e = (w1 * s1).astype(matmul_dtype)
    w2e = (w2 * s2).astype(matmul_dtype)
    xb = x_nhwc.astype(matmul_dtype)

    y = jnp.einsum("nhwc,cd->nhwd", xb, w1e,
                   preferred_element_type=jnp.float32)
    y1 = _silu(y + b1)

    def pool(a):
        return lax.reduce_window(a, -jnp.inf, lax.max,
                                 (1, 5, 5, 1), (1, 1, 1, 1),
                                 padding=((0, 0), (2, 2), (2, 2), (0, 0)))

    y2 = pool(y1)
    y3 = pool(y2)
    y4 = pool(y3)

    z = jnp.einsum("nhwc,cd->nhwd", y1.astype(matmul_dtype),
                   w2e[0 * hid:1 * hid], preferred_element_type=jnp.float32)
    z += jnp.einsum("nhwc,cd->nhwd", y2.astype(matmul_dtype),
                    w2e[1 * hid:2 * hid], preferred_element_type=jnp.float32)
    z += jnp.einsum("nhwc,cd->nhwd", y3.astype(matmul_dtype),
                    w2e[2 * hid:3 * hid], preferred_element_type=jnp.float32)
    z += jnp.einsum("nhwc,cd->nhwd", y4.astype(matmul_dtype),
                    w2e[3 * hid:4 * hid], preferred_element_type=jnp.float32)
    return _silu(z + b2)


# ----------------------------------------------------------------------------
# deterministic parameter construction (synthetic, BN folded to scale/bias)
# ----------------------------------------------------------------------------
def _make_params(key, cin, cout):
    hid = cin // 2
    ks = jax.random.split(key, 10)
    eps = 1e-3  # BatchNorm2d(eps=0.001) in the YOLO Conv block

    def bn_fold(kg, kb, km, kv, c):
        gamma = 1.0 + 0.1 * jax.random.normal(kg, (c,), jnp.float32)
        beta = 0.1 * jax.random.normal(kb, (c,), jnp.float32)
        mean = 0.1 * jax.random.normal(km, (c,), jnp.float32)
        var = jnp.abs(jax.random.normal(kv, (c,), jnp.float32)) + 0.5
        scale = gamma / jnp.sqrt(var + eps)
        bias = beta - mean * scale
        return scale.reshape(1, c), bias.reshape(1, c)

    # conv1: PyTorch weight (hid, cin, 1, 1) -> NHWC matmul weight (cin, hid)
    w1 = 0.2 * jax.random.normal(ks[0], (cin, hid), jnp.float32)
    s1, b1 = bn_fold(ks[1], ks[2], ks[3], ks[4], hid)
    # mix: PyTorch weight (cout, 4*hid, 1, 1) -> (4*hid, cout)
    w2 = 0.2 * jax.random.normal(ks[5], (4 * hid, cout), jnp.float32)
    s2, b2 = bn_fold(ks[6], ks[7], ks[8], ks[9], cout)
    return w1, s1, b1, w2, s2, b2


if __name__ == "__main__":
    key = jax.random.PRNGKey(0)
    N, Cin, H, W = 2, 8, 16, 16
    Cout = 8

    kx, kp = jax.random.split(key)
    # PyTorch-style NCHW input, transposed to the kernel's NHWC layout.
    x_nchw = jax.random.normal(kx, (N, Cin, H, W), jnp.float32)
    x_nhwc = jnp.transpose(x_nchw, (0, 2, 3, 1))

    w1, s1, b1, w2, s2, b2 = _make_params(kp, Cin, Cout)

    out_nhwc = jax.block_until_ready(
        fast_spp_pallas(x_nhwc, w1, s1, b1, w2, s2, b2))
    out_nchw = jnp.transpose(out_nhwc, (0, 3, 1, 2))   # back to PyTorch layout
    assert out_nchw.shape == (N, Cout, H, W)

    out_f32 = np.asarray(out_nhwc.astype(jnp.float32))

    # Check against a reference mirroring the kernel's bf16 matmul policy
    # (output is bf16, hence ~0.4% rounding on top of accumulation-order noise).
    ref_bf16 = fast_spp_ref(x_nhwc, w1, s1, b1, w2, s2, b2,
                            matmul_dtype=jnp.bfloat16)
    np.testing.assert_allclose(out_f32, np.asarray(ref_bf16),
                               rtol=2e-2, atol=2e-2)

    # Loose check against exact f32 module semantics (bounds the bf16 error).
    ref_f32 = fast_spp_ref(x_nhwc, w1, s1, b1, w2, s2, b2,
                           matmul_dtype=jnp.float32)
    np.testing.assert_allclose(out_f32, np.asarray(ref_f32),
                               rtol=6e-2, atol=6e-2)

    print("KERNEL_OK")
</pallas_src>

<mosaic_0001>
module attributes {stable_mosaic.version = 11 : i64} {
  func.func @_fast_spp_kernel(%arg0: i32, %arg1: memref<1x16x16x8xf32, #tpu.memory_space<vmem>>, %arg2: memref<8x4xbf16, #tpu.memory_space<vmem>>, %arg3: memref<1x4xf32, #tpu.memory_space<vmem>>, %arg4: memref<16x8xbf16, #tpu.memory_space<vmem>>, %arg5: memref<1x8xf32, #tpu.memory_space<vmem>>, %arg6: memref<1x16x16x8xbf16, #tpu.memory_space<vmem>>) attributes {dimension_semantics = [#tpu.dimension_semantics<parallel>], iteration_bounds = array<i64: 2>, scalar_prefetch = 0 : i64, scratch_operands = 0 : i64, tpu.core_type = #tpu.core_type<tc>, window_params = [{transform_indices = @transform_0, window_bounds = array<i64: 1, 16, 16, 8>}, {pipeline_mode = #tpu.pipeline_mode<synchronous>, transform_indices = @transform_1, window_bounds = array<i64: 8, 4>}, {pipeline_mode = #tpu.pipeline_mode<synchronous>, transform_indices = @transform_2, window_bounds = array<i64: 1, 4>}, {pipeline_mode = #tpu.pipeline_mode<synchronous>, transform_indices = @transform_3, window_bounds = array<i64: 16, 8>}, {pipeline_mode = #tpu.pipeline_mode<synchronous>, transform_indices = @transform_4, window_bounds = array<i64: 1, 8>}, {transform_indices = @transform_5, window_bounds = array<i64: 1, 16, 16, 8>}]} {
    %c0 = arith.constant 0 : index
    %c0_0 = arith.constant 0 : index
    %c0_1 = arith.constant 0 : index
    %c0_2 = arith.constant 0 : index
    %0 = vector.load %arg1[%c0, %c0_0, %c0_1, %c0_2] : memref<1x16x16x8xf32, #tpu.memory_space<vmem>>, vector<1x16x16x8xf32>
    %1 = vector.shape_cast %0 : vector<1x16x16x8xf32> to vector<16x16x8xf32>
    %2 = arith.truncf %1 : vector<16x16x8xf32> to vector<16x16x8xbf16>
    %3 = vector.shape_cast %2 : vector<16x16x8xbf16> to vector<256x8xbf16>
    %c0_3 = arith.constant 0 : index
    %c0_4 = arith.constant 0 : index
    %4 = vector.load %arg2[%c0_3, %c0_4] : memref<8x4xbf16, #tpu.memory_space<vmem>>, vector<8x4xbf16>
    %cst = arith.constant dense<0.000000e+00> : vector<256x4xf32>
    %5 = tpu.matmul %3, %4, %cst {dimension_numbers = #tpu.dot_dimension_numbers<[1], [0], [0], [1], [0, 0, 1, 1], [], []>} : vector<256x8xbf16>, vector<8x4xbf16>, vector<256x4xf32> -> vector<256x4xf32>
    %c0_5 = arith.constant 0 : index
    %c0_6 = arith.constant 0 : index
    %6 = vector.load %arg3[%c0_5, %c0_6] : memref<1x4xf32, #tpu.memory_space<vmem>>, vector<1x4xf32>
    %7 = vector.broadcast %6 : vector<1x4xf32> to vector<256x4xf32>
    %8 = arith.addf %5, %7 : vector<256x4xf32>
    %9 = arith.negf %8 : vector<256x4xf32>
    %10 = math.exp %9 : vector<256x4xf32>
    %cst_7 = arith.constant 1.000000e+00 : f32
    %11 = vector.broadcast %cst_7 : f32 to vector<256x4xf32>
    %12 = arith.addf %11, %10 : vector<256x4xf32>
    %13 = arith.divf %11, %12 : vector<256x4xf32>
    %14 = arith.mulf %8, %13 : vector<256x4xf32>
    %15 = arith.truncf %14 : vector<256x4xf32> to vector<256x4xbf16>
    %c0_8 = arith.constant 0 : index
    %c0_9 = arith.constant 0 : index
    %16 = vector.load %arg4[%c0_8, %c0_9] : memref<16x8xbf16, #tpu.memory_space<vmem>>, vector<4x8xbf16>
    %cst_10 = arith.constant dense<0.000000e+00> : vector<256x8xf32>
    %17 = tpu.matmul %15, %16, %cst_10 {dimension_numbers = #tpu.dot_dimension_numbers<[1], [0], [0], [1], [0, 0, 1, 1], [], []>} : vector<256x4xbf16>, vector<4x8xbf16>, vector<256x8xf32> -> vector<256x8xf32>
    %18 = vector.shape_cast %15 : vector<256x4xbf16> to vector<16x16x4xbf16>
    %cst_11 = arith.constant 0xFF80 : bf16
    %19 = vector.broadcast %cst_11 : bf16 to vector<16x6x4xbf16>
    %20 = tpu.concatenate %19, %18, %19 in 1 : vector<16x6x4xbf16>, vector<16x16x4xbf16>, vector<16x6x4xbf16> -> vector<16x28x4xbf16>
    %cst_12 = arith.constant 0xFF80 : bf16
    %21 = vector.broadcast %cst_12 : bf16 to vector<6x28x4xbf16>
    %22 = tpu.concatenate %21, %20, %21 in 0 : vector<6x28x4xbf16>, vector<16x28x4xbf16>, vector<6x28x4xbf16> -> vector<28x28x4xbf16>
    %23 = vector.extract_strided_slice %22 {offsets = [0, 0, 0], sizes = [24, 28, 4], strides = [1, 1, 1]} : vector<28x28x4xbf16> to vector<24x28x4xbf16>
    %24 = vector.extract_strided_slice %22 {offsets = [1, 0, 0], sizes = [24, 28, 4], strides = [1, 1, 1]} : vector<28x28x4xbf16> to vector<24x28x4xbf16>
    %25 = vector.extract_strided_slice %22 {offsets = [2, 0, 0], sizes = [24, 28, 4], strides = [1, 1, 1]} : vector<28x28x4xbf16> to vector<24x28x4xbf16>
    %26 = vector.extract_strided_slice %22 {offsets = [3, 0, 0], sizes = [24, 28, 4], strides = [1, 1, 1]} : vector<28x28x4xbf16> to vector<24x28x4xbf16>
    %27 = vector.extract_strided_slice %22 {offsets = [4, 0, 0], sizes = [24, 28, 4], strides = [1, 1, 1]} : vector<28x28x4xbf16> to vector<24x28x4xbf16>
    %28 = arith.maximumf %23, %24 : vector<24x28x4xbf16>
    %29 = arith.maximumf %28, %25 : vector<24x28x4xbf16>
    %30 = arith.maximumf %29, %26 : vector<24x28x4xbf16>
    %31 = arith.maximumf %30, %27 : vector<24x28x4xbf16>
    %32 = vector.extract_strided_slice %31 {offsets = [0, 0, 0], sizes = [24, 24, 4], strides = [1, 1, 1]} : vector<24x28x4xbf16> to vector<24x24x4xbf16>
    %33 = vector.extract_strided_slice %31 {offsets = [0, 1, 0], sizes = [24, 24, 4], strides = [1, 1, 1]} : vector<24x28x4xbf16> to vector<24x24x4xbf16>
    %34 = vector.extract_strided_slice %31 {offsets = [0, 2, 0], sizes = [24, 24, 4], strides = [1, 1, 1]} : vector<24x28x4xbf16> to vector<24x24x4xbf16>
    %35 = vector.extract_strided_slice %31 {offsets = [0, 3, 0], sizes = [24, 24, 4], strides = [1, 1, 1]} : vector<24x28x4xbf16> to vector<24x24x4xbf16>
    %36 = vector.extract_strided_slice %31 {offsets = [0, 4, 0], sizes = [24, 24, 4], strides = [1, 1, 1]} : vector<24x28x4xbf16> to vector<24x24x4xbf16>
    %37 = arith.maximumf %32, %33 : vector<24x24x4xbf16>
    %38 = arith.maximumf %37, %34 : vector<24x24x4xbf16>
    %39 = arith.maximumf %38, %35 : vector<24x24x4xbf16>
    %40 = arith.maximumf %39, %36 : vector<24x24x4xbf16>
    %41 = vector.extract_strided_slice %40 {offsets = [4, 4, 0], sizes = [16, 16, 4], strides = [1, 1, 1]} : vector<24x24x4xbf16> to vector<16x16x4xbf16>
    %42 = vector.shape_cast %41 : vector<16x16x4xbf16> to vector<256x4xbf16>
    %c4 = arith.constant 4 : index
    %c0_13 = arith.constant 0 : index
    %43 = vector.load %arg4[%c4, %c0_13] : memref<16x8xbf16, #tpu.memory_space<vmem>>, vector<4x8xbf16>
    %cst_14 = arith.constant dense<0.000000e+00> : vector<256x8xf32>
    %44 = tpu.matmul %42, %43, %cst_14 {dimension_numbers = #tpu.dot_dimension_numbers<[1], [0], [0], [1], [0, 0, 1, 1], [], []>} : vector<256x4xbf16>, vector<4x8xbf16>, vector<256x8xf32> -> vector<256x8xf32>
    %45 = arith.addf %17, %44 : vector<256x8xf32>
    %46 = vector.extract_strided_slice %40 {offsets = [0, 0, 0], sizes = [20, 24, 4], strides = [1, 1, 1]} : vector<24x24x4xbf16> to vector<20x24x4xbf16>
    %47 = vector.extract_strided_slice %40 {offsets = [1, 0, 0], sizes = [20, 24, 4], strides = [1, 1, 1]} : vector<24x24x4xbf16> to vector<20x24x4xbf16>
    %48 = vector.extract_strided_slice %40 {offsets = [2, 0, 0], sizes = [20, 24, 4], strides = [1, 1, 1]} : vector<24x24x4xbf16> to vector<20x24x4xbf16>
    %49 = vector.extract_strided_slice %40 {offsets = [3, 0, 0], sizes = [20, 24, 4], strides = [1, 1, 1]} : vector<24x24x4xbf16> to vector<20x24x4xbf16>
    %50 = vector.extract_strided_slice %40 {offsets = [4, 0, 0], sizes = [20, 24, 4], strides = [1, 1, 1]} : vector<24x24x4xbf16> to vector<20x24x4xbf16>
    %51 = arith.maximumf %46, %47 : vector<20x24x4xbf16>
    %52 = arith.maximumf %51, %48 : vector<20x24x4xbf16>
    %53 = arith.maximumf %52, %49 : vector<20x24x4xbf16>
    %54 = arith.maximumf %53, %50 : vector<20x24x4xbf16>
    %55 = vector.extract_strided_slice %54 {offsets = [0, 0, 0], sizes = [20, 20, 4], strides = [1, 1, 1]} : vector<20x24x4xbf16> to vector<20x20x4xbf16>
    %56 = vector.extract_strided_slice %54 {offsets = [0, 1, 0], sizes = [20, 20, 4], strides = [1, 1, 1]} : vector<20x24x4xbf16> to vector<20x20x4xbf16>
    %57 = vector.extract_strided_slice %54 {offsets = [0, 2, 0], sizes = [20, 20, 4], strides = [1, 1, 1]} : vector<20x24x4xbf16> to vector<20x20x4xbf16>
    %58 = vector.extract_strided_slice %54 {offsets = [0, 3, 0], sizes = [20, 20, 4], strides = [1, 1, 1]} : vector<20x24x4xbf16> to vector<20x20x4xbf16>
    %59 = vector.extract_strided_slice %54 {offsets = [0, 4, 0], sizes = [20, 20, 4], strides = [1, 1, 1]} : vector<20x24x4xbf16> to vector<20x20x4xbf16>
    %60 = arith.maximumf %55, %56 : vector<20x20x4xbf16>
    %61 = arith.maximumf %60, %57 : vector<20x20x4xbf16>
    %62 = arith.maximumf %61, %58 : vector<20x20x4xbf16>
    %63 = arith.maximumf %62, %59 : vector<20x20x4xbf16>
    %64 = vector.extract_strided_slice %63 {offsets = [2, 2, 0], sizes = [16, 16, 4], strides = [1, 1, 1]} : vector<20x20x4xbf16> to vector<16x16x4xbf16>
    %65 = vector.shape_cast %64 : vector<16x16x4xbf16> to vector<256x4xbf16>
    %c8 = arith.constant 8 : index
    %c0_15 = arith.constant 0 : index
    %66 = vector.load %arg4[%c8, %c0_15] : memref<16x8xbf16, #tpu.memory_space<vmem>>, vector<4x8xbf16>
    %cst_16 = arith.constant dense<0.000000e+00> : vector<256x8xf32>
    %67 = tpu.matmul %65, %66, %cst_16 {dimension_numbers = #tpu.dot_dimension_numbers<[1], [0], [0], [1], [0, 0, 1, 1], [], []>} : vector<256x4xbf16>, vector<4x8xbf16>, vector<256x8xf32> -> vector<256x8xf32>
    %68 = arith.addf %45, %67 : vector<256x8xf32>
    %69 = vector.extract_strided_slice %63 {offsets = [0, 0, 0], sizes = [16, 20, 4], strides = [1, 1, 1]} : vector<20x20x4xbf16> to vector<16x20x4xbf16>
    %70 = vector.extract_strided_slice %63 {offsets = [1, 0, 0], sizes = [16, 20, 4], strides = [1, 1, 1]} : vector<20x20x4xbf16> to vector<16x20x4xbf16>
    %71 = vector.extract_strided_slice %63 {offsets = [2, 0, 0], sizes = [16, 20, 4], strides = [1, 1, 1]} : vector<20x20x4xbf16> to vector<16x20x4xbf16>
    %72 = vector.extract_strided_slice %63 {offsets = [3, 0, 0], sizes = [16, 20, 4], strides = [1, 1, 1]} : vector<20x20x4xbf16> to vector<16x20x4xbf16>
    %73 = vector.extract_strided_slice %63 {offsets = [4, 0, 0], sizes = [16, 20, 4], strides = [1, 1, 1]} : vector<20x20x4xbf16> to vector<16x20x4xbf16>
    %74 = arith.maximumf %69, %70 : vector<16x20x4xbf16>
    %75 = arith.maximumf %74, %71 : vector<16x20x4xbf16>
    %76 = arith.maximumf %75, %72 : vector<16x20x4xbf16>
    %77 = arith.maximumf %76, %73 : vector<16x20x4xbf16>
    %78 = vector.extract_strided_slice %77 {offsets = [0, 0, 0], sizes = [16, 16, 4], strides = [1, 1, 1]} : vector<16x20x4xbf16> to vector<16x16x4xbf16>
    %79 = vector.extract_strided_slice %77 {offsets = [0, 1, 0], sizes = [16, 16, 4], strides = [1, 1, 1]} : vector<16x20x4xbf16> to vector<16x16x4xbf16>
    %80 = vector.extract_strided_slice %77 {offsets = [0, 2, 0], sizes = [16, 16, 4], strides = [1, 1, 1]} : vector<16x20x4xbf16> to vector<16x16x4xbf16>
    %81 = vector.extract_strided_slice %77 {offsets = [0, 3, 0], sizes = [16, 16, 4], strides = [1, 1, 1]} : vector<16x20x4xbf16> to vector<16x16x4xbf16>
    %82 = vector.extract_strided_slice %77 {offsets = [0, 4, 0], sizes = [16, 16, 4], strides = [1, 1, 1]} : vector<16x20x4xbf16> to vector<16x16x4xbf16>
    %83 = arith.maximumf %78, %79 : vector<16x16x4xbf16>
    %84 = arith.maximumf %83, %80 : vector<16x16x4xbf16>
    %85 = arith.maximumf %84, %81 : vector<16x16x4xbf16>
    %86 = arith.maximumf %85, %82 : vector<16x16x4xbf16>
    %87 = vector.shape_cast %86 : vector<16x16x4xbf16> to vector<256x4xbf16>
    %c12 = arith.constant 12 : index
    %c0_17 = arith.constant 0 : index
    %88 = vector.load %arg4[%c12, %c0_17] : memref<16x8xbf16, #tpu.memory_space<vmem>>, vector<4x8xbf16>
    %cst_18 = arith.constant dense<0.000000e+00> : vector<256x8xf32>
    %89 = tpu.matmul %87, %88, %cst_18 {dimension_numbers = #tpu.dot_dimension_numbers<[1], [0], [0], [1], [0, 0, 1, 1], [], []>} : vector<256x4xbf16>, vector<4x8xbf16>, vector<256x8xf32> -> vector<256x8xf32>
    %90 = arith.addf %68, %89 : vector<256x8xf32>
    %c0_19 = arith.constant 0 : index
    %c0_20 = arith.constant 0 : index
    %91 = vector.load %arg5[%c0_19, %c0_20] : memref<1x8xf32, #tpu.memory_space<vmem>>, vector<1x8xf32>
    %92 = vector.broadcast %91 : vector<1x8xf32> to vector<256x8xf32>
    %93 = arith.addf %90, %92 : vector<256x8xf32>
    %94 = arith.negf %93 : vector<256x8xf32>
    %95 = math.exp %94 : vector<256x8xf32>
    %cst_21 = arith.constant 1.000000e+00 : f32
    %96 = vector.broadcast %cst_21 : f32 to vector<256x8xf32>
    %97 = arith.addf %96, %95 : vector<256x8xf32>
    %98 = arith.divf %96, %97 : vector<256x8xf32>
    %99 = arith.mulf %93, %98 : vector<256x8xf32>
    %100 = vector.shape_cast %99 : vector<256x8xf32> to vector<16x16x8xf32>
    %101 = arith.truncf %100 : vector<16x16x8xf32> to vector<16x16x8xbf16>
    %c0_22 = arith.constant 0 : index
    %c0_23 = arith.constant 0 : index
    %c0_24 = arith.constant 0 : index
    %c0_25 = arith.constant 0 : index
    %102 = vector.load %arg6[%c0_22, %c0_23, %c0_24, %c0_25] : memref<1x16x16x8xbf16, #tpu.memory_space<vmem>>, vector<1x16x16x8xbf16>
    %103 = vector.shape_cast %102 : vector<1x16x16x8xbf16> to vector<16x16x8xbf16>
    %104 = vector.shape_cast %101 : vector<16x16x8xbf16> to vector<1x16x16x8xbf16>
    tpu.vector_store %arg6[%c0_22, %c0_23, %c0_24, %c0_25], %104 {strides = array<i32>} : memref<1x16x16x8xbf16, #tpu.memory_space<vmem>>, vector<1x16x16x8xbf16>,
    return
  }
  func.func @transform_0(%arg0: i32) -> (i32, i32, i32, i32) {
    %c0_i32 = arith.constant 0 : i32
    %c0_i32_0 = arith.constant 0 : i32
    %c0_i32_1 = arith.constant 0 : i32
    %c0_i32_2 = arith.constant 0 : i32
    return %arg0, %c0_i32, %c0_i32_0, %c0_i32_1 : i32, i32, i32, i32
  }
  func.func @transform_1(%arg0: i32) -> (i32, i32) {
    %c0_i32 = arith.constant 0 : i32
    %c0_i32_0 = arith.constant 0 : i32
    %c0_i32_1 = arith.constant 0 : i32
    return %c0_i32, %c0_i32_0 : i32, i32
  }
  func.func @transform_2(%arg0: i32) -> (i32, i32) {
    %c0_i32 = arith.constant 0 : i32
    %c0_i32_0 = arith.constant 0 : i32
    %c0_i32_1 = arith.constant 0 : i32
    return %c0_i32, %c0_i32_0 : i32, i32
  }
  func.func @transform_3(%arg0: i32) -> (i32, i32) {
    %c0_i32 = arith.constant 0 : i32
    %c0_i32_0 = arith.constant 0 : i32
    %c0_i32_1 = arith.constant 0 : i32
    return %c0_i32, %c0_i32_0 : i32, i32
  }
  func.func @transform_4(%arg0: i32) -> (i32, i32) {
    %c0_i32 = arith.constant 0 : i32
    %c0_i32_0 = arith.constant 0 : i32
    %c0_i32_1 = arith.constant 0 : i32
    return %c0_i32, %c0_i32_0 : i32, i32
  }
  func.func @transform_5(%arg0: i32) -> (i32, i32, i32, i32) {
    %c0_i32 = arith.constant 0 : i32
    %c0_i32_0 = arith.constant 0 : i32
    %c0_i32_1 = arith.constant 0 : i32
    %c0_i32_2 = arith.constant 0 : i32
    return %arg0, %c0_i32, %c0_i32_0, %c0_i32_1 : i32, i32, i32, i32
  }
}

module attributes {stable_mosaic.version = 11 : i64} {
  func.func @_fast_spp_kernel(%arg0: i32, %arg1: memref<1x16x16x8xf32, #tpu.memory_space<vmem>>, %arg2: memref<8x4xbf16, #tpu.memory_space<vmem>>, %arg3: memref<1x4xf32, #tpu.memory_space<vmem>>, %arg4: memref<16x8xbf16, #tpu.memory_space<vmem>>, %arg5: memref<1x8xf32, #tpu.memory_space<vmem>>, %arg6: memref<1x16x16x8xbf16, #tpu.memory_space<vmem>>) attributes {dimension_semantics = [#tpu.dimension_semantics<parallel>], iteration_bounds = array<i64: 2>, scalar_prefetch = 0 : i64, scratch_operands = 0 : i64, tpu.core_type = #tpu.core_type<tc>, window_params = [{transform_indices = @transform_0, window_bounds = array<i64: 1, 16, 16, 8>}, {pipeline_mode = #tpu.pipeline_mode<synchronous>, transform_indices = @transform_1, window_bounds = array<i64: 8, 4>}, {pipeline_mode = #tpu.pipeline_mode<synchronous>, transform_indices = @transform_2, window_bounds = array<i64: 1, 4>}, {pipeline_mode = #tpu.pipeline_mode<synchronous>, transform_indices = @transform_3, window_bounds = array<i64: 16, 8>}, {pipeline_mode = #tpu.pipeline_mode<synchronous>, transform_indices = @transform_4, window_bounds = array<i64: 1, 8>}, {transform_indices = @transform_5, window_bounds = array<i64: 1, 16, 16, 8>}]} {
    %c0 = arith.constant 0 : index
    %c0_0 = arith.constant 0 : index
    %c0_1 = arith.constant 0 : index
    %c0_2 = arith.constant 0 : index
    %0 = vector.load %arg1[%c0, %c0_0, %c0_1, %c0_2] : memref<1x16x16x8xf32, #tpu.memory_space<vmem>>, vector<1x16x16x8xf32>
    %1 = vector.shape_cast %0 : vector<1x16x16x8xf32> to vector<16x16x8xf32>
    %2 = arith.truncf %1 : vector<16x16x8xf32> to vector<16x16x8xbf16>
    %3 = vector.shape_cast %2 : vector<16x16x8xbf16> to vector<256x8xbf16>
    %c0_3 = arith.constant 0 : index
    %c0_4 = arith.constant 0 : index
    %4 = vector.load %arg2[%c0_3, %c0_4] : memref<8x4xbf16, #tpu.memory_space<vmem>>, vector<8x4xbf16>
    %cst = arith.constant dense<0.000000e+00> : vector<256x4xf32>
    %5 = tpu.matmul %3, %4, %cst {dimension_numbers = #tpu.dot_dimension_numbers<[1], [0], [0], [1], [0, 0, 1, 1], [], []>} : vector<256x8xbf16>, vector<8x4xbf16>, vector<256x4xf32> -> vector<256x4xf32>
    %c0_5 = arith.constant 0 : index
    %c0_6 = arith.constant 0 : index
    %6 = vector.load %arg3[%c0_5, %c0_6] : memref<1x4xf32, #tpu.memory_space<vmem>>, vector<1x4xf32>
    %7 = vector.broadcast %6 : vector<1x4xf32> to vector<256x4xf32>
    %8 = arith.addf %5, %7 : vector<256x4xf32>
    %9 = arith.negf %8 : vector<256x4xf32>
    %10 = math.exp %9 : vector<256x4xf32>
    %cst_7 = arith.constant 1.000000e+00 : f32
    %11 = vector.broadcast %cst_7 : f32 to vector<256x4xf32>
    %12 = arith.addf %11, %10 : vector<256x4xf32>
    %13 = arith.divf %11, %12 : vector<256x4xf32>
    %14 = arith.mulf %8, %13 : vector<256x4xf32>
    %15 = arith.truncf %14 : vector<256x4xf32> to vector<256x4xbf16>
    %c0_8 = arith.constant 0 : index
    %c0_9 = arith.constant 0 : index
    %16 = vector.load %arg4[%c0_8, %c0_9] : memref<16x8xbf16, #tpu.memory_space<vmem>>, vector<4x8xbf16>
    %cst_10 = arith.constant dense<0.000000e+00> : vector<256x8xf32>
    %17 = tpu.matmul %15, %16, %cst_10 {dimension_numbers = #tpu.dot_dimension_numbers<[1], [0], [0], [1], [0, 0, 1, 1], [], []>} : vector<256x4xbf16>, vector<4x8xbf16>, vector<256x8xf32> -> vector<256x8xf32>
    %18 = vector.shape_cast %15 : vector<256x4xbf16> to vector<16x16x4xbf16>
    %cst_11 = arith.constant 0xFF80 : bf16
    %19 = vector.broadcast %cst_11 : bf16 to vector<16x6x4xbf16>
    %20 = tpu.concatenate %19, %18, %19 in 1 : vector<16x6x4xbf16>, vector<16x16x4xbf16>, vector<16x6x4xbf16> -> vector<16x28x4xbf16>
    %cst_12 = arith.constant 0xFF80 : bf16
    %21 = vector.broadcast %cst_12 : bf16 to vector<6x28x4xbf16>
    %22 = tpu.concatenate %21, %20, %21 in 0 : vector<6x28x4xbf16>, vector<16x28x4xbf16>, vector<6x28x4xbf16> -> vector<28x28x4xbf16>
    %23 = vector.extract_strided_slice %22 {offsets = [0, 0, 0], sizes = [24, 28, 4], strides = [1, 1, 1]} : vector<28x28x4xbf16> to vector<24x28x4xbf16>
    %24 = vector.extract_strided_slice %22 {offsets = [1, 0, 0], sizes = [24, 28, 4], strides = [1, 1, 1]} : vector<28x28x4xbf16> to vector<24x28x4xbf16>
    %25 = vector.extract_strided_slice %22 {offsets = [2, 0, 0], sizes = [24, 28, 4], strides = [1, 1, 1]} : vector<28x28x4xbf16> to vector<24x28x4xbf16>
    %26 = vector.extract_strided_slice %22 {offsets = [3, 0, 0], sizes = [24, 28, 4], strides = [1, 1, 1]} : vector<28x28x4xbf16> to vector<24x28x4xbf16>
    %27 = vector.extract_strided_slice %22 {offsets = [4, 0, 0], sizes = [24, 28, 4], strides = [1, 1, 1]} : vector<28x28x4xbf16> to vector<24x28x4xbf16>
    %28 = arith.maximumf %23, %24 : vector<24x28x4xbf16>
    %29 = arith.maximumf %28, %25 : vector<24x28x4xbf16>
    %30 = arith.maximumf %29, %26 : vector<24x28x4xbf16>
    %31 = arith.maximumf %30, %27 : vector<24x28x4xbf16>
    %32 = vector.extract_strided_slice %31 {offsets = [0, 0, 0], sizes = [24, 24, 4], strides = [1, 1, 1]} : vector<24x28x4xbf16> to vector<24x24x4xbf16>
    %33 = vector.extract_strided_slice %31 {offsets = [0, 1, 0], sizes = [24, 24, 4], strides = [1, 1, 1]} : vector<24x28x4xbf16> to vector<24x24x4xbf16>
    %34 = vector.extract_strided_slice %31 {offsets = [0, 2, 0], sizes = [24, 24, 4], strides = [1, 1, 1]} : vector<24x28x4xbf16> to vector<24x24x4xbf16>
    %35 = vector.extract_strided_slice %31 {offsets = [0, 3, 0], sizes = [24, 24, 4], strides = [1, 1, 1]} : vector<24x28x4xbf16> to vector<24x24x4xbf16>
    %36 = vector.extract_strided_slice %31 {offsets = [0, 4, 0], sizes = [24, 24, 4], strides = [1, 1, 1]} : vector<24x28x4xbf16> to vector<24x24x4xbf16>
    %37 = arith.maximumf %32, %33 : vector<24x24x4xbf16>
    %38 = arith.maximumf %37, %34 : vector<24x24x4xbf16>
    %39 = arith.maximumf %38, %35 : vector<24x24x4xbf16>
    %40 = arith.maximumf %39, %36 : vector<24x24x4xbf16>
    %41 = vector.extract_strided_slice %40 {offsets = [4, 4, 0], sizes = [16, 16, 4], strides = [1, 1, 1]} : vector<24x24x4xbf16> to vector<16x16x4xbf16>
    %42 = vector.shape_cast %41 : vector<16x16x4xbf16> to vector<256x4xbf16>
    %c4 = arith.constant 4 : index
    %c0_13 = arith.constant 0 : index
    %43 = vector.load %arg4[%c4, %c0_13] : memref<16x8xbf16, #tpu.memory_space<vmem>>, vector<4x8xbf16>
    %cst_14 = arith.constant dense<0.000000e+00> : vector<256x8xf32>
    %44 = tpu.matmul %42, %43, %cst_14 {dimension_numbers = #tpu.dot_dimension_numbers<[1], [0], [0], [1], [0, 0, 1, 1], [], []>} : vector<256x4xbf16>, vector<4x8xbf16>, vector<256x8xf32> -> vector<256x8xf32>
    %45 = arith.addf %17, %44 : vector<256x8xf32>
    %46 = vector.extract_strided_slice %40 {offsets = [0, 0, 0], sizes = [20, 24, 4], strides = [1, 1, 1]} : vector<24x24x4xbf16> to vector<20x24x4xbf16>
    %47 = vector.extract_strided_slice %40 {offsets = [1, 0, 0], sizes = [20, 24, 4], strides = [1, 1, 1]} : vector<24x24x4xbf16> to vector<20x24x4xbf16>
    %48 = vector.extract_strided_slice %40 {offsets = [2, 0, 0], sizes = [20, 24, 4], strides = [1, 1, 1]} : vector<24x24x4xbf16> to vector<20x24x4xbf16>
    %49 = vector.extract_strided_slice %40 {offsets = [3, 0, 0], sizes = [20, 24, 4], strides = [1, 1, 1]} : vector<24x24x4xbf16> to vector<20x24x4xbf16>
    %50 = vector.extract_strided_slice %40 {offsets = [4, 0, 0], sizes = [20, 24, 4], strides = [1, 1, 1]} : vector<24x24x4xbf16> to vector<20x24x4xbf16>
    %51 = arith.maximumf %46, %47 : vector<20x24x4xbf16>
    %52 = arith.maximumf %51, %48 : vector<20x24x4xbf16>
    %53 = arith.maximumf %52, %49 : vector<20x24x4xbf16>
    %54 = arith.maximumf %53, %50 : vector<20x24x4xbf16>
    %55 = vector.extract_strided_slice %54 {offsets = [0, 0, 0], sizes = [20, 20, 4], strides = [1, 1, 1]} : vector<20x24x4xbf16> to vector<20x20x4xbf16>
    %56 = vector.extract_strided_slice %54 {offsets = [0, 1, 0], sizes = [20, 20, 4], strides = [1, 1, 1]} : vector<20x24x4xbf16> to vector<20x20x4xbf16>
    %57 = vector.extract_strided_slice %54 {offsets = [0, 2, 0], sizes = [20, 20, 4], strides = [1, 1, 1]} : vector<20x24x4xbf16> to vector<20x20x4xbf16>
    %58 = vector.extract_strided_slice %54 {offsets = [0, 3, 0], sizes = [20, 20, 4], strides = [1, 1, 1]} : vector<20x24x4xbf16> to vector<20x20x4xbf16>
    %59 = vector.extract_strided_slice %54 {offsets = [0, 4, 0], sizes = [20, 20, 4], strides = [1, 1, 1]} : vector<20x24x4xbf16> to vector<20x20x4xbf16>
    %60 = arith.maximumf %55, %56 : vector<20x20x4xbf16>
    %61 = arith.maximumf %60, %57 : vector<20x20x4xbf16>
    %62 = arith.maximumf %61, %58 : vector<20x20x4xbf16>
    %63 = arith.maximumf %62, %59 : vector<20x20x4xbf16>
    %64 = vector.extract_strided_slice %63 {offsets = [2, 2, 0], sizes = [16, 16, 4], strides = [1, 1, 1]} : vector<20x20x4xbf16> to vector<16x16x4xbf16>
    %65 = vector.shape_cast %64 : vector<16x16x4xbf16> to vector<256x4xbf16>
    %c8 = arith.constant 8 : index
    %c0_15 = arith.constant 0 : index
    %66 = vector.load %arg4[%c8, %c0_15] : memref<16x8xbf16, #tpu.memory_space<vmem>>, vector<4x8xbf16>
    %cst_16 = arith.constant dense<0.000000e+00> : vector<256x8xf32>
    %67 = tpu.matmul %65, %66, %cst_16 {dimension_numbers = #tpu.dot_dimension_numbers<[1], [0], [0], [1], [0, 0, 1, 1], [], []>} : vector<256x4xbf16>, vector<4x8xbf16>, vector<256x8xf32> -> vector<256x8xf32>
    %68 = arith.addf %45, %67 : vector<256x8xf32>
    %69 = vector.extract_strided_slice %63 {offsets = [0, 0, 0], sizes = [16, 20, 4], strides = [1, 1, 1]} : vector<20x20x4xbf16> to vector<16x20x4xbf16>
    %70 = vector.extract_strided_slice %63 {offsets = [1, 0, 0], sizes = [16, 20, 4], strides = [1, 1, 1]} : vector<20x20x4xbf16> to vector<16x20x4xbf16>
    %71 = vector.extract_strided_slice %63 {offsets = [2, 0, 0], sizes = [16, 20, 4], strides = [1, 1, 1]} : vector<20x20x4xbf16> to vector<16x20x4xbf16>
    %72 = vector.extract_strided_slice %63 {offsets = [3, 0, 0], sizes = [16, 20, 4], strides = [1, 1, 1]} : vector<20x20x4xbf16> to vector<16x20x4xbf16>
    %73 = vector.extract_strided_slice %63 {offsets = [4, 0, 0], sizes = [16, 20, 4], strides = [1, 1, 1]} : vector<20x20x4xbf16> to vector<16x20x4xbf16>
    %74 = arith.maximumf %69, %70 : vector<16x20x4xbf16>
    %75 = arith.maximumf %74, %71 : vector<16x20x4xbf16>
    %76 = arith.maximumf %75, %72 : vector<16x20x4xbf16>
    %77 = arith.maximumf %76, %73 : vector<16x20x4xbf16>
    %78 = vector.extract_strided_slice %77 {offsets = [0, 0, 0], sizes = [16, 16, 4], strides = [1, 1, 1]} : vector<16x20x4xbf16> to vector<16x16x4xbf16>
    %79 = vector.extract_strided_slice %77 {offsets = [0, 1, 0], sizes = [16, 16, 4], strides = [1, 1, 1]} : vector<16x20x4xbf16> to vector<16x16x4xbf16>
    %80 = vector.extract_strided_slice %77 {offsets = [0, 2, 0], sizes = [16, 16, 4], strides = [1, 1, 1]} : vector<16x20x4xbf16> to vector<16x16x4xbf16>
    %81 = vector.extract_strided_slice %77 {offsets = [0, 3, 0], sizes = [16, 16, 4], strides = [1, 1, 1]} : vector<16x20x4xbf16> to vector<16x16x4xbf16>
    %82 = vector.extract_strided_slice %77 {offsets = [0, 4, 0], sizes = [16, 16, 4], strides = [1, 1, 1]} : vector<16x20x4xbf16> to vector<16x16x4xbf16>
    %83 = arith.maximumf %78, %79 : vector<16x16x4xbf16>
    %84 = arith.maximumf %83, %80 : vector<16x16x4xbf16>
    %85 = arith.maximumf %84, %81 : vector<16x16x4xbf16>
    %86 = arith.maximumf %85, %82 : vector<16x16x4xbf16>
    %87 = vector.shape_cast %86 : vector<16x16x4xbf16> to vector<256x4xbf16>
    %c12 = arith.constant 12 : index
    %c0_17 = arith.constant 0 : index
    %88 = vector.load %arg4[%c12, %c0_17] : memref<16x8xbf16, #tpu.memory_space<vmem>>, vector<4x8xbf16>
    %cst_18 = arith.constant dense<0.000000e+00> : vector<256x8xf32>
    %89 = tpu.matmul %87, %88, %cst_18 {dimension_numbers = #tpu.dot_dimension_numbers<[1], [0], [0], [1], [0, 0, 1, 1], [], []>} : vector<256x4xbf16>, vector<4x8xbf16>, vector<256x8xf32> -> vector<256x8xf32>
    %90 = arith.addf %68, %89 : vector<256x8xf32>
    %c0_19 = arith.constant 0 : index
    %c0_20 = arith.constant 0 : index
    %91 = vector.load %arg5[%c0_19, %c0_20] : memref<1x8xf32, #tpu.memory_space<vmem>>, vector<1x8xf32>
    %92 = vector.broadcast %91 : vector<1x8xf32> to vector<256x8xf32>
    %93 = arith.addf %90, %92 : vector<256x8xf32>
    %94 = arith.negf %93 : vector<256x8xf32>
    %95 = math.exp %94 : vector<256x8xf32>
    %cst_21 = arith.constant 1.000000e+00 : f32
    %96 = vector.broadcast %cst_21 : f32 to vector<256x8xf32>
    %97 = arith.addf %96, %95 : vector<256x8xf32>
    %98 = arith.divf %96, %97 : vector<256x8xf32>
    %99 = arith.mulf %93, %98 : vector<256x8xf32>
    %100 = vector.shape_cast %99 : vector<256x8xf32> to vector<16x16x8xf32>
    %101 = arith.truncf %100 : vector<16x16x8xf32> to vector<16x16x8xbf16>
    %c0_22 = arith.constant 0 : index
    %c0_23 = arith.constant 0 : index
    %c0_24 = arith.constant 0 : index
    %c0_25 = arith.constant 0 : index
    %102 = vector.load %arg6[%c0_22, %c0_23, %c0_24, %c0_25] : memref<1x16x16x8xbf16, #tpu.memory_space<vmem>>, vector<1x16x16x8xbf16>
    %103 = vector.shape_cast %102 : vector<1x16x16x8xbf16> to vector<16x16x8xbf16>
    %104 = vector.shape_cast %101 : vector<16x16x8xbf16> to vector<1x16x16x8xbf16>
    tpu.vector_store %arg6[%c0_22, %c0_23, %c0_24, %c0_25], %104 {strides = array<i32>} : memref<1x16x16x8xbf16, #tpu.memory_space<vmem>>, vector<1x16x16x8xbf16>,
    return
  }
  func.func @transform_0(%arg0: i32) -> (i32, i32, i32, i32) {
    %c0_i32 = arith.constant 0 : i32
    %c0_i32_0 = arith.constant 0 : i32
    %c0_i32_1 = arith.constant 0 : i32
    %c0_i32_2 = arith.constant 0 : i32
    return %arg0, %c0_i32, %c0_i32_0, %c0_i32_1 : i32, i32, i32, i32
  }
  func.func @transform_1(%arg0: i32) -> (i32, i32) {
    %c0_i32 = arith.constant 0 : i32
    %c0_i32_0 = arith.constant 0 : i32
    %c0_i32_1 = arith.constant 0 : i32
    return %c0_i32, %c0_i32_0 : i32, i32
  }
  func.func @transform_2(%arg0: i32) -> (i32, i32) {
    %c0_i32 = arith.constant 0 : i32
    %c0_i32_0 = arith.constant 0 : i32
    %c0_i32_1 = arith.constant 0 : i32
    return %c0_i32, %c0_i32_0 : i32, i32
  }
  func.func @transform_3(%arg0: i32) -> (i32, i32) {
    %c0_i32 = arith.constant 0 : i32
    %c0_i32_0 = arith.constant 0 : i32
    %c0_i32_1 = arith.constant 0 : i32
    return %c0_i32, %c0_i32_0 : i32, i32
  }
  func.func @transform_4(%arg0: i32) -> (i32, i32) {
    %c0_i32 = arith.constant 0 : i32
    %c0_i32_0 = arith.constant 0 : i32
    %c0_i32_1 = arith.constant 0 : i32
    return %c0_i32, %c0_i32_0 : i32, i32
  }
  func.func @transform_5(%arg0: i32) -> (i32, i32, i32, i32) {
    %c0_i32 = arith.constant 0 : i32
    %c0_i32_0 = arith.constant 0 : i32
    %c0_i32_1 = arith.constant 0 : i32
    %c0_i32_2 = arith.constant 0 : i32
    return %arg0, %c0_i32, %c0_i32_0, %c0_i32_1 : i32, i32, i32, i32
  }
}

</mosaic_0001>

<llo_original>
// kernel: tpu_custom_call.1
$region0: #{tpu_custom_call.1}
  #allocation0 [shape = 'u32[]', space=smem, size = 0x4, offset = 0x4, fixed_abs, tag = 'smem constant byte address 0x4 - core index']
  #allocation1 [shape = 'u32[144,128]{1,0:T(1,128)}', space=vmem, size = 0x12000, scoped, tag = 'internal scratch']
  %s0 = inlined_call_operand.vmem [shape: f32[2,16,16,8], index: 0, kind: input, shape index: {}]
  %s1 = inlined_call_operand.vmem [shape: bf16[8,4], index: 1, kind: input, shape index: {}]
  %s2 = inlined_call_operand.vmem [shape: f32[1,4], index: 2, kind: input, shape index: {}]
  %s3 = inlined_call_operand.vmem [shape: bf16[16,8], index: 3, kind: input, shape index: {}]
  %s4 = inlined_call_operand.vmem [shape: f32[1,8], index: 4, kind: input, shape index: {}]
  %s5 = inlined_call_operand.vmem [shape: bf16[2,16,16,8], index: 5, kind: output, shape index: {}]
  %s6 = sld [smem:[#allocation0]]
  $region53: #{tpu_custom_call.1} parent=0
    _
  %s8 = ssub.s32 1, %s6
  %s9 = scalar_select 0, %s8, %s6
  loop: start=0, step=1, limit=4
  $region2: #{tpu_custom_call.1} parent=0 // loop_pre_header
    _
  $region3: #{tpu_custom_call.1} parent=0 // loop_header
    %s11 = sphi 0, %s15
    %p12 = scmp.ge.s32.totalorder %s11, 4
    %s21 = sphi 0, %s23
    %s24 = sphi 0, %s21
    %s25 = sphi 0, %s24
    %s41 = sphi 0, %s25
    %s45 = sphi 0, %s45
    %s47 = sphi 0, %s45
    %s48 = sphi 0, %s47
    %s62 = sphi 0, %s48
    %s66 = sphi 0, %s66
    %s68 = sphi 0, %s66
    %s69 = sphi 0, %s68
    %s83 = sphi 0, %s69
    %s87 = sphi 0, %s87
    %s89 = sphi 0, %s87
    %s90 = sphi 0, %s89
    %s104 = sphi 0, %s90
    %s108 = sphi 0, %s108
    %s110 = sphi 0, %s108
    %s111 = sphi 0, %s110
    %s125 = sphi 0, %s111
    %s131 = sphi 0, %s133
    %s134 = sphi 0, %s131
    %s135 = sphi 0, %s134
    %s151 = sphi 0, %s135
  $region4: #{tpu_custom_call.1} parent=0 // loop_header_branch
    %14 = sbr.rel (%p12) target = $region8
  $region5: #{tpu_custom_call.1} parent=0 // loop_body
    %s16 = ssub.s32 %s11, 1
    %s17 = ssub.s32 %s11, 2
    %s18 = sadd.s32 %s11, 1
    %s19 = ssub.s32 %s11, %s18
    %p20 = scmp.eq.s32.totalorder %s19, 0
    %s22 = sadd.s32 %s21, 1
    %s23 = scalar_select %p20, %s21, %s22
    %p26 = pneg %p20
    %p27 = scmp.eq.s32.totalorder %s11, 1
    %p28 = por %p26, %p27
    %p29 = scmp.ne.s32.totalorder %s21, %s24
    %p30 = scmp.eq.s32.totalorder %s11, 0
    %p31 = por %p29, %p30
    %p32 = scmp.ne.s32.totalorder %s21, %s24
    %p33 = scmp.eq.s32.totalorder %s16, 1
    %p34 = por %p32, %p33
    %p35 = scmp.ne.s32.totalorder %s24, %s25
    %p36 = scmp.eq.s32.totalorder %s16, 0
    %p37 = por %p35, %p36
    %p38 = scmp.ne.s32.totalorder %s24, %s25
    %p39 = scmp.eq.s32.totalorder %s17, 1
    %p40 = por %p38, %p39
    %p42 = scmp.ne.s32.totalorder %s25, %s41
    %p43 = scmp.eq.s32.totalorder %s17, 0
    %p44 = por %p42, %p43
    %s46 = sadd.s32 %s45, 1
    %p49 = scmp.eq.s32.totalorder %s11, 1
    %p50 = scmp.ne.s32.totalorder %s45, %s47
    %p51 = scmp.eq.s32.totalorder %s11, 0
    %p52 = por %p50, %p51
    %p53 = scmp.ne.s32.totalorder %s45, %s47
    %p54 = scmp.eq.s32.totalorder %s16, 1
    %p55 = por %p53, %p54
    %p56 = scmp.ne.s32.totalorder %s47, %s48
    %p57 = scmp.eq.s32.totalorder %s16, 0
    %p58 = por %p56, %p57
    %p59 = scmp.ne.s32.totalorder %s47, %s48
    %p60 = scmp.eq.s32.totalorder %s17, 1
    %p61 = por %p59, %p60
    %p63 = scmp.ne.s32.totalorder %s48, %s62
    %p64 = scmp.eq.s32.totalorder %s17, 0
    %p65 = por %p63, %p64
    %s67 = sadd.s32 %s66, 1
    %p70 = scmp.eq.s32.totalorder %s11, 1
    %p71 = scmp.ne.s32.totalorder %s66, %s68
    %p72 = scmp.eq.s32.totalorder %s11, 0
    %p73 = por %p71, %p72
    %p74 = scmp.ne.s32.totalorder %s66, %s68
    %p75 = scmp.eq.s32.totalorder %s16, 1
    %p76 = por %p74, %p75
    %p77 = scmp.ne.s32.totalorder %s68, %s69
    %p78 = scmp.eq.s32.totalorder %s16, 0
    %p79 = por %p77, %p78
    %p80 = scmp.ne.s32.totalorder %s68, %s69
    %p81 = scmp.eq.s32.totalorder %s17, 1
    %p82 = por %p80, %p81
    %p84 = scmp.ne.s32.totalorder %s69, %s83
    %p85 = scmp.eq.s32.totalorder %s17, 0
    %p86 = por %p84, %p85
    %s88 = sadd.s32 %s87, 1
    %p91 = scmp.eq.s32.totalorder %s11, 1
    %p92 = scmp.ne.s32.totalorder %s87, %s89
    %p93 = scmp.eq.s32.totalorder %s11, 0
    %p94 = por %p92, %p93
    %p95 = scmp.ne.s32.totalorder %s87, %s89
    %p96 = scmp.eq.s32.totalorder %s16, 1
    %p97 = por %p95, %p96
    %p98 = scmp.ne.s32.totalorder %s89, %s90
    %p99 = scmp.eq.s32.totalorder %s16, 0
    %p100 = por %p98, %p99
    %p101 = scmp.ne.s32.totalorder %s89, %s90
    %p102 = scmp.eq.s32.totalorder %s17, 1
    %p103 = por %p101, %p102
    %p105 = scmp.ne.s32.totalorder %s90, %s104
    %p106 = scmp.eq.s32.totalorder %s17, 0
    %p107 = por %p105, %p106
    %s109 = sadd.s32 %s108, 1
    %p112 = scmp.eq.s32.totalorder %s11, 1
    %p113 = scmp.ne.s32.totalorder %s108, %s110
    %p114 = scmp.eq.s32.totalorder %s11, 0
    %p115 = por %p113, %p114
    %p116 = scmp.ne.s32.totalorder %s108, %s110
    %p117 = scmp.eq.s32.totalorder %s16, 1
    %p118 = por %p116, %p117
    %p119 = scmp.ne.s32.totalorder %s110, %s111
    %p120 = scmp.eq.s32.totalorder %s16, 0
    %p121 = por %p119, %p120
    %p122 = scmp.ne.s32.totalorder %s110, %s111
    %p123 = scmp.eq.s32.totalorder %s17, 1
    %p124 = por %p122, %p123
    %p126 = scmp.ne.s32.totalorder %s111, %s125
    %p127 = scmp.eq.s32.totalorder %s17, 0
    %p128 = por %p126, %p127
    %s129 = ssub.s32 %s11, %s18
    %p130 = scmp.eq.s32.totalorder %s129, 0
    %s132 = sadd.s32 %s131, 1
    %s133 = scalar_select %p130, %s131, %s132
    %p136 = pneg %p130
    %p137 = scmp.eq.s32.totalorder %s11, 1
    %p138 = por %p136, %p137
    %p139 = scmp.ne.s32.totalorder %s131, %s134
    %p140 = scmp.eq.s32.totalorder %s11, 0
    %p141 = por %p139, %p140
    %p142 = scmp.ne.s32.totalorder %s131, %s134
    %p143 = scmp.eq.s32.totalorder %s16, 1
    %p144 = por %p142, %p143
    %p145 = scmp.ne.s32.totalorder %s134, %s135
    %p146 = scmp.eq.s32.totalorder %s16, 0
    %p147 = por %p145, %p146
    %p148 = scmp.ne.s32.totalorder %s134, %s135
    %p149 = scmp.eq.s32.totalorder %s17, 1
    %p150 = por %p148, %p149
    %p152 = scmp.ne.s32.totalorder %s135, %s151
    %p153 = scmp.eq.s32.totalorder %s17, 0
    %p154 = por %p152, %p153
    %p155 = scmp.le.s32.totalorder 1, %s11
    %p156 = scmp.lt.s32.totalorder %s11, 3
    %p157 = pnand %p155, %p156
    %p158 = pneg %p157
    // Predicated region
    $region9: #{tpu_custom_call.1} parent=5 // pred_check
      _
    $region10: #{tpu_custom_call.1} parent=5 // pred_check_branch
      %160 = sbr.rel (%p157) target = $region12
    $region11: #{tpu_custom_call.1} parent=5 // pred_region
      %s161 = ssub.s32 %s11, 1
      // Predicated region
      $region13: #{tpu_custom_call.1} parent=11 // pred_check
        %p162 = pneg %p58
      $region14: #{tpu_custom_call.1} parent=11 // pred_check_branch
        %164 = sbr.rel (%p162) target = $region16
      $region15: #{tpu_custom_call.1} parent=11 // pred_region
        _
      $region16: #{tpu_custom_call.1} parent=11 // pred_fallthru
        _
      // Predicated region
      $region17: #{tpu_custom_call.1} parent=11 // pred_check
        %p165 = pneg %p79
      $region18: #{tpu_custom_call.1} parent=11 // pred_check_branch
        %167 = sbr.rel (%p165) target = $region20
      $region19: #{tpu_custom_call.1} parent=11 // pred_region
        _
      $region20: #{tpu_custom_call.1} parent=11 // pred_fallthru
        _
      // Predicated region
      $region21: #{tpu_custom_call.1} parent=11 // pred_check
        %p168 = pneg %p100
      $region22: #{tpu_custom_call.1} parent=11 // pred_check_branch
        %170 = sbr.rel (%p168) target = $region24
      $region23: #{tpu_custom_call.1} parent=11 // pred_region
        _
      $region24: #{tpu_custom_call.1} parent=11 // pred_fallthru
        _
      // Predicated region
      $region25: #{tpu_custom_call.1} parent=11 // pred_check
        %p171 = pneg %p121
      $region26: #{tpu_custom_call.1} parent=11 // pred_check_branch
        %173 = sbr.rel (%p171) target = $region28
      $region27: #{tpu_custom_call.1} parent=11 // pred_region
        _
      $region28: #{tpu_custom_call.1} parent=11 // pred_fallthru
        _
    $region12: #{tpu_custom_call.1} parent=5 // pred_fallthru
      _
    %p174 = scmp.lt.s32.totalorder %s11, 2
    // Predicated region
    $region29: #{tpu_custom_call.1} parent=5 // pred_check
      %p175 = pneg %p174
    $region30: #{tpu_custom_call.1} parent=5 // pred_check_branch
      %177 = sbr.rel (%p175) target = $region32
    $region31: #{tpu_custom_call.1} parent=5 // pred_region
      // Predicated region
      $region33: #{tpu_custom_call.1} parent=31 // pred_check
        %p178 = pneg %p31
      $region34: #{tpu_custom_call.1} parent=31 // pred_check_branch
        %180 = sbr.rel (%p178) target = $region36
      $region35: #{tpu_custom_call.1} parent=31 // pred_region
        %p181 = scmp.lt.s32.totalorder %s11, 1
        %s182 = scalar_select %p181, %s11, 1
        %s183 = smul.addr %s182, 32
        %s184 = smul.addr %s183, 8
        %s185 = scalar_lea.vmem %s0, %s184
      $region36: #{tpu_custom_call.1} parent=31 // pred_fallthru
        _
    $region32: #{tpu_custom_call.1} parent=5 // pred_fallthru
      _
    %p186 = scmp.le.s32.totalorder 1, %s11
    %p187 = scmp.lt.s32.totalorder %s11, 3
    %p188 = pnand %p186, %p187
    %p189 = pneg %p188
    // Predicated region
    $region37: #{tpu_custom_call.1} parent=5 // pred_check
      _
    $region38: #{tpu_custom_call.1} parent=5 // pred_check_branch
      %191 = sbr.rel (%p188) target = $region40
    $region39: #{tpu_custom_call.1} parent=5 // pred_region
      %s192 = ssub.s32 %s11, 1
      %p193 = scmp.lt.s32.totalorder %s16, 1
      %s194 = scalar_select %p193, %s16, 1
      %s195 = smul.addr %s194, 32
      %s196 = smul.addr %s195, 8
      %s197 = scalar_lea.vmem %s0, %s196
      %p198 = pneg %p37
      %p199 = pneg %p34
      %p200 = pneg %p58
      %p201 = pneg %p55
      %p202 = pneg %p79
      %p203 = pneg %p76
      %p204 = pneg %p100
      %p205 = pneg %p97
      %p206 = pneg %p121
      %p207 = pneg %p118
      %p208 = pneg %p147
      %p209 = pneg %p144
      %p210 = scmp.lt.s32.totalorder %s16, 1
      %s211 = scalar_select %p210, %s16, 1
      %s212 = smul.addr %s211, 32
      %s213 = smul.addr %s212, 4
      %s214 = scalar_lea.vmem %s5, %s213
      %p215 = scmp.lt.s32.totalorder %s16, 1
      %s216 = scalar_select %p215, %s16, 1
      %s217 = smul.addr %s216, 32
      %s218 = smul.addr %s217, 8
      %s219 = scalar_lea.vmem %s0, %s218
      %p220 = scmp.lt.s32.totalorder %s16, 1
      %s221 = scalar_select %p220, %s16, 1
      %s222 = smul.addr %s221, 32
      %s223 = smul.addr %s222, 4
      %s224 = scalar_lea.vmem %s5, %s223
      %v227 = vld [vmem:[%s219] sm:$0xff]
      %v228 = vld [vmem:[%s219 + $0x8] sm:$0xff]
      %v229 = vld [vmem:[%s219 + $0x10] sm:$0xff]
      %v230 = vld [vmem:[%s219 + $0x18] sm:$0xff]
      %v231 = vld [vmem:[%s219 + $0x20] sm:$0xff]
      %v232 = vld [vmem:[%s219 + $0x28] sm:$0xff]
      %v233 = vld [vmem:[%s219 + $0x30] sm:$0xff]
      %v234 = vld [vmem:[%s219 + $0x38] sm:$0xff]
      %v235 = vld [vmem:[%s219 + $0x40] sm:$0xff]
      %v236 = vld [vmem:[%s219 + $0x48] sm:$0xff]
      %v237 = vld [vmem:[%s219 + $0x50] sm:$0xff]
      %v238 = vld [vmem:[%s219 + $0x58] sm:$0xff]
      %v239 = vld [vmem:[%s219 + $0x60] sm:$0xff]
      %v240 = vld [vmem:[%s219 + $0x68] sm:$0xff]
      %v241 = vld [vmem:[%s219 + $0x70] sm:$0xff]
      %v242 = vld [vmem:[%s219 + $0x78] sm:$0xff]
      %v243 = vld [vmem:[%s219 + $0x80] sm:$0xff]
      %v244 = vld [vmem:[%s219 + $0x88] sm:$0xff]
      %v245 = vld [vmem:[%s219 + $0x90] sm:$0xff]
      %v246 = vld [vmem:[%s219 + $0x98] sm:$0xff]
      %v247 = vld [vmem:[%s219 + $0xa0] sm:$0xff]
      %v248 = vld [vmem:[%s219 + $0xa8] sm:$0xff]
      %v249 = vld [vmem:[%s219 + $0xb0] sm:$0xff]
      %v250 = vld [vmem:[%s219 + $0xb8] sm:$0xff]
      %v251 = vld [vmem:[%s219 + $0xc0] sm:$0xff]
      %v252 = vld [vmem:[%s219 + $0xc8] sm:$0xff]
      %v253 = vld [vmem:[%s219 + $0xd0] sm:$0xff]
      %v254 = vld [vmem:[%s219 + $0xd8] sm:$0xff]
      %v255 = vld [vmem:[%s219 + $0xe0] sm:$0xff]
      %v256 = vld [vmem:[%s219 + $0xe8] sm:$0xff]
      %v257 = vld [vmem:[%s219 + $0xf0] sm:$0xff]
      %v258 = vld [vmem:[%s219 + $0xf8] sm:$0xff]
      %v259 = vpack.c.bf16 %v228, %v227
      %v260 = vpack.c.bf16 %v230, %v229
      %v261 = vpack.c.bf16 %v232, %v231
      %v262 = vpack.c.bf16 %v234, %v233
      %v263 = vpack.c.bf16 %v236, %v235
      %v264 = vpack.c.bf16 %v238, %v237
      %v265 = vpack.c.bf16 %v240, %v239
      %v266 = vpack.c.bf16 %v242, %v241
      %v267 = vpack.c.bf16 %v244, %v243
      %v268 = vpack.c.bf16 %v246, %v245
      %v269 = vpack.c.bf16 %v248, %v247
      %v270 = vpack.c.bf16 %v250, %v249
      %v271 = vpack.c.bf16 %v252, %v251
      %v272 = vpack.c.bf16 %v254, %v253
      %v273 = vpack.c.bf16 %v256, %v255
      %v274 = vpack.c.bf16 %v258, %v257
      %v275 = vld [vmem:[%s1] sm:$0xf]
      %v276 = vld [vmem:[%s2] sm:$0x1]
      %v278 = vlaneseq
      %v279 = vshrl.u32 %v278, 7
      %v280 = vsub.s32 0, %v279
      %v281 = vrot.slane %v276, %v280
      %vm283 = vcmask 64512
      %v285 = vsel %vm283, %v259, 0
      %v288 = vsel %vm283, %v260, 0
      %v291 = vsel %vm283, %v261, 0
      %v294 = vsel %vm283, %v262, 0
      %v297 = vsel %vm283, %v263, 0
      %v300 = vsel %vm283, %v264, 0
      %v303 = vsel %vm283, %v265, 0
      %v306 = vsel %vm283, %v266, 0
      %v309 = vsel %vm283, %v267, 0
      %v312 = vsel %vm283, %v268, 0
      %v315 = vsel %vm283, %v269, 0
      %v318 = vsel %vm283, %v270, 0
      %v321 = vsel %vm283, %v271, 0
      %v324 = vsel %vm283, %v272, 0
      %v327 = vsel %vm283, %v273, 0
      %v330 = vsel %vm283, %v274, 0
      %vm332 = vcmask 1043456
      %v334 = vsel %vm332, %v275, 0
      %336 = vmatprep.subr.bf16.mxu0 0
      %337 = vmatpush1.bf16.msra.mxu0 %v334
      %338 = vmatprep.subr.bf16.mxu0 0
      %339 = vmatpush1.bf16.msra.mxu0 0
      %340 = vmatprep.subr.bf16.mxu0 0
      %341 = vmatpush1.bf16.msra.mxu0 0
      %342 = vmatprep.subr.bf16.mxu0 0
      %343 = vmatpush1.bf16.msra.mxu0 0
      %344 = vmatprep.subr.bf16.mxu0 0
      %345 = vmatpush1.bf16.msra.mxu0 0
      %346 = vmatprep.subr.bf16.mxu0 0
      %347 = vmatpush1.bf16.msra.mxu0 0
      %348 = vmatprep.subr.bf16.mxu0 0
      %349 = vmatpush1.bf16.msra.mxu0 0
      %350 = vmatprep.subr.bf16.mxu0 0
      %351 = vmatpush1.bf16.msra.mxu0 0
      %352 = vmatprep.subr.bf16.mxu0 0
      %353 = vmatpush1.bf16.msra.mxu0 0
      %354 = vmatprep.subr.bf16.mxu0 0
      %355 = vmatpush1.bf16.msra.mxu0 0
      %356 = vmatprep.subr.bf16.mxu0 0
      %357 = vmatpush1.bf16.msra.mxu0 0
      %358 = vmatprep.subr.bf16.mxu0 0
      %359 = vmatpush1.bf16.msra.mxu0 0
      %360 = vmatprep.subr.bf16.mxu0 0
      %361 = vmatpush1.bf16.msra.mxu0 0
      %362 = vmatprep.subr.bf16.mxu0 0
      %363 = vmatpush1.bf16.msra.mxu0 0
      %364 = vmatprep.subr.bf16.mxu0 0
      %365 = vmatpush1.bf16.msra.mxu0 0
      %366 = vmatprep.subr.bf16.mxu0 0
      %367 = vmatpush1.bf16.msra.mxu0 0
      %368 = vmatprep.mubr.bf16.mxu0 0
      %369 = vmatmul.mubr.bf16.gmra.mrb[0].mxu0 %v285
      %v370 = vpop.f32.mrb[0].mxu0
      %v371 = vadd.f32 %v281, %v370
      %v372 = vpop.f32.mrb[0].mxu0
      %v373 = vpop.f32.mrb[0].mxu0
      %v374 = vadd.f32 %v281, %v373
      %v375 = vpop.f32.mrb[0].mxu0
      %376 = vmatprep.mubr.bf16.mxu0 0
      %377 = vmatmul.mubr.bf16.gmra.mrb[0].mxu0 %v288
      %v378 = vpop.f32.mrb[0].mxu0
      %v379 = vadd.f32 %v281, %v378
      %v380 = vpop.f32.mrb[0].mxu0
      %v381 = vpop.f32.mrb[0].mxu0
      %v382 = vadd.f32 %v281, %v381
      %v383 = vpop.f32.mrb[0].mxu0
      %384 = vmatprep.mubr.bf16.mxu0 0
      %385 = vmatmul.mubr.bf16.gmra.mrb[0].mxu0 %v291
      %v386 = vpop.f32.mrb[0].mxu0
      %v387 = vadd.f32 %v281, %v386
      %v388 = vpop.f32.mrb[0].mxu0
      %v389 = vpop.f32.mrb[0].mxu0
      %v390 = vadd.f32 %v281, %v389
      %v391 = vpop.f32.mrb[0].mxu0
      %392 = vmatprep.mubr.bf16.mxu0 0
      %393 = vmatmul.mubr.bf16.gmra.mrb[0].mxu0 %v294
      %v394 = vpop.f32.mrb[0].mxu0
      %v395 = vadd.f32 %v281, %v394
      %v396 = vpop.f32.mrb[0].mxu0
      %v397 = vpop.f32.mrb[0].mxu0
      %v398 = vadd.f32 %v281, %v397
      %v399 = vpop.f32.mrb[0].mxu0
      %400 = vmatprep.mubr.bf16.mxu0 0
      %401 = vmatmul.mubr.bf16.gmra.mrb[0].mxu0 %v297
      %v402 = vpop.f32.mrb[0].mxu0
      %v403 = vadd.f32 %v281, %v402
      %v404 = vpop.f32.mrb[0].mxu0
      %v405 = vpop.f32.mrb[0].mxu0
      %v406 = vadd.f32 %v281, %v405
      %v407 = vpop.f32.mrb[0].mxu0
      %408 = vmatprep.mubr.bf16.mxu0 0
      %409 = vmatmul.mubr.bf16.gmra.mrb[0].mxu0 %v300
      %v410 = vpop.f32.mrb[0].mxu0
      %v411 = vadd.f32 %v281, %v410
      %v412 = vpop.f32.mrb[0].mxu0
      %v413 = vpop.f32.mrb[0].mxu0
      %v414 = vadd.f32 %v281, %v413
      %v415 = vpop.f32.mrb[0].mxu0
      %416 = vmatprep.mubr.bf16.mxu0 0
      %417 = vmatmul.mubr.bf16.gmra.mrb[0].mxu0 %v303
      %v418 = vpop.f32.mrb[0].mxu0
      %v419 = vadd.f32 %v281, %v418
      %v420 = vpop.f32.mrb[0].mxu0
      %v421 = vpop.f32.mrb[0].mxu0
      %v422 = vadd.f32 %v281, %v421
      %v423 = vpop.f32.mrb[0].mxu0
      %424 = vmatprep.mubr.bf16.mxu0 0
      %425 = vmatmul.mubr.bf16.gmra.mrb[0].mxu0 %v306
      %v426 = vpop.f32.mrb[0].mxu0
      %v427 = vadd.f32 %v281, %v426
      %v428 = vpop.f32.mrb[0].mxu0
      %v429 = vpop.f32.mrb[0].mxu0
      %v430 = vadd.f32 %v281, %v429
      %v431 = vpop.f32.mrb[0].mxu0
      %432 = vmatprep.mubr.bf16.mxu0 0
      %433 = vmatmul.mubr.bf16.gmra.mrb[0].mxu0 %v309
      %v434 = vpop.f32.mrb[0].mxu0
      %v435 = vadd.f32 %v281, %v434
      %v436 = vpop.f32.mrb[0].mxu0
      %v437 = vpop.f32.mrb[0].mxu0
      %v438 = vadd.f32 %v281, %v437
      %v439 = vpop.f32.mrb[0].mxu0
      %440 = vmatprep.mubr.bf16.mxu0 0
      %441 = vmatmul.mubr.bf16.gmra.mrb[0].mxu0 %v312
      %v442 = vpop.f32.mrb[0].mxu0
      %v443 = vadd.f32 %v281, %v442
      %v444 = vpop.f32.mrb[0].mxu0
      %v445 = vpop.f32.mrb[0].mxu0
      %v446 = vadd.f32 %v281, %v445
      %v447 = vpop.f32.mrb[0].mxu0
      %448 = vmatprep.mubr.bf16.mxu0 0
      %449 = vmatmul.mubr.bf16.gmra.mrb[0].mxu0 %v315
      %v450 = vpop.f32.mrb[0].mxu0
      %v451 = vadd.f32 %v281, %v450
      %v452 = vpop.f32.mrb[0].mxu0
      %v453 = vpop.f32.mrb[0].mxu0
      %v454 = vadd.f32 %v281, %v453
      %v455 = vpop.f32.mrb[0].mxu0
      %456 = vmatprep.mubr.bf16.mxu0 0
      %457 = vmatmul.mubr.bf16.gmra.mrb[0].mxu0 %v318
      %v458 = vpop.f32.mrb[0].mxu0
      %v459 = vadd.f32 %v281, %v458
      %v460 = vpop.f32.mrb[0].mxu0
      %v461 = vpop.f32.mrb[0].mxu0
      %v462 = vadd.f32 %v281, %v461
      %v463 = vpop.f32.mrb[0].mxu0
      %464 = vmatprep.mubr.bf16.mxu0 0
      %465 = vmatmul.mubr.bf16.gmra.mrb[0].mxu0 %v321
      %v466 = vpop.f32.mrb[0].mxu0
      %v467 = vadd.f32 %v281, %v466
      %v468 = vpop.f32.mrb[0].mxu0
      %v469 = vpop.f32.mrb[0].mxu0
      %v470 = vadd.f32 %v281, %v469
      %v471 = vpop.f32.mrb[0].mxu0
      %472 = vmatprep.mubr.bf16.mxu0 0
      %473 = vmatmul.mubr.bf16.gmra.mrb[0].mxu0 %v324
      %v474 = vpop.f32.mrb[0].mxu0
      %v475 = vadd.f32 %v281, %v474
      %v476 = vpop.f32.mrb[0].mxu0
      %v477 = vpop.f32.mrb[0].mxu0
      %v478 = vadd.f32 %v281, %v477
      %v479 = vpop.f32.mrb[0].mxu0
      %480 = vmatprep.mubr.bf16.mxu0 0
      %481 = vmatmul.mubr.bf16.gmra.mrb[0].mxu0 %v327
      %v482 = vpop.f32.mrb[0].mxu0
      %v483 = vadd.f32 %v281, %v482
      %v484 = vpop.f32.mrb[0].mxu0
      %v485 = vpop.f32.mrb[0].mxu0
      %v486 = vadd.f32 %v281, %v485
      %v487 = vpop.f32.mrb[0].mxu0
      %488 = vmatprep.mubr.bf16.mxu0 0
      %489 = vmatmul.mubr.bf16.gmra.mrb[0].mxu0 %v330
      %v490 = vpop.f32.mrb[0].mxu0
      %v491 = vadd.f32 %v281, %v490
      %v492 = vpop.f32.mrb[0].mxu0
      %v493 = vpop.f32.mrb[0].mxu0
      %v494 = vadd.f32 %v281, %v493
      %v495 = vpop.f32.mrb[0].mxu0
      %496 = vdwg.mxu0
      %v497 = vxor.u32 %v371, 2147483648
      %v498 = vxor.u32 %v374, 2147483648
      %v499 = vxor.u32 %v379, 2147483648
      %v500 = vxor.u32 %v382, 2147483648
      %v501 = vxor.u32 %v387, 2147483648
      %v502 = vxor.u32 %v390, 2147483648
      %v503 = vxor.u32 %v395, 2147483648
      %v504 = vxor.u32 %v398, 2147483648
      %v505 = vxor.u32 %v403, 2147483648
      %v506 = vxor.u32 %v406, 2147483648
      %v507 = vxor.u32 %v411, 2147483648
      %v508 = vxor.u32 %v414, 2147483648
      %v509 = vxor.u32 %v419, 2147483648
      %v510 = vxor.u32 %v422, 2147483648
      %v511 = vxor.u32 %v427, 2147483648
      %v512 = vxor.u32 %v430, 2147483648
      %v513 = vxor.u32 %v435, 2147483648
      %v514 = vxor.u32 %v438, 2147483648
      %v515 = vxor.u32 %v443, 2147483648
      %v516 = vxor.u32 %v446, 2147483648
      %v517 = vxor.u32 %v451, 2147483648
      %v518 = vxor.u32 %v454, 2147483648
      %v519 = vxor.u32 %v459, 2147483648
      %v520 = vxor.u32 %v462, 2147483648
      %v521 = vxor.u32 %v467, 2147483648
      %v522 = vxor.u32 %v470, 2147483648
      %v523 = vxor.u32 %v475, 2147483648
      %v524 = vxor.u32 %v478, 2147483648
      %v525 = vxor.u32 %v483, 2147483648
      %v526 = vxor.u32 %v486, 2147483648
      %v527 = vxor.u32 %v491, 2147483648
      %v528 = vxor.u32 %v494, 2147483648
      %v529 = vmul.f32 %v497, 1.442695
      %v530 = vpow.pop %v529
      %v531 = vmul.f32 %v498, 1.442695
      %v532 = vpow.pop %v531
      %v533 = vmul.f32 %v499, 1.442695
      %v534 = vpow.pop %v533
      %v535 = vmul.f32 %v500, 1.442695
      %v536 = vpow.pop %v535
      %v537 = vmul.f32 %v501, 1.442695
      %v538 = vpow.pop %v537
      %v539 = vmul.f32 %v502, 1.442695
      %v540 = vpow.pop %v539
      %v541 = vmul.f32 %v503, 1.442695
      %v542 = vpow.pop %v541
      %v543 = vmul.f32 %v504, 1.442695
      %v544 = vpow.pop %v543
      %v545 = vmul.f32 %v505, 1.442695
      %v546 = vpow.pop %v545
      %v547 = vmul.f32 %v506, 1.442695
      %v548 = vpow.pop %v547
      %v549 = vmul.f32 %v507, 1.442695
      %v550 = vpow.pop %v549
      %v551 = vmul.f32 %v508, 1.442695
      %v552 = vpow.pop %v551
      %v553 = vmul.f32 %v509, 1.442695
      %v554 = vpow.pop %v553
      %v555 = vmul.f32 %v510, 1.442695
      %v556 = vpow.pop %v555
      %v557 = vmul.f32 %v511, 1.442695
      %v558 = vpow.pop %v557
      %v559 = vmul.f32 %v512, 1.442695
      %v560 = vpow.pop %v559
      %v561 = vmul.f32 %v513, 1.442695
      %v562 = vpow.pop %v561
      %v563 = vmul.f32 %v514, 1.442695
      %v564 = vpow.pop %v563
      %v565 = vmul.f32 %v515, 1.442695
      %v566 = vpow.pop %v565
      %v567 = vmul.f32 %v516, 1.442695
      %v568 = vpow.pop %v567
      %v569 = vmul.f32 %v517, 1.442695
      %v570 = vpow.pop %v569
      %v571 = vmul.f32 %v518, 1.442695
      %v572 = vpow.pop %v571
      %v573 = vmul.f32 %v519, 1.442695
      %v574 = vpow.pop %v573
      %v575 = vmul.f32 %v520, 1.442695
      %v576 = vpow.pop %v575
      %v577 = vmul.f32 %v521, 1.442695
      %v578 = vpow.pop %v577
      %v579 = vmul.f32 %v522, 1.442695
      %v580 = vpow.pop %v579
      %v581 = vmul.f32 %v523, 1.442695
      %v582 = vpow.pop %v581
      %v583 = vmul.f32 %v524, 1.442695
      %v584 = vpow.pop %v583
      %v585 = vmul.f32 %v525, 1.442695
      %v586 = vpow.pop %v585
      %v587 = vmul.f32 %v526, 1.442695
      %v588 = vpow.pop %v587
      %v589 = vmul.f32 %v527, 1.442695
      %v590 = vpow.pop %v589
      %v591 = vmul.f32 %v528, 1.442695
      %v592 = vpow.pop %v591
      %v593 = vadd.f32 %v530, 1.0
      %v594 = vadd.f32 %v532, 1.0
      %v595 = vadd.f32 %v534, 1.0
      %v596 = vadd.f32 %v536, 1.0
      %v597 = vadd.f32 %v538, 1.0
      %v598 = vadd.f32 %v540, 1.0
      %v599 = vadd.f32 %v542, 1.0
      %v600 = vadd.f32 %v544, 1.0
      %v601 = vadd.f32 %v546, 1.0
      %v602 = vadd.f32 %v548, 1.0
      %v603 = vadd.f32 %v550, 1.0
      %v604 = vadd.f32 %v552, 1.0
      %v605 = vadd.f32 %v554, 1.0
      %v606 = vadd.f32 %v556, 1.0
      %v607 = vadd.f32 %v558, 1.0
      %v608 = vadd.f32 %v560, 1.0
      %v609 = vadd.f32 %v562, 1.0
      %v610 = vadd.f32 %v564, 1.0
      %v611 = vadd.f32 %v566, 1.0
      %v612 = vadd.f32 %v568, 1.0
      %v613 = vadd.f32 %v570, 1.0
      %v614 = vadd.f32 %v572, 1.0
      %v615 = vadd.f32 %v574, 1.0
      %v616 = vadd.f32 %v576, 1.0
      %v617 = vadd.f32 %v578, 1.0
      %v618 = vadd.f32 %v580, 1.0
      %v619 = vadd.f32 %v582, 1.0
      %v620 = vadd.f32 %v584, 1.0
      %v621 = vadd.f32 %v586, 1.0
      %v622 = vadd.f32 %v588, 1.0
      %v623 = vadd.f32 %v590, 1.0
      %v624 = vadd.f32 %v592, 1.0
      %v625 = vrcp.pop %v593
      %v626 = vmul.f32 1.0, %v625
      %v627 = vrcp.pop %v594
      %v628 = vmul.f32 1.0, %v627
      %v629 = vrcp.pop %v595
      %v630 = vmul.f32 1.0, %v629
      %v631 = vrcp.pop %v596
      %v632 = vmul.f32 1.0, %v631
      %v633 = vrcp.pop %v597
      %v634 = vmul.f32 1.0, %v633
      %v635 = vrcp.pop %v598
      %v636 = vmul.f32 1.0, %v635
      %v637 = vrcp.pop %v599
      %v638 = vmul.f32 1.0, %v637
      %v639 = vrcp.pop %v600
      %v640 = vmul.f32 1.0, %v639
      %v641 = vrcp.pop %v601
      %v642 = vmul.f32 1.0, %v641
      %v643 = vrcp.pop %v602
      %v644 = vmul.f32 1.0, %v643
      %v645 = vrcp.pop %v603
      %v646 = vmul.f32 1.0, %v645
      %v647 = vrcp.pop %v604
      %v648 = vmul.f32 1.0, %v647
      %v649 = vrcp.pop %v605
      %v650 = vmul.f32 1.0, %v649
      %v651 = vrcp.pop %v606
      %v652 = vmul.f32 1.0, %v651
      %v653 = vrcp.pop %v607
      %v654 = vmul.f32 1.0, %v653
      %v655 = vrcp.pop %v608
      %v656 = vmul.f32 1.0, %v655
      %v657 = vrcp.pop %v609
      %v658 = vmul.f32 1.0, %v657
      %v659 = vrcp.pop %v610
      %v660 = vmul.f32 1.0, %v659
      %v661 = vrcp.pop %v611
      %v662 = vmul.f32 1.0, %v661
      %v663 = vrcp.pop %v612
      %v664 = vmul.f32 1.0, %v663
      %v665 = vrcp.pop %v613
      %v666 = vmul.f32 1.0, %v665
      %v667 = vrcp.pop %v614
      %v668 = vmul.f32 1.0, %v667
      %v669 = vrcp.pop %v615
      %v670 = vmul.f32 1.0, %v669
      %v671 = vrcp.pop %v616
      %v672 = vmul.f32 1.0, %v671
      %v673 = vrcp.pop %v617
      %v674 = vmul.f32 1.0, %v673
      %v675 = vrcp.pop %v618
      %v676 = vmul.f32 1.0, %v675
      %v677 = vrcp.pop %v619
      %v678 = vmul.f32 1.0, %v677
      %v679 = vrcp.pop %v620
      %v680 = vmul.f32 1.0, %v679
      %v681 = vrcp.pop %v621
      %v682 = vmul.f32 1.0, %v681
      %v683 = vrcp.pop %v622
      %v684 = vmul.f32 1.0, %v683
      %v685 = vrcp.pop %v623
      %v686 = vmul.f32 1.0, %v685
      %v687 = vrcp.pop %v624
      %v688 = vmul.f32 1.0, %v687
      %v689 = vmul.f32 %v371, %v626
      %v690 = vmul.f32 %v374, %v628
      %v691 = vmul.f32 %v379, %v630
      %v692 = vmul.f32 %v382, %v632
      %v693 = vmul.f32 %v387, %v634
      %v694 = vmul.f32 %v390, %v636
      %v695 = vmul.f32 %v395, %v638
      %v696 = vmul.f32 %v398, %v640
      %v697 = vmul.f32 %v403, %v642
      %v698 = vmul.f32 %v406, %v644
      %v699 = vmul.f32 %v411, %v646
      %v700 = vmul.f32 %v414, %v648
      %v701 = vmul.f32 %v419, %v650
      %v702 = vmul.f32 %v422, %v652
      %v703 = vmul.f32 %v427, %v654
      %v704 = vmul.f32 %v430, %v656
      %v705 = vmul.f32 %v435, %v658
      %v706 = vmul.f32 %v438, %v660
      %v707 = vmul.f32 %v443, %v662
      %v708 = vmul.f32 %v446, %v664
      %v709 = vmul.f32 %v451, %v666
      %v710 = vmul.f32 %v454, %v668
      %v711 = vmul.f32 %v459, %v670
      %v712 = vmul.f32 %v462, %v672
      %v713 = vmul.f32 %v467, %v674
      %v714 = vmul.f32 %v470, %v676
      %v715 = vmul.f32 %v475, %v678
      %v716 = vmul.f32 %v478, %v680
      %v717 = vmul.f32 %v483, %v682
      %v718 = vmul.f32 %v486, %v684
      %v719 = vmul.f32 %v491, %v686
      %v720 = vmul.f32 %v494, %v688
      %v721 = vpack.c.bf16 %v690, %v689
      %v722 = vpack.c.bf16 %v692, %v691
      %v723 = vpack.c.bf16 %v694, %v693
      %v724 = vpack.c.bf16 %v696, %v695
      %v725 = vpack.c.bf16 %v698, %v697
      %v726 = vpack.c.bf16 %v700, %v699
      %v727 = vpack.c.bf16 %v702, %v701
      %v728 = vpack.c.bf16 %v704, %v703
      %v729 = vpack.c.bf16 %v706, %v705
      %v730 = vpack.c.bf16 %v708, %v707
      %v731 = vpack.c.bf16 %v710, %v709
      %v732 = vpack.c.bf16 %v712, %v711
      %v733 = vpack.c.bf16 %v714, %v713
      %v734 = vpack.c.bf16 %v716, %v715
      %v735 = vpack.c.bf16 %v718, %v717
      %v736 = vpack.c.bf16 %v720, %v719
      %v737 = vld [vmem:[%s3] sm:$0x3]
      %v754 = vrot.slane %v721, 5
      %v755 = vrot.slane %v722, 5
      %v756 = vrot.slane %v723, 5
      %v757 = vrot.slane %v724, 5
      %v758 = vrot.slane %v725, 5
      %v759 = vrot.slane %v726, 5
      %v760 = vrot.slane %v727, 5
      %v761 = vrot.slane %v728, 5
      %v762 = vrot.slane %v729, 5
      %v763 = vrot.slane %v730, 5
      %v764 = vrot.slane %v731, 5
      %v765 = vrot.slane %v732, 5
      %v766 = vrot.slane %v733, 5
      %v767 = vrot.slane %v734, 5
      %v768 = vrot.slane %v735, 5
      %v769 = vrot.slane %v736, 5
      %vm770 = vcmask 1042432
      %v773 = vsel %vm770, 4286644096, %v754
      %v776 = vsel %vm770, 4286644096, %v755
      %v779 = vsel %vm770, 4286644096, %v756
      %v782 = vsel %vm770, 4286644096, %v757
      %v785 = vsel %vm770, 4286644096, %v758
      %v788 = vsel %vm770, 4286644096, %v759
      %v791 = vsel %vm770, 4286644096, %v760
      %v794 = vsel %vm770, 4286644096, %v761
      %v797 = vsel %vm770, 4286644096, %v762
      %v800 = vsel %vm770, 4286644096, %v763
      %v803 = vsel %vm770, 4286644096, %v764
      %v806 = vsel %vm770, 4286644096, %v765
      %v809 = vsel %vm770, 4286644096, %v766
      %v812 = vsel %vm770, 4286644096, %v767
      %v815 = vsel %vm770, 4286644096, %v768
      %v818 = vsel %vm770, 4286644096, %v769
      %v820 = vsel %vm770, %v754, 4286644096
      %v822 = vsel %vm770, %v755, 4286644096
      %v824 = vsel %vm770, %v756, 4286644096
      %v826 = vsel %vm770, %v757, 4286644096
      %v828 = vsel %vm770, %v758, 4286644096
      %v830 = vsel %vm770, %v759, 4286644096
      %v832 = vsel %vm770, %v760, 4286644096
      %v834 = vsel %vm770, %v761, 4286644096
      %v836 = vsel %vm770, %v762, 4286644096
      %v838 = vsel %vm770, %v763, 4286644096
      %v840 = vsel %vm770, %v764, 4286644096
      %v842 = vsel %vm770, %v765, 4286644096
      %v844 = vsel %vm770, %v766, 4286644096
      %v846 = vsel %vm770, %v767, 4286644096
      %v848 = vsel %vm770, %v768, 4286644096
      %v850 = vsel %vm770, %v769, 4286644096
      %v852 = vmax.bf16 %v773, %v776
      %v853 = vmax.bf16 %v820, %v822
      %v854 = vmax.bf16 %v776, %v779
      %v855 = vmax.bf16 %v822, %v824
      %v856 = vmax.bf16 %v779, %v782
      %v857 = vmax.bf16 %v824, %v826
      %v858 = vmax.bf16 %v782, %v785
      %v859 = vmax.bf16 %v826, %v828
      %v860 = vmax.bf16 %v785, %v788
      %v861 = vmax.bf16 %v828, %v830
      %v862 = vmax.bf16 %v788, %v791
      %v863 = vmax.bf16 %v830, %v832
      %v864 = vmax.bf16 %v791, %v794
      %v865 = vmax.bf16 %v832, %v834
      %v866 = vmax.bf16 %v794, %v797
      %v867 = vmax.bf16 %v834, %v836
      %v868 = vmax.bf16 %v797, %v800
      %v869 = vmax.bf16 %v836, %v838
      %v870 = vmax.bf16 %v800, %v803
      %v871 = vmax.bf16 %v838, %v840
      %v872 = vmax.bf16 %v803, %v806
      %v873 = vmax.bf16 %v840, %v842
      %v874 = vmax.bf16 %v806, %v809
      %v875 = vmax.bf16 %v842, %v844
      %v876 = vmax.bf16 %v809, %v812
      %v877 = vmax.bf16 %v844, %v846
      %v878 = vmax.bf16 %v812, %v815
      %v879 = vmax.bf16 %v846, %v848
      %v880 = vmax.bf16 %v815, %v818
      %v881 = vmax.bf16 %v848, %v850
      %v882 = vmax.bf16 %v852, %v779
      %v883 = vmax.bf16 %v853, %v824
      %v884 = vmax.bf16 %v854, %v782
      %v885 = vmax.bf16 %v855, %v826
      %v886 = vmax.bf16 %v856, %v785
      %v887 = vmax.bf16 %v857, %v828
      %v888 = vmax.bf16 %v858, %v788
      %v889 = vmax.bf16 %v859, %v830
      %v890 = vmax.bf16 %v860, %v791
      %v891 = vmax.bf16 %v861, %v832
      %v892 = vmax.bf16 %v862, %v794
      %v893 = vmax.bf16 %v863, %v834
      %v894 = vmax.bf16 %v864, %v797
      %v895 = vmax.bf16 %v865, %v836
      %v896 = vmax.bf16 %v866, %v800
      %v897 = vmax.bf16 %v867, %v838
      %v898 = vmax.bf16 %v868, %v803
      %v899 = vmax.bf16 %v869, %v840
      %v900 = vmax.bf16 %v870, %v806
      %v901 = vmax.bf16 %v871, %v842
      %v902 = vmax.bf16 %v872, %v809
      %v903 = vmax.bf16 %v873, %v844
      %v904 = vmax.bf16 %v874, %v812
      %v905 = vmax.bf16 %v875, %v846
      %v906 = vmax.bf16 %v876, %v815
      %v907 = vmax.bf16 %v877, %v848
      %v908 = vmax.bf16 %v878, %v818
      %v909 = vmax.bf16 %v879, %v850
      %v910 = vmax.bf16 %v882, %v782
      %v911 = vmax.bf16 %v883, %v826
      %v912 = vmax.bf16 %v884, %v785
      %v913 = vmax.bf16 %v885, %v828
      %v914 = vmax.bf16 %v886, %v788
      %v915 = vmax.bf16 %v887, %v830
      %v916 = vmax.bf16 %v888, %v791
      %v917 = vmax.bf16 %v889, %v832
      %v918 = vmax.bf16 %v890, %v794
      %v919 = vmax.bf16 %v891, %v834
      %v920 = vmax.bf16 %v892, %v797
      %v921 = vmax.bf16 %v893, %v836
      %v922 = vmax.bf16 %v894, %v800
      %v923 = vmax.bf16 %v895, %v838
      %v924 = vmax.bf16 %v896, %v803
      %v925 = vmax.bf16 %v897, %v840
      %v926 = vmax.bf16 %v898, %v806
      %v927 = vmax.bf16 %v899, %v842
      %v928 = vmax.bf16 %v900, %v809
      %v929 = vmax.bf16 %v901, %v844
      %v930 = vmax.bf16 %v902, %v812
      %v931 = vmax.bf16 %v903, %v846
      %v932 = vmax.bf16 %v904, %v815
      %v933 = vmax.bf16 %v905, %v848
      %v934 = vmax.bf16 %v906, %v818
      %v935 = vmax.bf16 %v907, %v850
      %v936 = vmax.bf16 %v910, %v785
      %v937 = vmax.bf16 %v911, %v828
      %v938 = vmax.bf16 %v912, %v788
      %v939 = vmax.bf16 %v913, %v830
      %v940 = vmax.bf16 %v914, %v791
      %v941 = vmax.bf16 %v915, %v832
      %v942 = vmax.bf16 %v916, %v794
      %v943 = vmax.bf16 %v917, %v834
      %v944 = vmax.bf16 %v918, %v797
      %v945 = vmax.bf16 %v919, %v836
      %v946 = vmax.bf16 %v920, %v800
      %v947 = vmax.bf16 %v921, %v838
      %v948 = vmax.bf16 %v922, %v803
      %v949 = vmax.bf16 %v923, %v840
      %v950 = vmax.bf16 %v924, %v806
      %v951 = vmax.bf16 %v925, %v842
      %v952 = vmax.bf16 %v926, %v809
      %v953 = vmax.bf16 %v927, %v844
      %v954 = vmax.bf16 %v928, %v812
      %v955 = vmax.bf16 %v929, %v846
      %v956 = vmax.bf16 %v930, %v815
      %v957 = vmax.bf16 %v931, %v848
      %v958 = vmax.bf16 %v932, %v818
      %v959 = vmax.bf16 %v933, %v850
      %vm960 = vsmask.f32 7424
      %v961 = vshrl.u32 4286644096, 16
      %v963 = vshll.u32 4286644096, 16
      %v965 = vrot.slane %v963, 1
      %v966 = vor.u32 %v961, %v965
      %v967 = vsel %vm960, %v966, %v965
      %v968 = vshrl.u32 %v773, 16
      %v970 = vshll.u32 %v773, 16
      %v972 = vrot.slane %v970, 1
      %v973 = vor.u32 %v968, %v972
      %v974 = vshll.u32 %v820, 16
      %v976 = vrot.slane %v974, 1
      %v977 = vsel %vm960, %v973, %v976
      %v978 = vshrl.u32 %v820, 16
      %v980 = vor.u32 %v978, %v976
      %v982 = vshrl.u32 %v852, 16
      %v984 = vshll.u32 %v852, 16
      %v986 = vrot.slane %v984, 1
      %v987 = vor.u32 %v982, %v986
      %v989 = vshll.u32 %v853, 16
      %v991 = vrot.slane %v989, 1
      %v992 = vsel %vm960, %v987, %v991
      %v993 = vshrl.u32 %v853, 16
      %v995 = vor.u32 %v993, %v991
      %v997 = vshrl.u32 %v882, 16
      %v999 = vshll.u32 %v882, 16
      %v1001 = vrot.slane %v999, 1
      %v1002 = vor.u32 %v997, %v1001
      %v1004 = vshll.u32 %v883, 16
      %v1006 = vrot.slane %v1004, 1
      %v1007 = vsel %vm960, %v1002, %v1006
      %v1008 = vshrl.u32 %v883, 16
      %v1010 = vor.u32 %v1008, %v1006
      %v1012 = vshrl.u32 %v910, 16
      %v1014 = vshll.u32 %v910, 16
      %v1016 = vrot.slane %v1014, 1
      %v1017 = vor.u32 %v1012, %v1016
      %v1019 = vshll.u32 %v911, 16
      %v1021 = vrot.slane %v1019, 1
      %v1022 = vsel %vm960, %v1017, %v1021
      %v1023 = vshrl.u32 %v911, 16
      %v1025 = vor.u32 %v1023, %v1021
      %v1027 = vshrl.u32 %v936, 16
      %v1029 = vshll.u32 %v936, 16
      %v1031 = vrot.slane %v1029, 1
      %v1032 = vor.u32 %v1027, %v1031
      %v1034 = vshll.u32 %v937, 16
      %v1036 = vrot.slane %v1034, 1
      %v1037 = vsel %vm960, %v1032, %v1036
      %v1038 = vshrl.u32 %v937, 16
      %v1040 = vor.u32 %v1038, %v1036
      %v1042 = vshrl.u32 %v938, 16
      %v1044 = vshll.u32 %v938, 16
      %v1046 = vrot.slane %v1044, 1
      %v1047 = vor.u32 %v1042, %v1046
      %v1049 = vshll.u32 %v939, 16
      %v1051 = vrot.slane %v1049, 1
      %v1052 = vsel %vm960, %v1047, %v1051
      %v1053 = vshrl.u32 %v939, 16
      %v1055 = vor.u32 %v1053, %v1051
      %v1057 = vshrl.u32 %v940, 16
      %v1059 = vshll.u32 %v940, 16
      %v1061 = vrot.slane %v1059, 1
      %v1062 = vor.u32 %v1057, %v1061
      %v1064 = vshll.u32 %v941, 16
      %v1066 = vrot.slane %v1064, 1
      %v1067 = vsel %vm960, %v1062, %v1066
      %v1068 = vshrl.u32 %v941, 16
      %v1070 = vor.u32 %v1068, %v1066
      %v1072 = vshrl.u32 %v942, 16
      %v1074 = vshll.u32 %v942, 16
      %v1076 = vrot.slane %v1074, 1
      %v1077 = vor.u32 %v1072, %v1076
      %v1079 = vshll.u32 %v943, 16
      %v1081 = vrot.slane %v1079, 1
      %v1082 = vsel %vm960, %v1077, %v1081
      %v1083 = vshrl.u32 %v943, 16
      %v1085 = vor.u32 %v1083, %v1081
      %v1087 = vshrl.u32 %v944, 16
      %v1089 = vshll.u32 %v944, 16
      %v1091 = vrot.slane %v1089, 1
      %v1092 = vor.u32 %v1087, %v1091
      %v1094 = vshll.u32 %v945, 16
      %v1096 = vrot.slane %v1094, 1
      %v1097 = vsel %vm960, %v1092, %v1096
      %v1098 = vshrl.u32 %v945, 16
      %v1100 = vor.u32 %v1098, %v1096
      %v1102 = vshrl.u32 %v946, 16
      %v1104 = vshll.u32 %v946, 16
      %v1106 = vrot.slane %v1104, 1
      %v1107 = vor.u32 %v1102, %v1106
      %v1109 = vshll.u32 %v947, 16
      %v1111 = vrot.slane %v1109, 1
      %v1112 = vsel %vm960, %v1107, %v1111
      %v1113 = vshrl.u32 %v947, 16
      %v1115 = vor.u32 %v1113, %v1111
      %v1117 = vshrl.u32 %v948, 16
      %v1119 = vshll.u32 %v948, 16
      %v1121 = vrot.slane %v1119, 1
      %v1122 = vor.u32 %v1117, %v1121
      %v1124 = vshll.u32 %v949, 16
      %v1126 = vrot.slane %v1124, 1
      %v1127 = vsel %vm960, %v1122, %v1126
      %v1128 = vshrl.u32 %v949, 16
      %v1130 = vor.u32 %v1128, %v1126
      %v1132 = vshrl.u32 %v950, 16
      %v1134 = vshll.u32 %v950, 16
      %v1136 = vrot.slane %v1134, 1
      %v1137 = vor.u32 %v1132, %v1136
      %v1139 = vshll.u32 %v951, 16
      %v1141 = vrot.slane %v1139, 1
      %v1142 = vsel %vm960, %v1137, %v1141
      %v1143 = vshrl.u32 %v951, 16
      %v1145 = vor.u32 %v1143, %v1141
      %v1147 = vshrl.u32 %v952, 16
      %v1149 = vshll.u32 %v952, 16
      %v1151 = vrot.slane %v1149, 1
      %v1152 = vor.u32 %v1147, %v1151
      %v1154 = vshll.u32 %v953, 16
      %v1156 = vrot.slane %v1154, 1
      %v1157 = vsel %vm960, %v1152, %v1156
      %v1158 = vshrl.u32 %v953, 16
      %v1160 = vor.u32 %v1158, %v1156
      %v1162 = vshrl.u32 %v954, 16
      %v1164 = vshll.u32 %v954, 16
      %v1166 = vrot.slane %v1164, 1
      %v1167 = vor.u32 %v1162, %v1166
      %v1169 = vshll.u32 %v955, 16
      %v1171 = vrot.slane %v1169, 1
      %v1172 = vsel %vm960, %v1167, %v1171
      %v1173 = vshrl.u32 %v955, 16
      %v1175 = vor.u32 %v1173, %v1171
      %v1177 = vshrl.u32 %v956, 16
      %v1179 = vshll.u32 %v956, 16
      %v1181 = vrot.slane %v1179, 1
      %v1182 = vor.u32 %v1177, %v1181
      %v1184 = vshll.u32 %v957, 16
      %v1186 = vrot.slane %v1184, 1
      %v1187 = vsel %vm960, %v1182, %v1186
      %v1188 = vshrl.u32 %v957, 16
      %v1190 = vor.u32 %v1188, %v1186
      %v1192 = vshrl.u32 %v958, 16
      %v1194 = vshll.u32 %v958, 16
      %v1196 = vrot.slane %v1194, 1
      %v1197 = vor.u32 %v1192, %v1196
      %v1199 = vshll.u32 %v959, 16
      %v1201 = vrot.slane %v1199, 1
      %v1202 = vsel %vm960, %v1197, %v1201
      %v1203 = vshrl.u32 %v959, 16
      %v1205 = vor.u32 %v1203, %v1201
      %v1207 = vshrl.u32 %v934, 16
      %v1209 = vshll.u32 %v934, 16
      %v1211 = vrot.slane %v1209, 1
      %v1212 = vor.u32 %v1207, %v1211
      %v1214 = vshll.u32 %v935, 16
      %v1216 = vrot.slane %v1214, 1
      %v1217 = vsel %vm960, %v1212, %v1216
      %v1218 = vshrl.u32 %v935, 16
      %v1220 = vor.u32 %v1218, %v1216
      %v1222 = vshrl.u32 %v908, 16
      %v1224 = vshll.u32 %v908, 16
      %v1226 = vrot.slane %v1224, 1
      %v1227 = vor.u32 %v1222, %v1226
      %v1229 = vshll.u32 %v909, 16
      %v1231 = vrot.slane %v1229, 1
      %v1232 = vsel %vm960, %v1227, %v1231
      %v1233 = vshrl.u32 %v909, 16
      %v1235 = vor.u32 %v1233, %v1231
      %v1237 = vshrl.u32 %v880, 16
      %v1239 = vshll.u32 %v880, 16
      %v1241 = vrot.slane %v1239, 1
      %v1242 = vor.u32 %v1237, %v1241
      %v1244 = vshll.u32 %v881, 16
      %v1246 = vrot.slane %v1244, 1
      %v1247 = vsel %vm960, %v1242, %v1246
      %v1248 = vshrl.u32 %v881, 16
      %v1250 = vor.u32 %v1248, %v1246
      %v1251 = vshrl.u32 %v818, 16
      %v1253 = vshll.u32 %v818, 16
      %v1255 = vrot.slane %v1253, 1
      %v1256 = vor.u32 %v1251, %v1255
      %v1257 = vshll.u32 %v850, 16
      %v1259 = vrot.slane %v1257, 1
      %v1260 = vsel %vm960, %v1256, %v1259
      %v1261 = vshrl.u32 %v850, 16
      %v1263 = vor.u32 %v1261, %v1259
      %v1306 = vmax.bf16 %v773, %v977
      %v1307 = vmax.bf16 %v820, %v980
      %v1308 = vmax.bf16 %v852, %v992
      %v1309 = vmax.bf16 %v853, %v995
      %v1310 = vmax.bf16 %v882, %v1007
      %v1311 = vmax.bf16 %v883, %v1010
      %v1312 = vmax.bf16 %v910, %v1022
      %v1313 = vmax.bf16 %v911, %v1025
      %v1314 = vmax.bf16 %v936, %v1037
      %v1315 = vmax.bf16 %v937, %v1040
      %v1316 = vmax.bf16 %v938, %v1052
      %v1317 = vmax.bf16 %v939, %v1055
      %v1318 = vmax.bf16 %v940, %v1067
      %v1319 = vmax.bf16 %v941, %v1070
      %v1320 = vmax.bf16 %v942, %v1082
      %v1321 = vmax.bf16 %v943, %v1085
      %v1322 = vmax.bf16 %v944, %v1097
      %v1323 = vmax.bf16 %v945, %v1100
      %v1324 = vmax.bf16 %v946, %v1112
      %v1325 = vmax.bf16 %v947, %v1115
      %v1326 = vmax.bf16 %v948, %v1127
      %v1327 = vmax.bf16 %v949, %v1130
      %v1328 = vmax.bf16 %v950, %v1142
      %v1329 = vmax.bf16 %v951, %v1145
      %v1330 = vmax.bf16 %v952, %v1157
      %v1331 = vmax.bf16 %v953, %v1160
      %v1332 = vmax.bf16 %v954, %v1172
      %v1333 = vmax.bf16 %v955, %v1175
      %v1334 = vmax.bf16 %v956, %v1187
      %v1335 = vmax.bf16 %v957, %v1190
      %v1336 = vmax.bf16 %v958, %v1202
      %v1337 = vmax.bf16 %v959, %v1205
      %v1338 = vmax.bf16 %v934, %v1217
      %v1339 = vmax.bf16 %v935, %v1220
      %v1340 = vmax.bf16 %v908, %v1232
      %v1341 = vmax.bf16 %v909, %v1235
      %v1342 = vmax.bf16 %v880, %v1247
      %v1343 = vmax.bf16 %v881, %v1250
      %v1344 = vmax.bf16 %v818, %v1260
      %v1345 = vmax.bf16 %v850, %v1263
      %vm1387 = vcmask 1046528
      %v1388 = vrot.slane 4286644096, 1
      %v1389 = vsel %vm1387, %v1388, %v1388
      %v1390 = vrot.slane %v773, 1
      %v1391 = vrot.slane %v820, 1
      %v1392 = vsel %vm1387, %v1390, %v1391
      %v1393 = vrot.slane %v852, 1
      %v1394 = vrot.slane %v853, 1
      %v1395 = vsel %vm1387, %v1393, %v1394
      %v1396 = vrot.slane %v882, 1
      %v1397 = vrot.slane %v883, 1
      %v1398 = vsel %vm1387, %v1396, %v1397
      %v1399 = vrot.slane %v910, 1
      %v1400 = vrot.slane %v911, 1
      %v1401 = vsel %vm1387, %v1399, %v1400
      %v1402 = vrot.slane %v936, 1
      %v1403 = vrot.slane %v937, 1
      %v1404 = vsel %vm1387, %v1402, %v1403
      %v1405 = vrot.slane %v938, 1
      %v1406 = vrot.slane %v939, 1
      %v1407 = vsel %vm1387, %v1405, %v1406
      %v1408 = vrot.slane %v940, 1
      %v1409 = vrot.slane %v941, 1
      %v1410 = vsel %vm1387, %v1408, %v1409
      %v1411 = vrot.slane %v942, 1
      %v1412 = vrot.slane %v943, 1
      %v1413 = vsel %vm1387, %v1411, %v1412
      %v1414 = vrot.slane %v944, 1
      %v1415 = vrot.slane %v945, 1
      %v1416 = vsel %vm1387, %v1414, %v1415
      %v1417 = vrot.slane %v946, 1
      %v1418 = vrot.slane %v947, 1
      %v1419 = vsel %vm1387, %v1417, %v1418
      %v1420 = vrot.slane %v948, 1
      %v1421 = vrot.slane %v949, 1
      %v1422 = vsel %vm1387, %v1420, %v1421
      %v1423 = vrot.slane %v950, 1
      %v1424 = vrot.slane %v951, 1
      %v1425 = vsel %vm1387, %v1423, %v1424
      %v1426 = vrot.slane %v952, 1
      %v1427 = vrot.slane %v953, 1
      %v1428 = vsel %vm1387, %v1426, %v1427
      %v1429 = vrot.slane %v954, 1
      %v1430 = vrot.slane %v955, 1
      %v1431 = vsel %vm1387, %v1429, %v1430
      %v1432 = vrot.slane %v956, 1
      %v1433 = vrot.slane %v957, 1
      %v1434 = vsel %vm1387, %v1432, %v1433
      %v1435 = vrot.slane %v958, 1
      %v1436 = vrot.slane %v959, 1
      %v1437 = vsel %vm1387, %v1435, %v1436
      %v1438 = vrot.slane %v934, 1
      %v1439 = vrot.slane %v935, 1
      %v1440 = vsel %vm1387, %v1438, %v1439
      %v1441 = vrot.slane %v908, 1
      %v1442 = vrot.slane %v909, 1
      %v1443 = vsel %vm1387, %v1441, %v1442
      %v1444 = vrot.slane %v880, 1
      %v1445 = vrot.slane %v881, 1
      %v1446 = vsel %vm1387, %v1444, %v1445
      %v1447 = vrot.slane %v818, 1
      %v1448 = vrot.slane %v850, 1
      %v1449 = vsel %vm1387, %v1447, %v1448
      %v1492 = vmax.bf16 %v967, %v1389
      %v1493 = vmax.bf16 %v966, %v1388
      %v1494 = vmax.bf16 %v1306, %v1392
      %v1495 = vmax.bf16 %v1307, %v1391
      %v1496 = vmax.bf16 %v1308, %v1395
      %v1497 = vmax.bf16 %v1309, %v1394
      %v1498 = vmax.bf16 %v1310, %v1398
      %v1499 = vmax.bf16 %v1311, %v1397
      %v1500 = vmax.bf16 %v1312, %v1401
      %v1501 = vmax.bf16 %v1313, %v1400
      %v1502 = vmax.bf16 %v1314, %v1404
      %v1503 = vmax.bf16 %v1315, %v1403
      %v1504 = vmax.bf16 %v1316, %v1407
      %v1505 = vmax.bf16 %v1317, %v1406
      %v1506 = vmax.bf16 %v1318, %v1410
      %v1507 = vmax.bf16 %v1319, %v1409
      %v1508 = vmax.bf16 %v1320, %v1413
      %v1509 = vmax.bf16 %v1321, %v1412
      %v1510 = vmax.bf16 %v1322, %v1416
      %v1511 = vmax.bf16 %v1323, %v1415
      %v1512 = vmax.bf16 %v1324, %v1419
      %v1513 = vmax.bf16 %v1325, %v1418
      %v1514 = vmax.bf16 %v1326, %v1422
      %v1515 = vmax.bf16 %v1327, %v1421
      %v1516 = vmax.bf16 %v1328, %v1425
      %v1517 = vmax.bf16 %v1329, %v1424
      %v1518 = vmax.bf16 %v1330, %v1428
      %v1519 = vmax.bf16 %v1331, %v1427
      %v1520 = vmax.bf16 %v1332, %v1431
      %v1521 = vmax.bf16 %v1333, %v1430
      %v1522 = vmax.bf16 %v1334, %v1434
      %v1523 = vmax.bf16 %v1335, %v1433
      %v1524 = vmax.bf16 %v1336, %v1437
      %v1525 = vmax.bf16 %v1337, %v1436
      %v1526 = vmax.bf16 %v1338, %v1440
      %v1527 = vmax.bf16 %v1339, %v1439
      %v1528 = vmax.bf16 %v1340, %v1443
      %v1529 = vmax.bf16 %v1341, %v1442
      %v1530 = vmax.bf16 %v1342, %v1446
      %v1531 = vmax.bf16 %v1343, %v1445
      %v1532 = vmax.bf16 %v1344, %v1449
      %v1533 = vmax.bf16 %v1345, %v1448
      %vm1534 = vsmask.f32 6400
      %v1535 = vrot.slane %v961, 1
      %v1536 = vrot.slane %v963, 2
      %v1537 = vor.u32 %v1535, %v1536
      %v1538 = vsel %vm1534, %v1537, %v1537
      %v1539 = vrot.slane %v968, 1
      %v1540 = vrot.slane %v970, 2
      %v1541 = vor.u32 %v1539, %v1540
      %v1542 = vrot.slane %v978, 1
      %v1543 = vrot.slane %v974, 2
      %v1544 = vor.u32 %v1542, %v1543
      %v1545 = vsel %vm1534, %v1541, %v1544
      %v1546 = vrot.slane %v982, 1
      %v1547 = vrot.slane %v984, 2
      %v1548 = vor.u32 %v1546, %v1547
      %v1549 = vrot.slane %v993, 1
      %v1550 = vrot.slane %v989, 2
      %v1551 = vor.u32 %v1549, %v1550
      %v1552 = vsel %vm1534, %v1548, %v1551
      %v1553 = vrot.slane %v997, 1
      %v1554 = vrot.slane %v999, 2
      %v1555 = vor.u32 %v1553, %v1554
      %v1556 = vrot.slane %v1008, 1
      %v1557 = vrot.slane %v1004, 2
      %v1558 = vor.u32 %v1556, %v1557
      %v1559 = vsel %vm1534, %v1555, %v1558
      %v1560 = vrot.slane %v1012, 1
      %v1561 = vrot.slane %v1014, 2
      %v1562 = vor.u32 %v1560, %v1561
      %v1563 = vrot.slane %v1023, 1
      %v1564 = vrot.slane %v1019, 2
      %v1565 = vor.u32 %v1563, %v1564
      %v1566 = vsel %vm1534, %v1562, %v1565
      %v1567 = vrot.slane %v1027, 1
      %v1568 = vrot.slane %v1029, 2
      %v1569 = vor.u32 %v1567, %v1568
      %v1570 = vrot.slane %v1038, 1
      %v1571 = vrot.slane %v1034, 2
      %v1572 = vor.u32 %v1570, %v1571
      %v1573 = vsel %vm1534, %v1569, %v1572
      %v1574 = vrot.slane %v1042, 1
      %v1575 = vrot.slane %v1044, 2
      %v1576 = vor.u32 %v1574, %v1575
      %v1577 = vrot.slane %v1053, 1
      %v1578 = vrot.slane %v1049, 2
      %v1579 = vor.u32 %v1577, %v1578
      %v1580 = vsel %vm1534, %v1576, %v1579
      %v1581 = vrot.slane %v1057, 1
      %v1582 = vrot.slane %v1059, 2
      %v1583 = vor.u32 %v1581, %v1582
      %v1584 = vrot.slane %v1068, 1
      %v1585 = vrot.slane %v1064, 2
      %v1586 = vor.u32 %v1584, %v1585
      %v1587 = vsel %vm1534, %v1583, %v1586
      %v1588 = vrot.slane %v1072, 1
      %v1589 = vrot.slane %v1074, 2
      %v1590 = vor.u32 %v1588, %v1589
      %v1591 = vrot.slane %v1083, 1
      %v1592 = vrot.slane %v1079, 2
      %v1593 = vor.u32 %v1591, %v1592
      %v1594 = vsel %vm1534, %v1590, %v1593
      %v1595 = vrot.slane %v1087, 1
      %v1596 = vrot.slane %v1089, 2
      %v1597 = vor.u32 %v1595, %v1596
      %v1598 = vrot.slane %v1098, 1
      %v1599 = vrot.slane %v1094, 2
      %v1600 = vor.u32 %v1598, %v1599
      %v1601 = vsel %vm1534, %v1597, %v1600
      %v1602 = vrot.slane %v1102, 1
      %v1603 = vrot.slane %v1104, 2
      %v1604 = vor.u32 %v1602, %v1603
      %v1605 = vrot.slane %v1113, 1
      %v1606 = vrot.slane %v1109, 2
      %v1607 = vor.u32 %v1605, %v1606
      %v1608 = vsel %vm1534, %v1604, %v1607
      %v1609 = vrot.slane %v1117, 1
      %v1610 = vrot.slane %v1119, 2
      %v1611 = vor.u32 %v1609, %v1610
      %v1612 = vrot.slane %v1128, 1
      %v1613 = vrot.slane %v1124, 2
      %v1614 = vor.u32 %v1612, %v1613
      %v1615 = vsel %vm1534, %v1611, %v1614
      %v1616 = vrot.slane %v1132, 1
      %v1617 = vrot.slane %v1134, 2
      %v1618 = vor.u32 %v1616, %v1617
      %v1619 = vrot.slane %v1143, 1
      %v1620 = vrot.slane %v1139, 2
      %v1621 = vor.u32 %v1619, %v1620
      %v1622 = vsel %vm1534, %v1618, %v1621
      %v1623 = vrot.slane %v1147, 1
      %v1624 = vrot.slane %v1149, 2
      %v1625 = vor.u32 %v1623, %v1624
      %v1626 = vrot.slane %v1158, 1
      %v1627 = vrot.slane %v1154, 2
      %v1628 = vor.u32 %v1626, %v1627
      %v1629 = vsel %vm1534, %v1625, %v1628
      %v1630 = vrot.slane %v1162, 1
      %v1631 = vrot.slane %v1164, 2
      %v1632 = vor.u32 %v1630, %v1631
      %v1633 = vrot.slane %v1173, 1
      %v1634 = vrot.slane %v1169, 2
      %v1635 = vor.u32 %v1633, %v1634
      %v1636 = vsel %vm1534, %v1632, %v1635
      %v1637 = vrot.slane %v1177, 1
      %v1638 = vrot.slane %v1179, 2
      %v1639 = vor.u32 %v1637, %v1638
      %v1640 = vrot.slane %v1188, 1
      %v1641 = vrot.slane %v1184, 2
      %v1642 = vor.u32 %v1640, %v1641
      %v1643 = vsel %vm1534, %v1639, %v1642
      %v1644 = vrot.slane %v1192, 1
      %v1645 = vrot.slane %v1194, 2
      %v1646 = vor.u32 %v1644, %v1645
      %v1647 = vrot.slane %v1203, 1
      %v1648 = vrot.slane %v1199, 2
      %v1649 = vor.u32 %v1647, %v1648
      %v1650 = vsel %vm1534, %v1646, %v1649
      %v1651 = vrot.slane %v1207, 1
      %v1652 = vrot.slane %v1209, 2
      %v1653 = vor.u32 %v1651, %v1652
      %v1654 = vrot.slane %v1218, 1
      %v1655 = vrot.slane %v1214, 2
      %v1656 = vor.u32 %v1654, %v1655
      %v1657 = vsel %vm1534, %v1653, %v1656
      %v1658 = vrot.slane %v1222, 1
      %v1659 = vrot.slane %v1224, 2
      %v1660 = vor.u32 %v1658, %v1659
      %v1661 = vrot.slane %v1233, 1
      %v1662 = vrot.slane %v1229, 2
      %v1663 = vor.u32 %v1661, %v1662
      %v1664 = vsel %vm1534, %v1660, %v1663
      %v1665 = vrot.slane %v1237, 1
      %v1666 = vrot.slane %v1239, 2
      %v1667 = vor.u32 %v1665, %v1666
      %v1668 = vrot.slane %v1248, 1
      %v1669 = vrot.slane %v1244, 2
      %v1670 = vor.u32 %v1668, %v1669
      %v1671 = vsel %vm1534, %v1667, %v1670
      %v1672 = vrot.slane %v1251, 1
      %v1673 = vrot.slane %v1253, 2
      %v1674 = vor.u32 %v1672, %v1673
      %v1675 = vrot.slane %v1261, 1
      %v1676 = vrot.slane %v1257, 2
      %v1677 = vor.u32 %v1675, %v1676
      %v1678 = vsel %vm1534, %v1674, %v1677
      %v1721 = vmax.bf16 %v1492, %v1538
      %v1722 = vmax.bf16 %v1493, %v1537
      %v1723 = vmax.bf16 %v1494, %v1545
      %v1724 = vmax.bf16 %v1495, %v1544
      %v1725 = vmax.bf16 %v1496, %v1552
      %v1726 = vmax.bf16 %v1497, %v1551
      %v1727 = vmax.bf16 %v1498, %v1559
      %v1728 = vmax.bf16 %v1499, %v1558
      %v1729 = vmax.bf16 %v1500, %v1566
      %v1730 = vmax.bf16 %v1501, %v1565
      %v1731 = vmax.bf16 %v1502, %v1573
      %v1732 = vmax.bf16 %v1503, %v1572
      %v1733 = vmax.bf16 %v1504, %v1580
      %v1734 = vmax.bf16 %v1505, %v1579
      %v1735 = vmax.bf16 %v1506, %v1587
      %v1736 = vmax.bf16 %v1507, %v1586
      %v1737 = vmax.bf16 %v1508, %v1594
      %v1738 = vmax.bf16 %v1509, %v1593
      %v1739 = vmax.bf16 %v1510, %v1601
      %v1740 = vmax.bf16 %v1511, %v1600
      %v1741 = vmax.bf16 %v1512, %v1608
      %v1742 = vmax.bf16 %v1513, %v1607
      %v1743 = vmax.bf16 %v1514, %v1615
      %v1744 = vmax.bf16 %v1515, %v1614
      %v1745 = vmax.bf16 %v1516, %v1622
      %v1746 = vmax.bf16 %v1517, %v1621
      %v1747 = vmax.bf16 %v1518, %v1629
      %v1748 = vmax.bf16 %v1519, %v1628
      %v1749 = vmax.bf16 %v1520, %v1636
      %v1750 = vmax.bf16 %v1521, %v1635
      %v1751 = vmax.bf16 %v1522, %v1643
      %v1752 = vmax.bf16 %v1523, %v1642
      %v1753 = vmax.bf16 %v1524, %v1650
      %v1754 = vmax.bf16 %v1525, %v1649
      %v1755 = vmax.bf16 %v1526, %v1657
      %v1756 = vmax.bf16 %v1527, %v1656
      %v1757 = vmax.bf16 %v1528, %v1664
      %v1758 = vmax.bf16 %v1529, %v1663
      %v1759 = vmax.bf16 %v1530, %v1671
      %v1760 = vmax.bf16 %v1531, %v1670
      %v1761 = vmax.bf16 %v1532, %v1678
      %v1762 = vmax.bf16 %v1533, %v1677
      %vm1763 = vcmask 1045504
      %v1764 = vrot.slane 4286644096, 2
      %v1765 = vsel %vm1763, %v1764, %v1764
      %v1766 = vrot.slane %v773, 2
      %v1767 = vrot.slane %v820, 2
      %v1768 = vsel %vm1763, %v1766, %v1767
      %v1769 = vrot.slane %v852, 2
      %v1770 = vrot.slane %v853, 2
      %v1771 = vsel %vm1763, %v1769, %v1770
      %v1772 = vrot.slane %v882, 2
      %v1773 = vrot.slane %v883, 2
      %v1774 = vsel %vm1763, %v1772, %v1773
      %v1775 = vrot.slane %v910, 2
      %v1776 = vrot.slane %v911, 2
      %v1777 = vsel %vm1763, %v1775, %v1776
      %v1778 = vrot.slane %v936, 2
      %v1779 = vrot.slane %v937, 2
      %v1780 = vsel %vm1763, %v1778, %v1779
      %v1781 = vrot.slane %v938, 2
      %v1782 = vrot.slane %v939, 2
      %v1783 = vsel %vm1763, %v1781, %v1782
      %v1784 = vrot.slane %v940, 2
      %v1785 = vrot.slane %v941, 2
      %v1786 = vsel %vm1763, %v1784, %v1785
      %v1787 = vrot.slane %v942, 2
      %v1788 = vrot.slane %v943, 2
      %v1789 = vsel %vm1763, %v1787, %v1788
      %v1790 = vrot.slane %v944, 2
      %v1791 = vrot.slane %v945, 2
      %v1792 = vsel %vm1763, %v1790, %v1791
      %v1793 = vrot.slane %v946, 2
      %v1794 = vrot.slane %v947, 2
      %v1795 = vsel %vm1763, %v1793, %v1794
      %v1796 = vrot.slane %v948, 2
      %v1797 = vrot.slane %v949, 2
      %v1798 = vsel %vm1763, %v1796, %v1797
      %v1799 = vrot.slane %v950, 2
      %v1800 = vrot.slane %v951, 2
      %v1801 = vsel %vm1763, %v1799, %v1800
      %v1802 = vrot.slane %v952, 2
      %v1803 = vrot.slane %v953, 2
      %v1804 = vsel %vm1763, %v1802, %v1803
      %v1805 = vrot.slane %v954, 2
      %v1806 = vrot.slane %v955, 2
      %v1807 = vsel %vm1763, %v1805, %v1806
      %v1808 = vrot.slane %v956, 2
      %v1809 = vrot.slane %v957, 2
      %v1810 = vsel %vm1763, %v1808, %v1809
      %v1811 = vrot.slane %v958, 2
      %v1812 = vrot.slane %v959, 2
      %v1813 = vsel %vm1763, %v1811, %v1812
      %v1814 = vrot.slane %v934, 2
      %v1815 = vrot.slane %v935, 2
      %v1816 = vsel %vm1763, %v1814, %v1815
      %v1817 = vrot.slane %v908, 2
      %v1818 = vrot.slane %v909, 2
      %v1819 = vsel %vm1763, %v1817, %v1818
      %v1820 = vrot.slane %v880, 2
      %v1821 = vrot.slane %v881, 2
      %v1822 = vsel %vm1763, %v1820, %v1821
      %v1823 = vrot.slane %v818, 2
      %v1824 = vrot.slane %v850, 2
      %v1825 = vsel %vm1763, %v1823, %v1824
      %v1868 = vmax.bf16 %v1721, %v1765
      %v1869 = vmax.bf16 %v1722, %v1764
      %v1870 = vmax.bf16 %v1723, %v1768
      %v1871 = vmax.bf16 %v1724, %v1767
      %v1872 = vmax.bf16 %v1725, %v1771
      %v1873 = vmax.bf16 %v1726, %v1770
      %v1874 = vmax.bf16 %v1727, %v1774
      %v1875 = vmax.bf16 %v1728, %v1773
      %v1876 = vmax.bf16 %v1729, %v1777
      %v1877 = vmax.bf16 %v1730, %v1776
      %v1878 = vmax.bf16 %v1731, %v1780
      %v1879 = vmax.bf16 %v1732, %v1779
      %v1880 = vmax.bf16 %v1733, %v1783
      %v1881 = vmax.bf16 %v1734, %v1782
      %v1882 = vmax.bf16 %v1735, %v1786
      %v1883 = vmax.bf16 %v1736, %v1785
      %v1884 = vmax.bf16 %v1737, %v1789
      %v1885 = vmax.bf16 %v1738, %v1788
      %v1886 = vmax.bf16 %v1739, %v1792
      %v1887 = vmax.bf16 %v1740, %v1791
      %v1888 = vmax.bf16 %v1741, %v1795
      %v1889 = vmax.bf16 %v1742, %v1794
      %v1890 = vmax.bf16 %v1743, %v1798
      %v1891 = vmax.bf16 %v1744, %v1797
      %v1892 = vmax.bf16 %v1745, %v1801
      %v1893 = vmax.bf16 %v1746, %v1800
      %v1894 = vmax.bf16 %v1747, %v1804
      %v1895 = vmax.bf16 %v1748, %v1803
      %v1896 = vmax.bf16 %v1749, %v1807
      %v1897 = vmax.bf16 %v1750, %v1806
      %v1898 = vmax.bf16 %v1751, %v1810
      %v1899 = vmax.bf16 %v1752, %v1809
      %v1900 = vmax.bf16 %v1753, %v1813
      %v1901 = vmax.bf16 %v1754, %v1812
      %v1902 = vmax.bf16 %v1755, %v1816
      %v1903 = vmax.bf16 %v1756, %v1815
      %v1904 = vmax.bf16 %v1757, %v1819
      %v1905 = vmax.bf16 %v1758, %v1818
      %v1906 = vmax.bf16 %v1759, %v1822
      %v1907 = vmax.bf16 %v1760, %v1821
      %v1908 = vmax.bf16 %v1761, %v1825
      %v1909 = vmax.bf16 %v1762, %v1824
      %v1942 = vrot.slane %v1874, 2
      %v1943 = vrot.slane %v1875, 2
      %v1944 = vsel %vm1763, %v1942, %v1943
      %v1945 = vrot.slane %v1876, 2
      %v1946 = vrot.slane %v1877, 2
      %v1947 = vsel %vm1763, %v1945, %v1946
      %v1948 = vrot.slane %v1878, 2
      %v1949 = vrot.slane %v1879, 2
      %v1950 = vsel %vm1763, %v1948, %v1949
      %v1951 = vrot.slane %v1880, 2
      %v1952 = vrot.slane %v1881, 2
      %v1953 = vsel %vm1763, %v1951, %v1952
      %v1954 = vrot.slane %v1882, 2
      %v1955 = vrot.slane %v1883, 2
      %v1956 = vsel %vm1763, %v1954, %v1955
      %v1957 = vrot.slane %v1884, 2
      %v1958 = vrot.slane %v1885, 2
      %v1959 = vsel %vm1763, %v1957, %v1958
      %v1960 = vrot.slane %v1886, 2
      %v1961 = vrot.slane %v1887, 2
      %v1962 = vsel %vm1763, %v1960, %v1961
      %v1963 = vrot.slane %v1888, 2
      %v1964 = vrot.slane %v1889, 2
      %v1965 = vsel %vm1763, %v1963, %v1964
      %v1966 = vrot.slane %v1890, 2
      %v1967 = vrot.slane %v1891, 2
      %v1968 = vsel %vm1763, %v1966, %v1967
      %v1969 = vrot.slane %v1892, 2
      %v1970 = vrot.slane %v1893, 2
      %v1971 = vsel %vm1763, %v1969, %v1970
      %v1972 = vrot.slane %v1894, 2
      %v1973 = vrot.slane %v1895, 2
      %v1974 = vsel %vm1763, %v1972, %v1973
      %v1975 = vrot.slane %v1896, 2
      %v1976 = vrot.slane %v1897, 2
      %v1977 = vsel %vm1763, %v1975, %v1976
      %v1978 = vrot.slane %v1898, 2
      %v1979 = vrot.slane %v1899, 2
      %v1980 = vsel %vm1763, %v1978, %v1979
      %v1981 = vrot.slane %v1900, 2
      %v1982 = vrot.slane %v1901, 2
      %v1983 = vsel %vm1763, %v1981, %v1982
      %v1984 = vrot.slane %v1902, 2
      %v1985 = vrot.slane %v1903, 2
      %v1986 = vsel %vm1763, %v1984, %v1985
      %v1987 = vrot.slane %v1904, 2
      %v1988 = vrot.slane %v1905, 2
      %v1989 = vsel %vm1763, %v1987, %v1988
      %v1990 = vld [vmem:[%s3] sm:$0xc]
      %v1992 = vunpack.c.l.b16 %v1990
      %v1993 = vpack.c.b16 %v1992, %v1992
      %v1994 = vrot.slane %v1993, 2
      %vm1995 = vcmask 31744
      %v1997 = vsel %vm1995, %v1944, 0
      %v2000 = vsel %vm1995, %v1947, 0
      %v2003 = vsel %vm1995, %v1950, 0
      %v2006 = vsel %vm1995, %v1953, 0
      %v2009 = vsel %vm1995, %v1956, 0
      %v2012 = vsel %vm1995, %v1959, 0
      %v2015 = vsel %vm1995, %v1962, 0
      %v2018 = vsel %vm1995, %v1965, 0
      %v2021 = vsel %vm1995, %v1968, 0
      %v2024 = vsel %vm1995, %v1971, 0
      %v2027 = vsel %vm1995, %v1974, 0
      %v2030 = vsel %vm1995, %v1977, 0
      %v2033 = vsel %vm1995, %v1980, 0
      %v2036 = vsel %vm1995, %v1983, 0
      %v2039 = vsel %vm1995, %v1986, 0
      %v2042 = vsel %vm1995, %v1989, 0
      %vm2044 = vcmask 1041408
      %v2046 = vsel %vm2044, %v1994, 0
      %2048 = vmatprep.subr.bf16.mxu0 0
      %2049 = vmatpush1.bf16.msra.mxu0 %v2046
      %2050 = vmatprep.subr.bf16.mxu0 0
      %2051 = vmatpush1.bf16.msra.mxu0 0
      %2052 = vmatprep.subr.bf16.mxu0 0
      %2053 = vmatpush1.bf16.msra.mxu0 0
      %2054 = vmatprep.subr.bf16.mxu0 0
      %2055 = vmatpush1.bf16.msra.mxu0 0
      %2056 = vmatprep.subr.bf16.mxu0 0
      %2057 = vmatpush1.bf16.msra.mxu0 0
      %2058 = vmatprep.subr.bf16.mxu0 0
      %2059 = vmatpush1.bf16.msra.mxu0 0
      %2060 = vmatprep.subr.bf16.mxu0 0
      %2061 = vmatpush1.bf16.msra.mxu0 0
      %2062 = vmatprep.subr.bf16.mxu0 0
      %2063 = vmatpush1.bf16.msra.mxu0 0
      %2064 = vmatprep.subr.bf16.mxu0 0
      %2065 = vmatpush1.bf16.msra.mxu0 0
      %2066 = vmatprep.subr.bf16.mxu0 0
      %2067 = vmatpush1.bf16.msra.mxu0 0
      %2068 = vmatprep.subr.bf16.mxu0 0
      %2069 = vmatpush1.bf16.msra.mxu0 0
      %2070 = vmatprep.subr.bf16.mxu0 0
      %2071 = vmatpush1.bf16.msra.mxu0 0
      %2072 = vmatprep.subr.bf16.mxu0 0
      %2073 = vmatpush1.bf16.msra.mxu0 0
      %2074 = vmatprep.subr.bf16.mxu0 0
      %2075 = vmatpush1.bf16.msra.mxu0 0
      %2076 = vmatprep.subr.bf16.mxu0 0
      %2077 = vmatpush1.bf16.msra.mxu0 0
      %2078 = vmatprep.subr.bf16.mxu0 0
      %2079 = vmatpush1.bf16.msra.mxu0 0
      %2080 = vmatprep.mubr.bf16.mxu0 0
      %2081 = vmatmul.mubr.bf16.gmra.mrb[0].mxu0 %v1997
      %v2082 = vpop.f32.mrb[0].mxu0
      %v2083 = vadd.f32 0.0, %v2082
      %v2084 = vpop.f32.mrb[0].mxu0
      %v2085 = vpop.f32.mrb[0].mxu0
      %v2086 = vadd.f32 0.0, %v2085
      %v2087 = vpop.f32.mrb[0].mxu0
      %2088 = vmatprep.mubr.bf16.mxu0 0
      %2089 = vmatmul.mubr.bf16.gmra.mrb[0].mxu0 %v2000
      %v2090 = vpop.f32.mrb[0].mxu0
      %v2091 = vadd.f32 0.0, %v2090
      %v2092 = vpop.f32.mrb[0].mxu0
      %v2093 = vpop.f32.mrb[0].mxu0
      %v2094 = vadd.f32 0.0, %v2093
      %v2095 = vpop.f32.mrb[0].mxu0
      %2096 = vmatprep.mubr.bf16.mxu0 0
      %2097 = vmatmul.mubr.bf16.gmra.mrb[0].mxu0 %v2003
      %v2098 = vpop.f32.mrb[0].mxu0
      %v2099 = vadd.f32 0.0, %v2098
      %v2100 = vpop.f32.mrb[0].mxu0
      %v2101 = vpop.f32.mrb[0].mxu0
      %v2102 = vadd.f32 0.0, %v2101
      %v2103 = vpop.f32.mrb[0].mxu0
      %2104 = vmatprep.mubr.bf16.mxu0 0
      %2105 = vmatmul.mubr.bf16.gmra.mrb[0].mxu0 %v2006
      %v2106 = vpop.f32.mrb[0].mxu0
      %v2107 = vadd.f32 0.0, %v2106
      %v2108 = vpop.f32.mrb[0].mxu0
      %v2109 = vpop.f32.mrb[0].mxu0
      %v2110 = vadd.f32 0.0, %v2109
      %v2111 = vpop.f32.mrb[0].mxu0
      %2112 = vmatprep.mubr.bf16.mxu0 0
      %2113 = vmatmul.mubr.bf16.gmra.mrb[0].mxu0 %v2009
      %v2114 = vpop.f32.mrb[0].mxu0
      %v2115 = vadd.f32 0.0, %v2114
      %v2116 = vpop.f32.mrb[0].mxu0
      %v2117 = vpop.f32.mrb[0].mxu0
      %v2118 = vadd.f32 0.0, %v2117
      %v2119 = vpop.f32.mrb[0].mxu0
      %2120 = vmatprep.mubr.bf16.mxu0 0
      %2121 = vmatmul.mubr.bf16.gmra.mrb[0].mxu0 %v2012
      %v2122 = vpop.f32.mrb[0].mxu0
      %v2123 = vadd.f32 0.0, %v2122
      %v2124 = vpop.f32.mrb[0].mxu0
      %v2125 = vpop.f32.mrb[0].mxu0
      %v2126 = vadd.f32 0.0, %v2125
      %v2127 = vpop.f32.mrb[0].mxu0
      %2128 = vmatprep.mubr.bf16.mxu0 0
      %2129 = vmatmul.mubr.bf16.gmra.mrb[0].mxu0 %v2015
      %v2130 = vpop.f32.mrb[0].mxu0
      %v2131 = vadd.f32 0.0, %v2130
      %v2132 = vpop.f32.mrb[0].mxu0
      %v2133 = vpop.f32.mrb[0].mxu0
      %v2134 = vadd.f32 0.0, %v2133
      %v2135 = vpop.f32.mrb[0].mxu0
      %2136 = vmatprep.mubr.bf16.mxu0 0
      %2137 = vmatmul.mubr.bf16.gmra.mrb[0].mxu0 %v2018
      %v2138 = vpop.f32.mrb[0].mxu0
      %v2139 = vadd.f32 0.0, %v2138
      %v2140 = vpop.f32.mrb[0].mxu0
      %v2141 = vpop.f32.mrb[0].mxu0
      %v2142 = vadd.f32 0.0, %v2141
      %v2143 = vpop.f32.mrb[0].mxu0
      %2144 = vmatprep.mubr.bf16.mxu0 0
      %2145 = vmatmul.mubr.bf16.gmra.mrb[0].mxu0 %v2021
      %v2146 = vpop.f32.mrb[0].mxu0
      %v2147 = vadd.f32 0.0, %v2146
      %v2148 = vpop.f32.mrb[0].mxu0
      %v2149 = vpop.f32.mrb[0].mxu0
      %v2150 = vadd.f32 0.0, %v2149
      %v2151 = vpop.f32.mrb[0].mxu0
      %2152 = vmatprep.mubr.bf16.mxu0 0
      %2153 = vmatmul.mubr.bf16.gmra.mrb[0].mxu0 %v2024
      %v2154 = vpop.f32.mrb[0].mxu0
      %v2155 = vadd.f32 0.0, %v2154
      %v2156 = vpop.f32.mrb[0].mxu0
      %v2157 = vpop.f32.mrb[0].mxu0
      %v2158 = vadd.f32 0.0, %v2157
      %v2159 = vpop.f32.mrb[0].mxu0
      %2160 = vmatprep.mubr.bf16.mxu0 0
      %2161 = vmatmul.mubr.bf16.gmra.mrb[0].mxu0 %v2027
      %v2162 = vpop.f32.mrb[0].mxu0
      %v2163 = vadd.f32 0.0, %v2162
      %v2164 = vpop.f32.mrb[0].mxu0
      %v2165 = vpop.f32.mrb[0].mxu0
      %v2166 = vadd.f32 0.0, %v2165
      %v2167 = vpop.f32.mrb[0].mxu0
      %2168 = vmatprep.mubr.bf16.mxu0 0
      %2169 = vmatmul.mubr.bf16.gmra.mrb[0].mxu0 %v2030
      %v2170 = vpop.f32.mrb[0].mxu0
      %v2171 = vadd.f32 0.0, %v2170
      %v2172 = vpop.f32.mrb[0].mxu0
      %v2173 = vpop.f32.mrb[0].mxu0
      %v2174 = vadd.f32 0.0, %v2173
      %v2175 = vpop.f32.mrb[0].mxu0
      %2176 = vmatprep.mubr.bf16.mxu0 0
      %2177 = vmatmul.mubr.bf16.gmra.mrb[0].mxu0 %v2033
      %v2178 = vpop.f32.mrb[0].mxu0
      %v2179 = vadd.f32 0.0, %v2178
      %v2180 = vpop.f32.mrb[0].mxu0
      %v2181 = vpop.f32.mrb[0].mxu0
      %v2182 = vadd.f32 0.0, %v2181
      %v2183 = vpop.f32.mrb[0].mxu0
      %2184 = vmatprep.mubr.bf16.mxu0 0
      %2185 = vmatmul.mubr.bf16.gmra.mrb[0].mxu0 %v2036
      %v2186 = vpop.f32.mrb[0].mxu0
      %v2187 = vadd.f32 0.0, %v2186
      %v2188 = vpop.f32.mrb[0].mxu0
      %v2189 = vpop.f32.mrb[0].mxu0
      %v2190 = vadd.f32 0.0, %v2189
      %v2191 = vpop.f32.mrb[0].mxu0
      %2192 = vmatprep.mubr.bf16.mxu0 0
      %2193 = vmatmul.mubr.bf16.gmra.mrb[0].mxu0 %v2039
      %v2194 = vpop.f32.mrb[0].mxu0
      %v2195 = vadd.f32 0.0, %v2194
      %v2196 = vpop.f32.mrb[0].mxu0
      %v2197 = vpop.f32.mrb[0].mxu0
      %v2198 = vadd.f32 0.0, %v2197
      %v2199 = vpop.f32.mrb[0].mxu0
      %2200 = vmatprep.mubr.bf16.mxu0 0
      %2201 = vmatmul.mubr.bf16.gmra.mrb[0].mxu0 %v2042
      %v2202 = vpop.f32.mrb[0].mxu0
      %v2203 = vadd.f32 0.0, %v2202
      %v2204 = vpop.f32.mrb[0].mxu0
      %v2205 = vpop.f32.mrb[0].mxu0
      %v2206 = vadd.f32 0.0, %v2205
      %v2207 = vpop.f32.mrb[0].mxu0
      %2208 = vdwg.mxu0
      %v2210 = vsel %vm1995, %v721, 0
      %v2213 = vsel %vm1995, %v722, 0
      %v2216 = vsel %vm1995, %v723, 0
      %v2219 = vsel %vm1995, %v724, 0
      %v2222 = vsel %vm1995, %v725, 0
      %v2225 = vsel %vm1995, %v726, 0
      %v2228 = vsel %vm1995, %v727, 0
      %v2231 = vsel %vm1995, %v728, 0
      %v2234 = vsel %vm1995, %v729, 0
      %v2237 = vsel %vm1995, %v730, 0
      %v2240 = vsel %vm1995, %v731, 0
      %v2243 = vsel %vm1995, %v732, 0
      %v2246 = vsel %vm1995, %v733, 0
      %v2249 = vsel %vm1995, %v734, 0
      %v2252 = vsel %vm1995, %v735, 0
      %v2255 = vsel %vm1995, %v736, 0
      %v2258 = vsel %vm2044, %v737, 0
      %2260 = vmatprep.subr.bf16.mxu0 0
      %2261 = vmatpush1.bf16.msra.mxu0 %v2258
      %2262 = vmatprep.subr.bf16.mxu0 0
      %2263 = vmatpush1.bf16.msra.mxu0 0
      %2264 = vmatprep.subr.bf16.mxu0 0
      %2265 = vmatpush1.bf16.msra.mxu0 0
      %2266 = vmatprep.subr.bf16.mxu0 0
      %2267 = vmatpush1.bf16.msra.mxu0 0
      %2268 = vmatprep.subr.bf16.mxu0 0
      %2269 = vmatpush1.bf16.msra.mxu0 0
      %2270 = vmatprep.subr.bf16.mxu0 0
      %2271 = vmatpush1.bf16.msra.mxu0 0
      %2272 = vmatprep.subr.bf16.mxu0 0
      %2273 = vmatpush1.bf16.msra.mxu0 0
      %2274 = vmatprep.subr.bf16.mxu0 0
      %2275 = vmatpush1.bf16.msra.mxu0 0
      %2276 = vmatprep.subr.bf16.mxu0 0
      %2277 = vmatpush1.bf16.msra.mxu0 0
      %2278 = vmatprep.subr.bf16.mxu0 0
      %2279 = vmatpush1.bf16.msra.mxu0 0
      %2280 = vmatprep.subr.bf16.mxu0 0
      %2281 = vmatpush1.bf16.msra.mxu0 0
      %2282 = vmatprep.subr.bf16.mxu0 0
      %2283 = vmatpush1.bf16.msra.mxu0 0
      %2284 = vmatprep.subr.bf16.mxu0 0
      %2285 = vmatpush1.bf16.msra.mxu0 0
      %2286 = vmatprep.subr.bf16.mxu0 0
      %2287 = vmatpush1.bf16.msra.mxu0 0
      %2288 = vmatprep.subr.bf16.mxu0 0
      %2289 = vmatpush1.bf16.msra.mxu0 0
      %2290 = vmatprep.subr.bf16.mxu0 0
      %2291 = vmatpush1.bf16.msra.mxu0 0
      %2292 = vmatprep.mubr.bf16.mxu0 0
      %2293 = vmatmul.mubr.bf16.gmra.mrb[0].mxu0 %v2210
      %v2294 = vpop.f32.mrb[0].mxu0
      %v2295 = vadd.f32 %v2083, %v2294
      %v2296 = vpop.f32.mrb[0].mxu0
      %v2297 = vpop.f32.mrb[0].mxu0
      %v2298 = vadd.f32 %v2086, %v2297
      %v2299 = vpop.f32.mrb[0].mxu0
      %2300 = vmatprep.mubr.bf16.mxu0 0
      %2301 = vmatmul.mubr.bf16.gmra.mrb[0].mxu0 %v2213
      %v2302 = vpop.f32.mrb[0].mxu0
      %v2303 = vadd.f32 %v2091, %v2302
      %v2304 = vpop.f32.mrb[0].mxu0
      %v2305 = vpop.f32.mrb[0].mxu0
      %v2306 = vadd.f32 %v2094, %v2305
      %v2307 = vpop.f32.mrb[0].mxu0
      %2308 = vmatprep.mubr.bf16.mxu0 0
      %2309 = vmatmul.mubr.bf16.gmra.mrb[0].mxu0 %v2216
      %v2310 = vpop.f32.mrb[0].mxu0
      %v2311 = vadd.f32 %v2099, %v2310
      %v2312 = vpop.f32.mrb[0].mxu0
      %v2313 = vpop.f32.mrb[0].mxu0
      %v2314 = vadd.f32 %v2102, %v2313
      %v2315 = vpop.f32.mrb[0].mxu0
      %2316 = vmatprep.mubr.bf16.mxu0 0
      %2317 = vmatmul.mubr.bf16.gmra.mrb[0].mxu0 %v2219
      %v2318 = vpop.f32.mrb[0].mxu0
      %v2319 = vadd.f32 %v2107, %v2318
      %v2320 = vpop.f32.mrb[0].mxu0
      %v2321 = vpop.f32.mrb[0].mxu0
      %v2322 = vadd.f32 %v2110, %v2321
      %v2323 = vpop.f32.mrb[0].mxu0
      %2324 = vmatprep.mubr.bf16.mxu0 0
      %2325 = vmatmul.mubr.bf16.gmra.mrb[0].mxu0 %v2222
      %v2326 = vpop.f32.mrb[0].mxu0
      %v2327 = vadd.f32 %v2115, %v2326
      %v2328 = vpop.f32.mrb[0].mxu0
      %v2329 = vpop.f32.mrb[0].mxu0
      %v2330 = vadd.f32 %v2118, %v2329
      %v2331 = vpop.f32.mrb[0].mxu0
      %2332 = vmatprep.mubr.bf16.mxu0 0
      %2333 = vmatmul.mubr.bf16.gmra.mrb[0].mxu0 %v2225
      %v2334 = vpop.f32.mrb[0].mxu0
      %v2335 = vadd.f32 %v2123, %v2334
      %v2336 = vpop.f32.mrb[0].mxu0
      %v2337 = vpop.f32.mrb[0].mxu0
      %v2338 = vadd.f32 %v2126, %v2337
      %v2339 = vpop.f32.mrb[0].mxu0
      %2340 = vmatprep.mubr.bf16.mxu0 0
      %2341 = vmatmul.mubr.bf16.gmra.mrb[0].mxu0 %v2228
      %v2342 = vpop.f32.mrb[0].mxu0
      %v2343 = vadd.f32 %v2131, %v2342
      %v2344 = vpop.f32.mrb[0].mxu0
      %v2345 = vpop.f32.mrb[0].mxu0
      %v2346 = vadd.f32 %v2134, %v2345
      %v2347 = vpop.f32.mrb[0].mxu0
      %2348 = vmatprep.mubr.bf16.mxu0 0
      %2349 = vmatmul.mubr.bf16.gmra.mrb[0].mxu0 %v2231
      %v2350 = vpop.f32.mrb[0].mxu0
      %v2351 = vadd.f32 %v2139, %v2350
      %v2352 = vpop.f32.mrb[0].mxu0
      %v2353 = vpop.f32.mrb[0].mxu0
      %v2354 = vadd.f32 %v2142, %v2353
      %v2355 = vpop.f32.mrb[0].mxu0
      %2356 = vmatprep.mubr.bf16.mxu0 0
      %2357 = vmatmul.mubr.bf16.gmra.mrb[0].mxu0 %v2234
      %v2358 = vpop.f32.mrb[0].mxu0
      %v2359 = vadd.f32 %v2147, %v2358
      %v2360 = vpop.f32.mrb[0].mxu0
      %v2361 = vpop.f32.mrb[0].mxu0
      %v2362 = vadd.f32 %v2150, %v2361
      %v2363 = vpop.f32.mrb[0].mxu0
      %2364 = vmatprep.mubr.bf16.mxu0 0
      %2365 = vmatmul.mubr.bf16.gmra.mrb[0].mxu0 %v2237
      %v2366 = vpop.f32.mrb[0].mxu0
      %v2367 = vadd.f32 %v2155, %v2366
      %v2368 = vpop.f32.mrb[0].mxu0
      %v2369 = vpop.f32.mrb[0].mxu0
      %v2370 = vadd.f32 %v2158, %v2369
      %v2371 = vpop.f32.mrb[0].mxu0
      %2372 = vmatprep.mubr.bf16.mxu0 0
      %2373 = vmatmul.mubr.bf16.gmra.mrb[0].mxu0 %v2240
      %v2374 = vpop.f32.mrb[0].mxu0
      %v2375 = vadd.f32 %v2163, %v2374
      %v2376 = vpop.f32.mrb[0].mxu0
      %v2377 = vpop.f32.mrb[0].mxu0
      %v2378 = vadd.f32 %v2166, %v2377
      %v2379 = vpop.f32.mrb[0].mxu0
      %2380 = vmatprep.mubr.bf16.mxu0 0
      %2381 = vmatmul.mubr.bf16.gmra.mrb[0].mxu0 %v2243
      %v2382 = vpop.f32.mrb[0].mxu0
      %v2383 = vadd.f32 %v2171, %v2382
      %v2384 = vpop.f32.mrb[0].mxu0
      %v2385 = vpop.f32.mrb[0].mxu0
      %v2386 = vadd.f32 %v2174, %v2385
      %v2387 = vpop.f32.mrb[0].mxu0
      %2388 = vmatprep.mubr.bf16.mxu0 0
      %2389 = vmatmul.mubr.bf16.gmra.mrb[0].mxu0 %v2246
      %v2390 = vpop.f32.mrb[0].mxu0
      %v2391 = vadd.f32 %v2179, %v2390
      %v2392 = vpop.f32.mrb[0].mxu0
      %v2393 = vpop.f32.mrb[0].mxu0
      %v2394 = vadd.f32 %v2182, %v2393
      %v2395 = vpop.f32.mrb[0].mxu0
      %2396 = vmatprep.mubr.bf16.mxu0 0
      %2397 = vmatmul.mubr.bf16.gmra.mrb[0].mxu0 %v2249
      %v2398 = vpop.f32.mrb[0].mxu0
      %v2399 = vadd.f32 %v2187, %v2398
      %v2400 = vpop.f32.mrb[0].mxu0
      %v2401 = vpop.f32.mrb[0].mxu0
      %v2402 = vadd.f32 %v2190, %v2401
      %v2403 = vpop.f32.mrb[0].mxu0
      %2404 = vmatprep.mubr.bf16.mxu0 0
      %2405 = vmatmul.mubr.bf16.gmra.mrb[0].mxu0 %v2252
      %v2406 = vpop.f32.mrb[0].mxu0
      %v2407 = vadd.f32 %v2195, %v2406
      %v2408 = vpop.f32.mrb[0].mxu0
      %v2409 = vpop.f32.mrb[0].mxu0
      %v2410 = vadd.f32 %v2198, %v2409
      %v2411 = vpop.f32.mrb[0].mxu0
      %2412 = vmatprep.mubr.bf16.mxu0 0
      %2413 = vmatmul.mubr.bf16.gmra.mrb[0].mxu0 %v2255
      %v2414 = vpop.f32.mrb[0].mxu0
      %v2415 = vadd.f32 %v2203, %v2414
      %v2416 = vpop.f32.mrb[0].mxu0
      %v2417 = vpop.f32.mrb[0].mxu0
      %v2418 = vadd.f32 %v2206, %v2417
      %v2419 = vpop.f32.mrb[0].mxu0
      %2420 = vdwg.mxu0
      %v2421 = vmax.bf16 %v1868, %v1870
      %v2422 = vmax.bf16 %v1869, %v1871
      %v2423 = vmax.bf16 %v1870, %v1872
      %v2424 = vmax.bf16 %v1871, %v1873
      %v2425 = vmax.bf16 %v1872, %v1874
      %v2426 = vmax.bf16 %v1873, %v1875
      %v2427 = vmax.bf16 %v1874, %v1876
      %v2428 = vmax.bf16 %v1875, %v1877
      %v2429 = vmax.bf16 %v1876, %v1878
      %v2430 = vmax.bf16 %v1877, %v1879
      %v2431 = vmax.bf16 %v1878, %v1880
      %v2432 = vmax.bf16 %v1879, %v1881
      %v2433 = vmax.bf16 %v1880, %v1882
      %v2434 = vmax.bf16 %v1881, %v1883
      %v2435 = vmax.bf16 %v1882, %v1884
      %v2436 = vmax.bf16 %v1883, %v1885
      %v2437 = vmax.bf16 %v1884, %v1886
      %v2438 = vmax.bf16 %v1885, %v1887
      %v2439 = vmax.bf16 %v1886, %v1888
      %v2440 = vmax.bf16 %v1887, %v1889
      %v2441 = vmax.bf16 %v1888, %v1890
      %v2442 = vmax.bf16 %v1889, %v1891
      %v2443 = vmax.bf16 %v1890, %v1892
      %v2444 = vmax.bf16 %v1891, %v1893
      %v2445 = vmax.bf16 %v1892, %v1894
      %v2446 = vmax.bf16 %v1893, %v1895
      %v2447 = vmax.bf16 %v1894, %v1896
      %v2448 = vmax.bf16 %v1895, %v1897
      %v2449 = vmax.bf16 %v1896, %v1898
      %v2450 = vmax.bf16 %v1897, %v1899
      %v2451 = vmax.bf16 %v1898, %v1900
      %v2452 = vmax.bf16 %v1899, %v1901
      %v2453 = vmax.bf16 %v1900, %v1902
      %v2454 = vmax.bf16 %v1901, %v1903
      %v2455 = vmax.bf16 %v1902, %v1904
      %v2456 = vmax.bf16 %v1903, %v1905
      %v2457 = vmax.bf16 %v1904, %v1906
      %v2458 = vmax.bf16 %v1905, %v1907
      %v2459 = vmax.bf16 %v2421, %v1872
      %v2460 = vmax.bf16 %v2422, %v1873
      %v2461 = vmax.bf16 %v2423, %v1874
      %v2462 = vmax.bf16 %v2424, %v1875
      %v2463 = vmax.bf16 %v2425, %v1876
      %v2464 = vmax.bf16 %v2426, %v1877
      %v2465 = vmax.bf16 %v2427, %v1878
      %v2466 = vmax.bf16 %v2428, %v1879
      %v2467 = vmax.bf16 %v2429, %v1880
      %v2468 = vmax.bf16 %v2430, %v1881
      %v2469 = vmax.bf16 %v2431, %v1882
      %v2470 = vmax.bf16 %v2432, %v1883
      %v2471 = vmax.bf16 %v2433, %v1884
      %v2472 = vmax.bf16 %v2434, %v1885
      %v2473 = vmax.bf16 %v2435, %v1886
      %v2474 = vmax.bf16 %v2436, %v1887
      %v2475 = vmax.bf16 %v2437, %v1888
      %v2476 = vmax.bf16 %v2438, %v1889
      %v2477 = vmax.bf16 %v2439, %v1890
      %v2478 = vmax.bf16 %v2440, %v1891
      %v2479 = vmax.bf16 %v2441, %v1892
      %v2480 = vmax.bf16 %v2442, %v1893
      %v2481 = vmax.bf16 %v2443, %v1894
      %v2482 = vmax.bf16 %v2444, %v1895
      %v2483 = vmax.bf16 %v2445, %v1896
      %v2484 = vmax.bf16 %v2446, %v1897
      %v2485 = vmax.bf16 %v2447, %v1898
      %v2486 = vmax.bf16 %v2448, %v1899
      %v2487 = vmax.bf16 %v2449, %v1900
      %v2488 = vmax.bf16 %v2450, %v1901
      %v2489 = vmax.bf16 %v2451, %v1902
      %v2490 = vmax.bf16 %v2452, %v1903
      %v2491 = vmax.bf16 %v2453, %v1904
      %v2492 = vmax.bf16 %v2454, %v1905
      %v2493 = vmax.bf16 %v2455, %v1906
      %v2494 = vmax.bf16 %v2456, %v1907
      %v2495 = vmax.bf16 %v2457, %v1908
      %v2496 = vmax.bf16 %v2458, %v1909
      %v2497 = vmax.bf16 %v2459, %v1874
      %v2498 = vmax.bf16 %v2460, %v1875
      %v2499 = vmax.bf16 %v2461, %v1876
      %v2500 = vmax.bf16 %v2462, %v1877
      %v2501 = vmax.bf16 %v2463, %v1878
      %v2502 = vmax.bf16 %v2464, %v1879
      %v2503 = vmax.bf16 %v2465, %v1880
      %v2504 = vmax.bf16 %v2466, %v1881
      %v2505 = vmax.bf16 %v2467, %v1882
      %v2506 = vmax.bf16 %v2468, %v1883
      %v2507 = vmax.bf16 %v2469, %v1884
      %v2508 = vmax.bf16 %v2470, %v1885
      %v2509 = vmax.bf16 %v2471, %v1886
      %v2510 = vmax.bf16 %v2472, %v1887
      %v2511 = vmax.bf16 %v2473, %v1888
      %v2512 = vmax.bf16 %v2474, %v1889
      %v2513 = vmax.bf16 %v2475, %v1890
      %v2514 = vmax.bf16 %v2476, %v1891
      %v2515 = vmax.bf16 %v2477, %v1892
      %v2516 = vmax.bf16 %v2478, %v1893
      %v2517 = vmax.bf16 %v2479, %v1894
      %v2518 = vmax.bf16 %v2480, %v1895
      %v2519 = vmax.bf16 %v2481, %v1896
      %v2520 = vmax.bf16 %v2482, %v1897
      %v2521 = vmax.bf16 %v2483, %v1898
      %v2522 = vmax.bf16 %v2484, %v1899
      %v2523 = vmax.bf16 %v2485, %v1900
      %v2524 = vmax.bf16 %v2486, %v1901
      %v2525 = vmax.bf16 %v2487, %v1902
      %v2526 = vmax.bf16 %v2488, %v1903
      %v2527 = vmax.bf16 %v2489, %v1904
      %v2528 = vmax.bf16 %v2490, %v1905
      %v2529 = vmax.bf16 %v2491, %v1906
      %v2530 = vmax.bf16 %v2492, %v1907
      %v2531 = vmax.bf16 %v2493, %v1908
      %v2532 = vmax.bf16 %v2494, %v1909
      %v2533 = vmax.bf16 %v2495, %v1868
      %v2534 = vmax.bf16 %v2496, %v1869
      %v2535 = vmax.bf16 %v2497, %v1876
      %v2536 = vmax.bf16 %v2498, %v1877
      %v2537 = vmax.bf16 %v2499, %v1878
      %v2538 = vmax.bf16 %v2500, %v1879
      %v2539 = vmax.bf16 %v2501, %v1880
      %v2540 = vmax.bf16 %v2502, %v1881
      %v2541 = vmax.bf16 %v2503, %v1882
      %v2542 = vmax.bf16 %v2504, %v1883
      %v2543 = vmax.bf16 %v2505, %v1884
      %v2544 = vmax.bf16 %v2506, %v1885
      %v2545 = vmax.bf16 %v2507, %v1886
      %v2546 = vmax.bf16 %v2508, %v1887
      %v2547 = vmax.bf16 %v2509, %v1888
      %v2548 = vmax.bf16 %v2510, %v1889
      %v2549 = vmax.bf16 %v2511, %v1890
      %v2550 = vmax.bf16 %v2512, %v1891
      %v2551 = vmax.bf16 %v2513, %v1892
      %v2552 = vmax.bf16 %v2514, %v1893
      %v2553 = vmax.bf16 %v2515, %v1894
      %v2554 = vmax.bf16 %v2516, %v1895
      %v2555 = vmax.bf16 %v2517, %v1896
      %v2556 = vmax.bf16 %v2518, %v1897
      %v2557 = vmax.bf16 %v2519, %v1898
      %v2558 = vmax.bf16 %v2520, %v1899
      %v2559 = vmax.bf16 %v2521, %v1900
      %v2560 = vmax.bf16 %v2522, %v1901
      %v2561 = vmax.bf16 %v2523, %v1902
      %v2562 = vmax.bf16 %v2524, %v1903
      %v2563 = vmax.bf16 %v2525, %v1904
      %v2564 = vmax.bf16 %v2526, %v1905
      %v2565 = vmax.bf16 %v2527, %v1906
      %v2566 = vmax.bf16 %v2528, %v1907
      %v2567 = vmax.bf16 %v2529, %v1908
      %v2568 = vmax.bf16 %v2530, %v1909
      %v2569 = vmax.bf16 %v2531, %v1868
      %v2570 = vmax.bf16 %v2532, %v1869
      %v2571 = vmax.bf16 %v2533, %v1868
      %v2572 = vmax.bf16 %v2534, %v1869
      %v2574 = vshrl.u32 %v2497, 16
      %v2576 = vshll.u32 %v2497, 16
      %v2578 = vrot.slane %v2576, 1
      %v2579 = vor.u32 %v2574, %v2578
      %v2581 = vshll.u32 %v2498, 16
      %v2583 = vrot.slane %v2581, 1
      %v2584 = vsel %vm960, %v2579, %v2583
      %v2585 = vshrl.u32 %v2498, 16
      %v2587 = vor.u32 %v2585, %v2583
      %v2589 = vshrl.u32 %v2535, 16
      %v2591 = vshll.u32 %v2535, 16
      %v2593 = vrot.slane %v2591, 1
      %v2594 = vor.u32 %v2589, %v2593
      %v2596 = vshll.u32 %v2536, 16
      %v2598 = vrot.slane %v2596, 1
      %v2599 = vsel %vm960, %v2594, %v2598
      %v2600 = vshrl.u32 %v2536, 16
      %v2602 = vor.u32 %v2600, %v2598
      %v2604 = vshrl.u32 %v2537, 16
      %v2606 = vshll.u32 %v2537, 16
      %v2608 = vrot.slane %v2606, 1
      %v2609 = vor.u32 %v2604, %v2608
      %v2611 = vshll.u32 %v2538, 16
      %v2613 = vrot.slane %v2611, 1
      %v2614 = vsel %vm960, %v2609, %v2613
      %v2615 = vshrl.u32 %v2538, 16
      %v2617 = vor.u32 %v2615, %v2613
      %v2619 = vshrl.u32 %v2539, 16
      %v2621 = vshll.u32 %v2539, 16
      %v2623 = vrot.slane %v2621, 1
      %v2624 = vor.u32 %v2619, %v2623
      %v2626 = vshll.u32 %v2540, 16
      %v2628 = vrot.slane %v2626, 1
      %v2629 = vsel %vm960, %v2624, %v2628
      %v2630 = vshrl.u32 %v2540, 16
      %v2632 = vor.u32 %v2630, %v2628
      %v2634 = vshrl.u32 %v2541, 16
      %v2636 = vshll.u32 %v2541, 16
      %v2638 = vrot.slane %v2636, 1
      %v2639 = vor.u32 %v2634, %v2638
      %v2641 = vshll.u32 %v2542, 16
      %v2643 = vrot.slane %v2641, 1
      %v2644 = vsel %vm960, %v2639, %v2643
      %v2645 = vshrl.u32 %v2542, 16
      %v2647 = vor.u32 %v2645, %v2643
      %v2649 = vshrl.u32 %v2543, 16
      %v2651 = vshll.u32 %v2543, 16
      %v2653 = vrot.slane %v2651, 1
      %v2654 = vor.u32 %v2649, %v2653
      %v2656 = vshll.u32 %v2544, 16
      %v2658 = vrot.slane %v2656, 1
      %v2659 = vsel %vm960, %v2654, %v2658
      %v2660 = vshrl.u32 %v2544, 16
      %v2662 = vor.u32 %v2660, %v2658
      %v2664 = vshrl.u32 %v2545, 16
      %v2666 = vshll.u32 %v2545, 16
      %v2668 = vrot.slane %v2666, 1
      %v2669 = vor.u32 %v2664, %v2668
      %v2671 = vshll.u32 %v2546, 16
      %v2673 = vrot.slane %v2671, 1
      %v2674 = vsel %vm960, %v2669, %v2673
      %v2675 = vshrl.u32 %v2546, 16
      %v2677 = vor.u32 %v2675, %v2673
      %v2679 = vshrl.u32 %v2547, 16
      %v2681 = vshll.u32 %v2547, 16
      %v2683 = vrot.slane %v2681, 1
      %v2684 = vor.u32 %v2679, %v2683
      %v2686 = vshll.u32 %v2548, 16
      %v2688 = vrot.slane %v2686, 1
      %v2689 = vsel %vm960, %v2684, %v2688
      %v2690 = vshrl.u32 %v2548, 16
      %v2692 = vor.u32 %v2690, %v2688
      %v2694 = vshrl.u32 %v2549, 16
      %v2696 = vshll.u32 %v2549, 16
      %v2698 = vrot.slane %v2696, 1
      %v2699 = vor.u32 %v2694, %v2698
      %v2701 = vshll.u32 %v2550, 16
      %v2703 = vrot.slane %v2701, 1
      %v2704 = vsel %vm960, %v2699, %v2703
      %v2705 = vshrl.u32 %v2550, 16
      %v2707 = vor.u32 %v2705, %v2703
      %v2709 = vshrl.u32 %v2551, 16
      %v2711 = vshll.u32 %v2551, 16
      %v2713 = vrot.slane %v2711, 1
      %v2714 = vor.u32 %v2709, %v2713
      %v2716 = vshll.u32 %v2552, 16
      %v2718 = vrot.slane %v2716, 1
      %v2719 = vsel %vm960, %v2714, %v2718
      %v2720 = vshrl.u32 %v2552, 16
      %v2722 = vor.u32 %v2720, %v2718
      %v2724 = vshrl.u32 %v2553, 16
      %v2726 = vshll.u32 %v2553, 16
      %v2728 = vrot.slane %v2726, 1
      %v2729 = vor.u32 %v2724, %v2728
      %v2731 = vshll.u32 %v2554, 16
      %v2733 = vrot.slane %v2731, 1
      %v2734 = vsel %vm960, %v2729, %v2733
      %v2735 = vshrl.u32 %v2554, 16
      %v2737 = vor.u32 %v2735, %v2733
      %v2739 = vshrl.u32 %v2555, 16
      %v2741 = vshll.u32 %v2555, 16
      %v2743 = vrot.slane %v2741, 1
      %v2744 = vor.u32 %v2739, %v2743
      %v2746 = vshll.u32 %v2556, 16
      %v2748 = vrot.slane %v2746, 1
      %v2749 = vsel %vm960, %v2744, %v2748
      %v2750 = vshrl.u32 %v2556, 16
      %v2752 = vor.u32 %v2750, %v2748
      %v2754 = vshrl.u32 %v2557, 16
      %v2756 = vshll.u32 %v2557, 16
      %v2758 = vrot.slane %v2756, 1
      %v2759 = vor.u32 %v2754, %v2758
      %v2761 = vshll.u32 %v2558, 16
      %v2763 = vrot.slane %v2761, 1
      %v2764 = vsel %vm960, %v2759, %v2763
      %v2765 = vshrl.u32 %v2558, 16
      %v2767 = vor.u32 %v2765, %v2763
      %v2769 = vshrl.u32 %v2559, 16
      %v2771 = vshll.u32 %v2559, 16
      %v2773 = vrot.slane %v2771, 1
      %v2774 = vor.u32 %v2769, %v2773
      %v2776 = vshll.u32 %v2560, 16
      %v2778 = vrot.slane %v2776, 1
      %v2779 = vsel %vm960, %v2774, %v2778
      %v2780 = vshrl.u32 %v2560, 16
      %v2782 = vor.u32 %v2780, %v2778
      %v2784 = vshrl.u32 %v2561, 16
      %v2786 = vshll.u32 %v2561, 16
      %v2788 = vrot.slane %v2786, 1
      %v2789 = vor.u32 %v2784, %v2788
      %v2791 = vshll.u32 %v2562, 16
      %v2793 = vrot.slane %v2791, 1
      %v2794 = vsel %vm960, %v2789, %v2793
      %v2795 = vshrl.u32 %v2562, 16
      %v2797 = vor.u32 %v2795, %v2793
      %v2799 = vshrl.u32 %v2563, 16
      %v2801 = vshll.u32 %v2563, 16
      %v2803 = vrot.slane %v2801, 1
      %v2804 = vor.u32 %v2799, %v2803
      %v2806 = vshll.u32 %v2564, 16
      %v2808 = vrot.slane %v2806, 1
      %v2809 = vsel %vm960, %v2804, %v2808
      %v2810 = vshrl.u32 %v2564, 16
      %v2812 = vor.u32 %v2810, %v2808
      %v2814 = vshrl.u32 %v2565, 16
      %v2816 = vshll.u32 %v2565, 16
      %v2818 = vrot.slane %v2816, 1
      %v2819 = vor.u32 %v2814, %v2818
      %v2821 = vshll.u32 %v2566, 16
      %v2823 = vrot.slane %v2821, 1
      %v2824 = vsel %vm960, %v2819, %v2823
      %v2825 = vshrl.u32 %v2566, 16
      %v2827 = vor.u32 %v2825, %v2823
      %v2829 = vshrl.u32 %v2567, 16
      %v2831 = vshll.u32 %v2567, 16
      %v2833 = vrot.slane %v2831, 1
      %v2834 = vor.u32 %v2829, %v2833
      %v2836 = vshll.u32 %v2568, 16
      %v2838 = vrot.slane %v2836, 1
      %v2839 = vsel %vm960, %v2834, %v2838
      %v2840 = vshrl.u32 %v2568, 16
      %v2842 = vor.u32 %v2840, %v2838
      %v2844 = vshrl.u32 %v2569, 16
      %v2846 = vshll.u32 %v2569, 16
      %v2848 = vrot.slane %v2846, 1
      %v2849 = vor.u32 %v2844, %v2848
      %v2851 = vshll.u32 %v2570, 16
      %v2853 = vrot.slane %v2851, 1
      %v2854 = vsel %vm960, %v2849, %v2853
      %v2855 = vshrl.u32 %v2570, 16
      %v2857 = vor.u32 %v2855, %v2853
      %v2859 = vshrl.u32 %v2571, 16
      %v2861 = vshll.u32 %v2571, 16
      %v2863 = vrot.slane %v2861, 1
      %v2864 = vor.u32 %v2859, %v2863
      %v2866 = vshll.u32 %v2572, 16
      %v2868 = vrot.slane %v2866, 1
      %v2869 = vsel %vm960, %v2864, %v2868
      %v2870 = vshrl.u32 %v2572, 16
      %v2872 = vor.u32 %v2870, %v2868
      %v2913 = vmax.bf16 %v2497, %v2584
      %v2914 = vmax.bf16 %v2498, %v2587
      %v2915 = vmax.bf16 %v2535, %v2599
      %v2916 = vmax.bf16 %v2536, %v2602
      %v2917 = vmax.bf16 %v2537, %v2614
      %v2918 = vmax.bf16 %v2538, %v2617
      %v2919 = vmax.bf16 %v2539, %v2629
      %v2920 = vmax.bf16 %v2540, %v2632
      %v2921 = vmax.bf16 %v2541, %v2644
      %v2922 = vmax.bf16 %v2542, %v2647
      %v2923 = vmax.bf16 %v2543, %v2659
      %v2924 = vmax.bf16 %v2544, %v2662
      %v2925 = vmax.bf16 %v2545, %v2674
      %v2926 = vmax.bf16 %v2546, %v2677
      %v2927 = vmax.bf16 %v2547, %v2689
      %v2928 = vmax.bf16 %v2548, %v2692
      %v2929 = vmax.bf16 %v2549, %v2704
      %v2930 = vmax.bf16 %v2550, %v2707
      %v2931 = vmax.bf16 %v2551, %v2719
      %v2932 = vmax.bf16 %v2552, %v2722
      %v2933 = vmax.bf16 %v2553, %v2734
      %v2934 = vmax.bf16 %v2554, %v2737
      %v2935 = vmax.bf16 %v2555, %v2749
      %v2936 = vmax.bf16 %v2556, %v2752
      %v2937 = vmax.bf16 %v2557, %v2764
      %v2938 = vmax.bf16 %v2558, %v2767
      %v2939 = vmax.bf16 %v2559, %v2779
      %v2940 = vmax.bf16 %v2560, %v2782
      %v2941 = vmax.bf16 %v2561, %v2794
      %v2942 = vmax.bf16 %v2562, %v2797
      %v2943 = vmax.bf16 %v2563, %v2809
      %v2944 = vmax.bf16 %v2564, %v2812
      %v2945 = vmax.bf16 %v2565, %v2824
      %v2946 = vmax.bf16 %v2566, %v2827
      %v2947 = vmax.bf16 %v2567, %v2839
      %v2948 = vmax.bf16 %v2568, %v2842
      %v2949 = vmax.bf16 %v2569, %v2854
      %v2950 = vmax.bf16 %v2570, %v2857
      %v2951 = vmax.bf16 %v2571, %v2869
      %v2952 = vmax.bf16 %v2572, %v2872
      %v2993 = vrot.slane %v2497, 1
      %v2994 = vrot.slane %v2498, 1
      %v2995 = vsel %vm1387, %v2993, %v2994
      %v2996 = vrot.slane %v2535, 1
      %v2997 = vrot.slane %v2536, 1
      %v2998 = vsel %vm1387, %v2996, %v2997
      %v2999 = vrot.slane %v2537, 1
      %v3000 = vrot.slane %v2538, 1
      %v3001 = vsel %vm1387, %v2999, %v3000
      %v3002 = vrot.slane %v2539, 1
      %v3003 = vrot.slane %v2540, 1
      %v3004 = vsel %vm1387, %v3002, %v3003
      %v3005 = vrot.slane %v2541, 1
      %v3006 = vrot.slane %v2542, 1
      %v3007 = vsel %vm1387, %v3005, %v3006
      %v3008 = vrot.slane %v2543, 1
      %v3009 = vrot.slane %v2544, 1
      %v3010 = vsel %vm1387, %v3008, %v3009
      %v3011 = vrot.slane %v2545, 1
      %v3012 = vrot.slane %v2546, 1
      %v3013 = vsel %vm1387, %v3011, %v3012
      %v3014 = vrot.slane %v2547, 1
      %v3015 = vrot.slane %v2548, 1
      %v3016 = vsel %vm1387, %v3014, %v3015
      %v3017 = vrot.slane %v2549, 1
      %v3018 = vrot.slane %v2550, 1
      %v3019 = vsel %vm1387, %v3017, %v3018
      %v3020 = vrot.slane %v2551, 1
      %v3021 = vrot.slane %v2552, 1
      %v3022 = vsel %vm1387, %v3020, %v3021
      %v3023 = vrot.slane %v2553, 1
      %v3024 = vrot.slane %v2554, 1
      %v3025 = vsel %vm1387, %v3023, %v3024
      %v3026 = vrot.slane %v2555, 1
      %v3027 = vrot.slane %v2556, 1
      %v3028 = vsel %vm1387, %v3026, %v3027
      %v3029 = vrot.slane %v2557, 1
      %v3030 = vrot.slane %v2558, 1
      %v3031 = vsel %vm1387, %v3029, %v3030
      %v3032 = vrot.slane %v2559, 1
      %v3033 = vrot.slane %v2560, 1
      %v3034 = vsel %vm1387, %v3032, %v3033
      %v3035 = vrot.slane %v2561, 1
      %v3036 = vrot.slane %v2562, 1
      %v3037 = vsel %vm1387, %v3035, %v3036
      %v3038 = vrot.slane %v2563, 1
      %v3039 = vrot.slane %v2564, 1
      %v3040 = vsel %vm1387, %v3038, %v3039
      %v3041 = vrot.slane %v2565, 1
      %v3042 = vrot.slane %v2566, 1
      %v3043 = vsel %vm1387, %v3041, %v3042
      %v3044 = vrot.slane %v2567, 1
      %v3045 = vrot.slane %v2568, 1
      %v3046 = vsel %vm1387, %v3044, %v3045
      %v3047 = vrot.slane %v2569, 1
      %v3048 = vrot.slane %v2570, 1
      %v3049 = vsel %vm1387, %v3047, %v3048
      %v3050 = vrot.slane %v2571, 1
      %v3051 = vrot.slane %v2572, 1
      %v3052 = vsel %vm1387, %v3050, %v3051
      %v3093 = vmax.bf16 %v2913, %v2995
      %v3094 = vmax.bf16 %v2914, %v2994
      %v3095 = vmax.bf16 %v2915, %v2998
      %v3096 = vmax.bf16 %v2916, %v2997
      %v3097 = vmax.bf16 %v2917, %v3001
      %v3098 = vmax.bf16 %v2918, %v3000
      %v3099 = vmax.bf16 %v2919, %v3004
      %v3100 = vmax.bf16 %v2920, %v3003
      %v3101 = vmax.bf16 %v2921, %v3007
      %v3102 = vmax.bf16 %v2922, %v3006
      %v3103 = vmax.bf16 %v2923, %v3010
      %v3104 = vmax.bf16 %v2924, %v3009
      %v3105 = vmax.bf16 %v2925, %v3013
      %v3106 = vmax.bf16 %v2926, %v3012
      %v3107 = vmax.bf16 %v2927, %v3016
      %v3108 = vmax.bf16 %v2928, %v3015
      %v3109 = vmax.bf16 %v2929, %v3019
      %v3110 = vmax.bf16 %v2930, %v3018
      %v3111 = vmax.bf16 %v2931, %v3022
      %v3112 = vmax.bf16 %v2932, %v3021
      %v3113 = vmax.bf16 %v2933, %v3025
      %v3114 = vmax.bf16 %v2934, %v3024
      %v3115 = vmax.bf16 %v2935, %v3028
      %v3116 = vmax.bf16 %v2936, %v3027
      %v3117 = vmax.bf16 %v2937, %v3031
      %v3118 = vmax.bf16 %v2938, %v3030
      %v3119 = vmax.bf16 %v2939, %v3034
      %v3120 = vmax.bf16 %v2940, %v3033
      %v3121 = vmax.bf16 %v2941, %v3037
      %v3122 = vmax.bf16 %v2942, %v3036
      %v3123 = vmax.bf16 %v2943, %v3040
      %v3124 = vmax.bf16 %v2944, %v3039
      %v3125 = vmax.bf16 %v2945, %v3043
      %v3126 = vmax.bf16 %v2946, %v3042
      %v3127 = vmax.bf16 %v2947, %v3046
      %v3128 = vmax.bf16 %v2948, %v3045
      %v3129 = vmax.bf16 %v2949, %v3049
      %v3130 = vmax.bf16 %v2950, %v3048
      %v3131 = vmax.bf16 %v2951, %v3052
      %v3132 = vmax.bf16 %v2952, %v3051
      %v3133 = vrot.slane %v2574, 1
      %v3134 = vrot.slane %v2576, 2
      %v3135 = vor.u32 %v3133, %v3134
      %v3136 = vrot.slane %v2585, 1
      %v3137 = vrot.slane %v2581, 2
      %v3138 = vor.u32 %v3136, %v3137
      %v3139 = vsel %vm1534, %v3135, %v3138
      %v3140 = vrot.slane %v2589, 1
      %v3141 = vrot.slane %v2591, 2
      %v3142 = vor.u32 %v3140, %v3141
      %v3143 = vrot.slane %v2600, 1
      %v3144 = vrot.slane %v2596, 2
      %v3145 = vor.u32 %v3143, %v3144
      %v3146 = vsel %vm1534, %v3142, %v3145
      %v3147 = vrot.slane %v2604, 1
      %v3148 = vrot.slane %v2606, 2
      %v3149 = vor.u32 %v3147, %v3148
      %v3150 = vrot.slane %v2615, 1
      %v3151 = vrot.slane %v2611, 2
      %v3152 = vor.u32 %v3150, %v3151
      %v3153 = vsel %vm1534, %v3149, %v3152
      %v3154 = vrot.slane %v2619, 1
      %v3155 = vrot.slane %v2621, 2
      %v3156 = vor.u32 %v3154, %v3155
      %v3157 = vrot.slane %v2630, 1
      %v3158 = vrot.slane %v2626, 2
      %v3159 = vor.u32 %v3157, %v3158
      %v3160 = vsel %vm1534, %v3156, %v3159
      %v3161 = vrot.slane %v2634, 1
      %v3162 = vrot.slane %v2636, 2
      %v3163 = vor.u32 %v3161, %v3162
      %v3164 = vrot.slane %v2645, 1
      %v3165 = vrot.slane %v2641, 2
      %v3166 = vor.u32 %v3164, %v3165
      %v3167 = vsel %vm1534, %v3163, %v3166
      %v3168 = vrot.slane %v2649, 1
      %v3169 = vrot.slane %v2651, 2
      %v3170 = vor.u32 %v3168, %v3169
      %v3171 = vrot.slane %v2660, 1
      %v3172 = vrot.slane %v2656, 2
      %v3173 = vor.u32 %v3171, %v3172
      %v3174 = vsel %vm1534, %v3170, %v3173
      %v3175 = vrot.slane %v2664, 1
      %v3176 = vrot.slane %v2666, 2
      %v3177 = vor.u32 %v3175, %v3176
      %v3178 = vrot.slane %v2675, 1
      %v3179 = vrot.slane %v2671, 2
      %v3180 = vor.u32 %v3178, %v3179
      %v3181 = vsel %vm1534, %v3177, %v3180
      %v3182 = vrot.slane %v2679, 1
      %v3183 = vrot.slane %v2681, 2
      %v3184 = vor.u32 %v3182, %v3183
      %v3185 = vrot.slane %v2690, 1
      %v3186 = vrot.slane %v2686, 2
      %v3187 = vor.u32 %v3185, %v3186
      %v3188 = vsel %vm1534, %v3184, %v3187
      %v3189 = vrot.slane %v2694, 1
      %v3190 = vrot.slane %v2696, 2
      %v3191 = vor.u32 %v3189, %v3190
      %v3192 = vrot.slane %v2705, 1
      %v3193 = vrot.slane %v2701, 2
      %v3194 = vor.u32 %v3192, %v3193
      %v3195 = vsel %vm1534, %v3191, %v3194
      %v3196 = vrot.slane %v2709, 1
      %v3197 = vrot.slane %v2711, 2
      %v3198 = vor.u32 %v3196, %v3197
      %v3199 = vrot.slane %v2720, 1
      %v3200 = vrot.slane %v2716, 2
      %v3201 = vor.u32 %v3199, %v3200
      %v3202 = vsel %vm1534, %v3198, %v3201
      %v3203 = vrot.slane %v2724, 1
      %v3204 = vrot.slane %v2726, 2
      %v3205 = vor.u32 %v3203, %v3204
      %v3206 = vrot.slane %v2735, 1
      %v3207 = vrot.slane %v2731, 2
      %v3208 = vor.u32 %v3206, %v3207
      %v3209 = vsel %vm1534, %v3205, %v3208
      %v3210 = vrot.slane %v2739, 1
      %v3211 = vrot.slane %v2741, 2
      %v3212 = vor.u32 %v3210, %v3211
      %v3213 = vrot.slane %v2750, 1
      %v3214 = vrot.slane %v2746, 2
      %v3215 = vor.u32 %v3213, %v3214
      %v3216 = vsel %vm1534, %v3212, %v3215
      %v3217 = vrot.slane %v2754, 1
      %v3218 = vrot.slane %v2756, 2
      %v3219 = vor.u32 %v3217, %v3218
      %v3220 = vrot.slane %v2765, 1
      %v3221 = vrot.slane %v2761, 2
      %v3222 = vor.u32 %v3220, %v3221
      %v3223 = vsel %vm1534, %v3219, %v3222
      %v3224 = vrot.slane %v2769, 1
      %v3225 = vrot.slane %v2771, 2
      %v3226 = vor.u32 %v3224, %v3225
      %v3227 = vrot.slane %v2780, 1
      %v3228 = vrot.slane %v2776, 2
      %v3229 = vor.u32 %v3227, %v3228
      %v3230 = vsel %vm1534, %v3226, %v3229
      %v3231 = vrot.slane %v2784, 1
      %v3232 = vrot.slane %v2786, 2
      %v3233 = vor.u32 %v3231, %v3232
      %v3234 = vrot.slane %v2795, 1
      %v3235 = vrot.slane %v2791, 2
      %v3236 = vor.u32 %v3234, %v3235
      %v3237 = vsel %vm1534, %v3233, %v3236
      %v3238 = vrot.slane %v2799, 1
      %v3239 = vrot.slane %v2801, 2
      %v3240 = vor.u32 %v3238, %v3239
      %v3241 = vrot.slane %v2810, 1
      %v3242 = vrot.slane %v2806, 2
      %v3243 = vor.u32 %v3241, %v3242
      %v3244 = vsel %vm1534, %v3240, %v3243
      %v3245 = vrot.slane %v2814, 1
      %v3246 = vrot.slane %v2816, 2
      %v3247 = vor.u32 %v3245, %v3246
      %v3248 = vrot.slane %v2825, 1
      %v3249 = vrot.slane %v2821, 2
      %v3250 = vor.u32 %v3248, %v3249
      %v3251 = vsel %vm1534, %v3247, %v3250
      %v3252 = vrot.slane %v2829, 1
      %v3253 = vrot.slane %v2831, 2
      %v3254 = vor.u32 %v3252, %v3253
      %v3255 = vrot.slane %v2840, 1
      %v3256 = vrot.slane %v2836, 2
      %v3257 = vor.u32 %v3255, %v3256
      %v3258 = vsel %vm1534, %v3254, %v3257
      %v3259 = vrot.slane %v2844, 1
      %v3260 = vrot.slane %v2846, 2
      %v3261 = vor.u32 %v3259, %v3260
      %v3262 = vrot.slane %v2855, 1
      %v3263 = vrot.slane %v2851, 2
      %v3264 = vor.u32 %v3262, %v3263
      %v3265 = vsel %vm1534, %v3261, %v3264
      %v3266 = vrot.slane %v2859, 1
      %v3267 = vrot.slane %v2861, 2
      %v3268 = vor.u32 %v3266, %v3267
      %v3269 = vrot.slane %v2870, 1
      %v3270 = vrot.slane %v2866, 2
      %v3271 = vor.u32 %v3269, %v3270
      %v3272 = vsel %vm1534, %v3268, %v3271
      %v3313 = vmax.bf16 %v3093, %v3139
      %v3314 = vmax.bf16 %v3094, %v3138
      %v3315 = vmax.bf16 %v3095, %v3146
      %v3316 = vmax.bf16 %v3096, %v3145
      %v3317 = vmax.bf16 %v3097, %v3153
      %v3318 = vmax.bf16 %v3098, %v3152
      %v3319 = vmax.bf16 %v3099, %v3160
      %v3320 = vmax.bf16 %v3100, %v3159
      %v3321 = vmax.bf16 %v3101, %v3167
      %v3322 = vmax.bf16 %v3102, %v3166
      %v3323 = vmax.bf16 %v3103, %v3174
      %v3324 = vmax.bf16 %v3104, %v3173
      %v3325 = vmax.bf16 %v3105, %v3181
      %v3326 = vmax.bf16 %v3106, %v3180
      %v3327 = vmax.bf16 %v3107, %v3188
      %v3328 = vmax.bf16 %v3108, %v3187
      %v3329 = vmax.bf16 %v3109, %v3195
      %v3330 = vmax.bf16 %v3110, %v3194
      %v3331 = vmax.bf16 %v3111, %v3202
      %v3332 = vmax.bf16 %v3112, %v3201
      %v3333 = vmax.bf16 %v3113, %v3209
      %v3334 = vmax.bf16 %v3114, %v3208
      %v3335 = vmax.bf16 %v3115, %v3216
      %v3336 = vmax.bf16 %v3116, %v3215
      %v3337 = vmax.bf16 %v3117, %v3223
      %v3338 = vmax.bf16 %v3118, %v3222
      %v3339 = vmax.bf16 %v3119, %v3230
      %v3340 = vmax.bf16 %v3120, %v3229
      %v3341 = vmax.bf16 %v3121, %v3237
      %v3342 = vmax.bf16 %v3122, %v3236
      %v3343 = vmax.bf16 %v3123, %v3244
      %v3344 = vmax.bf16 %v3124, %v3243
      %v3345 = vmax.bf16 %v3125, %v3251
      %v3346 = vmax.bf16 %v3126, %v3250
      %v3347 = vmax.bf16 %v3127, %v3258
      %v3348 = vmax.bf16 %v3128, %v3257
      %v3349 = vmax.bf16 %v3129, %v3265
      %v3350 = vmax.bf16 %v3130, %v3264
      %v3351 = vmax.bf16 %v3131, %v3272
      %v3352 = vmax.bf16 %v3132, %v3271
      %v3353 = vrot.slane %v2497, 2
      %v3354 = vrot.slane %v2498, 2
      %v3355 = vsel %vm1763, %v3353, %v3354
      %v3356 = vrot.slane %v2535, 2
      %v3357 = vrot.slane %v2536, 2
      %v3358 = vsel %vm1763, %v3356, %v3357
      %v3359 = vrot.slane %v2537, 2
      %v3360 = vrot.slane %v2538, 2
      %v3361 = vsel %vm1763, %v3359, %v3360
      %v3362 = vrot.slane %v2539, 2
      %v3363 = vrot.slane %v2540, 2
      %v3364 = vsel %vm1763, %v3362, %v3363
      %v3365 = vrot.slane %v2541, 2
      %v3366 = vrot.slane %v2542, 2
      %v3367 = vsel %vm1763, %v3365, %v3366
      %v3368 = vrot.slane %v2543, 2
      %v3369 = vrot.slane %v2544, 2
      %v3370 = vsel %vm1763, %v3368, %v3369
      %v3371 = vrot.slane %v2545, 2
      %v3372 = vrot.slane %v2546, 2
      %v3373 = vsel %vm1763, %v3371, %v3372
      %v3374 = vrot.slane %v2547, 2
      %v3375 = vrot.slane %v2548, 2
      %v3376 = vsel %vm1763, %v3374, %v3375
      %v3377 = vrot.slane %v2549, 2
      %v3378 = vrot.slane %v2550, 2
      %v3379 = vsel %vm1763, %v3377, %v3378
      %v3380 = vrot.slane %v2551, 2
      %v3381 = vrot.slane %v2552, 2
      %v3382 = vsel %vm1763, %v3380, %v3381
      %v3383 = vrot.slane %v2553, 2
      %v3384 = vrot.slane %v2554, 2
      %v3385 = vsel %vm1763, %v3383, %v3384
      %v3386 = vrot.slane %v2555, 2
      %v3387 = vrot.slane %v2556, 2
      %v3388 = vsel %vm1763, %v3386, %v3387
      %v3389 = vrot.slane %v2557, 2
      %v3390 = vrot.slane %v2558, 2
      %v3391 = vsel %vm1763, %v3389, %v3390
      %v3392 = vrot.slane %v2559, 2
      %v3393 = vrot.slane %v2560, 2
      %v3394 = vsel %vm1763, %v3392, %v3393
      %v3395 = vrot.slane %v2561, 2
      %v3396 = vrot.slane %v2562, 2
      %v3397 = vsel %vm1763, %v3395, %v3396
      %v3398 = vrot.slane %v2563, 2
      %v3399 = vrot.slane %v2564, 2
      %v3400 = vsel %vm1763, %v3398, %v3399
      %v3401 = vrot.slane %v2565, 2
      %v3402 = vrot.slane %v2566, 2
      %v3403 = vsel %vm1763, %v3401, %v3402
      %v3404 = vrot.slane %v2567, 2
      %v3405 = vrot.slane %v2568, 2
      %v3406 = vsel %vm1763, %v3404, %v3405
      %v3407 = vrot.slane %v2569, 2
      %v3408 = vrot.slane %v2570, 2
      %v3409 = vsel %vm1763, %v3407, %v3408
      %v3410 = vrot.slane %v2571, 2
      %v3411 = vrot.slane %v2572, 2
      %v3412 = vsel %vm1763, %v3410, %v3411
      %v3453 = vmax.bf16 %v3313, %v3355
      %v3454 = vmax.bf16 %v3314, %v3354
      %v3455 = vmax.bf16 %v3315, %v3358
      %v3456 = vmax.bf16 %v3316, %v3357
      %v3457 = vmax.bf16 %v3317, %v3361
      %v3458 = vmax.bf16 %v3318, %v3360
      %v3459 = vmax.bf16 %v3319, %v3364
      %v3460 = vmax.bf16 %v3320, %v3363
      %v3461 = vmax.bf16 %v3321, %v3367
      %v3462 = vmax.bf16 %v3322, %v3366
      %v3463 = vmax.bf16 %v3323, %v3370
      %v3464 = vmax.bf16 %v3324, %v3369
      %v3465 = vmax.bf16 %v3325, %v3373
      %v3466 = vmax.bf16 %v3326, %v3372
      %v3467 = vmax.bf16 %v3327, %v3376
      %v3468 = vmax.bf16 %v3328, %v3375
      %v3469 = vmax.bf16 %v3329, %v3379
      %v3470 = vmax.bf16 %v3330, %v3378
      %v3471 = vmax.bf16 %v3331, %v3382
      %v3472 = vmax.bf16 %v3332, %v3381
      %v3473 = vmax.bf16 %v3333, %v3385
      %v3474 = vmax.bf16 %v3334, %v3384
      %v3475 = vmax.bf16 %v3335, %v3388
      %v3476 = vmax.bf16 %v3336, %v3387
      %v3477 = vmax.bf16 %v3337, %v3391
      %v3478 = vmax.bf16 %v3338, %v3390
      %v3479 = vmax.bf16 %v3339, %v3394
      %v3480 = vmax.bf16 %v3340, %v3393
      %v3481 = vmax.bf16 %v3341, %v3397
      %v3482 = vmax.bf16 %v3342, %v3396
      %v3483 = vmax.bf16 %v3343, %v3400
      %v3484 = vmax.bf16 %v3344, %v3399
      %v3485 = vmax.bf16 %v3345, %v3403
      %v3486 = vmax.bf16 %v3346, %v3402
      %v3487 = vmax.bf16 %v3347, %v3406
      %v3488 = vmax.bf16 %v3348, %v3405
      %v3489 = vmax.bf16 %v3349, %v3409
      %v3490 = vmax.bf16 %v3350, %v3408
      %v3491 = vmax.bf16 %v3351, %v3412
      %v3492 = vmax.bf16 %v3352, %v3411
      %v3525 = vrot.slane %v3457, 1
      %v3526 = vrot.slane %v3458, 1
      %v3527 = vsel %vm1387, %v3525, %v3526
      %v3528 = vrot.slane %v3459, 1
      %v3529 = vrot.slane %v3460, 1
      %v3530 = vsel %vm1387, %v3528, %v3529
      %v3531 = vrot.slane %v3461, 1
      %v3532 = vrot.slane %v3462, 1
      %v3533 = vsel %vm1387, %v3531, %v3532
      %v3534 = vrot.slane %v3463, 1
      %v3535 = vrot.slane %v3464, 1
      %v3536 = vsel %vm1387, %v3534, %v3535
      %v3537 = vrot.slane %v3465, 1
      %v3538 = vrot.slane %v3466, 1
      %v3539 = vsel %vm1387, %v3537, %v3538
      %v3540 = vrot.slane %v3467, 1
      %v3541 = vrot.slane %v3468, 1
      %v3542 = vsel %vm1387, %v3540, %v3541
      %v3543 = vrot.slane %v3469, 1
      %v3544 = vrot.slane %v3470, 1
      %v3545 = vsel %vm1387, %v3543, %v3544
      %v3546 = vrot.slane %v3471, 1
      %v3547 = vrot.slane %v3472, 1
      %v3548 = vsel %vm1387, %v3546, %v3547
      %v3549 = vrot.slane %v3473, 1
      %v3550 = vrot.slane %v3474, 1
      %v3551 = vsel %vm1387, %v3549, %v3550
      %v3552 = vrot.slane %v3475, 1
      %v3553 = vrot.slane %v3476, 1
      %v3554 = vsel %vm1387, %v3552, %v3553
      %v3555 = vrot.slane %v3477, 1
      %v3556 = vrot.slane %v3478, 1
      %v3557 = vsel %vm1387, %v3555, %v3556
      %v3558 = vrot.slane %v3479, 1
      %v3559 = vrot.slane %v3480, 1
      %v3560 = vsel %vm1387, %v3558, %v3559
      %v3561 = vrot.slane %v3481, 1
      %v3562 = vrot.slane %v3482, 1
      %v3563 = vsel %vm1387, %v3561, %v3562
      %v3564 = vrot.slane %v3483, 1
      %v3565 = vrot.slane %v3484, 1
      %v3566 = vsel %vm1387, %v3564, %v3565
      %v3567 = vrot.slane %v3485, 1
      %v3568 = vrot.slane %v3486, 1
      %v3569 = vsel %vm1387, %v3567, %v3568
      %v3570 = vrot.slane %v3487, 1
      %v3571 = vrot.slane %v3488, 1
      %v3572 = vsel %vm1387, %v3570, %v3571
      %v3573 = vld [vmem:[%s3 + $0x4] sm:$0x3]
      %v3575 = vsel %vm1995, %v3527, 0
      %v3578 = vsel %vm1995, %v3530, 0
      %v3581 = vsel %vm1995, %v3533, 0
      %v3584 = vsel %vm1995, %v3536, 0
      %v3587 = vsel %vm1995, %v3539, 0
      %v3590 = vsel %vm1995, %v3542, 0
      %v3593 = vsel %vm1995, %v3545, 0
      %v3596 = vsel %vm1995, %v3548, 0
      %v3599 = vsel %vm1995, %v3551, 0
      %v3602 = vsel %vm1995, %v3554, 0
      %v3605 = vsel %vm1995, %v3557, 0
      %v3608 = vsel %vm1995, %v3560, 0
      %v3611 = vsel %vm1995, %v3563, 0
      %v3614 = vsel %vm1995, %v3566, 0
      %v3617 = vsel %vm1995, %v3569, 0
      %v3620 = vsel %vm1995, %v3572, 0
      %v3623 = vsel %vm2044, %v3573, 0
      %3625 = vmatprep.subr.bf16.mxu0 0
      %3626 = vmatpush1.bf16.msra.mxu0 %v3623
      %3627 = vmatprep.subr.bf16.mxu0 0
      %3628 = vmatpush1.bf16.msra.mxu0 0
      %3629 = vmatprep.subr.bf16.mxu0 0
      %3630 = vmatpush1.bf16.msra.mxu0 0
      %3631 = vmatprep.subr.bf16.mxu0 0
      %3632 = vmatpush1.bf16.msra.mxu0 0
      %3633 = vmatprep.subr.bf16.mxu0 0
      %3634 = vmatpush1.bf16.msra.mxu0 0
      %3635 = vmatprep.subr.bf16.mxu0 0
      %3636 = vmatpush1.bf16.msra.mxu0 0
      %3637 = vmatprep.subr.bf16.mxu0 0
      %3638 = vmatpush1.bf16.msra.mxu0 0
      %3639 = vmatprep.subr.bf16.mxu0 0
      %3640 = vmatpush1.bf16.msra.mxu0 0
      %3641 = vmatprep.subr.bf16.mxu0 0
      %3642 = vmatpush1.bf16.msra.mxu0 0
      %3643 = vmatprep.subr.bf16.mxu0 0
      %3644 = vmatpush1.bf16.msra.mxu0 0
      %3645 = vmatprep.subr.bf16.mxu0 0
      %3646 = vmatpush1.bf16.msra.mxu0 0
      %3647 = vmatprep.subr.bf16.mxu0 0
      %3648 = vmatpush1.bf16.msra.mxu0 0
      %3649 = vmatprep.subr.bf16.mxu0 0
      %3650 = vmatpush1.bf16.msra.mxu0 0
      %3651 = vmatprep.subr.bf16.mxu0 0
      %3652 = vmatpush1.bf16.msra.mxu0 0
      %3653 = vmatprep.subr.bf16.mxu0 0
      %3654 = vmatpush1.bf16.msra.mxu0 0
      %3655 = vmatprep.subr.bf16.mxu0 0
      %3656 = vmatpush1.bf16.msra.mxu0 0
      %3657 = vmatprep.mubr.bf16.mxu0 0
      %3658 = vmatmul.mubr.bf16.gmra.mrb[0].mxu0 %v3575
      %v3659 = vpop.f32.mrb[0].mxu0
      %v3660 = vadd.f32 0.0, %v3659
      %v3661 = vpop.f32.mrb[0].mxu0
      %v3662 = vpop.f32.mrb[0].mxu0
      %v3663 = vadd.f32 0.0, %v3662
      %v3664 = vpop.f32.mrb[0].mxu0
      %3665 = vmatprep.mubr.bf16.mxu0 0
      %3666 = vmatmul.mubr.bf16.gmra.mrb[0].mxu0 %v3578
      %v3667 = vpop.f32.mrb[0].mxu0
      %v3668 = vadd.f32 0.0, %v3667
      %v3669 = vpop.f32.mrb[0].mxu0
      %v3670 = vpop.f32.mrb[0].mxu0
      %v3671 = vadd.f32 0.0, %v3670
      %v3672 = vpop.f32.mrb[0].mxu0
      %3673 = vmatprep.mubr.bf16.mxu0 0
      %3674 = vmatmul.mubr.bf16.gmra.mrb[0].mxu0 %v3581
      %v3675 = vpop.f32.mrb[0].mxu0
      %v3676 = vadd.f32 0.0, %v3675
      %v3677 = vpop.f32.mrb[0].mxu0
      %v3678 = vpop.f32.mrb[0].mxu0
      %v3679 = vadd.f32 0.0, %v3678
      %v3680 = vpop.f32.mrb[0].mxu0
      %3681 = vmatprep.mubr.bf16.mxu0 0
      %3682 = vmatmul.mubr.bf16.gmra.mrb[0].mxu0 %v3584
      %v3683 = vpop.f32.mrb[0].mxu0
      %v3684 = vadd.f32 0.0, %v3683
      %v3685 = vpop.f32.mrb[0].mxu0
      %v3686 = vpop.f32.mrb[0].mxu0
      %v3687 = vadd.f32 0.0, %v3686
      %v3688 = vpop.f32.mrb[0].mxu0
      %3689 = vmatprep.mubr.bf16.mxu0 0
      %3690 = vmatmul.mubr.bf16.gmra.mrb[0].mxu0 %v3587
      %v3691 = vpop.f32.mrb[0].mxu0
      %v3692 = vadd.f32 0.0, %v3691
      %v3693 = vpop.f32.mrb[0].mxu0
      %v3694 = vpop.f32.mrb[0].mxu0
      %v3695 = vadd.f32 0.0, %v3694
      %v3696 = vpop.f32.mrb[0].mxu0
      %3697 = vmatprep.mubr.bf16.mxu0 0
      %3698 = vmatmul.mubr.bf16.gmra.mrb[0].mxu0 %v3590
      %v3699 = vpop.f32.mrb[0].mxu0
      %v3700 = vadd.f32 0.0, %v3699
      %v3701 = vpop.f32.mrb[0].mxu0
      %v3702 = vpop.f32.mrb[0].mxu0
      %v3703 = vadd.f32 0.0, %v3702
      %v3704 = vpop.f32.mrb[0].mxu0
      %3705 = vmatprep.mubr.bf16.mxu0 0
      %3706 = vmatmul.mubr.bf16.gmra.mrb[0].mxu0 %v3593
      %v3707 = vpop.f32.mrb[0].mxu0
      %v3708 = vadd.f32 0.0, %v3707
      %v3709 = vpop.f32.mrb[0].mxu0
      %v3710 = vpop.f32.mrb[0].mxu0
      %v3711 = vadd.f32 0.0, %v3710
      %v3712 = vpop.f32.mrb[0].mxu0
      %3713 = vmatprep.mubr.bf16.mxu0 0
      %3714 = vmatmul.mubr.bf16.gmra.mrb[0].mxu0 %v3596
      %v3715 = vpop.f32.mrb[0].mxu0
      %v3716 = vadd.f32 0.0, %v3715
      %v3717 = vpop.f32.mrb[0].mxu0
      %v3718 = vpop.f32.mrb[0].mxu0
      %v3719 = vadd.f32 0.0, %v3718
      %v3720 = vpop.f32.mrb[0].mxu0
      %3721 = vmatprep.mubr.bf16.mxu0 0
      %3722 = vmatmul.mubr.bf16.gmra.mrb[0].mxu0 %v3599
      %v3723 = vpop.f32.mrb[0].mxu0
      %v3724 = vadd.f32 0.0, %v3723
      %v3725 = vpop.f32.mrb[0].mxu0
      %v3726 = vpop.f32.mrb[0].mxu0
      %v3727 = vadd.f32 0.0, %v3726
      %v3728 = vpop.f32.mrb[0].mxu0
      %3729 = vmatprep.mubr.bf16.mxu0 0
      %3730 = vmatmul.mubr.bf16.gmra.mrb[0].mxu0 %v3602
      %v3731 = vpop.f32.mrb[0].mxu0
      %v3732 = vadd.f32 0.0, %v3731
      %v3733 = vpop.f32.mrb[0].mxu0
      %v3734 = vpop.f32.mrb[0].mxu0
      %v3735 = vadd.f32 0.0, %v3734
      %v3736 = vpop.f32.mrb[0].mxu0
      %3737 = vmatprep.mubr.bf16.mxu0 0
      %3738 = vmatmul.mubr.bf16.gmra.mrb[0].mxu0 %v3605
      %v3739 = vpop.f32.mrb[0].mxu0
      %v3740 = vadd.f32 0.0, %v3739
      %v3741 = vpop.f32.mrb[0].mxu0
      %v3742 = vpop.f32.mrb[0].mxu0
      %v3743 = vadd.f32 0.0, %v3742
      %v3744 = vpop.f32.mrb[0].mxu0
      %3745 = vmatprep.mubr.bf16.mxu0 0
      %3746 = vmatmul.mubr.bf16.gmra.mrb[0].mxu0 %v3608
      %v3747 = vpop.f32.mrb[0].mxu0
      %v3748 = vadd.f32 0.0, %v3747
      %v3749 = vpop.f32.mrb[0].mxu0
      %v3750 = vpop.f32.mrb[0].mxu0
      %v3751 = vadd.f32 0.0, %v3750
      %v3752 = vpop.f32.mrb[0].mxu0
      %3753 = vmatprep.mubr.bf16.mxu0 0
      %3754 = vmatmul.mubr.bf16.gmra.mrb[0].mxu0 %v3611
      %v3755 = vpop.f32.mrb[0].mxu0
      %v3756 = vadd.f32 0.0, %v3755
      %v3757 = vpop.f32.mrb[0].mxu0
      %v3758 = vpop.f32.mrb[0].mxu0
      %v3759 = vadd.f32 0.0, %v3758
      %v3760 = vpop.f32.mrb[0].mxu0
      %3761 = vmatprep.mubr.bf16.mxu0 0
      %3762 = vmatmul.mubr.bf16.gmra.mrb[0].mxu0 %v3614
      %v3763 = vpop.f32.mrb[0].mxu0
      %v3764 = vadd.f32 0.0, %v3763
      %v3765 = vpop.f32.mrb[0].mxu0
      %v3766 = vpop.f32.mrb[0].mxu0
      %v3767 = vadd.f32 0.0, %v3766
      %v3768 = vpop.f32.mrb[0].mxu0
      %3769 = vmatprep.mubr.bf16.mxu0 0
      %3770 = vmatmul.mubr.bf16.gmra.mrb[0].mxu0 %v3617
      %v3771 = vpop.f32.mrb[0].mxu0
      %v3772 = vadd.f32 0.0, %v3771
      %v3773 = vpop.f32.mrb[0].mxu0
      %v3774 = vpop.f32.mrb[0].mxu0
      %v3775 = vadd.f32 0.0, %v3774
      %v3776 = vpop.f32.mrb[0].mxu0
      %3777 = vmatprep.mubr.bf16.mxu0 0
      %3778 = vmatmul.mubr.bf16.gmra.mrb[0].mxu0 %v3620
      %v3779 = vpop.f32.mrb[0].mxu0
      %v3780 = vadd.f32 0.0, %v3779
      %v3781 = vpop.f32.mrb[0].mxu0
      %v3782 = vpop.f32.mrb[0].mxu0
      %v3783 = vadd.f32 0.0, %v3782
      %v3784 = vpop.f32.mrb[0].mxu0
      %3785 = vdwg.mxu0
      %v3786 = vadd.f32 %v2295, %v3660
      %v3787 = vadd.f32 %v2298, %v3663
      %v3788 = vadd.f32 %v2303, %v3668
      %v3789 = vadd.f32 %v2306, %v3671
      %v3790 = vadd.f32 %v2311, %v3676
      %v3791 = vadd.f32 %v2314, %v3679
      %v3792 = vadd.f32 %v2319, %v3684
      %v3793 = vadd.f32 %v2322, %v3687
      %v3794 = vadd.f32 %v2327, %v3692
      %v3795 = vadd.f32 %v2330, %v3695
      %v3796 = vadd.f32 %v2335, %v3700
      %v3797 = vadd.f32 %v2338, %v3703
      %v3798 = vadd.f32 %v2343, %v3708
      %v3799 = vadd.f32 %v2346, %v3711
      %v3800 = vadd.f32 %v2351, %v3716
      %v3801 = vadd.f32 %v2354, %v3719
      %v3802 = vadd.f32 %v2359, %v3724
      %v3803 = vadd.f32 %v2362, %v3727
      %v3804 = vadd.f32 %v2367, %v3732
      %v3805 = vadd.f32 %v2370, %v3735
      %v3806 = vadd.f32 %v2375, %v3740
      %v3807 = vadd.f32 %v2378, %v3743
      %v3808 = vadd.f32 %v2383, %v3748
      %v3809 = vadd.f32 %v2386, %v3751
      %v3810 = vadd.f32 %v2391, %v3756
      %v3811 = vadd.f32 %v2394, %v3759
      %v3812 = vadd.f32 %v2399, %v3764
      %v3813 = vadd.f32 %v2402, %v3767
      %v3814 = vadd.f32 %v2407, %v3772
      %v3815 = vadd.f32 %v2410, %v3775
      %v3816 = vadd.f32 %v2415, %v3780
      %v3817 = vadd.f32 %v2418, %v3783
      %v3818 = vmax.bf16 %v3453, %v3455
      %v3819 = vmax.bf16 %v3454, %v3456
      %v3820 = vmax.bf16 %v3455, %v3457
      %v3821 = vmax.bf16 %v3456, %v3458
      %v3822 = vmax.bf16 %v3457, %v3459
      %v3823 = vmax.bf16 %v3458, %v3460
      %v3824 = vmax.bf16 %v3459, %v3461
      %v3825 = vmax.bf16 %v3460, %v3462
      %v3826 = vmax.bf16 %v3461, %v3463
      %v3827 = vmax.bf16 %v3462, %v3464
      %v3828 = vmax.bf16 %v3463, %v3465
      %v3829 = vmax.bf16 %v3464, %v3466
      %v3830 = vmax.bf16 %v3465, %v3467
      %v3831 = vmax.bf16 %v3466, %v3468
      %v3832 = vmax.bf16 %v3467, %v3469
      %v3833 = vmax.bf16 %v3468, %v3470
      %v3834 = vmax.bf16 %v3469, %v3471
      %v3835 = vmax.bf16 %v3470, %v3472
      %v3836 = vmax.bf16 %v3471, %v3473
      %v3837 = vmax.bf16 %v3472, %v3474
      %v3838 = vmax.bf16 %v3473, %v3475
      %v3839 = vmax.bf16 %v3474, %v3476
      %v3840 = vmax.bf16 %v3475, %v3477
      %v3841 = vmax.bf16 %v3476, %v3478
      %v3842 = vmax.bf16 %v3477, %v3479
      %v3843 = vmax.bf16 %v3478, %v3480
      %v3844 = vmax.bf16 %v3479, %v3481
      %v3845 = vmax.bf16 %v3480, %v3482
      %v3846 = vmax.bf16 %v3481, %v3483
      %v3847 = vmax.bf16 %v3482, %v3484
      %v3848 = vmax.bf16 %v3483, %v3485
      %v3849 = vmax.bf16 %v3484, %v3486
      %v3850 = vmax.bf16 %v3818, %v3457
      %v3851 = vmax.bf16 %v3819, %v3458
      %v3852 = vmax.bf16 %v3820, %v3459
      %v3853 = vmax.bf16 %v3821, %v3460
      %v3854 = vmax.bf16 %v3822, %v3461
      %v3855 = vmax.bf16 %v3823, %v3462
      %v3856 = vmax.bf16 %v3824, %v3463
      %v3857 = vmax.bf16 %v3825, %v3464
      %v3858 = vmax.bf16 %v3826, %v3465
      %v3859 = vmax.bf16 %v3827, %v3466
      %v3860 = vmax.bf16 %v3828, %v3467
      %v3861 = vmax.bf16 %v3829, %v3468
      %v3862 = vmax.bf16 %v3830, %v3469
      %v3863 = vmax.bf16 %v3831, %v3470
      %v3864 = vmax.bf16 %v3832, %v3471
      %v3865 = vmax.bf16 %v3833, %v3472
      %v3866 = vmax.bf16 %v3834, %v3473
      %v3867 = vmax.bf16 %v3835, %v3474
      %v3868 = vmax.bf16 %v3836, %v3475
      %v3869 = vmax.bf16 %v3837, %v3476
      %v3870 = vmax.bf16 %v3838, %v3477
      %v3871 = vmax.bf16 %v3839, %v3478
      %v3872 = vmax.bf16 %v3840, %v3479
      %v3873 = vmax.bf16 %v3841, %v3480
      %v3874 = vmax.bf16 %v3842, %v3481
      %v3875 = vmax.bf16 %v3843, %v3482
      %v3876 = vmax.bf16 %v3844, %v3483
      %v3877 = vmax.bf16 %v3845, %v3484
      %v3878 = vmax.bf16 %v3846, %v3485
      %v3879 = vmax.bf16 %v3847, %v3486
      %v3880 = vmax.bf16 %v3848, %v3487
      %v3881 = vmax.bf16 %v3849, %v3488
      %v3882 = vmax.bf16 %v3850, %v3459
      %v3883 = vmax.bf16 %v3851, %v3460
      %v3884 = vmax.bf16 %v3852, %v3461
      %v3885 = vmax.bf16 %v3853, %v3462
      %v3886 = vmax.bf16 %v3854, %v3463
      %v3887 = vmax.bf16 %v3855, %v3464
      %v3888 = vmax.bf16 %v3856, %v3465
      %v3889 = vmax.bf16 %v3857, %v3466
      %v3890 = vmax.bf16 %v3858, %v3467
      %v3891 = vmax.bf16 %v3859, %v3468
      %v3892 = vmax.bf16 %v3860, %v3469
      %v3893 = vmax.bf16 %v3861, %v3470
      %v3894 = vmax.bf16 %v3862, %v3471
      %v3895 = vmax.bf16 %v3863, %v3472
      %v3896 = vmax.bf16 %v3864, %v3473
      %v3897 = vmax.bf16 %v3865, %v3474
      %v3898 = vmax.bf16 %v3866, %v3475
      %v3899 = vmax.bf16 %v3867, %v3476
      %v3900 = vmax.bf16 %v3868, %v3477
      %v3901 = vmax.bf16 %v3869, %v3478
      %v3902 = vmax.bf16 %v3870, %v3479
      %v3903 = vmax.bf16 %v3871, %v3480
      %v3904 = vmax.bf16 %v3872, %v3481
      %v3905 = vmax.bf16 %v3873, %v3482
      %v3906 = vmax.bf16 %v3874, %v3483
      %v3907 = vmax.bf16 %v3875, %v3484
      %v3908 = vmax.bf16 %v3876, %v3485
      %v3909 = vmax.bf16 %v3877, %v3486
      %v3910 = vmax.bf16 %v3878, %v3487
      %v3911 = vmax.bf16 %v3879, %v3488
      %v3912 = vmax.bf16 %v3880, %v3489
      %v3913 = vmax.bf16 %v3881, %v3490
      %v3914 = vmax.bf16 %v3882, %v3461
      %v3915 = vmax.bf16 %v3883, %v3462
      %v3916 = vmax.bf16 %v3884, %v3463
      %v3917 = vmax.bf16 %v3885, %v3464
      %v3918 = vmax.bf16 %v3886, %v3465
      %v3919 = vmax.bf16 %v3887, %v3466
      %v3920 = vmax.bf16 %v3888, %v3467
      %v3921 = vmax.bf16 %v3889, %v3468
      %v3922 = vmax.bf16 %v3890, %v3469
      %v3923 = vmax.bf16 %v3891, %v3470
      %v3924 = vmax.bf16 %v3892, %v3471
      %v3925 = vmax.bf16 %v3893, %v3472
      %v3926 = vmax.bf16 %v3894, %v3473
      %v3927 = vmax.bf16 %v3895, %v3474
      %v3928 = vmax.bf16 %v3896, %v3475
      %v3929 = vmax.bf16 %v3897, %v3476
      %v3930 = vmax.bf16 %v3898, %v3477
      %v3931 = vmax.bf16 %v3899, %v3478
      %v3932 = vmax.bf16 %v3900, %v3479
      %v3933 = vmax.bf16 %v3901, %v3480
      %v3934 = vmax.bf16 %v3902, %v3481
      %v3935 = vmax.bf16 %v3903, %v3482
      %v3936 = vmax.bf16 %v3904, %v3483
      %v3937 = vmax.bf16 %v3905, %v3484
      %v3938 = vmax.bf16 %v3906, %v3485
      %v3939 = vmax.bf16 %v3907, %v3486
      %v3940 = vmax.bf16 %v3908, %v3487
      %v3941 = vmax.bf16 %v3909, %v3488
      %v3942 = vmax.bf16 %v3910, %v3489
      %v3943 = vmax.bf16 %v3911, %v3490
      %v3944 = vmax.bf16 %v3912, %v3491
      %v3945 = vmax.bf16 %v3913, %v3492
      %v3947 = vshrl.u32 %v3914, 16
      %v3949 = vshll.u32 %v3914, 16
      %v3951 = vrot.slane %v3949, 1
      %v3952 = vor.u32 %v3947, %v3951
      %v3954 = vshll.u32 %v3915, 16
      %v3956 = vrot.slane %v3954, 1
      %v3957 = vsel %vm960, %v3952, %v3956
      %v3959 = vshrl.u32 %v3916, 16
      %v3961 = vshll.u32 %v3916, 16
      %v3963 = vrot.slane %v3961, 1
      %v3964 = vor.u32 %v3959, %v3963
      %v3966 = vshll.u32 %v3917, 16
      %v3968 = vrot.slane %v3966, 1
      %v3969 = vsel %vm960, %v3964, %v3968
      %v3971 = vshrl.u32 %v3918, 16
      %v3973 = vshll.u32 %v3918, 16
      %v3975 = vrot.slane %v3973, 1
      %v3976 = vor.u32 %v3971, %v3975
      %v3978 = vshll.u32 %v3919, 16
      %v3980 = vrot.slane %v3978, 1
      %v3981 = vsel %vm960, %v3976, %v3980
      %v3983 = vshrl.u32 %v3920, 16
      %v3985 = vshll.u32 %v3920, 16
      %v3987 = vrot.slane %v3985, 1
      %v3988 = vor.u32 %v3983, %v3987
      %v3990 = vshll.u32 %v3921, 16
      %v3992 = vrot.slane %v3990, 1
      %v3993 = vsel %vm960, %v3988, %v3992
      %v3995 = vshrl.u32 %v3922, 16
      %v3997 = vshll.u32 %v3922, 16
      %v3999 = vrot.slane %v3997, 1
      %v4000 = vor.u32 %v3995, %v3999
      %v4002 = vshll.u32 %v3923, 16
      %v4004 = vrot.slane %v4002, 1
      %v4005 = vsel %vm960, %v4000, %v4004
      %v4007 = vshrl.u32 %v3924, 16
      %v4009 = vshll.u32 %v3924, 16
      %v4011 = vrot.slane %v4009, 1
      %v4012 = vor.u32 %v4007, %v4011
      %v4014 = vshll.u32 %v3925, 16
      %v4016 = vrot.slane %v4014, 1
      %v4017 = vsel %vm960, %v4012, %v4016
      %v4019 = vshrl.u32 %v3926, 16
      %v4021 = vshll.u32 %v3926, 16
      %v4023 = vrot.slane %v4021, 1
      %v4024 = vor.u32 %v4019, %v4023
      %v4026 = vshll.u32 %v3927, 16
      %v4028 = vrot.slane %v4026, 1
      %v4029 = vsel %vm960, %v4024, %v4028
      %v4031 = vshrl.u32 %v3928, 16
      %v4033 = vshll.u32 %v3928, 16
      %v4035 = vrot.slane %v4033, 1
      %v4036 = vor.u32 %v4031, %v4035
      %v4038 = vshll.u32 %v3929, 16
      %v4040 = vrot.slane %v4038, 1
      %v4041 = vsel %vm960, %v4036, %v4040
      %v4043 = vshrl.u32 %v3930, 16
      %v4045 = vshll.u32 %v3930, 16
      %v4047 = vrot.slane %v4045, 1
      %v4048 = vor.u32 %v4043, %v4047
      %v4050 = vshll.u32 %v3931, 16
      %v4052 = vrot.slane %v4050, 1
      %v4053 = vsel %vm960, %v4048, %v4052
      %v4055 = vshrl.u32 %v3932, 16
      %v4057 = vshll.u32 %v3932, 16
      %v4059 = vrot.slane %v4057, 1
      %v4060 = vor.u32 %v4055, %v4059
      %v4062 = vshll.u32 %v3933, 16
      %v4064 = vrot.slane %v4062, 1
      %v4065 = vsel %vm960, %v4060, %v4064
      %v4067 = vshrl.u32 %v3934, 16
      %v4069 = vshll.u32 %v3934, 16
      %v4071 = vrot.slane %v4069, 1
      %v4072 = vor.u32 %v4067, %v4071
      %v4074 = vshll.u32 %v3935, 16
      %v4076 = vrot.slane %v4074, 1
      %v4077 = vsel %vm960, %v4072, %v4076
      %v4079 = vshrl.u32 %v3936, 16
      %v4081 = vshll.u32 %v3936, 16
      %v4083 = vrot.slane %v4081, 1
      %v4084 = vor.u32 %v4079, %v4083
      %v4086 = vshll.u32 %v3937, 16
      %v4088 = vrot.slane %v4086, 1
      %v4089 = vsel %vm960, %v4084, %v4088
      %v4091 = vshrl.u32 %v3938, 16
      %v4093 = vshll.u32 %v3938, 16
      %v4095 = vrot.slane %v4093, 1
      %v4096 = vor.u32 %v4091, %v4095
      %v4098 = vshll.u32 %v3939, 16
      %v4100 = vrot.slane %v4098, 1
      %v4101 = vsel %vm960, %v4096, %v4100
      %v4103 = vshrl.u32 %v3940, 16
      %v4105 = vshll.u32 %v3940, 16
      %v4107 = vrot.slane %v4105, 1
      %v4108 = vor.u32 %v4103, %v4107
      %v4110 = vshll.u32 %v3941, 16
      %v4112 = vrot.slane %v4110, 1
      %v4113 = vsel %vm960, %v4108, %v4112
      %v4115 = vshrl.u32 %v3942, 16
      %v4117 = vshll.u32 %v3942, 16
      %v4119 = vrot.slane %v4117, 1
      %v4120 = vor.u32 %v4115, %v4119
      %v4122 = vshll.u32 %v3943, 16
      %v4124 = vrot.slane %v4122, 1
      %v4125 = vsel %vm960, %v4120, %v4124
      %v4127 = vshrl.u32 %v3944, 16
      %v4129 = vshll.u32 %v3944, 16
      %v4131 = vrot.slane %v4129, 1
      %v4132 = vor.u32 %v4127, %v4131
      %v4134 = vshll.u32 %v3945, 16
      %v4136 = vrot.slane %v4134, 1
      %v4137 = vsel %vm960, %v4132, %v4136
      %v4154 = vmax.bf16 %v3914, %v3957
      %v4155 = vmax.bf16 %v3916, %v3969
      %v4156 = vmax.bf16 %v3918, %v3981
      %v4157 = vmax.bf16 %v3920, %v3993
      %v4158 = vmax.bf16 %v3922, %v4005
      %v4159 = vmax.bf16 %v3924, %v4017
      %v4160 = vmax.bf16 %v3926, %v4029
      %v4161 = vmax.bf16 %v3928, %v4041
      %v4162 = vmax.bf16 %v3930, %v4053
      %v4163 = vmax.bf16 %v3932, %v4065
      %v4164 = vmax.bf16 %v3934, %v4077
      %v4165 = vmax.bf16 %v3936, %v4089
      %v4166 = vmax.bf16 %v3938, %v4101
      %v4167 = vmax.bf16 %v3940, %v4113
      %v4168 = vmax.bf16 %v3942, %v4125
      %v4169 = vmax.bf16 %v3944, %v4137
      %v4202 = vrot.slane %v3914, 1
      %v4203 = vrot.slane %v3915, 1
      %v4204 = vsel %vm1387, %v4202, %v4203
      %v4205 = vrot.slane %v3916, 1
      %v4206 = vrot.slane %v3917, 1
      %v4207 = vsel %vm1387, %v4205, %v4206
      %v4208 = vrot.slane %v3918, 1
      %v4209 = vrot.slane %v3919, 1
      %v4210 = vsel %vm1387, %v4208, %v4209
      %v4211 = vrot.slane %v3920, 1
      %v4212 = vrot.slane %v3921, 1
      %v4213 = vsel %vm1387, %v4211, %v4212
      %v4214 = vrot.slane %v3922, 1
      %v4215 = vrot.slane %v3923, 1
      %v4216 = vsel %vm1387, %v4214, %v4215
      %v4217 = vrot.slane %v3924, 1
      %v4218 = vrot.slane %v3925, 1
      %v4219 = vsel %vm1387, %v4217, %v4218
      %v4220 = vrot.slane %v3926, 1
      %v4221 = vrot.slane %v3927, 1
      %v4222 = vsel %vm1387, %v4220, %v4221
      %v4223 = vrot.slane %v3928, 1
      %v4224 = vrot.slane %v3929, 1
      %v4225 = vsel %vm1387, %v4223, %v4224
      %v4226 = vrot.slane %v3930, 1
      %v4227 = vrot.slane %v3931, 1
      %v4228 = vsel %vm1387, %v4226, %v4227
      %v4229 = vrot.slane %v3932, 1
      %v4230 = vrot.slane %v3933, 1
      %v4231 = vsel %vm1387, %v4229, %v4230
      %v4232 = vrot.slane %v3934, 1
      %v4233 = vrot.slane %v3935, 1
      %v4234 = vsel %vm1387, %v4232, %v4233
      %v4235 = vrot.slane %v3936, 1
      %v4236 = vrot.slane %v3937, 1
      %v4237 = vsel %vm1387, %v4235, %v4236
      %v4238 = vrot.slane %v3938, 1
      %v4239 = vrot.slane %v3939, 1
      %v4240 = vsel %vm1387, %v4238, %v4239
      %v4241 = vrot.slane %v3940, 1
      %v4242 = vrot.slane %v3941, 1
      %v4243 = vsel %vm1387, %v4241, %v4242
      %v4244 = vrot.slane %v3942, 1
      %v4245 = vrot.slane %v3943, 1
      %v4246 = vsel %vm1387, %v4244, %v4245
      %v4247 = vrot.slane %v3944, 1
      %v4248 = vrot.slane %v3945, 1
      %v4249 = vsel %vm1387, %v4247, %v4248
      %v4266 = vmax.bf16 %v4154, %v4204
      %v4267 = vmax.bf16 %v4155, %v4207
      %v4268 = vmax.bf16 %v4156, %v4210
      %v4269 = vmax.bf16 %v4157, %v4213
      %v4270 = vmax.bf16 %v4158, %v4216
      %v4271 = vmax.bf16 %v4159, %v4219
      %v4272 = vmax.bf16 %v4160, %v4222
      %v4273 = vmax.bf16 %v4161, %v4225
      %v4274 = vmax.bf16 %v4162, %v4228
      %v4275 = vmax.bf16 %v4163, %v4231
      %v4276 = vmax.bf16 %v4164, %v4234
      %v4277 = vmax.bf16 %v4165, %v4237
      %v4278 = vmax.bf16 %v4166, %v4240
      %v4279 = vmax.bf16 %v4167, %v4243
      %v4280 = vmax.bf16 %v4168, %v4246
      %v4281 = vmax.bf16 %v4169, %v4249
      %v4282 = vrot.slane %v3947, 1
      %v4283 = vrot.slane %v3949, 2
      %v4284 = vor.u32 %v4282, %v4283
      %v4285 = vshrl.u32 %v3915, 16
      %v4287 = vrot.slane %v4285, 1
      %v4288 = vrot.slane %v3954, 2
      %v4289 = vor.u32 %v4287, %v4288
      %v4290 = vsel %vm1534, %v4284, %v4289
      %v4291 = vrot.slane %v3959, 1
      %v4292 = vrot.slane %v3961, 2
      %v4293 = vor.u32 %v4291, %v4292
      %v4294 = vshrl.u32 %v3917, 16
      %v4296 = vrot.slane %v4294, 1
      %v4297 = vrot.slane %v3966, 2
      %v4298 = vor.u32 %v4296, %v4297
      %v4299 = vsel %vm1534, %v4293, %v4298
      %v4300 = vrot.slane %v3971, 1
      %v4301 = vrot.slane %v3973, 2
      %v4302 = vor.u32 %v4300, %v4301
      %v4303 = vshrl.u32 %v3919, 16
      %v4305 = vrot.slane %v4303, 1
      %v4306 = vrot.slane %v3978, 2
      %v4307 = vor.u32 %v4305, %v4306
      %v4308 = vsel %vm1534, %v4302, %v4307
      %v4309 = vrot.slane %v3983, 1
      %v4310 = vrot.slane %v3985, 2
      %v4311 = vor.u32 %v4309, %v4310
      %v4312 = vshrl.u32 %v3921, 16
      %v4314 = vrot.slane %v4312, 1
      %v4315 = vrot.slane %v3990, 2
      %v4316 = vor.u32 %v4314, %v4315
      %v4317 = vsel %vm1534, %v4311, %v4316
      %v4318 = vrot.slane %v3995, 1
      %v4319 = vrot.slane %v3997, 2
      %v4320 = vor.u32 %v4318, %v4319
      %v4321 = vshrl.u32 %v3923, 16
      %v4323 = vrot.slane %v4321, 1
      %v4324 = vrot.slane %v4002, 2
      %v4325 = vor.u32 %v4323, %v4324
      %v4326 = vsel %vm1534, %v4320, %v4325
      %v4327 = vrot.slane %v4007, 1
      %v4328 = vrot.slane %v4009, 2
      %v4329 = vor.u32 %v4327, %v4328
      %v4330 = vshrl.u32 %v3925, 16
      %v4332 = vrot.slane %v4330, 1
      %v4333 = vrot.slane %v4014, 2
      %v4334 = vor.u32 %v4332, %v4333
      %v4335 = vsel %vm1534, %v4329, %v4334
      %v4336 = vrot.slane %v4019, 1
      %v4337 = vrot.slane %v4021, 2
      %v4338 = vor.u32 %v4336, %v4337
      %v4339 = vshrl.u32 %v3927, 16
      %v4341 = vrot.slane %v4339, 1
      %v4342 = vrot.slane %v4026, 2
      %v4343 = vor.u32 %v4341, %v4342
      %v4344 = vsel %vm1534, %v4338, %v4343
      %v4345 = vrot.slane %v4031, 1
      %v4346 = vrot.slane %v4033, 2
      %v4347 = vor.u32 %v4345, %v4346
      %v4348 = vshrl.u32 %v3929, 16
      %v4350 = vrot.slane %v4348, 1
      %v4351 = vrot.slane %v4038, 2
      %v4352 = vor.u32 %v4350, %v4351
      %v4353 = vsel %vm1534, %v4347, %v4352
      %v4354 = vrot.slane %v4043, 1
      %v4355 = vrot.slane %v4045, 2
      %v4356 = vor.u32 %v4354, %v4355
      %v4357 = vshrl.u32 %v3931, 16
      %v4359 = vrot.slane %v4357, 1
      %v4360 = vrot.slane %v4050, 2
      %v4361 = vor.u32 %v4359, %v4360
      %v4362 = vsel %vm1534, %v4356, %v4361
      %v4363 = vrot.slane %v4055, 1
      %v4364 = vrot.slane %v4057, 2
      %v4365 = vor.u32 %v4363, %v4364
      %v4366 = vshrl.u32 %v3933, 16
      %v4368 = vrot.slane %v4366, 1
      %v4369 = vrot.slane %v4062, 2
      %v4370 = vor.u32 %v4368, %v4369
      %v4371 = vsel %vm1534, %v4365, %v4370
      %v4372 = vrot.slane %v4067, 1
      %v4373 = vrot.slane %v4069, 2
      %v4374 = vor.u32 %v4372, %v4373
      %v4375 = vshrl.u32 %v3935, 16
      %v4377 = vrot.slane %v4375, 1
      %v4378 = vrot.slane %v4074, 2
      %v4379 = vor.u32 %v4377, %v4378
      %v4380 = vsel %vm1534, %v4374, %v4379
      %v4381 = vrot.slane %v4079, 1
      %v4382 = vrot.slane %v4081, 2
      %v4383 = vor.u32 %v4381, %v4382
      %v4384 = vshrl.u32 %v3937, 16
      %v4386 = vrot.slane %v4384, 1
      %v4387 = vrot.slane %v4086, 2
      %v4388 = vor.u32 %v4386, %v4387
      %v4389 = vsel %vm1534, %v4383, %v4388
      %v4390 = vrot.slane %v4091, 1
      %v4391 = vrot.slane %v4093, 2
      %v4392 = vor.u32 %v4390, %v4391
      %v4393 = vshrl.u32 %v3939, 16
      %v4395 = vrot.slane %v4393, 1
      %v4396 = vrot.slane %v4098, 2
      %v4397 = vor.u32 %v4395, %v4396
      %v4398 = vsel %vm1534, %v4392, %v4397
      %v4399 = vrot.slane %v4103, 1
      %v4400 = vrot.slane %v4105, 2
      %v4401 = vor.u32 %v4399, %v4400
      %v4402 = vshrl.u32 %v3941, 16
      %v4404 = vrot.slane %v4402, 1
      %v4405 = vrot.slane %v4110, 2
      %v4406 = vor.u32 %v4404, %v4405
      %v4407 = vsel %vm1534, %v4401, %v4406
      %v4408 = vrot.slane %v4115, 1
      %v4409 = vrot.slane %v4117, 2
      %v4410 = vor.u32 %v4408, %v4409
      %v4411 = vshrl.u32 %v3943, 16
      %v4413 = vrot.slane %v4411, 1
      %v4414 = vrot.slane %v4122, 2
      %v4415 = vor.u32 %v4413, %v4414
      %v4416 = vsel %vm1534, %v4410, %v4415
      %v4417 = vrot.slane %v4127, 1
      %v4418 = vrot.slane %v4129, 2
      %v4419 = vor.u32 %v4417, %v4418
      %v4420 = vshrl.u32 %v3945, 16
      %v4422 = vrot.slane %v4420, 1
      %v4423 = vrot.slane %v4134, 2
      %v4424 = vor.u32 %v4422, %v4423
      %v4425 = vsel %vm1534, %v4419, %v4424
      %v4442 = vmax.bf16 %v4266, %v4290
      %v4443 = vmax.bf16 %v4267, %v4299
      %v4444 = vmax.bf16 %v4268, %v4308
      %v4445 = vmax.bf16 %v4269, %v4317
      %v4446 = vmax.bf16 %v4270, %v4326
      %v4447 = vmax.bf16 %v4271, %v4335
      %v4448 = vmax.bf16 %v4272, %v4344
      %v4449 = vmax.bf16 %v4273, %v4353
      %v4450 = vmax.bf16 %v4274, %v4362
      %v4451 = vmax.bf16 %v4275, %v4371
      %v4452 = vmax.bf16 %v4276, %v4380
      %v4453 = vmax.bf16 %v4277, %v4389
      %v4454 = vmax.bf16 %v4278, %v4398
      %v4455 = vmax.bf16 %v4279, %v4407
      %v4456 = vmax.bf16 %v4280, %v4416
      %v4457 = vmax.bf16 %v4281, %v4425
      %v4458 = vrot.slane %v3914, 2
      %v4459 = vrot.slane %v3915, 2
      %v4460 = vsel %vm1763, %v4458, %v4459
      %v4461 = vrot.slane %v3916, 2
      %v4462 = vrot.slane %v3917, 2
      %v4463 = vsel %vm1763, %v4461, %v4462
      %v4464 = vrot.slane %v3918, 2
      %v4465 = vrot.slane %v3919, 2
      %v4466 = vsel %vm1763, %v4464, %v4465
      %v4467 = vrot.slane %v3920, 2
      %v4468 = vrot.slane %v3921, 2
      %v4469 = vsel %vm1763, %v4467, %v4468
      %v4470 = vrot.slane %v3922, 2
      %v4471 = vrot.slane %v3923, 2
      %v4472 = vsel %vm1763, %v4470, %v4471
      %v4473 = vrot.slane %v3924, 2
      %v4474 = vrot.slane %v3925, 2
      %v4475 = vsel %vm1763, %v4473, %v4474
      %v4476 = vrot.slane %v3926, 2
      %v4477 = vrot.slane %v3927, 2
      %v4478 = vsel %vm1763, %v4476, %v4477
      %v4479 = vrot.slane %v3928, 2
      %v4480 = vrot.slane %v3929, 2
      %v4481 = vsel %vm1763, %v4479, %v4480
      %v4482 = vrot.slane %v3930, 2
      %v4483 = vrot.slane %v3931, 2
      %v4484 = vsel %vm1763, %v4482, %v4483
      %v4485 = vrot.slane %v3932, 2
      %v4486 = vrot.slane %v3933, 2
      %v4487 = vsel %vm1763, %v4485, %v4486
      %v4488 = vrot.slane %v3934, 2
      %v4489 = vrot.slane %v3935, 2
      %v4490 = vsel %vm1763, %v4488, %v4489
      %v4491 = vrot.slane %v3936, 2
      %v4492 = vrot.slane %v3937, 2
      %v4493 = vsel %vm1763, %v4491, %v4492
      %v4494 = vrot.slane %v3938, 2
      %v4495 = vrot.slane %v3939, 2
      %v4496 = vsel %vm1763, %v4494, %v4495
      %v4497 = vrot.slane %v3940, 2
      %v4498 = vrot.slane %v3941, 2
      %v4499 = vsel %vm1763, %v4497, %v4498
      %v4500 = vrot.slane %v3942, 2
      %v4501 = vrot.slane %v3943, 2
      %v4502 = vsel %vm1763, %v4500, %v4501
      %v4503 = vrot.slane %v3944, 2
      %v4504 = vrot.slane %v3945, 2
      %v4505 = vsel %vm1763, %v4503, %v4504
      %v4522 = vmax.bf16 %v4442, %v4460
      %v4523 = vmax.bf16 %v4443, %v4463
      %v4524 = vmax.bf16 %v4444, %v4466
      %v4525 = vmax.bf16 %v4445, %v4469
      %v4526 = vmax.bf16 %v4446, %v4472
      %v4527 = vmax.bf16 %v4447, %v4475
      %v4528 = vmax.bf16 %v4448, %v4478
      %v4529 = vmax.bf16 %v4449, %v4481
      %v4530 = vmax.bf16 %v4450, %v4484
      %v4531 = vmax.bf16 %v4451, %v4487
      %v4532 = vmax.bf16 %v4452, %v4490
      %v4533 = vmax.bf16 %v4453, %v4493
      %v4534 = vmax.bf16 %v4454, %v4496
      %v4535 = vmax.bf16 %v4455, %v4499
      %v4536 = vmax.bf16 %v4456, %v4502
      %v4537 = vmax.bf16 %v4457, %v4505
      %v4538 = vld [vmem:[%s3 + $0x4] sm:$0xc]
      %v4540 = vunpack.c.l.b16 %v4538
      %v4541 = vpack.c.b16 %v4540, %v4540
      %v4542 = vrot.slane %v4541, 2
      %v4544 = vsel %vm1995, %v4522, 0
      %v4547 = vsel %vm1995, %v4523, 0
      %v4550 = vsel %vm1995, %v4524, 0
      %v4553 = vsel %vm1995, %v4525, 0
      %v4556 = vsel %vm1995, %v4526, 0
      %v4559 = vsel %vm1995, %v4527, 0
      %v4562 = vsel %vm1995, %v4528, 0
      %v4565 = vsel %vm1995, %v4529, 0
      %v4568 = vsel %vm1995, %v4530, 0
      %v4571 = vsel %vm1995, %v4531, 0
      %v4574 = vsel %vm1995, %v4532, 0
      %v4577 = vsel %vm1995, %v4533, 0
      %v4580 = vsel %vm1995, %v4534, 0
      %v4583 = vsel %vm1995, %v4535, 0
      %v4586 = vsel %vm1995, %v4536, 0
      %v4589 = vsel %vm1995, %v4537, 0
      %v4592 = vsel %vm2044, %v4542, 0
      %4594 = vmatprep.subr.bf16.mxu0 0
      %4595 = vmatpush1.bf16.msra.mxu0 %v4592
      %4596 = vmatprep.subr.bf16.mxu0 0
      %4597 = vmatpush1.bf16.msra.mxu0 0
      %4598 = vmatprep.subr.bf16.mxu0 0
      %4599 = vmatpush1.bf16.msra.mxu0 0
      %4600 = vmatprep.subr.bf16.mxu0 0
      %4601 = vmatpush1.bf16.msra.mxu0 0
      %4602 = vmatprep.subr.bf16.mxu0 0
      %4603 = vmatpush1.bf16.msra.mxu0 0
      %4604 = vmatprep.subr.bf16.mxu0 0
      %4605 = vmatpush1.bf16.msra.mxu0 0
      %4606 = vmatprep.subr.bf16.mxu0 0
      %4607 = vmatpush1.bf16.msra.mxu0 0
      %4608 = vmatprep.subr.bf16.mxu0 0
      %4609 = vmatpush1.bf16.msra.mxu0 0
      %4610 = vmatprep.subr.bf16.mxu0 0
      %4611 = vmatpush1.bf16.msra.mxu0 0
      %4612 = vmatprep.subr.bf16.mxu0 0
      %4613 = vmatpush1.bf16.msra.mxu0 0
      %4614 = vmatprep.subr.bf16.mxu0 0
      %4615 = vmatpush1.bf16.msra.mxu0 0
      %4616 = vmatprep.subr.bf16.mxu0 0
      %4617 = vmatpush1.bf16.msra.mxu0 0
      %4618 = vmatprep.subr.bf16.mxu0 0
      %4619 = vmatpush1.bf16.msra.mxu0 0
      %4620 = vmatprep.subr.bf16.mxu0 0
      %4621 = vmatpush1.bf16.msra.mxu0 0
      %4622 = vmatprep.subr.bf16.mxu0 0
      %4623 = vmatpush1.bf16.msra.mxu0 0
      %4624 = vmatprep.subr.bf16.mxu0 0
      %4625 = vmatpush1.bf16.msra.mxu0 0
      %4626 = vmatprep.mubr.bf16.mxu0 0
      %4627 = vmatmul.mubr.bf16.gmra.mrb[0].mxu0 %v4544
      %v4628 = vpop.f32.mrb[0].mxu0
      %v4629 = vadd.f32 0.0, %v4628
      %v4630 = vpop.f32.mrb[0].mxu0
      %v4631 = vpop.f32.mrb[0].mxu0
      %v4632 = vadd.f32 0.0, %v4631
      %v4633 = vpop.f32.mrb[0].mxu0
      %4634 = vmatprep.mubr.bf16.mxu0 0
      %4635 = vmatmul.mubr.bf16.gmra.mrb[0].mxu0 %v4547
      %v4636 = vpop.f32.mrb[0].mxu0
      %v4637 = vadd.f32 0.0, %v4636
      %v4638 = vpop.f32.mrb[0].mxu0
      %v4639 = vpop.f32.mrb[0].mxu0
      %v4640 = vadd.f32 0.0, %v4639
      %v4641 = vpop.f32.mrb[0].mxu0
      %4642 = vmatprep.mubr.bf16.mxu0 0
      %4643 = vmatmul.mubr.bf16.gmra.mrb[0].mxu0 %v4550
      %v4644 = vpop.f32.mrb[0].mxu0
      %v4645 = vadd.f32 0.0, %v4644
      %v4646 = vpop.f32.mrb[0].mxu0
      %v4647 = vpop.f32.mrb[0].mxu0
      %v4648 = vadd.f32 0.0, %v4647
      %v4649 = vpop.f32.mrb[0].mxu0
      %4650 = vmatprep.mubr.bf16.mxu0 0
      %4651 = vmatmul.mubr.bf16.gmra.mrb[0].mxu0 %v4553
      %v4652 = vpop.f32.mrb[0].mxu0
      %v4653 = vadd.f32 0.0, %v4652
      %v4654 = vpop.f32.mrb[0].mxu0
      %v4655 = vpop.f32.mrb[0].mxu0
      %v4656 = vadd.f32 0.0, %v4655
      %v4657 = vpop.f32.mrb[0].mxu0
      %4658 = vmatprep.mubr.bf16.mxu0 0
      %4659 = vmatmul.mubr.bf16.gmra.mrb[0].mxu0 %v4556
      %v4660 = vpop.f32.mrb[0].mxu0
      %v4661 = vadd.f32 0.0, %v4660
      %v4662 = vpop.f32.mrb[0].mxu0
      %v4663 = vpop.f32.mrb[0].mxu0
      %v4664 = vadd.f32 0.0, %v4663
      %v4665 = vpop.f32.mrb[0].mxu0
      %4666 = vmatprep.mubr.bf16.mxu0 0
      %4667 = vmatmul.mubr.bf16.gmra.mrb[0].mxu0 %v4559
      %v4668 = vpop.f32.mrb[0].mxu0
      %v4669 = vadd.f32 0.0, %v4668
      %v4670 = vpop.f32.mrb[0].mxu0
      %v4671 = vpop.f32.mrb[0].mxu0
      %v4672 = vadd.f32 0.0, %v4671
      %v4673 = vpop.f32.mrb[0].mxu0
      %4674 = vmatprep.mubr.bf16.mxu0 0
      %4675 = vmatmul.mubr.bf16.gmra.mrb[0].mxu0 %v4562
      %v4676 = vpop.f32.mrb[0].mxu0
      %v4677 = vadd.f32 0.0, %v4676
      %v4678 = vpop.f32.mrb[0].mxu0
      %v4679 = vpop.f32.mrb[0].mxu0
      %v4680 = vadd.f32 0.0, %v4679
      %v4681 = vpop.f32.mrb[0].mxu0
      %4682 = vmatprep.mubr.bf16.mxu0 0
      %4683 = vmatmul.mubr.bf16.gmra.mrb[0].mxu0 %v4565
      %v4684 = vpop.f32.mrb[0].mxu0
      %v4685 = vadd.f32 0.0, %v4684
      %v4686 = vpop.f32.mrb[0].mxu0
      %v4687 = vpop.f32.mrb[0].mxu0
      %v4688 = vadd.f32 0.0, %v4687
      %v4689 = vpop.f32.mrb[0].mxu0
      %4690 = vmatprep.mubr.bf16.mxu0 0
      %4691 = vmatmul.mubr.bf16.gmra.mrb[0].mxu0 %v4568
      %v4692 = vpop.f32.mrb[0].mxu0
      %v4693 = vadd.f32 0.0, %v4692
      %v4694 = vpop.f32.mrb[0].mxu0
      %v4695 = vpop.f32.mrb[0].mxu0
      %v4696 = vadd.f32 0.0, %v4695
      %v4697 = vpop.f32.mrb[0].mxu0
      %4698 = vmatprep.mubr.bf16.mxu0 0
      %4699 = vmatmul.mubr.bf16.gmra.mrb[0].mxu0 %v4571
      %v4700 = vpop.f32.mrb[0].mxu0
      %v4701 = vadd.f32 0.0, %v4700
      %v4702 = vpop.f32.mrb[0].mxu0
      %v4703 = vpop.f32.mrb[0].mxu0
      %v4704 = vadd.f32 0.0, %v4703
      %v4705 = vpop.f32.mrb[0].mxu0
      %4706 = vmatprep.mubr.bf16.mxu0 0
      %4707 = vmatmul.mubr.bf16.gmra.mrb[0].mxu0 %v4574
      %v4708 = vpop.f32.mrb[0].mxu0
      %v4709 = vadd.f32 0.0, %v4708
      %v4710 = vpop.f32.mrb[0].mxu0
      %v4711 = vpop.f32.mrb[0].mxu0
      %v4712 = vadd.f32 0.0, %v4711
      %v4713 = vpop.f32.mrb[0].mxu0
      %4714 = vmatprep.mubr.bf16.mxu0 0
      %4715 = vmatmul.mubr.bf16.gmra.mrb[0].mxu0 %v4577
      %v4716 = vpop.f32.mrb[0].mxu0
      %v4717 = vadd.f32 0.0, %v4716
      %v4718 = vpop.f32.mrb[0].mxu0
      %v4719 = vpop.f32.mrb[0].mxu0
      %v4720 = vadd.f32 0.0, %v4719
      %v4721 = vpop.f32.mrb[0].mxu0
      %4722 = vmatprep.mubr.bf16.mxu0 0
      %4723 = vmatmul.mubr.bf16.gmra.mrb[0].mxu0 %v4580
      %v4724 = vpop.f32.mrb[0].mxu0
      %v4725 = vadd.f32 0.0, %v4724
      %v4726 = vpop.f32.mrb[0].mxu0
      %v4727 = vpop.f32.mrb[0].mxu0
      %v4728 = vadd.f32 0.0, %v4727
      %v4729 = vpop.f32.mrb[0].mxu0
      %4730 = vmatprep.mubr.bf16.mxu0 0
      %4731 = vmatmul.mubr.bf16.gmra.mrb[0].mxu0 %v4583
      %v4732 = vpop.f32.mrb[0].mxu0
      %v4733 = vadd.f32 0.0, %v4732
      %v4734 = vpop.f32.mrb[0].mxu0
      %v4735 = vpop.f32.mrb[0].mxu0
      %v4736 = vadd.f32 0.0, %v4735
      %v4737 = vpop.f32.mrb[0].mxu0
      %4738 = vmatprep.mubr.bf16.mxu0 0
      %4739 = vmatmul.mubr.bf16.gmra.mrb[0].mxu0 %v4586
      %v4740 = vpop.f32.mrb[0].mxu0
      %v4741 = vadd.f32 0.0, %v4740
      %v4742 = vpop.f32.mrb[0].mxu0
      %v4743 = vpop.f32.mrb[0].mxu0
      %v4744 = vadd.f32 0.0, %v4743
      %v4745 = vpop.f32.mrb[0].mxu0
      %4746 = vmatprep.mubr.bf16.mxu0 0
      %4747 = vmatmul.mubr.bf16.gmra.mrb[0].mxu0 %v4589
      %v4748 = vpop.f32.mrb[0].mxu0
      %v4749 = vadd.f32 0.0, %v4748
      %v4750 = vpop.f32.mrb[0].mxu0
      %v4751 = vpop.f32.mrb[0].mxu0
      %v4752 = vadd.f32 0.0, %v4751
      %v4753 = vpop.f32.mrb[0].mxu0
      %4754 = vdwg.mxu0
      %v4755 = vadd.f32 %v3786, %v4629
      %v4756 = vadd.f32 %v3787, %v4632
      %v4757 = vadd.f32 %v3788, %v4637
      %v4758 = vadd.f32 %v3789, %v4640
      %v4759 = vadd.f32 %v3790, %v4645
      %v4760 = vadd.f32 %v3791, %v4648
      %v4761 = vadd.f32 %v3792, %v4653
      %v4762 = vadd.f32 %v3793, %v4656
      %v4763 = vadd.f32 %v3794, %v4661
      %v4764 = vadd.f32 %v3795, %v4664
      %v4765 = vadd.f32 %v3796, %v4669
      %v4766 = vadd.f32 %v3797, %v4672
      %v4767 = vadd.f32 %v3798, %v4677
      %v4768 = vadd.f32 %v3799, %v4680
      %v4769 = vadd.f32 %v3800, %v4685
      %v4770 = vadd.f32 %v3801, %v4688
      %v4771 = vadd.f32 %v3802, %v4693
      %v4772 = vadd.f32 %v3803, %v4696
      %v4773 = vadd.f32 %v3804, %v4701
      %v4774 = vadd.f32 %v3805, %v4704
      %v4775 = vadd.f32 %v3806, %v4709
      %v4776 = vadd.f32 %v3807, %v4712
      %v4777 = vadd.f32 %v3808, %v4717
      %v4778 = vadd.f32 %v3809, %v4720
      %v4779 = vadd.f32 %v3810, %v4725
      %v4780 = vadd.f32 %v3811, %v4728
      %v4781 = vadd.f32 %v3812, %v4733
      %v4782 = vadd.f32 %v3813, %v4736
      %v4783 = vadd.f32 %v3814, %v4741
      %v4784 = vadd.f32 %v3815, %v4744
      %v4785 = vadd.f32 %v3816, %v4749
      %v4786 = vadd.f32 %v3817, %v4752
      %v4787 = vld [vmem:[%s4] sm:$0x1]
      %v4789 = vlaneseq
      %v4790 = vshrl.u32 %v4789, 7
      %v4791 = vsub.s32 0, %v4790
      %v4792 = vrot.slane %v4787, %v4791
      %v4794 = vadd.f32 %v4755, %v4792
      %v4795 = vadd.f32 %v4756, %v4792
      %v4796 = vadd.f32 %v4757, %v4792
      %v4797 = vadd.f32 %v4758, %v4792
      %v4798 = vadd.f32 %v4759, %v4792
      %v4799 = vadd.f32 %v4760, %v4792
      %v4800 = vadd.f32 %v4761, %v4792
      %v4801 = vadd.f32 %v4762, %v4792
      %v4802 = vadd.f32 %v4763, %v4792
      %v4803 = vadd.f32 %v4764, %v4792
      %v4804 = vadd.f32 %v4765, %v4792
      %v4805 = vadd.f32 %v4766, %v4792
      %v4806 = vadd.f32 %v4767, %v4792
      %v4807 = vadd.f32 %v4768, %v4792
      %v4808 = vadd.f32 %v4769, %v4792
      %v4809 = vadd.f32 %v4770, %v4792
      %v4810 = vadd.f32 %v4771, %v4792
      %v4811 = vadd.f32 %v4772, %v4792
      %v4812 = vadd.f32 %v4773, %v4792
      %v4813 = vadd.f32 %v4774, %v4792
      %v4814 = vadd.f32 %v4775, %v4792
      %v4815 = vadd.f32 %v4776, %v4792
      %v4816 = vadd.f32 %v4777, %v4792
      %v4817 = vadd.f32 %v4778, %v4792
      %v4818 = vadd.f32 %v4779, %v4792
      %v4819 = vadd.f32 %v4780, %v4792
      %v4820 = vadd.f32 %v4781, %v4792
      %v4821 = vadd.f32 %v4782, %v4792
      %v4822 = vadd.f32 %v4783, %v4792
      %v4823 = vadd.f32 %v4784, %v4792
      %v4824 = vadd.f32 %v4785, %v4792
      %v4825 = vadd.f32 %v4786, %v4792
      %v4826 = vxor.u32 %v4794, 2147483648
      %v4827 = vxor.u32 %v4795, 2147483648
      %v4828 = vxor.u32 %v4796, 2147483648
      %v4829 = vxor.u32 %v4797, 2147483648
      %v4830 = vxor.u32 %v4798, 2147483648
      %v4831 = vxor.u32 %v4799, 2147483648
      %v4832 = vxor.u32 %v4800, 2147483648
      %v4833 = vxor.u32 %v4801, 2147483648
      %v4834 = vxor.u32 %v4802, 2147483648
      %v4835 = vxor.u32 %v4803, 2147483648
      %v4836 = vxor.u32 %v4804, 2147483648
      %v4837 = vxor.u32 %v4805, 2147483648
      %v4838 = vxor.u32 %v4806, 2147483648
      %v4839 = vxor.u32 %v4807, 2147483648
      %v4840 = vxor.u32 %v4808, 2147483648
      %v4841 = vxor.u32 %v4809, 2147483648
      %v4842 = vxor.u32 %v4810, 2147483648
      %v4843 = vxor.u32 %v4811, 2147483648
      %v4844 = vxor.u32 %v4812, 2147483648
      %v4845 = vxor.u32 %v4813, 2147483648
      %v4846 = vxor.u32 %v4814, 2147483648
      %v4847 = vxor.u32 %v4815, 2147483648
      %v4848 = vxor.u32 %v4816, 2147483648
      %v4849 = vxor.u32 %v4817, 2147483648
      %v4850 = vxor.u32 %v4818, 2147483648
      %v4851 = vxor.u32 %v4819, 2147483648
      %v4852 = vxor.u32 %v4820, 2147483648
      %v4853 = vxor.u32 %v4821, 2147483648
      %v4854 = vxor.u32 %v4822, 2147483648
      %v4855 = vxor.u32 %v4823, 2147483648
      %v4856 = vxor.u32 %v4824, 2147483648
      %v4857 = vxor.u32 %v4825, 2147483648
      %v4858 = vmul.f32 %v4826, 1.442695
      %v4859 = vpow.pop %v4858
      %v4860 = vmul.f32 %v4827, 1.442695
      %v4861 = vpow.pop %v4860
      %v4862 = vmul.f32 %v4828, 1.442695
      %v4863 = vpow.pop %v4862
      %v4864 = vmul.f32 %v4829, 1.442695
      %v4865 = vpow.pop %v4864
      %v4866 = vmul.f32 %v4830, 1.442695
      %v4867 = vpow.pop %v4866
      %v4868 = vmul.f32 %v4831, 1.442695
      %v4869 = vpow.pop %v4868
      %v4870 = vmul.f32 %v4832, 1.442695
      %v4871 = vpow.pop %v4870
      %v4872 = vmul.f32 %v4833, 1.442695
      %v4873 = vpow.pop %v4872
      %v4874 = vmul.f32 %v4834, 1.442695
      %v4875 = vpow.pop %v4874
      %v4876 = vmul.f32 %v4835, 1.442695
      %v4877 = vpow.pop %v4876
      %v4878 = vmul.f32 %v4836, 1.442695
      %v4879 = vpow.pop %v4878
      %v4880 = vmul.f32 %v4837, 1.442695
      %v4881 = vpow.pop %v4880
      %v4882 = vmul.f32 %v4838, 1.442695
      %v4883 = vpow.pop %v4882
      %v4884 = vmul.f32 %v4839, 1.442695
      %v4885 = vpow.pop %v4884
      %v4886 = vmul.f32 %v4840, 1.442695
      %v4887 = vpow.pop %v4886
      %v4888 = vmul.f32 %v4841, 1.442695
      %v4889 = vpow.pop %v4888
      %v4890 = vmul.f32 %v4842, 1.442695
      %v4891 = vpow.pop %v4890
      %v4892 = vmul.f32 %v4843, 1.442695
      %v4893 = vpow.pop %v4892
      %v4894 = vmul.f32 %v4844, 1.442695
      %v4895 = vpow.pop %v4894
      %v4896 = vmul.f32 %v4845, 1.442695
      %v4897 = vpow.pop %v4896
      %v4898 = vmul.f32 %v4846, 1.442695
      %v4899 = vpow.pop %v4898
      %v4900 = vmul.f32 %v4847, 1.442695
      %v4901 = vpow.pop %v4900
      %v4902 = vmul.f32 %v4848, 1.442695
      %v4903 = vpow.pop %v4902
      %v4904 = vmul.f32 %v4849, 1.442695
      %v4905 = vpow.pop %v4904
      %v4906 = vmul.f32 %v4850, 1.442695
      %v4907 = vpow.pop %v4906
      %v4908 = vmul.f32 %v4851, 1.442695
      %v4909 = vpow.pop %v4908
      %v4910 = vmul.f32 %v4852, 1.442695
      %v4911 = vpow.pop %v4910
      %v4912 = vmul.f32 %v4853, 1.442695
      %v4913 = vpow.pop %v4912
      %v4914 = vmul.f32 %v4854, 1.442695
      %v4915 = vpow.pop %v4914
      %v4916 = vmul.f32 %v4855, 1.442695
      %v4917 = vpow.pop %v4916
      %v4918 = vmul.f32 %v4856, 1.442695
      %v4919 = vpow.pop %v4918
      %v4920 = vmul.f32 %v4857, 1.442695
      %v4921 = vpow.pop %v4920
      %v4922 = vadd.f32 %v4859, 1.0
      %v4923 = vadd.f32 %v4861, 1.0
      %v4924 = vadd.f32 %v4863, 1.0
      %v4925 = vadd.f32 %v4865, 1.0
      %v4926 = vadd.f32 %v4867, 1.0
      %v4927 = vadd.f32 %v4869, 1.0
      %v4928 = vadd.f32 %v4871, 1.0
      %v4929 = vadd.f32 %v4873, 1.0
      %v4930 = vadd.f32 %v4875, 1.0
      %v4931 = vadd.f32 %v4877, 1.0
      %v4932 = vadd.f32 %v4879, 1.0
      %v4933 = vadd.f32 %v4881, 1.0
      %v4934 = vadd.f32 %v4883, 1.0
      %v4935 = vadd.f32 %v4885, 1.0
      %v4936 = vadd.f32 %v4887, 1.0
      %v4937 = vadd.f32 %v4889, 1.0
      %v4938 = vadd.f32 %v4891, 1.0
      %v4939 = vadd.f32 %v4893, 1.0
      %v4940 = vadd.f32 %v4895, 1.0
      %v4941 = vadd.f32 %v4897, 1.0
      %v4942 = vadd.f32 %v4899, 1.0
      %v4943 = vadd.f32 %v4901, 1.0
      %v4944 = vadd.f32 %v4903, 1.0
      %v4945 = vadd.f32 %v4905, 1.0
      %v4946 = vadd.f32 %v4907, 1.0
      %v4947 = vadd.f32 %v4909, 1.0
      %v4948 = vadd.f32 %v4911, 1.0
      %v4949 = vadd.f32 %v4913, 1.0
      %v4950 = vadd.f32 %v4915, 1.0
      %v4951 = vadd.f32 %v4917, 1.0
      %v4952 = vadd.f32 %v4919, 1.0
      %v4953 = vadd.f32 %v4921, 1.0
      %v4954 = vrcp.pop %v4922
      %v4955 = vmul.f32 1.0, %v4954
      %v4956 = vrcp.pop %v4923
      %v4957 = vmul.f32 1.0, %v4956
      %v4958 = vrcp.pop %v4924
      %v4959 = vmul.f32 1.0, %v4958
      %v4960 = vrcp.pop %v4925
      %v4961 = vmul.f32 1.0, %v4960
      %v4962 = vrcp.pop %v4926
      %v4963 = vmul.f32 1.0, %v4962
      %v4964 = vrcp.pop %v4927
      %v4965 = vmul.f32 1.0, %v4964
      %v4966 = vrcp.pop %v4928
      %v4967 = vmul.f32 1.0, %v4966
      %v4968 = vrcp.pop %v4929
      %v4969 = vmul.f32 1.0, %v4968
      %v4970 = vrcp.pop %v4930
      %v4971 = vmul.f32 1.0, %v4970
      %v4972 = vrcp.pop %v4931
      %v4973 = vmul.f32 1.0, %v4972
      %v4974 = vrcp.pop %v4932
      %v4975 = vmul.f32 1.0, %v4974
      %v4976 = vrcp.pop %v4933
      %v4977 = vmul.f32 1.0, %v4976
      %v4978 = vrcp.pop %v4934
      %v4979 = vmul.f32 1.0, %v4978
      %v4980 = vrcp.pop %v4935
      %v4981 = vmul.f32 1.0, %v4980
      %v4982 = vrcp.pop %v4936
      %v4983 = vmul.f32 1.0, %v4982
      %v4984 = vrcp.pop %v4937
      %v4985 = vmul.f32 1.0, %v4984
      %v4986 = vrcp.pop %v4938
      %v4987 = vmul.f32 1.0, %v4986
      %v4988 = vrcp.pop %v4939
      %v4989 = vmul.f32 1.0, %v4988
      %v4990 = vrcp.pop %v4940
      %v4991 = vmul.f32 1.0, %v4990
      %v4992 = vrcp.pop %v4941
      %v4993 = vmul.f32 1.0, %v4992
      %v4994 = vrcp.pop %v4942
      %v4995 = vmul.f32 1.0, %v4994
      %v4996 = vrcp.pop %v4943
      %v4997 = vmul.f32 1.0, %v4996
      %v4998 = vrcp.pop %v4944
      %v4999 = vmul.f32 1.0, %v4998
      %v5000 = vrcp.pop %v4945
      %v5001 = vmul.f32 1.0, %v5000
      %v5002 = vrcp.pop %v4946
      %v5003 = vmul.f32 1.0, %v5002
      %v5004 = vrcp.pop %v4947
      %v5005 = vmul.f32 1.0, %v5004
      %v5006 = vrcp.pop %v4948
      %v5007 = vmul.f32 1.0, %v5006
      %v5008 = vrcp.pop %v4949
      %v5009 = vmul.f32 1.0, %v5008
      %v5010 = vrcp.pop %v4950
      %v5011 = vmul.f32 1.0, %v5010
      %v5012 = vrcp.pop %v4951
      %v5013 = vmul.f32 1.0, %v5012
      %v5014 = vrcp.pop %v4952
      %v5015 = vmul.f32 1.0, %v5014
      %v5016 = vrcp.pop %v4953
      %v5017 = vmul.f32 1.0, %v5016
      %v5018 = vmul.f32 %v4794, %v4955
      %v5019 = vmul.f32 %v4795, %v4957
      %v5020 = vmul.f32 %v4796, %v4959
      %v5021 = vmul.f32 %v4797, %v4961
      %v5022 = vmul.f32 %v4798, %v4963
      %v5023 = vmul.f32 %v4799, %v4965
      %v5024 = vmul.f32 %v4800, %v4967
      %v5025 = vmul.f32 %v4801, %v4969
      %v5026 = vmul.f32 %v4802, %v4971
      %v5027 = vmul.f32 %v4803, %v4973
      %v5028 = vmul.f32 %v4804, %v4975
      %v5029 = vmul.f32 %v4805, %v4977
      %v5030 = vmul.f32 %v4806, %v4979
      %v5031 = vmul.f32 %v4807, %v4981
      %v5032 = vmul.f32 %v4808, %v4983
      %v5033 = vmul.f32 %v4809, %v4985
      %v5034 = vmul.f32 %v4810, %v4987
      %v5035 = vmul.f32 %v4811, %v4989
      %v5036 = vmul.f32 %v4812, %v4991
      %v5037 = vmul.f32 %v4813, %v4993
      %v5038 = vmul.f32 %v4814, %v4995
      %v5039 = vmul.f32 %v4815, %v4997
      %v5040 = vmul.f32 %v4816, %v4999
      %v5041 = vmul.f32 %v4817, %v5001
      %v5042 = vmul.f32 %v4818, %v5003
      %v5043 = vmul.f32 %v4819, %v5005
      %v5044 = vmul.f32 %v4820, %v5007
      %v5045 = vmul.f32 %v4821, %v5009
      %v5046 = vmul.f32 %v4822, %v5011
      %v5047 = vmul.f32 %v4823, %v5013
      %v5048 = vmul.f32 %v4824, %v5015
      %v5049 = vmul.f32 %v4825, %v5017
      %v5050 = vpack.c.bf16 %v5019, %v5018
      %v5051 = vpack.c.bf16 %v5021, %v5020
      %v5052 = vpack.c.bf16 %v5023, %v5022
      %v5053 = vpack.c.bf16 %v5025, %v5024
      %v5054 = vpack.c.bf16 %v5027, %v5026
      %v5055 = vpack.c.bf16 %v5029, %v5028
      %v5056 = vpack.c.bf16 %v5031, %v5030
      %v5057 = vpack.c.bf16 %v5033, %v5032
      %v5058 = vpack.c.bf16 %v5035, %v5034
      %v5059 = vpack.c.bf16 %v5037, %v5036
      %v5060 = vpack.c.bf16 %v5039, %v5038
      %v5061 = vpack.c.bf16 %v5041, %v5040
      %v5062 = vpack.c.bf16 %v5043, %v5042
      %v5063 = vpack.c.bf16 %v5045, %v5044
      %v5064 = vpack.c.bf16 %v5047, %v5046
      %v5065 = vpack.c.bf16 %v5049, %v5048
      %v5082 = vunpack.c.l.b16 %v5050
      %v5083 = vunpack.c.h.b16 %v5050
      %v5084 = vunpack.c.l.b16 %v5051
      %v5085 = vunpack.c.h.b16 %v5051
      %v5086 = vunpack.c.l.b16 %v5052
      %v5087 = vunpack.c.h.b16 %v5052
      %v5088 = vunpack.c.l.b16 %v5053
      %v5089 = vunpack.c.h.b16 %v5053
      %v5090 = vunpack.c.l.b16 %v5054
      %v5091 = vunpack.c.h.b16 %v5054
      %v5092 = vunpack.c.l.b16 %v5055
      %v5093 = vunpack.c.h.b16 %v5055
      %v5094 = vunpack.c.l.b16 %v5056
      %v5095 = vunpack.c.h.b16 %v5056
      %v5096 = vunpack.c.l.b16 %v5057
      %v5097 = vunpack.c.h.b16 %v5057
      %v5098 = vunpack.c.l.b16 %v5058
      %v5099 = vunpack.c.h.b16 %v5058
      %v5100 = vunpack.c.l.b16 %v5059
      %v5101 = vunpack.c.h.b16 %v5059
      %v5102 = vunpack.c.l.b16 %v5060
      %v5103 = vunpack.c.h.b16 %v5060
      %v5104 = vunpack.c.l.b16 %v5061
      %v5105 = vunpack.c.h.b16 %v5061
      %v5106 = vunpack.c.l.b16 %v5062
      %v5107 = vunpack.c.h.b16 %v5062
      %v5108 = vunpack.c.l.b16 %v5063
      %v5109 = vunpack.c.h.b16 %v5063
      %v5110 = vunpack.c.l.b16 %v5064
      %v5111 = vunpack.c.h.b16 %v5064
      %v5112 = vunpack.c.l.b16 %v5065
      %v5113 = vunpack.c.h.b16 %v5065
      %v5114 = vpack.c.b16 %v5082, %v5082
      %v5115 = vpack.c.b16 %v5083, %v5083
      %v5116 = vpack.c.b16 %v5084, %v5084
      %v5117 = vpack.c.b16 %v5085, %v5085
      %v5118 = vpack.c.b16 %v5086, %v5086
      %v5119 = vpack.c.b16 %v5087, %v5087
      %v5120 = vpack.c.b16 %v5088, %v5088
      %v5121 = vpack.c.b16 %v5089, %v5089
      %v5122 = vpack.c.b16 %v5090, %v5090
      %v5123 = vpack.c.b16 %v5091, %v5091
      %v5124 = vpack.c.b16 %v5092, %v5092
      %v5125 = vpack.c.b16 %v5093, %v5093
      %v5126 = vpack.c.b16 %v5094, %v5094
      %v5127 = vpack.c.b16 %v5095, %v5095
      %v5128 = vpack.c.b16 %v5096, %v5096
      %v5129 = vpack.c.b16 %v5097, %v5097
      %v5130 = vpack.c.b16 %v5098, %v5098
      %v5131 = vpack.c.b16 %v5099, %v5099
      %v5132 = vpack.c.b16 %v5100, %v5100
      %v5133 = vpack.c.b16 %v5101, %v5101
      %v5134 = vpack.c.b16 %v5102, %v5102
      %v5135 = vpack.c.b16 %v5103, %v5103
      %v5136 = vpack.c.b16 %v5104, %v5104
      %v5137 = vpack.c.b16 %v5105, %v5105
      %v5138 = vpack.c.b16 %v5106, %v5106
      %v5139 = vpack.c.b16 %v5107, %v5107
      %v5140 = vpack.c.b16 %v5108, %v5108
      %v5141 = vpack.c.b16 %v5109, %v5109
      %v5142 = vpack.c.b16 %v5110, %v5110
      %v5143 = vpack.c.b16 %v5111, %v5111
      %v5144 = vpack.c.b16 %v5112, %v5112
      %v5145 = vpack.c.b16 %v5113, %v5113
      %vm5178 = vcmask 60416
      %5179 = vst.msk [vmem:[%s224] sm:$0xf] %vm5178, %v5114
      %5180 = vst.msk [vmem:[%s224 + $0x4] sm:$0xf] %vm5178, %v5115
      %5181 = vst.msk [vmem:[%s224 + $0x8] sm:$0xf] %vm5178, %v5116
      %5182 = vst.msk [vmem:[%s224 + $0xc] sm:$0xf] %vm5178, %v5117
      %5183 = vst.msk [vmem:[%s224 + $0x10] sm:$0xf] %vm5178, %v5118
      %5184 = vst.msk [vmem:[%s224 + $0x14] sm:$0xf] %vm5178, %v5119
      %5185 = vst.msk [vmem:[%s224 + $0x18] sm:$0xf] %vm5178, %v5120
      %5186 = vst.msk [vmem:[%s224 + $0x1c] sm:$0xf] %vm5178, %v5121
      %5187 = vst.msk [vmem:[%s224 + $0x20] sm:$0xf] %vm5178, %v5122
      %5188 = vst.msk [vmem:[%s224 + $0x24] sm:$0xf] %vm5178, %v5123
      %5189 = vst.msk [vmem:[%s224 + $0x28] sm:$0xf] %vm5178, %v5124
      %5190 = vst.msk [vmem:[%s224 + $0x2c] sm:$0xf] %vm5178, %v5125
      %5191 = vst.msk [vmem:[%s224 + $0x30] sm:$0xf] %vm5178, %v5126
      %5192 = vst.msk [vmem:[%s224 + $0x34] sm:$0xf] %vm5178, %v5127
      %5193 = vst.msk [vmem:[%s224 + $0x38] sm:$0xf] %vm5178, %v5128
      %5194 = vst.msk [vmem:[%s224 + $0x3c] sm:$0xf] %vm5178, %v5129
      %5195 = vst.msk [vmem:[%s224 + $0x40] sm:$0xf] %vm5178, %v5130
      %5196 = vst.msk [vmem:[%s224 + $0x44] sm:$0xf] %vm5178, %v5131
      %5197 = vst.msk [vmem:[%s224 + $0x48] sm:$0xf] %vm5178, %v5132
      %5198 = vst.msk [vmem:[%s224 + $0x4c] sm:$0xf] %vm5178, %v5133
      %5199 = vst.msk [vmem:[%s224 + $0x50] sm:$0xf] %vm5178, %v5134
      %5200 = vst.msk [vmem:[%s224 + $0x54] sm:$0xf] %vm5178, %v5135
      %5201 = vst.msk [vmem:[%s224 + $0x58] sm:$0xf] %vm5178, %v5136
      %5202 = vst.msk [vmem:[%s224 + $0x5c] sm:$0xf] %vm5178, %v5137
      %5203 = vst.msk [vmem:[%s224 + $0x60] sm:$0xf] %vm5178, %v5138
      %5204 = vst.msk [vmem:[%s224 + $0x64] sm:$0xf] %vm5178, %v5139
      %5205 = vst.msk [vmem:[%s224 + $0x68] sm:$0xf] %vm5178, %v5140
      %5206 = vst.msk [vmem:[%s224 + $0x6c] sm:$0xf] %vm5178, %v5141
      %5207 = vst.msk [vmem:[%s224 + $0x70] sm:$0xf] %vm5178, %v5142
      %5208 = vst.msk [vmem:[%s224 + $0x74] sm:$0xf] %vm5178, %v5143
      %5209 = vst.msk [vmem:[%s224 + $0x78] sm:$0xf] %vm5178, %v5144
      %5210 = vst.msk [vmem:[%s224 + $0x7c] sm:$0xf] %vm5178, %v5145
      %p5211 = scmp.lt.s32.totalorder %s16, 1
      %s5212 = scalar_select %p5211, %s16, 1
      %s5213 = smul.addr %s5212, 32
      %s5214 = smul.addr %s5213, 4
      %s5215 = scalar_lea.vmem %s5, %s5214
      // Predicated region
      $region41: #{tpu_custom_call.1} parent=39 // pred_check
        %p5216 = pneg %p144
      $region42: #{tpu_custom_call.1} parent=39 // pred_check_branch
        %5218 = sbr.rel (%p5216) target = $region44
      $region43: #{tpu_custom_call.1} parent=39 // pred_region
        _
      $region44: #{tpu_custom_call.1} parent=39 // pred_fallthru
        _
    $region40: #{tpu_custom_call.1} parent=5 // pred_fallthru
      _
    %p5219 = scmp.le.s32.totalorder 2, %s11
    // Predicated region
    $region45: #{tpu_custom_call.1} parent=5 // pred_check
      %p5220 = pneg %p5219
    $region46: #{tpu_custom_call.1} parent=5 // pred_check_branch
      %5222 = sbr.rel (%p5220) target = $region48
    $region47: #{tpu_custom_call.1} parent=5 // pred_region
      %s5223 = ssub.s32 %s11, 2
      // Predicated region
      $region49: #{tpu_custom_call.1} parent=47 // pred_check
        %p5224 = pneg %p150
      $region50: #{tpu_custom_call.1} parent=47 // pred_check_branch
        %5226 = sbr.rel (%p5224) target = $region52
      $region51: #{tpu_custom_call.1} parent=47 // pred_region
        %p5227 = scmp.lt.s32.totalorder %s17, 1
        %s5228 = scalar_select %p5227, %s17, 1
        %s5229 = smul.addr %s5228, 32
        %s5230 = smul.addr %s5229, 4
        %s5231 = scalar_lea.vmem %s5, %s5230
      $region52: #{tpu_custom_call.1} parent=47 // pred_fallthru
        _
    $region48: #{tpu_custom_call.1} parent=5 // pred_fallthru
      _
  $region6: #{tpu_custom_call.1} parent=0 // loop_footer
    %s15 = sadd.s32 1, %s11
  $region7: #{tpu_custom_call.1} parent=0 // loop_footer_branch
    %10 = sbr.rel target = $region3
  $region8: #{tpu_custom_call.1} parent=0 // loop_exit
    _

// kernel: tpu_custom_call.1
$region0: #{tpu_custom_call.1}
  #allocation0 [shape = 'u32[]', space=smem, size = 0x4, offset = 0x4, fixed_abs, tag = 'smem constant byte address 0x4 - core index']
  #allocation1 [shape = 'u32[144,128]{1,0:T(1,128)}', space=vmem, size = 0x12000, scoped, tag = 'internal scratch']
  %s0 = inlined_call_operand.vmem [shape: f32[2,16,16,8], index: 0, kind: input, shape index: {}]
  %s1 = inlined_call_operand.vmem [shape: bf16[8,4], index: 1, kind: input, shape index: {}]
  %s2 = inlined_call_operand.vmem [shape: f32[1,4], index: 2, kind: input, shape index: {}]
  %s3 = inlined_call_operand.vmem [shape: bf16[16,8], index: 3, kind: input, shape index: {}]
  %s4 = inlined_call_operand.vmem [shape: f32[1,8], index: 4, kind: input, shape index: {}]
  %s5 = inlined_call_operand.vmem [shape: bf16[2,16,16,8], index: 5, kind: output, shape index: {}]
  %s6 = sld [smem:[#allocation0]]
  $region53: #{tpu_custom_call.1} parent=0
    _
  %s8 = ssub.s32 1, %s6
  %s9 = scalar_select 0, %s8, %s6
  loop: start=0, step=1, limit=4
  $region2: #{tpu_custom_call.1} parent=0 // loop_pre_header
    _
  $region3: #{tpu_custom_call.1} parent=0 // loop_header
    %s11 = sphi 0, %s15
    %p12 = scmp.ge.s32.totalorder %s11, 4
    %s21 = sphi 0, %s23
    %s24 = sphi 0, %s21
    %s25 = sphi 0, %s24
    %s41 = sphi 0, %s25
    %s45 = sphi 0, %s45
    %s47 = sphi 0, %s45
    %s48 = sphi 0, %s47
    %s62 = sphi 0, %s48
    %s66 = sphi 0, %s66
    %s68 = sphi 0, %s66
    %s69 = sphi 0, %s68
    %s83 = sphi 0, %s69
    %s87 = sphi 0, %s87
    %s89 = sphi 0, %s87
    %s90 = sphi 0, %s89
    %s104 = sphi 0, %s90
    %s108 = sphi 0, %s108
    %s110 = sphi 0, %s108
    %s111 = sphi 0, %s110
    %s125 = sphi 0, %s111
    %s131 = sphi 0, %s133
    %s134 = sphi 0, %s131
    %s135 = sphi 0, %s134
    %s151 = sphi 0, %s135
  $region4: #{tpu_custom_call.1} parent=0 // loop_header_branch
    %14 = sbr.rel (%p12) target = $region8
  $region5: #{tpu_custom_call.1} parent=0 // loop_body
    %s16 = ssub.s32 %s11, 1
    %s17 = ssub.s32 %s11, 2
    %s18 = sadd.s32 %s11, 1
    %s19 = ssub.s32 %s11, %s18
    %p20 = scmp.eq.s32.totalorder %s19, 0
    %s22 = sadd.s32 %s21, 1
    %s23 = scalar_select %p20, %s21, %s22
    %p26 = pneg %p20
    %p27 = scmp.eq.s32.totalorder %s11, 1
    %p28 = por %p26, %p27
    %p29 = scmp.ne.s32.totalorder %s21, %s24
    %p30 = scmp.eq.s32.totalorder %s11, 0
    %p31 = por %p29, %p30
    %p32 = scmp.ne.s32.totalorder %s21, %s24
    %p33 = scmp.eq.s32.totalorder %s16, 1
    %p34 = por %p32, %p33
    %p35 = scmp.ne.s32.totalorder %s24, %s25
    %p36 = scmp.eq.s32.totalorder %s16, 0
    %p37 = por %p35, %p36
    %p38 = scmp.ne.s32.totalorder %s24, %s25
    %p39 = scmp.eq.s32.totalorder %s17, 1
    %p40 = por %p38, %p39
    %p42 = scmp.ne.s32.totalorder %s25, %s41
    %p43 = scmp.eq.s32.totalorder %s17, 0
    %p44 = por %p42, %p43
    %s46 = sadd.s32 %s45, 1
    %p49 = scmp.eq.s32.totalorder %s11, 1
    %p50 = scmp.ne.s32.totalorder %s45, %s47
    %p51 = scmp.eq.s32.totalorder %s11, 0
    %p52 = por %p50, %p51
    %p53 = scmp.ne.s32.totalorder %s45, %s47
    %p54 = scmp.eq.s32.totalorder %s16, 1
    %p55 = por %p53, %p54
    %p56 = scmp.ne.s32.totalorder %s47, %s48
    %p57 = scmp.eq.s32.totalorder %s16, 0
    %p58 = por %p56, %p57
    %p59 = scmp.ne.s32.totalorder %s47, %s48
    %p60 = scmp.eq.s32.totalorder %s17, 1
    %p61 = por %p59, %p60
    %p63 = scmp.ne.s32.totalorder %s48, %s62
    %p64 = scmp.eq.s32.totalorder %s17, 0
    %p65 = por %p63, %p64
    %s67 = sadd.s32 %s66, 1
    %p70 = scmp.eq.s32.totalorder %s11, 1
    %p71 = scmp.ne.s32.totalorder %s66, %s68
    %p72 = scmp.eq.s32.totalorder %s11, 0
    %p73 = por %p71, %p72
    %p74 = scmp.ne.s32.totalorder %s66, %s68
    %p75 = scmp.eq.s32.totalorder %s16, 1
    %p76 = por %p74, %p75
    %p77 = scmp.ne.s32.totalorder %s68, %s69
    %p78 = scmp.eq.s32.totalorder %s16, 0
    %p79 = por %p77, %p78
    %p80 = scmp.ne.s32.totalorder %s68, %s69
    %p81 = scmp.eq.s32.totalorder %s17, 1
    %p82 = por %p80, %p81
    %p84 = scmp.ne.s32.totalorder %s69, %s83
    %p85 = scmp.eq.s32.totalorder %s17, 0
    %p86 = por %p84, %p85
    %s88 = sadd.s32 %s87, 1
    %p91 = scmp.eq.s32.totalorder %s11, 1
    %p92 = scmp.ne.s32.totalorder %s87, %s89
    %p93 = scmp.eq.s32.totalorder %s11, 0
    %p94 = por %p92, %p93
    %p95 = scmp.ne.s32.totalorder %s87, %s89
    %p96 = scmp.eq.s32.totalorder %s16, 1
    %p97 = por %p95, %p96
    %p98 = scmp.ne.s32.totalorder %s89, %s90
    %p99 = scmp.eq.s32.totalorder %s16, 0
    %p100 = por %p98, %p99
    %p101 = scmp.ne.s32.totalorder %s89, %s90
    %p102 = scmp.eq.s32.totalorder %s17, 1
    %p103 = por %p101, %p102
    %p105 = scmp.ne.s32.totalorder %s90, %s104
    %p106 = scmp.eq.s32.totalorder %s17, 0
    %p107 = por %p105, %p106
    %s109 = sadd.s32 %s108, 1
    %p112 = scmp.eq.s32.totalorder %s11, 1
    %p113 = scmp.ne.s32.totalorder %s108, %s110
    %p114 = scmp.eq.s32.totalorder %s11, 0
    %p115 = por %p113, %p114
    %p116 = scmp.ne.s32.totalorder %s108, %s110
    %p117 = scmp.eq.s32.totalorder %s16, 1
    %p118 = por %p116, %p117
    %p119 = scmp.ne.s32.totalorder %s110, %s111
    %p120 = scmp.eq.s32.totalorder %s16, 0
    %p121 = por %p119, %p120
    %p122 = scmp.ne.s32.totalorder %s110, %s111
    %p123 = scmp.eq.s32.totalorder %s17, 1
    %p124 = por %p122, %p123
    %p126 = scmp.ne.s32.totalorder %s111, %s125
    %p127 = scmp.eq.s32.totalorder %s17, 0
    %p128 = por %p126, %p127
    %s129 = ssub.s32 %s11, %s18
    %p130 = scmp.eq.s32.totalorder %s129, 0
    %s132 = sadd.s32 %s131, 1
    %s133 = scalar_select %p130, %s131, %s132
    %p136 = pneg %p130
    %p137 = scmp.eq.s32.totalorder %s11, 1
    %p138 = por %p136, %p137
    %p139 = scmp.ne.s32.totalorder %s131, %s134
    %p140 = scmp.eq.s32.totalorder %s11, 0
    %p141 = por %p139, %p140
    %p142 = scmp.ne.s32.totalorder %s131, %s134
    %p143 = scmp.eq.s32.totalorder %s16, 1
    %p144 = por %p142, %p143
    %p145 = scmp.ne.s32.totalorder %s134, %s135
    %p146 = scmp.eq.s32.totalorder %s16, 0
    %p147 = por %p145, %p146
    %p148 = scmp.ne.s32.totalorder %s134, %s135
    %p149 = scmp.eq.s32.totalorder %s17, 1
    %p150 = por %p148, %p149
    %p152 = scmp.ne.s32.totalorder %s135, %s151
    %p153 = scmp.eq.s32.totalorder %s17, 0
    %p154 = por %p152, %p153
    %p155 = scmp.le.s32.totalorder 1, %s11
    %p156 = scmp.lt.s32.totalorder %s11, 3
    %p157 = pnand %p155, %p156
    %p158 = pneg %p157
    // Predicated region
    $region9: #{tpu_custom_call.1} parent=5 // pred_check
      _
    $region10: #{tpu_custom_call.1} parent=5 // pred_check_branch
      %160 = sbr.rel (%p157) target = $region12
    $region11: #{tpu_custom_call.1} parent=5 // pred_region
      %s161 = ssub.s32 %s11, 1
      // Predicated region
      $region13: #{tpu_custom_call.1} parent=11 // pred_check
        %p162 = pneg %p58
      $region14: #{tpu_custom_call.1} parent=11 // pred_check_branch
        %164 = sbr.rel (%p162) target = $region16
      $region15: #{tpu_custom_call.1} parent=11 // pred_region
        _
      $region16: #{tpu_custom_call.1} parent=11 // pred_fallthru
        _
      // Predicated region
      $region17: #{tpu_custom_call.1} parent=11 // pred_check
        %p165 = pneg %p79
      $region18: #{tpu_custom_call.1} parent=11 // pred_check_branch
        %167 = sbr.rel (%p165) target = $region20
      $region19: #{tpu_custom_call.1} parent=11 // pred_region
        _
      $region20: #{tpu_custom_call.1} parent=11 // pred_fallthru
        _
      // Predicated region
      $region21: #{tpu_custom_call.1} parent=11 // pred_check
        %p168 = pneg %p100
      $region22: #{tpu_custom_call.1} parent=11 // pred_check_branch
        %170 = sbr.rel (%p168) target = $region24
      $region23: #{tpu_custom_call.1} parent=11 // pred_region
        _
      $region24: #{tpu_custom_call.1} parent=11 // pred_fallthru
        _
      // Predicated region
      $region25: #{tpu_custom_call.1} parent=11 // pred_check
        %p171 = pneg %p121
      $region26: #{tpu_custom_call.1} parent=11 // pred_check_branch
        %173 = sbr.rel (%p171) target = $region28
      $region27: #{tpu_custom_call.1} parent=11 // pred_region
        _
      $region28: #{tpu_custom_call.1} parent=11 // pred_fallthru
        _
    $region12: #{tpu_custom_call.1} parent=5 // pred_fallthru
      _
    %p174 = scmp.lt.s32.totalorder %s11, 2
    // Predicated region
    $region29: #{tpu_custom_call.1} parent=5 // pred_check
      %p175 = pneg %p174
    $region30: #{tpu_custom_call.1} parent=5 // pred_check_branch
      %177 = sbr.rel (%p175) target = $region32
    $region31: #{tpu_custom_call.1} parent=5 // pred_region
      // Predicated region
      $region33: #{tpu_custom_call.1} parent=31 // pred_check
        %p178 = pneg %p31
      $region34: #{tpu_custom_call.1} parent=31 // pred_check_branch
        %180 = sbr.rel (%p178) target = $region36
      $region35: #{tpu_custom_call.1} parent=31 // pred_region
        %p181 = scmp.lt.s32.totalorder %s11, 1
        %s182 = scalar_select %p181, %s11, 1
        %s183 = smul.addr %s182, 32
        %s184 = smul.addr %s183, 8
        %s185 = scalar_lea.vmem %s0, %s184
      $region36: #{tpu_custom_call.1} parent=31 // pred_fallthru
        _
    $region32: #{tpu_custom_call.1} parent=5 // pred_fallthru
      _
    %p186 = scmp.le.s32.totalorder 1, %s11
    %p187 = scmp.lt.s32.totalorder %s11, 3
    %p188 = pnand %p186, %p187
    %p189 = pneg %p188
    // Predicated region
    $region37: #{tpu_custom_call.1} parent=5 // pred_check
      _
    $region38: #{tpu_custom_call.1} parent=5 // pred_check_branch
      %191 = sbr.rel (%p188) target = $region40
    $region39: #{tpu_custom_call.1} parent=5 // pred_region
      %s192 = ssub.s32 %s11, 1
      %p193 = scmp.lt.s32.totalorder %s16, 1
      %s194 = scalar_select %p193, %s16, 1
      %s195 = smul.addr %s194, 32
      %s196 = smul.addr %s195, 8
      %s197 = scalar_lea.vmem %s0, %s196
      %p198 = pneg %p37
      %p199 = pneg %p34
      %p200 = pneg %p58
      %p201 = pneg %p55
      %p202 = pneg %p79
      %p203 = pneg %p76
      %p204 = pneg %p100
      %p205 = pneg %p97
      %p206 = pneg %p121
      %p207 = pneg %p118
      %p208 = pneg %p147
      %p209 = pneg %p144
      %p210 = scmp.lt.s32.totalorder %s16, 1
      %s211 = scalar_select %p210, %s16, 1
      %s212 = smul.addr %s211, 32
      %s213 = smul.addr %s212, 4
      %s214 = scalar_lea.vmem %s5, %s213
      %p215 = scmp.lt.s32.totalorder %s16, 1
      %s216 = scalar_select %p215, %s16, 1
      %s217 = smul.addr %s216, 32
      %s218 = smul.addr %s217, 8
      %s219 = scalar_lea.vmem %s0, %s218
      %p220 = scmp.lt.s32.totalorder %s16, 1
      %s221 = scalar_select %p220, %s16, 1
      %s222 = smul.addr %s221, 32
      %s223 = smul.addr %s222, 4
      %s224 = scalar_lea.vmem %s5, %s223
      %v227 = vld [vmem:[%s219] sm:$0xff]
      %v228 = vld [vmem:[%s219 + $0x8] sm:$0xff]
      %v229 = vld [vmem:[%s219 + $0x10] sm:$0xff]
      %v230 = vld [vmem:[%s219 + $0x18] sm:$0xff]
      %v231 = vld [vmem:[%s219 + $0x20] sm:$0xff]
      %v232 = vld [vmem:[%s219 + $0x28] sm:$0xff]
      %v233 = vld [vmem:[%s219 + $0x30] sm:$0xff]
      %v234 = vld [vmem:[%s219 + $0x38] sm:$0xff]
      %v235 = vld [vmem:[%s219 + $0x40] sm:$0xff]
      %v236 = vld [vmem:[%s219 + $0x48] sm:$0xff]
      %v237 = vld [vmem:[%s219 + $0x50] sm:$0xff]
      %v238 = vld [vmem:[%s219 + $0x58] sm:$0xff]
      %v239 = vld [vmem:[%s219 + $0x60] sm:$0xff]
      %v240 = vld [vmem:[%s219 + $0x68] sm:$0xff]
      %v241 = vld [vmem:[%s219 + $0x70] sm:$0xff]
      %v242 = vld [vmem:[%s219 + $0x78] sm:$0xff]
      %v243 = vld [vmem:[%s219 + $0x80] sm:$0xff]
      %v244 = vld [vmem:[%s219 + $0x88] sm:$0xff]
      %v245 = vld [vmem:[%s219 + $0x90] sm:$0xff]
      %v246 = vld [vmem:[%s219 + $0x98] sm:$0xff]
      %v247 = vld [vmem:[%s219 + $0xa0] sm:$0xff]
      %v248 = vld [vmem:[%s219 + $0xa8] sm:$0xff]
      %v249 = vld [vmem:[%s219 + $0xb0] sm:$0xff]
      %v250 = vld [vmem:[%s219 + $0xb8] sm:$0xff]
      %v251 = vld [vmem:[%s219 + $0xc0] sm:$0xff]
      %v252 = vld [vmem:[%s219 + $0xc8] sm:$0xff]
      %v253 = vld [vmem:[%s219 + $0xd0] sm:$0xff]
      %v254 = vld [vmem:[%s219 + $0xd8] sm:$0xff]
      %v255 = vld [vmem:[%s219 + $0xe0] sm:$0xff]
      %v256 = vld [vmem:[%s219 + $0xe8] sm:$0xff]
      %v257 = vld [vmem:[%s219 + $0xf0] sm:$0xff]
      %v258 = vld [vmem:[%s219 + $0xf8] sm:$0xff]
      %v259 = vpack.c.bf16 %v228, %v227
      %v260 = vpack.c.bf16 %v230, %v229
      %v261 = vpack.c.bf16 %v232, %v231
      %v262 = vpack.c.bf16 %v234, %v233
      %v263 = vpack.c.bf16 %v236, %v235
      %v264 = vpack.c.bf16 %v238, %v237
      %v265 = vpack.c.bf16 %v240, %v239
      %v266 = vpack.c.bf16 %v242, %v241
      %v267 = vpack.c.bf16 %v244, %v243
      %v268 = vpack.c.bf16 %v246, %v245
      %v269 = vpack.c.bf16 %v248, %v247
      %v270 = vpack.c.bf16 %v250, %v249
      %v271 = vpack.c.bf16 %v252, %v251
      %v272 = vpack.c.bf16 %v254, %v253
      %v273 = vpack.c.bf16 %v256, %v255
      %v274 = vpack.c.bf16 %v258, %v257
      %v275 = vld [vmem:[%s1] sm:$0xf]
      %v276 = vld [vmem:[%s2] sm:$0x1]
      %v278 = vlaneseq
      %v279 = vshrl.u32 %v278, 7
      %v280 = vsub.s32 0, %v279
      %v281 = vrot.slane %v276, %v280
      %vm283 = vcmask 64512
      %v285 = vsel %vm283, %v259, 0
      %v288 = vsel %vm283, %v260, 0
      %v291 = vsel %vm283, %v261, 0
      %v294 = vsel %vm283, %v262, 0
      %v297 = vsel %vm283, %v263, 0
      %v300 = vsel %vm283, %v264, 0
      %v303 = vsel %vm283, %v265, 0
      %v306 = vsel %vm283, %v266, 0
      %v309 = vsel %vm283, %v267, 0
      %v312 = vsel %vm283, %v268, 0
      %v315 = vsel %vm283, %v269, 0
      %v318 = vsel %vm283, %v270, 0
      %v321 = vsel %vm283, %v271, 0
      %v324 = vsel %vm283, %v272, 0
      %v327 = vsel %vm283, %v273, 0
      %v330 = vsel %vm283, %v274, 0
      %vm332 = vcmask 1043456
      %v334 = vsel %vm332, %v275, 0
      %336 = vmatprep.subr.bf16.mxu0 0
      %337 = vmatpush1.bf16.msra.mxu0 %v334
      %338 = vmatprep.subr.bf16.mxu0 0
      %339 = vmatpush1.bf16.msra.mxu0 0
      %340 = vmatprep.subr.bf16.mxu0 0
      %341 = vmatpush1.bf16.msra.mxu0 0
      %342 = vmatprep.subr.bf16.mxu0 0
      %343 = vmatpush1.bf16.msra.mxu0 0
      %344 = vmatprep.subr.bf16.mxu0 0
      %345 = vmatpush1.bf16.msra.mxu0 0
      %346 = vmatprep.subr.bf16.mxu0 0
      %347 = vmatpush1.bf16.msra.mxu0 0
      %348 = vmatprep.subr.bf16.mxu0 0
      %349 = vmatpush1.bf16.msra.mxu0 0
      %350 = vmatprep.subr.bf16.mxu0 0
      %351 = vmatpush1.bf16.msra.mxu0 0
      %352 = vmatprep.subr.bf16.mxu0 0
      %353 = vmatpush1.bf16.msra.mxu0 0
      %354 = vmatprep.subr.bf16.mxu0 0
      %355 = vmatpush1.bf16.msra.mxu0 0
      %356 = vmatprep.subr.bf16.mxu0 0
      %357 = vmatpush1.bf16.msra.mxu0 0
      %358 = vmatprep.subr.bf16.mxu0 0
      %359 = vmatpush1.bf16.msra.mxu0 0
      %360 = vmatprep.subr.bf16.mxu0 0
      %361 = vmatpush1.bf16.msra.mxu0 0
      %362 = vmatprep.subr.bf16.mxu0 0
      %363 = vmatpush1.bf16.msra.mxu0 0
      %364 = vmatprep.subr.bf16.mxu0 0
      %365 = vmatpush1.bf16.msra.mxu0 0
      %366 = vmatprep.subr.bf16.mxu0 0
      %367 = vmatpush1.bf16.msra.mxu0 0
      %368 = vmatprep.mubr.bf16.mxu0 0
      %369 = vmatmul.mubr.bf16.gmra.mrb[0].mxu0 %v285
      %v370 = vpop.f32.mrb[0].mxu0
      %v371 = vadd.f32 %v281, %v370
      %v372 = vpop.f32.mrb[0].mxu0
      %v373 = vpop.f32.mrb[0].mxu0
      %v374 = vadd.f32 %v281, %v373
      %v375 = vpop.f32.mrb[0].mxu0
      %376 = vmatprep.mubr.bf16.mxu0 0
      %377 = vmatmul.mubr.bf16.gmra.mrb[0].mxu0 %v288
      %v378 = vpop.f32.mrb[0].mxu0
      %v379 = vadd.f32 %v281, %v378
      %v380 = vpop.f32.mrb[0].mxu0
      %v381 = vpop.f32.mrb[0].mxu0
      %v382 = vadd.f32 %v281, %v381
      %v383 = vpop.f32.mrb[0].mxu0
      %384 = vmatprep.mubr.bf16.mxu0 0
      %385 = vmatmul.mubr.bf16.gmra.mrb[0].mxu0 %v291
      %v386 = vpop.f32.mrb[0].mxu0
      %v387 = vadd.f32 %v281, %v386
      %v388 = vpop.f32.mrb[0].mxu0
      %v389 = vpop.f32.mrb[0].mxu0
      %v390 = vadd.f32 %v281, %v389
      %v391 = vpop.f32.mrb[0].mxu0
      %392 = vmatprep.mubr.bf16.mxu0 0
      %393 = vmatmul.mubr.bf16.gmra.mrb[0].mxu0 %v294
      %v394 = vpop.f32.mrb[0].mxu0
      %v395 = vadd.f32 %v281, %v394
      %v396 = vpop.f32.mrb[0].mxu0
      %v397 = vpop.f32.mrb[0].mxu0
      %v398 = vadd.f32 %v281, %v397
      %v399 = vpop.f32.mrb[0].mxu0
      %400 = vmatprep.mubr.bf16.mxu0 0
      %401 = vmatmul.mubr.bf16.gmra.mrb[0].mxu0 %v297
      %v402 = vpop.f32.mrb[0].mxu0
      %v403 = vadd.f32 %v281, %v402
      %v404 = vpop.f32.mrb[0].mxu0
      %v405 = vpop.f32.mrb[0].mxu0
      %v406 = vadd.f32 %v281, %v405
      %v407 = vpop.f32.mrb[0].mxu0
      %408 = vmatprep.mubr.bf16.mxu0 0
      %409 = vmatmul.mubr.bf16.gmra.mrb[0].mxu0 %v300
      %v410 = vpop.f32.mrb[0].mxu0
      %v411 = vadd.f32 %v281, %v410
      %v412 = vpop.f32.mrb[0].mxu0
      %v413 = vpop.f32.mrb[0].mxu0
      %v414 = vadd.f32 %v281, %v413
      %v415 = vpop.f32.mrb[0].mxu0
      %416 = vmatprep.mubr.bf16.mxu0 0
      %417 = vmatmul.mubr.bf16.gmra.mrb[0].mxu0 %v303
      %v418 = vpop.f32.mrb[0].mxu0
      %v419 = vadd.f32 %v281, %v418
      %v420 = vpop.f32.mrb[0].mxu0
      %v421 = vpop.f32.mrb[0].mxu0
      %v422 = vadd.f32 %v281, %v421
      %v423 = vpop.f32.mrb[0].mxu0
      %424 = vmatprep.mubr.bf16.mxu0 0
      %425 = vmatmul.mubr.bf16.gmra.mrb[0].mxu0 %v306
      %v426 = vpop.f32.mrb[0].mxu0
      %v427 = vadd.f32 %v281, %v426
      %v428 = vpop.f32.mrb[0].mxu0
      %v429 = vpop.f32.mrb[0].mxu0
      %v430 = vadd.f32 %v281, %v429
      %v431 = vpop.f32.mrb[0].mxu0
      %432 = vmatprep.mubr.bf16.mxu0 0
      %433 = vmatmul.mubr.bf16.gmra.mrb[0].mxu0 %v309
      %v434 = vpop.f32.mrb[0].mxu0
      %v435 = vadd.f32 %v281, %v434
      %v436 = vpop.f32.mrb[0].mxu0
      %v437 = vpop.f32.mrb[0].mxu0
      %v438 = vadd.f32 %v281, %v437
      %v439 = vpop.f32.mrb[0].mxu0
      %440 = vmatprep.mubr.bf16.mxu0 0
      %441 = vmatmul.mubr.bf16.gmra.mrb[0].mxu0 %v312
      %v442 = vpop.f32.mrb[0].mxu0
      %v443 = vadd.f32 %v281, %v442
      %v444 = vpop.f32.mrb[0].mxu0
      %v445 = vpop.f32.mrb[0].mxu0
      %v446 = vadd.f32 %v281, %v445
      %v447 = vpop.f32.mrb[0].mxu0
      %448 = vmatprep.mubr.bf16.mxu0 0
      %449 = vmatmul.mubr.bf16.gmra.mrb[0].mxu0 %v315
      %v450 = vpop.f32.mrb[0].mxu0
      %v451 = vadd.f32 %v281, %v450
      %v452 = vpop.f32.mrb[0].mxu0
      %v453 = vpop.f32.mrb[0].mxu0
      %v454 = vadd.f32 %v281, %v453
      %v455 = vpop.f32.mrb[0].mxu0
      %456 = vmatprep.mubr.bf16.mxu0 0
      %457 = vmatmul.mubr.bf16.gmra.mrb[0].mxu0 %v318
      %v458 = vpop.f32.mrb[0].mxu0
      %v459 = vadd.f32 %v281, %v458
      %v460 = vpop.f32.mrb[0].mxu0
      %v461 = vpop.f32.mrb[0].mxu0
      %v462 = vadd.f32 %v281, %v461
      %v463 = vpop.f32.mrb[0].mxu0
      %464 = vmatprep.mubr.bf16.mxu0 0
      %465 = vmatmul.mubr.bf16.gmra.mrb[0].mxu0 %v321
      %v466 = vpop.f32.mrb[0].mxu0
      %v467 = vadd.f32 %v281, %v466
      %v468 = vpop.f32.mrb[0].mxu0
      %v469 = vpop.f32.mrb[0].mxu0
      %v470 = vadd.f32 %v281, %v469
      %v471 = vpop.f32.mrb[0].mxu0
      %472 = vmatprep.mubr.bf16.mxu0 0
      %473 = vmatmul.mubr.bf16.gmra.mrb[0].mxu0 %v324
      %v474 = vpop.f32.mrb[0].mxu0
      %v475 = vadd.f32 %v281, %v474
      %v476 = vpop.f32.mrb[0].mxu0
      %v477 = vpop.f32.mrb[0].mxu0
      %v478 = vadd.f32 %v281, %v477
      %v479 = vpop.f32.mrb[0].mxu0
      %480 = vmatprep.mubr.bf16.mxu0 0
      %481 = vmatmul.mubr.bf16.gmra.mrb[0].mxu0 %v327
      %v482 = vpop.f32.mrb[0].mxu0
      %v483 = vadd.f32 %v281, %v482
      %v484 = vpop.f32.mrb[0].mxu0
      %v485 = vpop.f32.mrb[0].mxu0
      %v486 = vadd.f32 %v281, %v485
      %v487 = vpop.f32.mrb[0].mxu0
      %488 = vmatprep.mubr.bf16.mxu0 0
      %489 = vmatmul.mubr.bf16.gmra.mrb[0].mxu0 %v330
      %v490 = vpop.f32.mrb[0].mxu0
      %v491 = vadd.f32 %v281, %v490
      %v492 = vpop.f32.mrb[0].mxu0
      %v493 = vpop.f32.mrb[0].mxu0
      %v494 = vadd.f32 %v281, %v493
      %v495 = vpop.f32.mrb[0].mxu0
      %496 = vdwg.mxu0
      %v497 = vxor.u32 %v371, 2147483648
      %v498 = vxor.u32 %v374, 2147483648
      %v499 = vxor.u32 %v379, 2147483648
      %v500 = vxor.u32 %v382, 2147483648
      %v501 = vxor.u32 %v387, 2147483648
      %v502 = vxor.u32 %v390, 2147483648
      %v503 = vxor.u32 %v395, 2147483648
      %v504 = vxor.u32 %v398, 2147483648
      %v505 = vxor.u32 %v403, 2147483648
      %v506 = vxor.u32 %v406, 2147483648
      %v507 = vxor.u32 %v411, 2147483648
      %v508 = vxor.u32 %v414, 2147483648
      %v509 = vxor.u32 %v419, 2147483648
      %v510 = vxor.u32 %v422, 2147483648
      %v511 = vxor.u32 %v427, 2147483648
      %v512 = vxor.u32 %v430, 2147483648
      %v513 = vxor.u32 %v435, 2147483648
      %v514 = vxor.u32 %v438, 2147483648
      %v515 = vxor.u32 %v443, 2147483648
      %v516 = vxor.u32 %v446, 2147483648
      %v517 = vxor.u32 %v451, 2147483648
      %v518 = vxor.u32 %v454, 2147483648
      %v519 = vxor.u32 %v459, 2147483648
      %v520 = vxor.u32 %v462, 2147483648
      %v521 = vxor.u32 %v467, 2147483648
      %v522 = vxor.u32 %v470, 2147483648
      %v523 = vxor.u32 %v475, 2147483648
      %v524 = vxor.u32 %v478, 2147483648
      %v525 = vxor.u32 %v483, 2147483648
      %v526 = vxor.u32 %v486, 2147483648
      %v527 = vxor.u32 %v491, 2147483648
      %v528 = vxor.u32 %v494, 2147483648
      %v529 = vmul.f32 %v497, 1.442695
      %v530 = vpow.pop %v529
      %v531 = vmul.f32 %v498, 1.442695
      %v532 = vpow.pop %v531
      %v533 = vmul.f32 %v499, 1.442695
      %v534 = vpow.pop %v533
      %v535 = vmul.f32 %v500, 1.442695
      %v536 = vpow.pop %v535
      %v537 = vmul.f32 %v501, 1.442695
      %v538 = vpow.pop %v537
      %v539 = vmul.f32 %v502, 1.442695
      %v540 = vpow.pop %v539
      %v541 = vmul.f32 %v503, 1.442695
      %v542 = vpow.pop %v541
      %v543 = vmul.f32 %v504, 1.442695
      %v544 = vpow.pop %v543
      %v545 = vmul.f32 %v505, 1.442695
      %v546 = vpow.pop %v545
      %v547 = vmul.f32 %v506, 1.442695
      %v548 = vpow.pop %v547
      %v549 = vmul.f32 %v507, 1.442695
      %v550 = vpow.pop %v549
      %v551 = vmul.f32 %v508, 1.442695
      %v552 = vpow.pop %v551
      %v553 = vmul.f32 %v509, 1.442695
      %v554 = vpow.pop %v553
      %v555 = vmul.f32 %v510, 1.442695
      %v556 = vpow.pop %v555
      %v557 = vmul.f32 %v511, 1.442695
      %v558 = vpow.pop %v557
      %v559 = vmul.f32 %v512, 1.442695
      %v560 = vpow.pop %v559
      %v561 = vmul.f32 %v513, 1.442695
      %v562 = vpow.pop %v561
      %v563 = vmul.f32 %v514, 1.442695
      %v564 = vpow.pop %v563
      %v565 = vmul.f32 %v515, 1.442695
      %v566 = vpow.pop %v565
      %v567 = vmul.f32 %v516, 1.442695
      %v568 = vpow.pop %v567
      %v569 = vmul.f32 %v517, 1.442695
      %v570 = vpow.pop %v569
      %v571 = vmul.f32 %v518, 1.442695
      %v572 = vpow.pop %v571
      %v573 = vmul.f32 %v519, 1.442695
      %v574 = vpow.pop %v573
      %v575 = vmul.f32 %v520, 1.442695
      %v576 = vpow.pop %v575
      %v577 = vmul.f32 %v521, 1.442695
      %v578 = vpow.pop %v577
      %v579 = vmul.f32 %v522, 1.442695
      %v580 = vpow.pop %v579
      %v581 = vmul.f32 %v523, 1.442695
      %v582 = vpow.pop %v581
      %v583 = vmul.f32 %v524, 1.442695
      %v584 = vpow.pop %v583
      %v585 = vmul.f32 %v525, 1.442695
      %v586 = vpow.pop %v585
      %v587 = vmul.f32 %v526, 1.442695
      %v588 = vpow.pop %v587
      %v589 = vmul.f32 %v527, 1.442695
      %v590 = vpow.pop %v589
      %v591 = vmul.f32 %v528, 1.442695
      %v592 = vpow.pop %v591
      %v593 = vadd.f32 %v530, 1.0
      %v594 = vadd.f32 %v532, 1.0
      %v595 = vadd.f32 %v534, 1.0
      %v596 = vadd.f32 %v536, 1.0
      %v597 = vadd.f32 %v538, 1.0
      %v598 = vadd.f32 %v540, 1.0
      %v599 = vadd.f32 %v542, 1.0
      %v600 = vadd.f32 %v544, 1.0
      %v601 = vadd.f32 %v546, 1.0
      %v602 = vadd.f32 %v548, 1.0
      %v603 = vadd.f32 %v550, 1.0
      %v604 = vadd.f32 %v552, 1.0
      %v605 = vadd.f32 %v554, 1.0
      %v606 = vadd.f32 %v556, 1.0
      %v607 = vadd.f32 %v558, 1.0
      %v608 = vadd.f32 %v560, 1.0
      %v609 = vadd.f32 %v562, 1.0
      %v610 = vadd.f32 %v564, 1.0
      %v611 = vadd.f32 %v566, 1.0
      %v612 = vadd.f32 %v568, 1.0
      %v613 = vadd.f32 %v570, 1.0
      %v614 = vadd.f32 %v572, 1.0
      %v615 = vadd.f32 %v574, 1.0
      %v616 = vadd.f32 %v576, 1.0
      %v617 = vadd.f32 %v578, 1.0
      %v618 = vadd.f32 %v580, 1.0
      %v619 = vadd.f32 %v582, 1.0
      %v620 = vadd.f32 %v584, 1.0
      %v621 = vadd.f32 %v586, 1.0
      %v622 = vadd.f32 %v588, 1.0
      %v623 = vadd.f32 %v590, 1.0
      %v624 = vadd.f32 %v592, 1.0
      %v625 = vrcp.pop %v593
      %v626 = vmul.f32 1.0, %v625
      %v627 = vrcp.pop %v594
      %v628 = vmul.f32 1.0, %v627
      %v629 = vrcp.pop %v595
      %v630 = vmul.f32 1.0, %v629
      %v631 = vrcp.pop %v596
      %v632 = vmul.f32 1.0, %v631
      %v633 = vrcp.pop %v597
      %v634 = vmul.f32 1.0, %v633
      %v635 = vrcp.pop %v598
      %v636 = vmul.f32 1.0, %v635
      %v637 = vrcp.pop %v599
      %v638 = vmul.f32 1.0, %v637
      %v639 = vrcp.pop %v600
      %v640 = vmul.f32 1.0, %v639
      %v641 = vrcp.pop %v601
      %v642 = vmul.f32 1.0, %v641
      %v643 = vrcp.pop %v602
      %v644 = vmul.f32 1.0, %v643
      %v645 = vrcp.pop %v603
      %v646 = vmul.f32 1.0, %v645
      %v647 = vrcp.pop %v604
      %v648 = vmul.f32 1.0, %v647
      %v649 = vrcp.pop %v605
      %v650 = vmul.f32 1.0, %v649
      %v651 = vrcp.pop %v606
      %v652 = vmul.f32 1.0, %v651
      %v653 = vrcp.pop %v607
      %v654 = vmul.f32 1.0, %v653
      %v655 = vrcp.pop %v608
      %v656 = vmul.f32 1.0, %v655
      %v657 = vrcp.pop %v609
      %v658 = vmul.f32 1.0, %v657
      %v659 = vrcp.pop %v610
      %v660 = vmul.f32 1.0, %v659
      %v661 = vrcp.pop %v611
      %v662 = vmul.f32 1.0, %v661
      %v663 = vrcp.pop %v612
      %v664 = vmul.f32 1.0, %v663
      %v665 = vrcp.pop %v613
      %v666 = vmul.f32 1.0, %v665
      %v667 = vrcp.pop %v614
      %v668 = vmul.f32 1.0, %v667
      %v669 = vrcp.pop %v615
      %v670 = vmul.f32 1.0, %v669
      %v671 = vrcp.pop %v616
      %v672 = vmul.f32 1.0, %v671
      %v673 = vrcp.pop %v617
      %v674 = vmul.f32 1.0, %v673
      %v675 = vrcp.pop %v618
      %v676 = vmul.f32 1.0, %v675
      %v677 = vrcp.pop %v619
      %v678 = vmul.f32 1.0, %v677
      %v679 = vrcp.pop %v620
      %v680 = vmul.f32 1.0, %v679
      %v681 = vrcp.pop %v621
      %v682 = vmul.f32 1.0, %v681
      %v683 = vrcp.pop %v622
      %v684 = vmul.f32 1.0, %v683
      %v685 = vrcp.pop %v623
      %v686 = vmul.f32 1.0, %v685
      %v687 = vrcp.pop %v624
      %v688 = vmul.f32 1.0, %v687
      %v689 = vmul.f32 %v371, %v626
      %v690 = vmul.f32 %v374, %v628
      %v691 = vmul.f32 %v379, %v630
      %v692 = vmul.f32 %v382, %v632
      %v693 = vmul.f32 %v387, %v634
      %v694 = vmul.f32 %v390, %v636
      %v695 = vmul.f32 %v395, %v638
      %v696 = vmul.f32 %v398, %v640
      %v697 = vmul.f32 %v403, %v642
      %v698 = vmul.f32 %v406, %v644
      %v699 = vmul.f32 %v411, %v646
      %v700 = vmul.f32 %v414, %v648
      %v701 = vmul.f32 %v419, %v650
      %v702 = vmul.f32 %v422, %v652
      %v703 = vmul.f32 %v427, %v654
      %v704 = vmul.f32 %v430, %v656
      %v705 = vmul.f32 %v435, %v658
      %v706 = vmul.f32 %v438, %v660
      %v707 = vmul.f32 %v443, %v662
      %v708 = vmul.f32 %v446, %v664
      %v709 = vmul.f32 %v451, %v666
      %v710 = vmul.f32 %v454, %v668
      %v711 = vmul.f32 %v459, %v670
      %v712 = vmul.f32 %v462, %v672
      %v713 = vmul.f32 %v467, %v674
      %v714 = vmul.f32 %v470, %v676
      %v715 = vmul.f32 %v475, %v678
      %v716 = vmul.f32 %v478, %v680
      %v717 = vmul.f32 %v483, %v682
      %v718 = vmul.f32 %v486, %v684
      %v719 = vmul.f32 %v491, %v686
      %v720 = vmul.f32 %v494, %v688
      %v721 = vpack.c.bf16 %v690, %v689
      %v722 = vpack.c.bf16 %v692, %v691
      %v723 = vpack.c.bf16 %v694, %v693
      %v724 = vpack.c.bf16 %v696, %v695
      %v725 = vpack.c.bf16 %v698, %v697
      %v726 = vpack.c.bf16 %v700, %v699
      %v727 = vpack.c.bf16 %v702, %v701
      %v728 = vpack.c.bf16 %v704, %v703
      %v729 = vpack.c.bf16 %v706, %v705
      %v730 = vpack.c.bf16 %v708, %v707
      %v731 = vpack.c.bf16 %v710, %v709
      %v732 = vpack.c.bf16 %v712, %v711
      %v733 = vpack.c.bf16 %v714, %v713
      %v734 = vpack.c.bf16 %v716, %v715
      %v735 = vpack.c.bf16 %v718, %v717
      %v736 = vpack.c.bf16 %v720, %v719
      %v737 = vld [vmem:[%s3] sm:$0x3]
      %v754 = vrot.slane %v721, 5
      %v755 = vrot.slane %v722, 5
      %v756 = vrot.slane %v723, 5
      %v757 = vrot.slane %v724, 5
      %v758 = vrot.slane %v725, 5
      %v759 = vrot.slane %v726, 5
      %v760 = vrot.slane %v727, 5
      %v761 = vrot.slane %v728, 5
      %v762 = vrot.slane %v729, 5
      %v763 = vrot.slane %v730, 5
      %v764 = vrot.slane %v731, 5
      %v765 = vrot.slane %v732, 5
      %v766 = vrot.slane %v733, 5
      %v767 = vrot.slane %v734, 5
      %v768 = vrot.slane %v735, 5
      %v769 = vrot.slane %v736, 5
      %vm770 = vcmask 1042432
      %v773 = vsel %vm770, 4286644096, %v754
      %v776 = vsel %vm770, 4286644096, %v755
      %v779 = vsel %vm770, 4286644096, %v756
      %v782 = vsel %vm770, 4286644096, %v757
      %v785 = vsel %vm770, 4286644096, %v758
      %v788 = vsel %vm770, 4286644096, %v759
      %v791 = vsel %vm770, 4286644096, %v760
      %v794 = vsel %vm770, 4286644096, %v761
      %v797 = vsel %vm770, 4286644096, %v762
      %v800 = vsel %vm770, 4286644096, %v763
      %v803 = vsel %vm770, 4286644096, %v764
      %v806 = vsel %vm770, 4286644096, %v765
      %v809 = vsel %vm770, 4286644096, %v766
      %v812 = vsel %vm770, 4286644096, %v767
      %v815 = vsel %vm770, 4286644096, %v768
      %v818 = vsel %vm770, 4286644096, %v769
      %v820 = vsel %vm770, %v754, 4286644096
      %v822 = vsel %vm770, %v755, 4286644096
      %v824 = vsel %vm770, %v756, 4286644096
      %v826 = vsel %vm770, %v757, 4286644096
      %v828 = vsel %vm770, %v758, 4286644096
      %v830 = vsel %vm770, %v759, 4286644096
      %v832 = vsel %vm770, %v760, 4286644096
      %v834 = vsel %vm770, %v761, 4286644096
      %v836 = vsel %vm770, %v762, 4286644096
      %v838 = vsel %vm770, %v763, 4286644096
      %v840 = vsel %vm770, %v764, 4286644096
      %v842 = vsel %vm770, %v765, 4286644096
      %v844 = vsel %vm770, %v766, 4286644096
      %v846 = vsel %vm770, %v767, 4286644096
      %v848 = vsel %vm770, %v768, 4286644096
      %v850 = vsel %vm770, %v769, 4286644096
      %v852 = vmax.bf16 %v773, %v776
      %v853 = vmax.bf16 %v820, %v822
      %v854 = vmax.bf16 %v776, %v779
      %v855 = vmax.bf16 %v822, %v824
      %v856 = vmax.bf16 %v779, %v782
      %v857 = vmax.bf16 %v824, %v826
      %v858 = vmax.bf16 %v782, %v785
      %v859 = vmax.bf16 %v826, %v828
      %v860 = vmax.bf16 %v785, %v788
      %v861 = vmax.bf16 %v828, %v830
      %v862 = vmax.bf16 %v788, %v791
      %v863 = vmax.bf16 %v830, %v832
      %v864 = vmax.bf16 %v791, %v794
      %v865 = vmax.bf16 %v832, %v834
      %v866 = vmax.bf16 %v794, %v797
      %v867 = vmax.bf16 %v834, %v836
      %v868 = vmax.bf16 %v797, %v800
      %v869 = vmax.bf16 %v836, %v838
      %v870 = vmax.bf16 %v800, %v803
      %v871 = vmax.bf16 %v838, %v840
      %v872 = vmax.bf16 %v803, %v806
      %v873 = vmax.bf16 %v840, %v842
      %v874 = vmax.bf16 %v806, %v809
      %v875 = vmax.bf16 %v842, %v844
      %v876 = vmax.bf16 %v809, %v812
      %v877 = vmax.bf16 %v844, %v846
      %v878 = vmax.bf16 %v812, %v815
      %v879 = vmax.bf16 %v846, %v848
      %v880 = vmax.bf16 %v815, %v818
      %v881 = vmax.bf16 %v848, %v850
      %v882 = vmax.bf16 %v852, %v779
      %v883 = vmax.bf16 %v853, %v824
      %v884 = vmax.bf16 %v854, %v782
      %v885 = vmax.bf16 %v855, %v826
      %v886 = vmax.bf16 %v856, %v785
      %v887 = vmax.bf16 %v857, %v828
      %v888 = vmax.bf16 %v858, %v788
      %v889 = vmax.bf16 %v859, %v830
      %v890 = vmax.bf16 %v860, %v791
      %v891 = vmax.bf16 %v861, %v832
      %v892 = vmax.bf16 %v862, %v794
      %v893 = vmax.bf16 %v863, %v834
      %v894 = vmax.bf16 %v864, %v797
      %v895 = vmax.bf16 %v865, %v836
      %v896 = vmax.bf16 %v866, %v800
      %v897 = vmax.bf16 %v867, %v838
      %v898 = vmax.bf16 %v868, %v803
      %v899 = vmax.bf16 %v869, %v840
      %v900 = vmax.bf16 %v870, %v806
      %v901 = vmax.bf16 %v871, %v842
      %v902 = vmax.bf16 %v872, %v809
      %v903 = vmax.bf16 %v873, %v844
      %v904 = vmax.bf16 %v874, %v812
      %v905 = vmax.bf16 %v875, %v846
      %v906 = vmax.bf16 %v876, %v815
      %v907 = vmax.bf16 %v877, %v848
      %v908 = vmax.bf16 %v878, %v818
      %v909 = vmax.bf16 %v879, %v850
      %v910 = vmax.bf16 %v882, %v782
      %v911 = vmax.bf16 %v883, %v826
      %v912 = vmax.bf16 %v884, %v785
      %v913 = vmax.bf16 %v885, %v828
      %v914 = vmax.bf16 %v886, %v788
      %v915 = vmax.bf16 %v887, %v830
      %v916 = vmax.bf16 %v888, %v791
      %v917 = vmax.bf16 %v889, %v832
      %v918 = vmax.bf16 %v890, %v794
      %v919 = vmax.bf16 %v891, %v834
      %v920 = vmax.bf16 %v892, %v797
      %v921 = vmax.bf16 %v893, %v836
      %v922 = vmax.bf16 %v894, %v800
      %v923 = vmax.bf16 %v895, %v838
      %v924 = vmax.bf16 %v896, %v803
      %v925 = vmax.bf16 %v897, %v840
      %v926 = vmax.bf16 %v898, %v806
      %v927 = vmax.bf16 %v899, %v842
      %v928 = vmax.bf16 %v900, %v809
      %v929 = vmax.bf16 %v901, %v844
      %v930 = vmax.bf16 %v902, %v812
      %v931 = vmax.bf16 %v903, %v846
      %v932 = vmax.bf16 %v904, %v815
      %v933 = vmax.bf16 %v905, %v848
      %v934 = vmax.bf16 %v906, %v818
      %v935 = vmax.bf16 %v907, %v850
      %v936 = vmax.bf16 %v910, %v785
      %v937 = vmax.bf16 %v911, %v828
      %v938 = vmax.bf16 %v912, %v788
      %v939 = vmax.bf16 %v913, %v830
      %v940 = vmax.bf16 %v914, %v791
      %v941 = vmax.bf16 %v915, %v832
      %v942 = vmax.bf16 %v916, %v794
      %v943 = vmax.bf16 %v917, %v834
      %v944 = vmax.bf16 %v918, %v797
      %v945 = vmax.bf16 %v919, %v836
      %v946 = vmax.bf16 %v920, %v800
      %v947 = vmax.bf16 %v921, %v838
      %v948 = vmax.bf16 %v922, %v803
      %v949 = vmax.bf16 %v923, %v840
      %v950 = vmax.bf16 %v924, %v806
      %v951 = vmax.bf16 %v925, %v842
      %v952 = vmax.bf16 %v926, %v809
      %v953 = vmax.bf16 %v927, %v844
      %v954 = vmax.bf16 %v928, %v812
      %v955 = vmax.bf16 %v929, %v846
      %v956 = vmax.bf16 %v930, %v815
      %v957 = vmax.bf16 %v931, %v848
      %v958 = vmax.bf16 %v932, %v818
      %v959 = vmax.bf16 %v933, %v850
      %vm960 = vsmask.f32 7424
      %v961 = vshrl.u32 4286644096, 16
      %v963 = vshll.u32 4286644096, 16
      %v965 = vrot.slane %v963, 1
      %v966 = vor.u32 %v961, %v965
      %v967 = vsel %vm960, %v966, %v965
      %v968 = vshrl.u32 %v773, 16
      %v970 = vshll.u32 %v773, 16
      %v972 = vrot.slane %v970, 1
      %v973 = vor.u32 %v968, %v972
      %v974 = vshll.u32 %v820, 16
      %v976 = vrot.slane %v974, 1
      %v977 = vsel %vm960, %v973, %v976
      %v978 = vshrl.u32 %v820, 16
      %v980 = vor.u32 %v978, %v976
      %v982 = vshrl.u32 %v852, 16
      %v984 = vshll.u32 %v852, 16
      %v986 = vrot.slane %v984, 1
      %v987 = vor.u32 %v982, %v986
      %v989 = vshll.u32 %v853, 16
      %v991 = vrot.slane %v989, 1
      %v992 = vsel %vm960, %v987, %v991
      %v993 = vshrl.u32 %v853, 16
      %v995 = vor.u32 %v993, %v991
      %v997 = vshrl.u32 %v882, 16
      %v999 = vshll.u32 %v882, 16
      %v1001 = vrot.slane %v999, 1
      %v1002 = vor.u32 %v997, %v1001
      %v1004 = vshll.u32 %v883, 16
      %v1006 = vrot.slane %v1004, 1
      %v1007 = vsel %vm960, %v1002, %v1006
      %v1008 = vshrl.u32 %v883, 16
      %v1010 = vor.u32 %v1008, %v1006
      %v1012 = vshrl.u32 %v910, 16
      %v1014 = vshll.u32 %v910, 16
      %v1016 = vrot.slane %v1014, 1
      %v1017 = vor.u32 %v1012, %v1016
      %v1019 = vshll.u32 %v911, 16
      %v1021 = vrot.slane %v1019, 1
      %v1022 = vsel %vm960, %v1017, %v1021
      %v1023 = vshrl.u32 %v911, 16
      %v1025 = vor.u32 %v1023, %v1021
      %v1027 = vshrl.u32 %v936, 16
      %v1029 = vshll.u32 %v936, 16
      %v1031 = vrot.slane %v1029, 1
      %v1032 = vor.u32 %v1027, %v1031
      %v1034 = vshll.u32 %v937, 16
      %v1036 = vrot.slane %v1034, 1
      %v1037 = vsel %vm960, %v1032, %v1036
      %v1038 = vshrl.u32 %v937, 16
      %v1040 = vor.u32 %v1038, %v1036
      %v1042 = vshrl.u32 %v938, 16
      %v1044 = vshll.u32 %v938, 16
      %v1046 = vrot.slane %v1044, 1
      %v1047 = vor.u32 %v1042, %v1046
      %v1049 = vshll.u32 %v939, 16
      %v1051 = vrot.slane %v1049, 1
      %v1052 = vsel %vm960, %v1047, %v1051
      %v1053 = vshrl.u32 %v939, 16
      %v1055 = vor.u32 %v1053, %v1051
      %v1057 = vshrl.u32 %v940, 16
      %v1059 = vshll.u32 %v940, 16
      %v1061 = vrot.slane %v1059, 1
      %v1062 = vor.u32 %v1057, %v1061
      %v1064 = vshll.u32 %v941, 16
      %v1066 = vrot.slane %v1064, 1
      %v1067 = vsel %vm960, %v1062, %v1066
      %v1068 = vshrl.u32 %v941, 16
      %v1070 = vor.u32 %v1068, %v1066
      %v1072 = vshrl.u32 %v942, 16
      %v1074 = vshll.u32 %v942, 16
      %v1076 = vrot.slane %v1074, 1
      %v1077 = vor.u32 %v1072, %v1076
      %v1079 = vshll.u32 %v943, 16
      %v1081 = vrot.slane %v1079, 1
      %v1082 = vsel %vm960, %v1077, %v1081
      %v1083 = vshrl.u32 %v943, 16
      %v1085 = vor.u32 %v1083, %v1081
      %v1087 = vshrl.u32 %v944, 16
      %v1089 = vshll.u32 %v944, 16
      %v1091 = vrot.slane %v1089, 1
      %v1092 = vor.u32 %v1087, %v1091
      %v1094 = vshll.u32 %v945, 16
      %v1096 = vrot.slane %v1094, 1
      %v1097 = vsel %vm960, %v1092, %v1096
      %v1098 = vshrl.u32 %v945, 16
      %v1100 = vor.u32 %v1098, %v1096
      %v1102 = vshrl.u32 %v946, 16
      %v1104 = vshll.u32 %v946, 16
      %v1106 = vrot.slane %v1104, 1
      %v1107 = vor.u32 %v1102, %v1106
      %v1109 = vshll.u32 %v947, 16
      %v1111 = vrot.slane %v1109, 1
      %v1112 = vsel %vm960, %v1107, %v1111
      %v1113 = vshrl.u32 %v947, 16
      %v1115 = vor.u32 %v1113, %v1111
      %v1117 = vshrl.u32 %v948, 16
      %v1119 = vshll.u32 %v948, 16
      %v1121 = vrot.slane %v1119, 1
      %v1122 = vor.u32 %v1117, %v1121
      %v1124 = vshll.u32 %v949, 16
      %v1126 = vrot.slane %v1124, 1
      %v1127 = vsel %vm960, %v1122, %v1126
      %v1128 = vshrl.u32 %v949, 16
      %v1130 = vor.u32 %v1128, %v1126
      %v1132 = vshrl.u32 %v950, 16
      %v1134 = vshll.u32 %v950, 16
      %v1136 = vrot.slane %v1134, 1
      %v1137 = vor.u32 %v1132, %v1136
      %v1139 = vshll.u32 %v951, 16
      %v1141 = vrot.slane %v1139, 1
      %v1142 = vsel %vm960, %v1137, %v1141
      %v1143 = vshrl.u32 %v951, 16
      %v1145 = vor.u32 %v1143, %v1141
      %v1147 = vshrl.u32 %v952, 16
      %v1149 = vshll.u32 %v952, 16
      %v1151 = vrot.slane %v1149, 1
      %v1152 = vor.u32 %v1147, %v1151
      %v1154 = vshll.u32 %v953, 16
      %v1156 = vrot.slane %v1154, 1
      %v1157 = vsel %vm960, %v1152, %v1156
      %v1158 = vshrl.u32 %v953, 16
      %v1160 = vor.u32 %v1158, %v1156
      %v1162 = vshrl.u32 %v954, 16
      %v1164 = vshll.u32 %v954, 16
      %v1166 = vrot.slane %v1164, 1
      %v1167 = vor.u32 %v1162, %v1166
      %v1169 = vshll.u32 %v955, 16
      %v1171 = vrot.slane %v1169, 1
      %v1172 = vsel %vm960, %v1167, %v1171
      %v1173 = vshrl.u32 %v955, 16
      %v1175 = vor.u32 %v1173, %v1171
      %v1177 = vshrl.u32 %v956, 16
      %v1179 = vshll.u32 %v956, 16
      %v1181 = vrot.slane %v1179, 1
      %v1182 = vor.u32 %v1177, %v1181
      %v1184 = vshll.u32 %v957, 16
      %v1186 = vrot.slane %v1184, 1
      %v1187 = vsel %vm960, %v1182, %v1186
      %v1188 = vshrl.u32 %v957, 16
      %v1190 = vor.u32 %v1188, %v1186
      %v1192 = vshrl.u32 %v958, 16
      %v1194 = vshll.u32 %v958, 16
      %v1196 = vrot.slane %v1194, 1
      %v1197 = vor.u32 %v1192, %v1196
      %v1199 = vshll.u32 %v959, 16
      %v1201 = vrot.slane %v1199, 1
      %v1202 = vsel %vm960, %v1197, %v1201
      %v1203 = vshrl.u32 %v959, 16
      %v1205 = vor.u32 %v1203, %v1201
      %v1207 = vshrl.u32 %v934, 16
      %v1209 = vshll.u32 %v934, 16
      %v1211 = vrot.slane %v1209, 1
      %v1212 = vor.u32 %v1207, %v1211
      %v1214 = vshll.u32 %v935, 16
      %v1216 = vrot.slane %v1214, 1
      %v1217 = vsel %vm960, %v1212, %v1216
      %v1218 = vshrl.u32 %v935, 16
      %v1220 = vor.u32 %v1218, %v1216
      %v1222 = vshrl.u32 %v908, 16
      %v1224 = vshll.u32 %v908, 16
      %v1226 = vrot.slane %v1224, 1
      %v1227 = vor.u32 %v1222, %v1226
      %v1229 = vshll.u32 %v909, 16
      %v1231 = vrot.slane %v1229, 1
      %v1232 = vsel %vm960, %v1227, %v1231
      %v1233 = vshrl.u32 %v909, 16
      %v1235 = vor.u32 %v1233, %v1231
      %v1237 = vshrl.u32 %v880, 16
      %v1239 = vshll.u32 %v880, 16
      %v1241 = vrot.slane %v1239, 1
      %v1242 = vor.u32 %v1237, %v1241
      %v1244 = vshll.u32 %v881, 16
      %v1246 = vrot.slane %v1244, 1
      %v1247 = vsel %vm960, %v1242, %v1246
      %v1248 = vshrl.u32 %v881, 16
      %v1250 = vor.u32 %v1248, %v1246
      %v1251 = vshrl.u32 %v818, 16
      %v1253 = vshll.u32 %v818, 16
      %v1255 = vrot.slane %v1253, 1
      %v1256 = vor.u32 %v1251, %v1255
      %v1257 = vshll.u32 %v850, 16
      %v1259 = vrot.slane %v1257, 1
      %v1260 = vsel %vm960, %v1256, %v1259
      %v1261 = vshrl.u32 %v850, 16
      %v1263 = vor.u32 %v1261, %v1259
      %v1306 = vmax.bf16 %v773, %v977
      %v1307 = vmax.bf16 %v820, %v980
      %v1308 = vmax.bf16 %v852, %v992
      %v1309 = vmax.bf16 %v853, %v995
      %v1310 = vmax.bf16 %v882, %v1007
      %v1311 = vmax.bf16 %v883, %v1010
      %v1312 = vmax.bf16 %v910, %v1022
      %v1313 = vmax.bf16 %v911, %v1025
      %v1314 = vmax.bf16 %v936, %v1037
      %v1315 = vmax.bf16 %v937, %v1040
      %v1316 = vmax.bf16 %v938, %v1052
      %v1317 = vmax.bf16 %v939, %v1055
      %v1318 = vmax.bf16 %v940, %v1067
      %v1319 = vmax.bf16 %v941, %v1070
      %v1320 = vmax.bf16 %v942, %v1082
      %v1321 = vmax.bf16 %v943, %v1085
      %v1322 = vmax.bf16 %v944, %v1097
      %v1323 = vmax.bf16 %v945, %v1100
      %v1324 = vmax.bf16 %v946, %v1112
      %v1325 = vmax.bf16 %v947, %v1115
      %v1326 = vmax.bf16 %v948, %v1127
      %v1327 = vmax.bf16 %v949, %v1130
      %v1328 = vmax.bf16 %v950, %v1142
      %v1329 = vmax.bf16 %v951, %v1145
      %v1330 = vmax.bf16 %v952, %v1157
      %v1331 = vmax.bf16 %v953, %v1160
      %v1332 = vmax.bf16 %v954, %v1172
      %v1333 = vmax.bf16 %v955, %v1175
      %v1334 = vmax.bf16 %v956, %v1187
      %v1335 = vmax.bf16 %v957, %v1190
      %v1336 = vmax.bf16 %v958, %v1202
      %v1337 = vmax.bf16 %v959, %v1205
      %v1338 = vmax.bf16 %v934, %v1217
      %v1339 = vmax.bf16 %v935, %v1220
      %v1340 = vmax.bf16 %v908, %v1232
      %v1341 = vmax.bf16 %v909, %v1235
      %v1342 = vmax.bf16 %v880, %v1247
      %v1343 = vmax.bf16 %v881, %v1250
      %v1344 = vmax.bf16 %v818, %v1260
      %v1345 = vmax.bf16 %v850, %v1263
      %vm1387 = vcmask 1046528
      %v1388 = vrot.slane 4286644096, 1
      %v1389 = vsel %vm1387, %v1388, %v1388
      %v1390 = vrot.slane %v773, 1
      %v1391 = vrot.slane %v820, 1
      %v1392 = vsel %vm1387, %v1390, %v1391
      %v1393 = vrot.slane %v852, 1
      %v1394 = vrot.slane %v853, 1
      %v1395 = vsel %vm1387, %v1393, %v1394
      %v1396 = vrot.slane %v882, 1
      %v1397 = vrot.slane %v883, 1
      %v1398 = vsel %vm1387, %v1396, %v1397
      %v1399 = vrot.slane %v910, 1
      %v1400 = vrot.slane %v911, 1
      %v1401 = vsel %vm1387, %v1399, %v1400
      %v1402 = vrot.slane %v936, 1
      %v1403 = vrot.slane %v937, 1
      %v1404 = vsel %vm1387, %v1402, %v1403
      %v1405 = vrot.slane %v938, 1
      %v1406 = vrot.slane %v939, 1
      %v1407 = vsel %vm1387, %v1405, %v1406
      %v1408 = vrot.slane %v940, 1
      %v1409 = vrot.slane %v941, 1
      %v1410 = vsel %vm1387, %v1408, %v1409
      %v1411 = vrot.slane %v942, 1
      %v1412 = vrot.slane %v943, 1
      %v1413 = vsel %vm1387, %v1411, %v1412
      %v1414 = vrot.slane %v944, 1
      %v1415 = vrot.slane %v945, 1
      %v1416 = vsel %vm1387, %v1414, %v1415
      %v1417 = vrot.slane %v946, 1
      %v1418 = vrot.slane %v947, 1
      %v1419 = vsel %vm1387, %v1417, %v1418
      %v1420 = vrot.slane %v948, 1
      %v1421 = vrot.slane %v949, 1
      %v1422 = vsel %vm1387, %v1420, %v1421
      %v1423 = vrot.slane %v950, 1
      %v1424 = vrot.slane %v951, 1
      %v1425 = vsel %vm1387, %v1423, %v1424
      %v1426 = vrot.slane %v952, 1
      %v1427 = vrot.slane %v953, 1
      %v1428 = vsel %vm1387, %v1426, %v1427
      %v1429 = vrot.slane %v954, 1
      %v1430 = vrot.slane %v955, 1
      %v1431 = vsel %vm1387, %v1429, %v1430
      %v1432 = vrot.slane %v956, 1
      %v1433 = vrot.slane %v957, 1
      %v1434 = vsel %vm1387, %v1432, %v1433
      %v1435 = vrot.slane %v958, 1
      %v1436 = vrot.slane %v959, 1
      %v1437 = vsel %vm1387, %v1435, %v1436
      %v1438 = vrot.slane %v934, 1
      %v1439 = vrot.slane %v935, 1
      %v1440 = vsel %vm1387, %v1438, %v1439
      %v1441 = vrot.slane %v908, 1
      %v1442 = vrot.slane %v909, 1
      %v1443 = vsel %vm1387, %v1441, %v1442
      %v1444 = vrot.slane %v880, 1
      %v1445 = vrot.slane %v881, 1
      %v1446 = vsel %vm1387, %v1444, %v1445
      %v1447 = vrot.slane %v818, 1
      %v1448 = vrot.slane %v850, 1
      %v1449 = vsel %vm1387, %v1447, %v1448
      %v1492 = vmax.bf16 %v967, %v1389
      %v1493 = vmax.bf16 %v966, %v1388
      %v1494 = vmax.bf16 %v1306, %v1392
      %v1495 = vmax.bf16 %v1307, %v1391
      %v1496 = vmax.bf16 %v1308, %v1395
      %v1497 = vmax.bf16 %v1309, %v1394
      %v1498 = vmax.bf16 %v1310, %v1398
      %v1499 = vmax.bf16 %v1311, %v1397
      %v1500 = vmax.bf16 %v1312, %v1401
      %v1501 = vmax.bf16 %v1313, %v1400
      %v1502 = vmax.bf16 %v1314, %v1404
      %v1503 = vmax.bf16 %v1315, %v1403
      %v1504 = vmax.bf16 %v1316, %v1407
      %v1505 = vmax.bf16 %v1317, %v1406
      %v1506 = vmax.bf16 %v1318, %v1410
      %v1507 = vmax.bf16 %v1319, %v1409
      %v1508 = vmax.bf16 %v1320, %v1413
      %v1509 = vmax.bf16 %v1321, %v1412
      %v1510 = vmax.bf16 %v1322, %v1416
      %v1511 = vmax.bf16 %v1323, %v1415
      %v1512 = vmax.bf16 %v1324, %v1419
      %v1513 = vmax.bf16 %v1325, %v1418
      %v1514 = vmax.bf16 %v1326, %v1422
      %v1515 = vmax.bf16 %v1327, %v1421
      %v1516 = vmax.bf16 %v1328, %v1425
      %v1517 = vmax.bf16 %v1329, %v1424
      %v1518 = vmax.bf16 %v1330, %v1428
      %v1519 = vmax.bf16 %v1331, %v1427
      %v1520 = vmax.bf16 %v1332, %v1431
      %v1521 = vmax.bf16 %v1333, %v1430
      %v1522 = vmax.bf16 %v1334, %v1434
      %v1523 = vmax.bf16 %v1335, %v1433
      %v1524 = vmax.bf16 %v1336, %v1437
      %v1525 = vmax.bf16 %v1337, %v1436
      %v1526 = vmax.bf16 %v1338, %v1440
      %v1527 = vmax.bf16 %v1339, %v1439
      %v1528 = vmax.bf16 %v1340, %v1443
      %v1529 = vmax.bf16 %v1341, %v1442
      %v1530 = vmax.bf16 %v1342, %v1446
      %v1531 = vmax.bf16 %v1343, %v1445
      %v1532 = vmax.bf16 %v1344, %v1449
      %v1533 = vmax.bf16 %v1345, %v1448
      %vm1534 = vsmask.f32 6400
      %v1535 = vrot.slane %v961, 1
      %v1536 = vrot.slane %v963, 2
      %v1537 = vor.u32 %v1535, %v1536
      %v1538 = vsel %vm1534, %v1537, %v1537
      %v1539 = vrot.slane %v968, 1
      %v1540 = vrot.slane %v970, 2
      %v1541 = vor.u32 %v1539, %v1540
      %v1542 = vrot.slane %v978, 1
      %v1543 = vrot.slane %v974, 2
      %v1544 = vor.u32 %v1542, %v1543
      %v1545 = vsel %vm1534, %v1541, %v1544
      %v1546 = vrot.slane %v982, 1
      %v1547 = vrot.slane %v984, 2
      %v1548 = vor.u32 %v1546, %v1547
      %v1549 = vrot.slane %v993, 1
      %v1550 = vrot.slane %v989, 2
      %v1551 = vor.u32 %v1549, %v1550
      %v1552 = vsel %vm1534, %v1548, %v1551
      %v1553 = vrot.slane %v997, 1
      %v1554 = vrot.slane %v999, 2
      %v1555 = vor.u32 %v1553, %v1554
      %v1556 = vrot.slane %v1008, 1
      %v1557 = vrot.slane %v1004, 2
      %v1558 = vor.u32 %v1556, %v1557
      %v1559 = vsel %vm1534, %v1555, %v1558
      %v1560 = vrot.slane %v1012, 1
      %v1561 = vrot.slane %v1014, 2
      %v1562 = vor.u32 %v1560, %v1561
      %v1563 = vrot.slane %v1023, 1
      %v1564 = vrot.slane %v1019, 2
      %v1565 = vor.u32 %v1563, %v1564
      %v1566 = vsel %vm1534, %v1562, %v1565
      %v1567 = vrot.slane %v1027, 1
      %v1568 = vrot.slane %v1029, 2
      %v1569 = vor.u32 %v1567, %v1568
      %v1570 = vrot.slane %v1038, 1
      %v1571 = vrot.slane %v1034, 2
      %v1572 = vor.u32 %v1570, %v1571
      %v1573 = vsel %vm1534, %v1569, %v1572
      %v1574 = vrot.slane %v1042, 1
      %v1575 = vrot.slane %v1044, 2
      %v1576 = vor.u32 %v1574, %v1575
      %v1577 = vrot.slane %v1053, 1
      %v1578 = vrot.slane %v1049, 2
      %v1579 = vor.u32 %v1577, %v1578
      %v1580 = vsel %vm1534, %v1576, %v1579
      %v1581 = vrot.slane %v1057, 1
      %v1582 = vrot.slane %v1059, 2
      %v1583 = vor.u32 %v1581, %v1582
      %v1584 = vrot.slane %v1068, 1
      %v1585 = vrot.slane %v1064, 2
      %v1586 = vor.u32 %v1584, %v1585
      %v1587 = vsel %vm1534, %v1583, %v1586
      %v1588 = vrot.slane %v1072, 1
      %v1589 = vrot.slane %v1074, 2
      %v1590 = vor.u32 %v1588, %v1589
      %v1591 = vrot.slane %v1083, 1
      %v1592 = vrot.slane %v1079, 2
      %v1593 = vor.u32 %v1591, %v1592
      %v1594 = vsel %vm1534, %v1590, %v1593
      %v1595 = vrot.slane %v1087, 1
      %v1596 = vrot.slane %v1089, 2
      %v1597 = vor.u32 %v1595, %v1596
      %v1598 = vrot.slane %v1098, 1
      %v1599 = vrot.slane %v1094, 2
      %v1600 = vor.u32 %v1598, %v1599
      %v1601 = vsel %vm1534, %v1597, %v1600
      %v1602 = vrot.slane %v1102, 1
      %v1603 = vrot.slane %v1104, 2
      %v1604 = vor.u32 %v1602, %v1603
      %v1605 = vrot.slane %v1113, 1
      %v1606 = vrot.slane %v1109, 2
      %v1607 = vor.u32 %v1605, %v1606
      %v1608 = vsel %vm1534, %v1604, %v1607
      %v1609 = vrot.slane %v1117, 1
      %v1610 = vrot.slane %v1119, 2
      %v1611 = vor.u32 %v1609, %v1610
      %v1612 = vrot.slane %v1128, 1
      %v1613 = vrot.slane %v1124, 2
      %v1614 = vor.u32 %v1612, %v1613
      %v1615 = vsel %vm1534, %v1611, %v1614
      %v1616 = vrot.slane %v1132, 1
      %v1617 = vrot.slane %v1134, 2
      %v1618 = vor.u32 %v1616, %v1617
      %v1619 = vrot.slane %v1143, 1
      %v1620 = vrot.slane %v1139, 2
      %v1621 = vor.u32 %v1619, %v1620
      %v1622 = vsel %vm1534, %v1618, %v1621
      %v1623 = vrot.slane %v1147, 1
      %v1624 = vrot.slane %v1149, 2
      %v1625 = vor.u32 %v1623, %v1624
      %v1626 = vrot.slane %v1158, 1
      %v1627 = vrot.slane %v1154, 2
      %v1628 = vor.u32 %v1626, %v1627
      %v1629 = vsel %vm1534, %v1625, %v1628
      %v1630 = vrot.slane %v1162, 1
      %v1631 = vrot.slane %v1164, 2
      %v1632 = vor.u32 %v1630, %v1631
      %v1633 = vrot.slane %v1173, 1
      %v1634 = vrot.slane %v1169, 2
      %v1635 = vor.u32 %v1633, %v1634
      %v1636 = vsel %vm1534, %v1632, %v1635
      %v1637 = vrot.slane %v1177, 1
      %v1638 = vrot.slane %v1179, 2
      %v1639 = vor.u32 %v1637, %v1638
      %v1640 = vrot.slane %v1188, 1
      %v1641 = vrot.slane %v1184, 2
      %v1642 = vor.u32 %v1640, %v1641
      %v1643 = vsel %vm1534, %v1639, %v1642
      %v1644 = vrot.slane %v1192, 1
      %v1645 = vrot.slane %v1194, 2
      %v1646 = vor.u32 %v1644, %v1645
      %v1647 = vrot.slane %v1203, 1
      %v1648 = vrot.slane %v1199, 2
      %v1649 = vor.u32 %v1647, %v1648
      %v1650 = vsel %vm1534, %v1646, %v1649
      %v1651 = vrot.slane %v1207, 1
      %v1652 = vrot.slane %v1209, 2
      %v1653 = vor.u32 %v1651, %v1652
      %v1654 = vrot.slane %v1218, 1
      %v1655 = vrot.slane %v1214, 2
      %v1656 = vor.u32 %v1654, %v1655
      %v1657 = vsel %vm1534, %v1653, %v1656
      %v1658 = vrot.slane %v1222, 1
      %v1659 = vrot.slane %v1224, 2
      %v1660 = vor.u32 %v1658, %v1659
      %v1661 = vrot.slane %v1233, 1
      %v1662 = vrot.slane %v1229, 2
      %v1663 = vor.u32 %v1661, %v1662
      %v1664 = vsel %vm1534, %v1660, %v1663
      %v1665 = vrot.slane %v1237, 1
      %v1666 = vrot.slane %v1239, 2
      %v1667 = vor.u32 %v1665, %v1666
      %v1668 = vrot.slane %v1248, 1
      %v1669 = vrot.slane %v1244, 2
      %v1670 = vor.u32 %v1668, %v1669
      %v1671 = vsel %vm1534, %v1667, %v1670
      %v1672 = vrot.slane %v1251, 1
      %v1673 = vrot.slane %v1253, 2
      %v1674 = vor.u32 %v1672, %v1673
      %v1675 = vrot.slane %v1261, 1
      %v1676 = vrot.slane %v1257, 2
      %v1677 = vor.u32 %v1675, %v1676
      %v1678 = vsel %vm1534, %v1674, %v1677
      %v1721 = vmax.bf16 %v1492, %v1538
      %v1722 = vmax.bf16 %v1493, %v1537
      %v1723 = vmax.bf16 %v1494, %v1545
      %v1724 = vmax.bf16 %v1495, %v1544
      %v1725 = vmax.bf16 %v1496, %v1552
      %v1726 = vmax.bf16 %v1497, %v1551
      %v1727 = vmax.bf16 %v1498, %v1559
      %v1728 = vmax.bf16 %v1499, %v1558
      %v1729 = vmax.bf16 %v1500, %v1566
      %v1730 = vmax.bf16 %v1501, %v1565
      %v1731 = vmax.bf16 %v1502, %v1573
      %v1732 = vmax.bf16 %v1503, %v1572
      %v1733 = vmax.bf16 %v1504, %v1580
      %v1734 = vmax.bf16 %v1505, %v1579
      %v1735 = vmax.bf16 %v1506, %v1587
      %v1736 = vmax.bf16 %v1507, %v1586
      %v1737 = vmax.bf16 %v1508, %v1594
      %v1738 = vmax.bf16 %v1509, %v1593
      %v1739 = vmax.bf16 %v1510, %v1601
      %v1740 = vmax.bf16 %v1511, %v1600
      %v1741 = vmax.bf16 %v1512, %v1608
      %v1742 = vmax.bf16 %v1513, %v1607
      %v1743 = vmax.bf16 %v1514, %v1615
      %v1744 = vmax.bf16 %v1515, %v1614
      %v1745 = vmax.bf16 %v1516, %v1622
      %v1746 = vmax.bf16 %v1517, %v1621
      %v1747 = vmax.bf16 %v1518, %v1629
      %v1748 = vmax.bf16 %v1519, %v1628
      %v1749 = vmax.bf16 %v1520, %v1636
      %v1750 = vmax.bf16 %v1521, %v1635
      %v1751 = vmax.bf16 %v1522, %v1643
      %v1752 = vmax.bf16 %v1523, %v1642
      %v1753 = vmax.bf16 %v1524, %v1650
      %v1754 = vmax.bf16 %v1525, %v1649
      %v1755 = vmax.bf16 %v1526, %v1657
      %v1756 = vmax.bf16 %v1527, %v1656
      %v1757 = vmax.bf16 %v1528, %v1664
      %v1758 = vmax.bf16 %v1529, %v1663
      %v1759 = vmax.bf16 %v1530, %v1671
      %v1760 = vmax.bf16 %v1531, %v1670
      %v1761 = vmax.bf16 %v1532, %v1678
      %v1762 = vmax.bf16 %v1533, %v1677
      %vm1763 = vcmask 1045504
      %v1764 = vrot.slane 4286644096, 2
      %v1765 = vsel %vm1763, %v1764, %v1764
      %v1766 = vrot.slane %v773, 2
      %v1767 = vrot.slane %v820, 2
      %v1768 = vsel %vm1763, %v1766, %v1767
      %v1769 = vrot.slane %v852, 2
      %v1770 = vrot.slane %v853, 2
      %v1771 = vsel %vm1763, %v1769, %v1770
      %v1772 = vrot.slane %v882, 2
      %v1773 = vrot.slane %v883, 2
      %v1774 = vsel %vm1763, %v1772, %v1773
      %v1775 = vrot.slane %v910, 2
      %v1776 = vrot.slane %v911, 2
      %v1777 = vsel %vm1763, %v1775, %v1776
      %v1778 = vrot.slane %v936, 2
      %v1779 = vrot.slane %v937, 2
      %v1780 = vsel %vm1763, %v1778, %v1779
      %v1781 = vrot.slane %v938, 2
      %v1782 = vrot.slane %v939, 2
      %v1783 = vsel %vm1763, %v1781, %v1782
      %v1784 = vrot.slane %v940, 2
      %v1785 = vrot.slane %v941, 2
      %v1786 = vsel %vm1763, %v1784, %v1785
      %v1787 = vrot.slane %v942, 2
      %v1788 = vrot.slane %v943, 2
      %v1789 = vsel %vm1763, %v1787, %v1788
      %v1790 = vrot.slane %v944, 2
      %v1791 = vrot.slane %v945, 2
      %v1792 = vsel %vm1763, %v1790, %v1791
      %v1793 = vrot.slane %v946, 2
      %v1794 = vrot.slane %v947, 2
      %v1795 = vsel %vm1763, %v1793, %v1794
      %v1796 = vrot.slane %v948, 2
      %v1797 = vrot.slane %v949, 2
      %v1798 = vsel %vm1763, %v1796, %v1797
      %v1799 = vrot.slane %v950, 2
      %v1800 = vrot.slane %v951, 2
      %v1801 = vsel %vm1763, %v1799, %v1800
      %v1802 = vrot.slane %v952, 2
      %v1803 = vrot.slane %v953, 2
      %v1804 = vsel %vm1763, %v1802, %v1803
      %v1805 = vrot.slane %v954, 2
      %v1806 = vrot.slane %v955, 2
      %v1807 = vsel %vm1763, %v1805, %v1806
      %v1808 = vrot.slane %v956, 2
      %v1809 = vrot.slane %v957, 2
      %v1810 = vsel %vm1763, %v1808, %v1809
      %v1811 = vrot.slane %v958, 2
      %v1812 = vrot.slane %v959, 2
      %v1813 = vsel %vm1763, %v1811, %v1812
      %v1814 = vrot.slane %v934, 2
      %v1815 = vrot.slane %v935, 2
      %v1816 = vsel %vm1763, %v1814, %v1815
      %v1817 = vrot.slane %v908, 2
      %v1818 = vrot.slane %v909, 2
      %v1819 = vsel %vm1763, %v1817, %v1818
      %v1820 = vrot.slane %v880, 2
      %v1821 = vrot.slane %v881, 2
      %v1822 = vsel %vm1763, %v1820, %v1821
      %v1823 = vrot.slane %v818, 2
      %v1824 = vrot.slane %v850, 2
      %v1825 = vsel %vm1763, %v1823, %v1824
      %v1868 = vmax.bf16 %v1721, %v1765
      %v1869 = vmax.bf16 %v1722, %v1764
      %v1870 = vmax.bf16 %v1723, %v1768
      %v1871 = vmax.bf16 %v1724, %v1767
      %v1872 = vmax.bf16 %v1725, %v1771
      %v1873 = vmax.bf16 %v1726, %v1770
      %v1874 = vmax.bf16 %v1727, %v1774
      %v1875 = vmax.bf16 %v1728, %v1773
      %v1876 = vmax.bf16 %v1729, %v1777
      %v1877 = vmax.bf16 %v1730, %v1776
      %v1878 = vmax.bf16 %v1731, %v1780
      %v1879 = vmax.bf16 %v1732, %v1779
      %v1880 = vmax.bf16 %v1733, %v1783
      %v1881 = vmax.bf16 %v1734, %v1782
      %v1882 = vmax.bf16 %v1735, %v1786
      %v1883 = vmax.bf16 %v1736, %v1785
      %v1884 = vmax.bf16 %v1737, %v1789
      %v1885 = vmax.bf16 %v1738, %v1788
      %v1886 = vmax.bf16 %v1739, %v1792
      %v1887 = vmax.bf16 %v1740, %v1791
      %v1888 = vmax.bf16 %v1741, %v1795
      %v1889 = vmax.bf16 %v1742, %v1794
      %v1890 = vmax.bf16 %v1743, %v1798
      %v1891 = vmax.bf16 %v1744, %v1797
      %v1892 = vmax.bf16 %v1745, %v1801
      %v1893 = vmax.bf16 %v1746, %v1800
      %v1894 = vmax.bf16 %v1747, %v1804
      %v1895 = vmax.bf16 %v1748, %v1803
      %v1896 = vmax.bf16 %v1749, %v1807
      %v1897 = vmax.bf16 %v1750, %v1806
      %v1898 = vmax.bf16 %v1751, %v1810
      %v1899 = vmax.bf16 %v1752, %v1809
      %v1900 = vmax.bf16 %v1753, %v1813
      %v1901 = vmax.bf16 %v1754, %v1812
      %v1902 = vmax.bf16 %v1755, %v1816
      %v1903 = vmax.bf16 %v1756, %v1815
      %v1904 = vmax.bf16 %v1757, %v1819
      %v1905 = vmax.bf16 %v1758, %v1818
      %v1906 = vmax.bf16 %v1759, %v1822
      %v1907 = vmax.bf16 %v1760, %v1821
      %v1908 = vmax.bf16 %v1761, %v1825
      %v1909 = vmax.bf16 %v1762, %v1824
      %v1942 = vrot.slane %v1874, 2
      %v1943 = vrot.slane %v1875, 2
      %v1944 = vsel %vm1763, %v1942, %v1943
      %v1945 = vrot.slane %v1876, 2
      %v1946 = vrot.slane %v1877, 2
      %v1947 = vsel %vm1763, %v1945, %v1946
      %v1948 = vrot.slane %v1878, 2
      %v1949 = vrot.slane %v1879, 2
      %v1950 = vsel %vm1763, %v1948, %v1949
      %v1951 = vrot.slane %v1880, 2
      %v1952 = vrot.slane %v1881, 2
      %v1953 = vsel %vm1763, %v1951, %v1952
      %v1954 = vrot.slane %v1882, 2
      %v1955 = vrot.slane %v1883, 2
      %v1956 = vsel %vm1763, %v1954, %v1955
      %v1957 = vrot.slane %v1884, 2
      %v1958 = vrot.slane %v1885, 2
      %v1959 = vsel %vm1763, %v1957, %v1958
      %v1960 = vrot.slane %v1886, 2
      %v1961 = vrot.slane %v1887, 2
      %v1962 = vsel %vm1763, %v1960, %v1961
      %v1963 = vrot.slane %v1888, 2
      %v1964 = vrot.slane %v1889, 2
      %v1965 = vsel %vm1763, %v1963, %v1964
      %v1966 = vrot.slane %v1890, 2
      %v1967 = vrot.slane %v1891, 2
      %v1968 = vsel %vm1763, %v1966, %v1967
      %v1969 = vrot.slane %v1892, 2
      %v1970 = vrot.slane %v1893, 2
      %v1971 = vsel %vm1763, %v1969, %v1970
      %v1972 = vrot.slane %v1894, 2
      %v1973 = vrot.slane %v1895, 2
      %v1974 = vsel %vm1763, %v1972, %v1973
      %v1975 = vrot.slane %v1896, 2
      %v1976 = vrot.slane %v1897, 2
      %v1977 = vsel %vm1763, %v1975, %v1976
      %v1978 = vrot.slane %v1898, 2
      %v1979 = vrot.slane %v1899, 2
      %v1980 = vsel %vm1763, %v1978, %v1979
      %v1981 = vrot.slane %v1900, 2
      %v1982 = vrot.slane %v1901, 2
      %v1983 = vsel %vm1763, %v1981, %v1982
      %v1984 = vrot.slane %v1902, 2
      %v1985 = vrot.slane %v1903, 2
      %v1986 = vsel %vm1763, %v1984, %v1985
      %v1987 = vrot.slane %v1904, 2
      %v1988 = vrot.slane %v1905, 2
      %v1989 = vsel %vm1763, %v1987, %v1988
      %v1990 = vld [vmem:[%s3] sm:$0xc]
      %v1992 = vunpack.c.l.b16 %v1990
      %v1993 = vpack.c.b16 %v1992, %v1992
      %v1994 = vrot.slane %v1993, 2
      %vm1995 = vcmask 31744
      %v1997 = vsel %vm1995, %v1944, 0
      %v2000 = vsel %vm1995, %v1947, 0
      %v2003 = vsel %vm1995, %v1950, 0
      %v2006 = vsel %vm1995, %v1953, 0
      %v2009 = vsel %vm1995, %v1956, 0
      %v2012 = vsel %vm1995, %v1959, 0
      %v2015 = vsel %vm1995, %v1962, 0
      %v2018 = vsel %vm1995, %v1965, 0
      %v2021 = vsel %vm1995, %v1968, 0
      %v2024 = vsel %vm1995, %v1971, 0
      %v2027 = vsel %vm1995, %v1974, 0
      %v2030 = vsel %vm1995, %v1977, 0
      %v2033 = vsel %vm1995, %v1980, 0
      %v2036 = vsel %vm1995, %v1983, 0
      %v2039 = vsel %vm1995, %v1986, 0
      %v2042 = vsel %vm1995, %v1989, 0
      %vm2044 = vcmask 1041408
      %v2046 = vsel %vm2044, %v1994, 0
      %2048 = vmatprep.subr.bf16.mxu0 0
      %2049 = vmatpush1.bf16.msra.mxu0 %v2046
      %2050 = vmatprep.subr.bf16.mxu0 0
      %2051 = vmatpush1.bf16.msra.mxu0 0
      %2052 = vmatprep.subr.bf16.mxu0 0
      %2053 = vmatpush1.bf16.msra.mxu0 0
      %2054 = vmatprep.subr.bf16.mxu0 0
      %2055 = vmatpush1.bf16.msra.mxu0 0
      %2056 = vmatprep.subr.bf16.mxu0 0
      %2057 = vmatpush1.bf16.msra.mxu0 0
      %2058 = vmatprep.subr.bf16.mxu0 0
      %2059 = vmatpush1.bf16.msra.mxu0 0
      %2060 = vmatprep.subr.bf16.mxu0 0
      %2061 = vmatpush1.bf16.msra.mxu0 0
      %2062 = vmatprep.subr.bf16.mxu0 0
      %2063 = vmatpush1.bf16.msra.mxu0 0
      %2064 = vmatprep.subr.bf16.mxu0 0
      %2065 = vmatpush1.bf16.msra.mxu0 0
      %2066 = vmatprep.subr.bf16.mxu0 0
      %2067 = vmatpush1.bf16.msra.mxu0 0
      %2068 = vmatprep.subr.bf16.mxu0 0
      %2069 = vmatpush1.bf16.msra.mxu0 0
      %2070 = vmatprep.subr.bf16.mxu0 0
      %2071 = vmatpush1.bf16.msra.mxu0 0
      %2072 = vmatprep.subr.bf16.mxu0 0
      %2073 = vmatpush1.bf16.msra.mxu0 0
      %2074 = vmatprep.subr.bf16.mxu0 0
      %2075 = vmatpush1.bf16.msra.mxu0 0
      %2076 = vmatprep.subr.bf16.mxu0 0
      %2077 = vmatpush1.bf16.msra.mxu0 0
      %2078 = vmatprep.subr.bf16.mxu0 0
      %2079 = vmatpush1.bf16.msra.mxu0 0
      %2080 = vmatprep.mubr.bf16.mxu0 0
      %2081 = vmatmul.mubr.bf16.gmra.mrb[0].mxu0 %v1997
      %v2082 = vpop.f32.mrb[0].mxu0
      %v2083 = vadd.f32 0.0, %v2082
      %v2084 = vpop.f32.mrb[0].mxu0
      %v2085 = vpop.f32.mrb[0].mxu0
      %v2086 = vadd.f32 0.0, %v2085
      %v2087 = vpop.f32.mrb[0].mxu0
      %2088 = vmatprep.mubr.bf16.mxu0 0
      %2089 = vmatmul.mubr.bf16.gmra.mrb[0].mxu0 %v2000
      %v2090 = vpop.f32.mrb[0].mxu0
      %v2091 = vadd.f32 0.0, %v2090
      %v2092 = vpop.f32.mrb[0].mxu0
      %v2093 = vpop.f32.mrb[0].mxu0
      %v2094 = vadd.f32 0.0, %v2093
      %v2095 = vpop.f32.mrb[0].mxu0
      %2096 = vmatprep.mubr.bf16.mxu0 0
      %2097 = vmatmul.mubr.bf16.gmra.mrb[0].mxu0 %v2003
      %v2098 = vpop.f32.mrb[0].mxu0
      %v2099 = vadd.f32 0.0, %v2098
      %v2100 = vpop.f32.mrb[0].mxu0
      %v2101 = vpop.f32.mrb[0].mxu0
      %v2102 = vadd.f32 0.0, %v2101
      %v2103 = vpop.f32.mrb[0].mxu0
      %2104 = vmatprep.mubr.bf16.mxu0 0
      %2105 = vmatmul.mubr.bf16.gmra.mrb[0].mxu0 %v2006
      %v2106 = vpop.f32.mrb[0].mxu0
      %v2107 = vadd.f32 0.0, %v2106
      %v2108 = vpop.f32.mrb[0].mxu0
      %v2109 = vpop.f32.mrb[0].mxu0
      %v2110 = vadd.f32 0.0, %v2109
      %v2111 = vpop.f32.mrb[0].mxu0
      %2112 = vmatprep.mubr.bf16.mxu0 0
      %2113 = vmatmul.mubr.bf16.gmra.mrb[0].mxu0 %v2009
      %v2114 = vpop.f32.mrb[0].mxu0
      %v2115 = vadd.f32 0.0, %v2114
      %v2116 = vpop.f32.mrb[0].mxu0
      %v2117 = vpop.f32.mrb[0].mxu0
      %v2118 = vadd.f32 0.0, %v2117
      %v2119 = vpop.f32.mrb[0].mxu0
      %2120 = vmatprep.mubr.bf16.mxu0 0
      %2121 = vmatmul.mubr.bf16.gmra.mrb[0].mxu0 %v2012
      %v2122 = vpop.f32.mrb[0].mxu0
      %v2123 = vadd.f32 0.0, %v2122
      %v2124 = vpop.f32.mrb[0].mxu0
      %v2125 = vpop.f32.mrb[0].mxu0
      %v2126 = vadd.f32 0.0, %v2125
      %v2127 = vpop.f32.mrb[0].mxu0
      %2128 = vmatprep.mubr.bf16.mxu0 0
      %2129 = vmatmul.mubr.bf16.gmra.mrb[0].mxu0 %v2015
      %v2130 = vpop.f32.mrb[0].mxu0
      %v2131 = vadd.f32 0.0, %v2130
      %v2132 = vpop.f32.mrb[0].mxu0
      %v2133 = vpop.f32.mrb[0].mxu0
      %v2134 = vadd.f32 0.0, %v2133
      %v2135 = vpop.f32.mrb[0].mxu0
      %2136 = vmatprep.mubr.bf16.mxu0 0
      %2137 = vmatmul.mubr.bf16.gmra.mrb[0].mxu0 %v2018
      %v2138 = vpop.f32.mrb[0].mxu0
      %v2139 = vadd.f32 0.0, %v2138
      %v2140 = vpop.f32.mrb[0].mxu0
      %v2141 = vpop.f32.mrb[0].mxu0
      %v2142 = vadd.f32 0.0, %v2141
      %v2143 = vpop.f32.mrb[0].mxu0
      %2144 = vmatprep.mubr.bf16.mxu0 0
      %2145 = vmatmul.mubr.bf16.gmra.mrb[0].mxu0 %v2021
      %v2146 = vpop.f32.mrb[0].mxu0
      %v2147 = vadd.f32 0.0, %v2146
      %v2148 = vpop.f32.mrb[0].mxu0
      %v2149 = vpop.f32.mrb[0].mxu0
      %v2150 = vadd.f32 0.0, %v2149
      %v2151 = vpop.f32.mrb[0].mxu0
      %2152 = vmatprep.mubr.bf16.mxu0 0
      %2153 = vmatmul.mubr.bf16.gmra.mrb[0].mxu0 %v2024
      %v2154 = vpop.f32.mrb[0].mxu0
      %v2155 = vadd.f32 0.0, %v2154
      %v2156 = vpop.f32.mrb[0].mxu0
      %v2157 = vpop.f32.mrb[0].mxu0
      %v2158 = vadd.f32 0.0, %v2157
      %v2159 = vpop.f32.mrb[0].mxu0
      %2160 = vmatprep.mubr.bf16.mxu0 0
      %2161 = vmatmul.mubr.bf16.gmra.mrb[0].mxu0 %v2027
      %v2162 = vpop.f32.mrb[0].mxu0
      %v2163 = vadd.f32 0.0, %v2162
      %v2164 = vpop.f32.mrb[0].mxu0
      %v2165 = vpop.f32.mrb[0].mxu0
      %v2166 = vadd.f32 0.0, %v2165
      %v2167 = vpop.f32.mrb[0].mxu0
      %2168 = vmatprep.mubr.bf16.mxu0 0
      %2169 = vmatmul.mubr.bf16.gmra.mrb[0].mxu0 %v2030
      %v2170 = vpop.f32.mrb[0].mxu0
      %v2171 = vadd.f32 0.0, %v2170
      %v2172 = vpop.f32.mrb[0].mxu0
      %v2173 = vpop.f32.mrb[0].mxu0
      %v2174 = vadd.f32 0.0, %v2173
      %v2175 = vpop.f32.mrb[0].mxu0
      %2176 = vmatprep.mubr.bf16.mxu0 0
      %2177 = vmatmul.mubr.bf16.gmra.mrb[0].mxu0 %v2033
      %v2178 = vpop.f32.mrb[0].mxu0
      %v2179 = vadd.f32 0.0, %v2178
      %v2180 = vpop.f32.mrb[0].mxu0
      %v2181 = vpop.f32.mrb[0].mxu0
      %v2182 = vadd.f32 0.0, %v2181
      %v2183 = vpop.f32.mrb[0].mxu0
      %2184 = vmatprep.mubr.bf16.mxu0 0
      %2185 = vmatmul.mubr.bf16.gmra.mrb[0].mxu0 %v2036
      %v2186 = vpop.f32.mrb[0].mxu0
      %v2187 = vadd.f32 0.0, %v2186
      %v2188 = vpop.f32.mrb[0].mxu0
      %v2189 = vpop.f32.mrb[0].mxu0
      %v2190 = vadd.f32 0.0, %v2189
      %v2191 = vpop.f32.mrb[0].mxu0
      %2192 = vmatprep.mubr.bf16.mxu0 0
      %2193 = vmatmul.mubr.bf16.gmra.mrb[0].mxu0 %v2039
      %v2194 = vpop.f32.mrb[0].mxu0
      %v2195 = vadd.f32 0.0, %v2194
      %v2196 = vpop.f32.mrb[0].mxu0
      %v2197 = vpop.f32.mrb[0].mxu0
      %v2198 = vadd.f32 0.0, %v2197
      %v2199 = vpop.f32.mrb[0].mxu0
      %2200 = vmatprep.mubr.bf16.mxu0 0
      %2201 = vmatmul.mubr.bf16.gmra.mrb[0].mxu0 %v2042
      %v2202 = vpop.f32.mrb[0].mxu0
      %v2203 = vadd.f32 0.0, %v2202
      %v2204 = vpop.f32.mrb[0].mxu0
      %v2205 = vpop.f32.mrb[0].mxu0
      %v2206 = vadd.f32 0.0, %v2205
      %v2207 = vpop.f32.mrb[0].mxu0
      %2208 = vdwg.mxu0
      %v2210 = vsel %vm1995, %v721, 0
      %v2213 = vsel %vm1995, %v722, 0
      %v2216 = vsel %vm1995, %v723, 0
      %v2219 = vsel %vm1995, %v724, 0
      %v2222 = vsel %vm1995, %v725, 0
      %v2225 = vsel %vm1995, %v726, 0
      %v2228 = vsel %vm1995, %v727, 0
      %v2231 = vsel %vm1995, %v728, 0
      %v2234 = vsel %vm1995, %v729, 0
      %v2237 = vsel %vm1995, %v730, 0
      %v2240 = vsel %vm1995, %v731, 0
      %v2243 = vsel %vm1995, %v732, 0
      %v2246 = vsel %vm1995, %v733, 0
      %v2249 = vsel %vm1995, %v734, 0
      %v2252 = vsel %vm1995, %v735, 0
      %v2255 = vsel %vm1995, %v736, 0
      %v2258 = vsel %vm2044, %v737, 0
      %2260 = vmatprep.subr.bf16.mxu0 0
      %2261 = vmatpush1.bf16.msra.mxu0 %v2258
      %2262 = vmatprep.subr.bf16.mxu0 0
      %2263 = vmatpush1.bf16.msra.mxu0 0
      %2264 = vmatprep.subr.bf16.mxu0 0
      %2265 = vmatpush1.bf16.msra.mxu0 0
      %2266 = vmatprep.subr.bf16.mxu0 0
      %2267 = vmatpush1.bf16.msra.mxu0 0
      %2268 = vmatprep.subr.bf16.mxu0 0
      %2269 = vmatpush1.bf16.msra.mxu0 0
      %2270 = vmatprep.subr.bf16.mxu0 0
      %2271 = vmatpush1.bf16.msra.mxu0 0
      %2272 = vmatprep.subr.bf16.mxu0 0
      %2273 = vmatpush1.bf16.msra.mxu0 0
      %2274 = vmatprep.subr.bf16.mxu0 0
      %2275 = vmatpush1.bf16.msra.mxu0 0
      %2276 = vmatprep.subr.bf16.mxu0 0
      %2277 = vmatpush1.bf16.msra.mxu0 0
      %2278 = vmatprep.subr.bf16.mxu0 0
      %2279 = vmatpush1.bf16.msra.mxu0 0
      %2280 = vmatprep.subr.bf16.mxu0 0
      %2281 = vmatpush1.bf16.msra.mxu0 0
      %2282 = vmatprep.subr.bf16.mxu0 0
      %2283 = vmatpush1.bf16.msra.mxu0 0
      %2284 = vmatprep.subr.bf16.mxu0 0
      %2285 = vmatpush1.bf16.msra.mxu0 0
      %2286 = vmatprep.subr.bf16.mxu0 0
      %2287 = vmatpush1.bf16.msra.mxu0 0
      %2288 = vmatprep.subr.bf16.mxu0 0
      %2289 = vmatpush1.bf16.msra.mxu0 0
      %2290 = vmatprep.subr.bf16.mxu0 0
      %2291 = vmatpush1.bf16.msra.mxu0 0
      %2292 = vmatprep.mubr.bf16.mxu0 0
      %2293 = vmatmul.mubr.bf16.gmra.mrb[0].mxu0 %v2210
      %v2294 = vpop.f32.mrb[0].mxu0
      %v2295 = vadd.f32 %v2083, %v2294
      %v2296 = vpop.f32.mrb[0].mxu0
      %v2297 = vpop.f32.mrb[0].mxu0
      %v2298 = vadd.f32 %v2086, %v2297
      %v2299 = vpop.f32.mrb[0].mxu0
      %2300 = vmatprep.mubr.bf16.mxu0 0
      %2301 = vmatmul.mubr.bf16.gmra.mrb[0].mxu0 %v2213
      %v2302 = vpop.f32.mrb[0].mxu0
      %v2303 = vadd.f32 %v2091, %v2302
      %v2304 = vpop.f32.mrb[0].mxu0
      %v2305 = vpop.f32.mrb[0].mxu0
      %v2306 = vadd.f32 %v2094, %v2305
      %v2307 = vpop.f32.mrb[0].mxu0
      %2308 = vmatprep.mubr.bf16.mxu0 0
      %2309 = vmatmul.mubr.bf16.gmra.mrb[0].mxu0 %v2216
      %v2310 = vpop.f32.mrb[0].mxu0
      %v2311 = vadd.f32 %v2099, %v2310
      %v2312 = vpop.f32.mrb[0].mxu0
      %v2313 = vpop.f32.mrb[0].mxu0
      %v2314 = vadd.f32 %v2102, %v2313
      %v2315 = vpop.f32.mrb[0].mxu0
      %2316 = vmatprep.mubr.bf16.mxu0 0
      %2317 = vmatmul.mubr.bf16.gmra.mrb[0].mxu0 %v2219
      %v2318 = vpop.f32.mrb[0].mxu0
      %v2319 = vadd.f32 %v2107, %v2318
      %v2320 = vpop.f32.mrb[0].mxu0
      %v2321 = vpop.f32.mrb[0].mxu0
      %v2322 = vadd.f32 %v2110, %v2321
      %v2323 = vpop.f32.mrb[0].mxu0
      %2324 = vmatprep.mubr.bf16.mxu0 0
      %2325 = vmatmul.mubr.bf16.gmra.mrb[0].mxu0 %v2222
      %v2326 = vpop.f32.mrb[0].mxu0
      %v2327 = vadd.f32 %v2115, %v2326
      %v2328 = vpop.f32.mrb[0].mxu0
      %v2329 = vpop.f32.mrb[0].mxu0
      %v2330 = vadd.f32 %v2118, %v2329
      %v2331 = vpop.f32.mrb[0].mxu0
      %2332 = vmatprep.mubr.bf16.mxu0 0
      %2333 = vmatmul.mubr.bf16.gmra.mrb[0].mxu0 %v2225
      %v2334 = vpop.f32.mrb[0].mxu0
      %v2335 = vadd.f32 %v2123, %v2334
      %v2336 = vpop.f32.mrb[0].mxu0
      %v2337 = vpop.f32.mrb[0].mxu0
      %v2338 = vadd.f32 %v2126, %v2337
      %v2339 = vpop.f32.mrb[0].mxu0
      %2340 = vmatprep.mubr.bf16.mxu0 0
      %2341 = vmatmul.mubr.bf16.gmra.mrb[0].mxu0 %v2228
      %v2342 = vpop.f32.mrb[0].mxu0
      %v2343 = vadd.f32 %v2131, %v2342
      %v2344 = vpop.f32.mrb[0].mxu0
      %v2345 = vpop.f32.mrb[0].mxu0
      %v2346 = vadd.f32 %v2134, %v2345
      %v2347 = vpop.f32.mrb[0].mxu0
      %2348 = vmatprep.mubr.bf16.mxu0 0
      %2349 = vmatmul.mubr.bf16.gmra.mrb[0].mxu0 %v2231
      %v2350 = vpop.f32.mrb[0].mxu0
      %v2351 = vadd.f32 %v2139, %v2350
      %v2352 = vpop.f32.mrb[0].mxu0
      %v2353 = vpop.f32.mrb[0].mxu0
      %v2354 = vadd.f32 %v2142, %v2353
      %v2355 = vpop.f32.mrb[0].mxu0
      %2356 = vmatprep.mubr.bf16.mxu0 0
      %2357 = vmatmul.mubr.bf16.gmra.mrb[0].mxu0 %v2234
      %v2358 = vpop.f32.mrb[0].mxu0
      %v2359 = vadd.f32 %v2147, %v2358
      %v2360 = vpop.f32.mrb[0].mxu0
      %v2361 = vpop.f32.mrb[0].mxu0
      %v2362 = vadd.f32 %v2150, %v2361
      %v2363 = vpop.f32.mrb[0].mxu0
      %2364 = vmatprep.mubr.bf16.mxu0 0
      %2365 = vmatmul.mubr.bf16.gmra.mrb[0].mxu0 %v2237
      %v2366 = vpop.f32.mrb[0].mxu0
      %v2367 = vadd.f32 %v2155, %v2366
      %v2368 = vpop.f32.mrb[0].mxu0
      %v2369 = vpop.f32.mrb[0].mxu0
      %v2370 = vadd.f32 %v2158, %v2369
      %v2371 = vpop.f32.mrb[0].mxu0
      %2372 = vmatprep.mubr.bf16.mxu0 0
      %2373 = vmatmul.mubr.bf16.gmra.mrb[0].mxu0 %v2240
      %v2374 = vpop.f32.mrb[0].mxu0
      %v2375 = vadd.f32 %v2163, %v2374
      %v2376 = vpop.f32.mrb[0].mxu0
      %v2377 = vpop.f32.mrb[0].mxu0
      %v2378 = vadd.f32 %v2166, %v2377
      %v2379 = vpop.f32.mrb[0].mxu0
      %2380 = vmatprep.mubr.bf16.mxu0 0
      %2381 = vmatmul.mubr.bf16.gmra.mrb[0].mxu0 %v2243
      %v2382 = vpop.f32.mrb[0].mxu0
      %v2383 = vadd.f32 %v2171, %v2382
      %v2384 = vpop.f32.mrb[0].mxu0
      %v2385 = vpop.f32.mrb[0].mxu0
      %v2386 = vadd.f32 %v2174, %v2385
      %v2387 = vpop.f32.mrb[0].mxu0
      %2388 = vmatprep.mubr.bf16.mxu0 0
      %2389 = vmatmul.mubr.bf16.gmra.mrb[0].mxu0 %v2246
      %v2390 = vpop.f32.mrb[0].mxu0
      %v2391 = vadd.f32 %v2179, %v2390
      %v2392 = vpop.f32.mrb[0].mxu0
      %v2393 = vpop.f32.mrb[0].mxu0
      %v2394 = vadd.f32 %v2182, %v2393
      %v2395 = vpop.f32.mrb[0].mxu0
      %2396 = vmatprep.mubr.bf16.mxu0 0
      %2397 = vmatmul.mubr.bf16.gmra.mrb[0].mxu0 %v2249
      %v2398 = vpop.f32.mrb[0].mxu0
      %v2399 = vadd.f32 %v2187, %v2398
      %v2400 = vpop.f32.mrb[0].mxu0
      %v2401 = vpop.f32.mrb[0].mxu0
      %v2402 = vadd.f32 %v2190, %v2401
      %v2403 = vpop.f32.mrb[0].mxu0
      %2404 = vmatprep.mubr.bf16.mxu0 0
      %2405 = vmatmul.mubr.bf16.gmra.mrb[0].mxu0 %v2252
      %v2406 = vpop.f32.mrb[0].mxu0
      %v2407 = vadd.f32 %v2195, %v2406
      %v2408 = vpop.f32.mrb[0].mxu0
      %v2409 = vpop.f32.mrb[0].mxu0
      %v2410 = vadd.f32 %v2198, %v2409
      %v2411 = vpop.f32.mrb[0].mxu0
      %2412 = vmatprep.mubr.bf16.mxu0 0
      %2413 = vmatmul.mubr.bf16.gmra.mrb[0].mxu0 %v2255
      %v2414 = vpop.f32.mrb[0].mxu0
      %v2415 = vadd.f32 %v2203, %v2414
      %v2416 = vpop.f32.mrb[0].mxu0
      %v2417 = vpop.f32.mrb[0].mxu0
      %v2418 = vadd.f32 %v2206, %v2417
      %v2419 = vpop.f32.mrb[0].mxu0
      %2420 = vdwg.mxu0
      %v2421 = vmax.bf16 %v1868, %v1870
      %v2422 = vmax.bf16 %v1869, %v1871
      %v2423 = vmax.bf16 %v1870, %v1872
      %v2424 = vmax.bf16 %v1871, %v1873
      %v2425 = vmax.bf16 %v1872, %v1874
      %v2426 = vmax.bf16 %v1873, %v1875
      %v2427 = vmax.bf16 %v1874, %v1876
      %v2428 = vmax.bf16 %v1875, %v1877
      %v2429 = vmax.bf16 %v1876, %v1878
      %v2430 = vmax.bf16 %v1877, %v1879
      %v2431 = vmax.bf16 %v1878, %v1880
      %v2432 = vmax.bf16 %v1879, %v1881
      %v2433 = vmax.bf16 %v1880, %v1882
      %v2434 = vmax.bf16 %v1881, %v1883
      %v2435 = vmax.bf16 %v1882, %v1884
      %v2436 = vmax.bf16 %v1883, %v1885
      %v2437 = vmax.bf16 %v1884, %v1886
      %v2438 = vmax.bf16 %v1885, %v1887
      %v2439 = vmax.bf16 %v1886, %v1888
      %v2440 = vmax.bf16 %v1887, %v1889
      %v2441 = vmax.bf16 %v1888, %v1890
      %v2442 = vmax.bf16 %v1889, %v1891
      %v2443 = vmax.bf16 %v1890, %v1892
      %v2444 = vmax.bf16 %v1891, %v1893
      %v2445 = vmax.bf16 %v1892, %v1894
      %v2446 = vmax.bf16 %v1893, %v1895
      %v2447 = vmax.bf16 %v1894, %v1896
      %v2448 = vmax.bf16 %v1895, %v1897
      %v2449 = vmax.bf16 %v1896, %v1898
      %v2450 = vmax.bf16 %v1897, %v1899
      %v2451 = vmax.bf16 %v1898, %v1900
      %v2452 = vmax.bf16 %v1899, %v1901
      %v2453 = vmax.bf16 %v1900, %v1902
      %v2454 = vmax.bf16 %v1901, %v1903
      %v2455 = vmax.bf16 %v1902, %v1904
      %v2456 = vmax.bf16 %v1903, %v1905
      %v2457 = vmax.bf16 %v1904, %v1906
      %v2458 = vmax.bf16 %v1905, %v1907
      %v2459 = vmax.bf16 %v2421, %v1872
      %v2460 = vmax.bf16 %v2422, %v1873
      %v2461 = vmax.bf16 %v2423, %v1874
      %v2462 = vmax.bf16 %v2424, %v1875
      %v2463 = vmax.bf16 %v2425, %v1876
      %v2464 = vmax.bf16 %v2426, %v1877
      %v2465 = vmax.bf16 %v2427, %v1878
      %v2466 = vmax.bf16 %v2428, %v1879
      %v2467 = vmax.bf16 %v2429, %v1880
      %v2468 = vmax.bf16 %v2430, %v1881
      %v2469 = vmax.bf16 %v2431, %v1882
      %v2470 = vmax.bf16 %v2432, %v1883
      %v2471 = vmax.bf16 %v2433, %v1884
      %v2472 = vmax.bf16 %v2434, %v1885
      %v2473 = vmax.bf16 %v2435, %v1886
      %v2474 = vmax.bf16 %v2436, %v1887
      %v2475 = vmax.bf16 %v2437, %v1888
      %v2476 = vmax.bf16 %v2438, %v1889
      %v2477 = vmax.bf16 %v2439, %v1890
      %v2478 = vmax.bf16 %v2440, %v1891
      %v2479 = vmax.bf16 %v2441, %v1892
      %v2480 = vmax.bf16 %v2442, %v1893
      %v2481 = vmax.bf16 %v2443, %v1894
      %v2482 = vmax.bf16 %v2444, %v1895
      %v2483 = vmax.bf16 %v2445, %v1896
      %v2484 = vmax.bf16 %v2446, %v1897
      %v2485 = vmax.bf16 %v2447, %v1898
      %v2486 = vmax.bf16 %v2448, %v1899
      %v2487 = vmax.bf16 %v2449, %v1900
      %v2488 = vmax.bf16 %v2450, %v1901
      %v2489 = vmax.bf16 %v2451, %v1902
      %v2490 = vmax.bf16 %v2452, %v1903
      %v2491 = vmax.bf16 %v2453, %v1904
      %v2492 = vmax.bf16 %v2454, %v1905
      %v2493 = vmax.bf16 %v2455, %v1906
      %v2494 = vmax.bf16 %v2456, %v1907
      %v2495 = vmax.bf16 %v2457, %v1908
      %v2496 = vmax.bf16 %v2458, %v1909
      %v2497 = vmax.bf16 %v2459, %v1874
      %v2498 = vmax.bf16 %v2460, %v1875
      %v2499 = vmax.bf16 %v2461, %v1876
      %v2500 = vmax.bf16 %v2462, %v1877
      %v2501 = vmax.bf16 %v2463, %v1878
      %v2502 = vmax.bf16 %v2464, %v1879
      %v2503 = vmax.bf16 %v2465, %v1880
      %v2504 = vmax.bf16 %v2466, %v1881
      %v2505 = vmax.bf16 %v2467, %v1882
      %v2506 = vmax.bf16 %v2468, %v1883
      %v2507 = vmax.bf16 %v2469, %v1884
      %v2508 = vmax.bf16 %v2470, %v1885
      %v2509 = vmax.bf16 %v2471, %v1886
      %v2510 = vmax.bf16 %v2472, %v1887
      %v2511 = vmax.bf16 %v2473, %v1888
      %v2512 = vmax.bf16 %v2474, %v1889
      %v2513 = vmax.bf16 %v2475, %v1890
      %v2514 = vmax.bf16 %v2476, %v1891
      %v2515 = vmax.bf16 %v2477, %v1892
      %v2516 = vmax.bf16 %v2478, %v1893
      %v2517 = vmax.bf16 %v2479, %v1894
      %v2518 = vmax.bf16 %v2480, %v1895
      %v2519 = vmax.bf16 %v2481, %v1896
      %v2520 = vmax.bf16 %v2482, %v1897
      %v2521 = vmax.bf16 %v2483, %v1898
      %v2522 = vmax.bf16 %v2484, %v1899
      %v2523 = vmax.bf16 %v2485, %v1900
      %v2524 = vmax.bf16 %v2486, %v1901
      %v2525 = vmax.bf16 %v2487, %v1902
      %v2526 = vmax.bf16 %v2488, %v1903
      %v2527 = vmax.bf16 %v2489, %v1904
      %v2528 = vmax.bf16 %v2490, %v1905
      %v2529 = vmax.bf16 %v2491, %v1906
      %v2530 = vmax.bf16 %v2492, %v1907
      %v2531 = vmax.bf16 %v2493, %v1908
      %v2532 = vmax.bf16 %v2494, %v1909
      %v2533 = vmax.bf16 %v2495, %v1868
      %v2534 = vmax.bf16 %v2496, %v1869
      %v2535 = vmax.bf16 %v2497, %v1876
      %v2536 = vmax.bf16 %v2498, %v1877
      %v2537 = vmax.bf16 %v2499, %v1878
      %v2538 = vmax.bf16 %v2500, %v1879
      %v2539 = vmax.bf16 %v2501, %v1880
      %v2540 = vmax.bf16 %v2502, %v1881
      %v2541 = vmax.bf16 %v2503, %v1882
      %v2542 = vmax.bf16 %v2504, %v1883
      %v2543 = vmax.bf16 %v2505, %v1884
      %v2544 = vmax.bf16 %v2506, %v1885
      %v2545 = vmax.bf16 %v2507, %v1886
      %v2546 = vmax.bf16 %v2508, %v1887
      %v2547 = vmax.bf16 %v2509, %v1888
      %v2548 = vmax.bf16 %v2510, %v1889
      %v2549 = vmax.bf16 %v2511, %v1890
      %v2550 = vmax.bf16 %v2512, %v1891
      %v2551 = vmax.bf16 %v2513, %v1892
      %v2552 = vmax.bf16 %v2514, %v1893
      %v2553 = vmax.bf16 %v2515, %v1894
      %v2554 = vmax.bf16 %v2516, %v1895
      %v2555 = vmax.bf16 %v2517, %v1896
      %v2556 = vmax.bf16 %v2518, %v1897
      %v2557 = vmax.bf16 %v2519, %v1898
      %v2558 = vmax.bf16 %v2520, %v1899
      %v2559 = vmax.bf16 %v2521, %v1900
      %v2560 = vmax.bf16 %v2522, %v1901
      %v2561 = vmax.bf16 %v2523, %v1902
      %v2562 = vmax.bf16 %v2524, %v1903
      %v2563 = vmax.bf16 %v2525, %v1904
      %v2564 = vmax.bf16 %v2526, %v1905
      %v2565 = vmax.bf16 %v2527, %v1906
      %v2566 = vmax.bf16 %v2528, %v1907
      %v2567 = vmax.bf16 %v2529, %v1908
      %v2568 = vmax.bf16 %v2530, %v1909
      %v2569 = vmax.bf16 %v2531, %v1868
      %v2570 = vmax.bf16 %v2532, %v1869
      %v2571 = vmax.bf16 %v2533, %v1868
      %v2572 = vmax.bf16 %v2534, %v1869
      %v2574 = vshrl.u32 %v2497, 16
      %v2576 = vshll.u32 %v2497, 16
      %v2578 = vrot.slane %v2576, 1
      %v2579 = vor.u32 %v2574, %v2578
      %v2581 = vshll.u32 %v2498, 16
      %v2583 = vrot.slane %v2581, 1
      %v2584 = vsel %vm960, %v2579, %v2583
      %v2585 = vshrl.u32 %v2498, 16
      %v2587 = vor.u32 %v2585, %v2583
      %v2589 = vshrl.u32 %v2535, 16
      %v2591 = vshll.u32 %v2535, 16
      %v2593 = vrot.slane %v2591, 1
      %v2594 = vor.u32 %v2589, %v2593
      %v2596 = vshll.u32 %v2536, 16
      %v2598 = vrot.slane %v2596, 1
      %v2599 = vsel %vm960, %v2594, %v2598
      %v2600 = vshrl.u32 %v2536, 16
      %v2602 = vor.u32 %v2600, %v2598
      %v2604 = vshrl.u32 %v2537, 16
      %v2606 = vshll.u32 %v2537, 16
      %v2608 = vrot.slane %v2606, 1
      %v2609 = vor.u32 %v2604, %v2608
      %v2611 = vshll.u32 %v2538, 16
      %v2613 = vrot.slane %v2611, 1
      %v2614 = vsel %vm960, %v2609, %v2613
      %v2615 = vshrl.u32 %v2538, 16
      %v2617 = vor.u32 %v2615, %v2613
      %v2619 = vshrl.u32 %v2539, 16
      %v2621 = vshll.u32 %v2539, 16
      %v2623 = vrot.slane %v2621, 1
      %v2624 = vor.u32 %v2619, %v2623
      %v2626 = vshll.u32 %v2540, 16
      %v2628 = vrot.slane %v2626, 1
      %v2629 = vsel %vm960, %v2624, %v2628
      %v2630 = vshrl.u32 %v2540, 16
      %v2632 = vor.u32 %v2630, %v2628
      %v2634 = vshrl.u32 %v2541, 16
      %v2636 = vshll.u32 %v2541, 16
      %v2638 = vrot.slane %v2636, 1
      %v2639 = vor.u32 %v2634, %v2638
      %v2641 = vshll.u32 %v2542, 16
      %v2643 = vrot.slane %v2641, 1
      %v2644 = vsel %vm960, %v2639, %v2643
      %v2645 = vshrl.u32 %v2542, 16
      %v2647 = vor.u32 %v2645, %v2643
      %v2649 = vshrl.u32 %v2543, 16
      %v2651 = vshll.u32 %v2543, 16
      %v2653 = vrot.slane %v2651, 1
      %v2654 = vor.u32 %v2649, %v2653
      %v2656 = vshll.u32 %v2544, 16
      %v2658 = vrot.slane %v2656, 1
      %v2659 = vsel %vm960, %v2654, %v2658
      %v2660 = vshrl.u32 %v2544, 16
      %v2662 = vor.u32 %v2660, %v2658
      %v2664 = vshrl.u32 %v2545, 16
      %v2666 = vshll.u32 %v2545, 16
      %v2668 = vrot.slane %v2666, 1
      %v2669 = vor.u32 %v2664, %v2668
      %v2671 = vshll.u32 %v2546, 16
      %v2673 = vrot.slane %v2671, 1
      %v2674 = vsel %vm960, %v2669, %v2673
      %v2675 = vshrl.u32 %v2546, 16
      %v2677 = vor.u32 %v2675, %v2673
      %v2679 = vshrl.u32 %v2547, 16
      %v2681 = vshll.u32 %v2547, 16
      %v2683 = vrot.slane %v2681, 1
      %v2684 = vor.u32 %v2679, %v2683
      %v2686 = vshll.u32 %v2548, 16
      %v2688 = vrot.slane %v2686, 1
      %v2689 = vsel %vm960, %v2684, %v2688
      %v2690 = vshrl.u32 %v2548, 16
      %v2692 = vor.u32 %v2690, %v2688
      %v2694 = vshrl.u32 %v2549, 16
      %v2696 = vshll.u32 %v2549, 16
      %v2698 = vrot.slane %v2696, 1
      %v2699 = vor.u32 %v2694, %v2698
      %v2701 = vshll.u32 %v2550, 16
      %v2703 = vrot.slane %v2701, 1
      %v2704 = vsel %vm960, %v2699, %v2703
      %v2705 = vshrl.u32 %v2550, 16
      %v2707 = vor.u32 %v2705, %v2703
      %v2709 = vshrl.u32 %v2551, 16
      %v2711 = vshll.u32 %v2551, 16
      %v2713 = vrot.slane %v2711, 1
      %v2714 = vor.u32 %v2709, %v2713
      %v2716 = vshll.u32 %v2552, 16
      %v2718 = vrot.slane %v2716, 1
      %v2719 = vsel %vm960, %v2714, %v2718
      %v2720 = vshrl.u32 %v2552, 16
      %v2722 = vor.u32 %v2720, %v2718
      %v2724 = vshrl.u32 %v2553, 16
      %v2726 = vshll.u32 %v2553, 16
      %v2728 = vrot.slane %v2726, 1
      %v2729 = vor.u32 %v2724, %v2728
      %v2731 = vshll.u32 %v2554, 16
      %v2733 = vrot.slane %v2731, 1
      %v2734 = vsel %vm960, %v2729, %v2733
      %v2735 = vshrl.u32 %v2554, 16
      %v2737 = vor.u32 %v2735, %v2733
      %v2739 = vshrl.u32 %v2555, 16
      %v2741 = vshll.u32 %v2555, 16
      %v2743 = vrot.slane %v2741, 1
      %v2744 = vor.u32 %v2739, %v2743
      %v2746 = vshll.u32 %v2556, 16
      %v2748 = vrot.slane %v2746, 1
      %v2749 = vsel %vm960, %v2744, %v2748
      %v2750 = vshrl.u32 %v2556, 16
      %v2752 = vor.u32 %v2750, %v2748
      %v2754 = vshrl.u32 %v2557, 16
      %v2756 = vshll.u32 %v2557, 16
      %v2758 = vrot.slane %v2756, 1
      %v2759 = vor.u32 %v2754, %v2758
      %v2761 = vshll.u32 %v2558, 16
      %v2763 = vrot.slane %v2761, 1
      %v2764 = vsel %vm960, %v2759, %v2763
      %v2765 = vshrl.u32 %v2558, 16
      %v2767 = vor.u32 %v2765, %v2763
      %v2769 = vshrl.u32 %v2559, 16
      %v2771 = vshll.u32 %v2559, 16
      %v2773 = vrot.slane %v2771, 1
      %v2774 = vor.u32 %v2769, %v2773
      %v2776 = vshll.u32 %v2560, 16
      %v2778 = vrot.slane %v2776, 1
      %v2779 = vsel %vm960, %v2774, %v2778
      %v2780 = vshrl.u32 %v2560, 16
      %v2782 = vor.u32 %v2780, %v2778
      %v2784 = vshrl.u32 %v2561, 16
      %v2786 = vshll.u32 %v2561, 16
      %v2788 = vrot.slane %v2786, 1
      %v2789 = vor.u32 %v2784, %v2788
      %v2791 = vshll.u32 %v2562, 16
      %v2793 = vrot.slane %v2791, 1
      %v2794 = vsel %vm960, %v2789, %v2793
      %v2795 = vshrl.u32 %v2562, 16
      %v2797 = vor.u32 %v2795, %v2793
      %v2799 = vshrl.u32 %v2563, 16
      %v2801 = vshll.u32 %v2563, 16
      %v2803 = vrot.slane %v2801, 1
      %v2804 = vor.u32 %v2799, %v2803
      %v2806 = vshll.u32 %v2564, 16
      %v2808 = vrot.slane %v2806, 1
      %v2809 = vsel %vm960, %v2804, %v2808
      %v2810 = vshrl.u32 %v2564, 16
      %v2812 = vor.u32 %v2810, %v2808
      %v2814 = vshrl.u32 %v2565, 16
      %v2816 = vshll.u32 %v2565, 16
      %v2818 = vrot.slane %v2816, 1
      %v2819 = vor.u32 %v2814, %v2818
      %v2821 = vshll.u32 %v2566, 16
      %v2823 = vrot.slane %v2821, 1
      %v2824 = vsel %vm960, %v2819, %v2823
      %v2825 = vshrl.u32 %v2566, 16
      %v2827 = vor.u32 %v2825, %v2823
      %v2829 = vshrl.u32 %v2567, 16
      %v2831 = vshll.u32 %v2567, 16
      %v2833 = vrot.slane %v2831, 1
      %v2834 = vor.u32 %v2829, %v2833
      %v2836 = vshll.u32 %v2568, 16
      %v2838 = vrot.slane %v2836, 1
      %v2839 = vsel %vm960, %v2834, %v2838
      %v2840 = vshrl.u32 %v2568, 16
      %v2842 = vor.u32 %v2840, %v2838
      %v2844 = vshrl.u32 %v2569, 16
      %v2846 = vshll.u32 %v2569, 16
      %v2848 = vrot.slane %v2846, 1
      %v2849 = vor.u32 %v2844, %v2848
      %v2851 = vshll.u32 %v2570, 16
      %v2853 = vrot.slane %v2851, 1
      %v2854 = vsel %vm960, %v2849, %v2853
      %v2855 = vshrl.u32 %v2570, 16
      %v2857 = vor.u32 %v2855, %v2853
      %v2859 = vshrl.u32 %v2571, 16
      %v2861 = vshll.u32 %v2571, 16
      %v2863 = vrot.slane %v2861, 1
      %v2864 = vor.u32 %v2859, %v2863
      %v2866 = vshll.u32 %v2572, 16
      %v2868 = vrot.slane %v2866, 1
      %v2869 = vsel %vm960, %v2864, %v2868
      %v2870 = vshrl.u32 %v2572, 16
      %v2872 = vor.u32 %v2870, %v2868
      %v2913 = vmax.bf16 %v2497, %v2584
      %v2914 = vmax.bf16 %v2498, %v2587
      %v2915 = vmax.bf16 %v2535, %v2599
      %v2916 = vmax.bf16 %v2536, %v2602
      %v2917 = vmax.bf16 %v2537, %v2614
      %v2918 = vmax.bf16 %v2538, %v2617
      %v2919 = vmax.bf16 %v2539, %v2629
      %v2920 = vmax.bf16 %v2540, %v2632
      %v2921 = vmax.bf16 %v2541, %v2644
      %v2922 = vmax.bf16 %v2542, %v2647
      %v2923 = vmax.bf16 %v2543, %v2659
      %v2924 = vmax.bf16 %v2544, %v2662
      %v2925 = vmax.bf16 %v2545, %v2674
      %v2926 = vmax.bf16 %v2546, %v2677
      %v2927 = vmax.bf16 %v2547, %v2689
      %v2928 = vmax.bf16 %v2548, %v2692
      %v2929 = vmax.bf16 %v2549, %v2704
      %v2930 = vmax.bf16 %v2550, %v2707
      %v2931 = vmax.bf16 %v2551, %v2719
      %v2932 = vmax.bf16 %v2552, %v2722
      %v2933 = vmax.bf16 %v2553, %v2734
      %v2934 = vmax.bf16 %v2554, %v2737
      %v2935 = vmax.bf16 %v2555, %v2749
      %v2936 = vmax.bf16 %v2556, %v2752
      %v2937 = vmax.bf16 %v2557, %v2764
      %v2938 = vmax.bf16 %v2558, %v2767
      %v2939 = vmax.bf16 %v2559, %v2779
      %v2940 = vmax.bf16 %v2560, %v2782
      %v2941 = vmax.bf16 %v2561, %v2794
      %v2942 = vmax.bf16 %v2562, %v2797
      %v2943 = vmax.bf16 %v2563, %v2809
      %v2944 = vmax.bf16 %v2564, %v2812
      %v2945 = vmax.bf16 %v2565, %v2824
      %v2946 = vmax.bf16 %v2566, %v2827
      %v2947 = vmax.bf16 %v2567, %v2839
      %v2948 = vmax.bf16 %v2568, %v2842
      %v2949 = vmax.bf16 %v2569, %v2854
      %v2950 = vmax.bf16 %v2570, %v2857
      %v2951 = vmax.bf16 %v2571, %v2869
      %v2952 = vmax.bf16 %v2572, %v2872
      %v2993 = vrot.slane %v2497, 1
      %v2994 = vrot.slane %v2498, 1
      %v2995 = vsel %vm1387, %v2993, %v2994
      %v2996 = vrot.slane %v2535, 1
      %v2997 = vrot.slane %v2536, 1
      %v2998 = vsel %vm1387, %v2996, %v2997
      %v2999 = vrot.slane %v2537, 1
      %v3000 = vrot.slane %v2538, 1
      %v3001 = vsel %vm1387, %v2999, %v3000
      %v3002 = vrot.slane %v2539, 1
      %v3003 = vrot.slane %v2540, 1
      %v3004 = vsel %vm1387, %v3002, %v3003
      %v3005 = vrot.slane %v2541, 1
      %v3006 = vrot.slane %v2542, 1
      %v3007 = vsel %vm1387, %v3005, %v3006
      %v3008 = vrot.slane %v2543, 1
      %v3009 = vrot.slane %v2544, 1
      %v3010 = vsel %vm1387, %v3008, %v3009
      %v3011 = vrot.slane %v2545, 1
      %v3012 = vrot.slane %v2546, 1
      %v3013 = vsel %vm1387, %v3011, %v3012
      %v3014 = vrot.slane %v2547, 1
      %v3015 = vrot.slane %v2548, 1
      %v3016 = vsel %vm1387, %v3014, %v3015
      %v3017 = vrot.slane %v2549, 1
      %v3018 = vrot.slane %v2550, 1
      %v3019 = vsel %vm1387, %v3017, %v3018
      %v3020 = vrot.slane %v2551, 1
      %v3021 = vrot.slane %v2552, 1
      %v3022 = vsel %vm1387, %v3020, %v3021
      %v3023 = vrot.slane %v2553, 1
      %v3024 = vrot.slane %v2554, 1
      %v3025 = vsel %vm1387, %v3023, %v3024
      %v3026 = vrot.slane %v2555, 1
      %v3027 = vrot.slane %v2556, 1
      %v3028 = vsel %vm1387, %v3026, %v3027
      %v3029 = vrot.slane %v2557, 1
      %v3030 = vrot.slane %v2558, 1
      %v3031 = vsel %vm1387, %v3029, %v3030
      %v3032 = vrot.slane %v2559, 1
      %v3033 = vrot.slane %v2560, 1
      %v3034 = vsel %vm1387, %v3032, %v3033
      %v3035 = vrot.slane %v2561, 1
      %v3036 = vrot.slane %v2562, 1
      %v3037 = vsel %vm1387, %v3035, %v3036
      %v3038 = vrot.slane %v2563, 1
      %v3039 = vrot.slane %v2564, 1
      %v3040 = vsel %vm1387, %v3038, %v3039
      %v3041 = vrot.slane %v2565, 1
      %v3042 = vrot.slane %v2566, 1
      %v3043 = vsel %vm1387, %v3041, %v3042
      %v3044 = vrot.slane %v2567, 1
      %v3045 = vrot.slane %v2568, 1
      %v3046 = vsel %vm1387, %v3044, %v3045
      %v3047 = vrot.slane %v2569, 1
      %v3048 = vrot.slane %v2570, 1
      %v3049 = vsel %vm1387, %v3047, %v3048
      %v3050 = vrot.slane %v2571, 1
      %v3051 = vrot.slane %v2572, 1
      %v3052 = vsel %vm1387, %v3050, %v3051
      %v3093 = vmax.bf16 %v2913, %v2995
      %v3094 = vmax.bf16 %v2914, %v2994
      %v3095 = vmax.bf16 %v2915, %v2998
      %v3096 = vmax.bf16 %v2916, %v2997
      %v3097 = vmax.bf16 %v2917, %v3001
      %v3098 = vmax.bf16 %v2918, %v3000
      %v3099 = vmax.bf16 %v2919, %v3004
      %v3100 = vmax.bf16 %v2920, %v3003
      %v3101 = vmax.bf16 %v2921, %v3007
      %v3102 = vmax.bf16 %v2922, %v3006
      %v3103 = vmax.bf16 %v2923, %v3010
      %v3104 = vmax.bf16 %v2924, %v3009
      %v3105 = vmax.bf16 %v2925, %v3013
      %v3106 = vmax.bf16 %v2926, %v3012
      %v3107 = vmax.bf16 %v2927, %v3016
      %v3108 = vmax.bf16 %v2928, %v3015
      %v3109 = vmax.bf16 %v2929, %v3019
      %v3110 = vmax.bf16 %v2930, %v3018
      %v3111 = vmax.bf16 %v2931, %v3022
      %v3112 = vmax.bf16 %v2932, %v3021
      %v3113 = vmax.bf16 %v2933, %v3025
      %v3114 = vmax.bf16 %v2934, %v3024
      %v3115 = vmax.bf16 %v2935, %v3028
      %v3116 = vmax.bf16 %v2936, %v3027
      %v3117 = vmax.bf16 %v2937, %v3031
      %v3118 = vmax.bf16 %v2938, %v3030
      %v3119 = vmax.bf16 %v2939, %v3034
      %v3120 = vmax.bf16 %v2940, %v3033
      %v3121 = vmax.bf16 %v2941, %v3037
      %v3122 = vmax.bf16 %v2942, %v3036
      %v3123 = vmax.bf16 %v2943, %v3040
      %v3124 = vmax.bf16 %v2944, %v3039
      %v3125 = vmax.bf16 %v2945, %v3043
      %v3126 = vmax.bf16 %v2946, %v3042
      %v3127 = vmax.bf16 %v2947, %v3046
      %v3128 = vmax.bf16 %v2948, %v3045
      %v3129 = vmax.bf16 %v2949, %v3049
      %v3130 = vmax.bf16 %v2950, %v3048
      %v3131 = vmax.bf16 %v2951, %v3052
      %v3132 = vmax.bf16 %v2952, %v3051
      %v3133 = vrot.slane %v2574, 1
      %v3134 = vrot.slane %v2576, 2
      %v3135 = vor.u32 %v3133, %v3134
      %v3136 = vrot.slane %v2585, 1
      %v3137 = vrot.slane %v2581, 2
      %v3138 = vor.u32 %v3136, %v3137
      %v3139 = vsel %vm1534, %v3135, %v3138
      %v3140 = vrot.slane %v2589, 1
      %v3141 = vrot.slane %v2591, 2
      %v3142 = vor.u32 %v3140, %v3141
      %v3143 = vrot.slane %v2600, 1
      %v3144 = vrot.slane %v2596, 2
      %v3145 = vor.u32 %v3143, %v3144
      %v3146 = vsel %vm1534, %v3142, %v3145
      %v3147 = vrot.slane %v2604, 1
      %v3148 = vrot.slane %v2606, 2
      %v3149 = vor.u32 %v3147, %v3148
      %v3150 = vrot.slane %v2615, 1
      %v3151 = vrot.slane %v2611, 2
      %v3152 = vor.u32 %v3150, %v3151
      %v3153 = vsel %vm1534, %v3149, %v3152
      %v3154 = vrot.slane %v2619, 1
      %v3155 = vrot.slane %v2621, 2
      %v3156 = vor.u32 %v3154, %v3155
      %v3157 = vrot.slane %v2630, 1
      %v3158 = vrot.slane %v2626, 2
      %v3159 = vor.u32 %v3157, %v3158
      %v3160 = vsel %vm1534, %v3156, %v3159
      %v3161 = vrot.slane %v2634, 1
      %v3162 = vrot.slane %v2636, 2
      %v3163 = vor.u32 %v3161, %v3162
      %v3164 = vrot.slane %v2645, 1
      %v3165 = vrot.slane %v2641, 2
      %v3166 = vor.u32 %v3164, %v3165
      %v3167 = vsel %vm1534, %v3163, %v3166
      %v3168 = vrot.slane %v2649, 1
      %v3169 = vrot.slane %v2651, 2
      %v3170 = vor.u32 %v3168, %v3169
      %v3171 = vrot.slane %v2660, 1
      %v3172 = vrot.slane %v2656, 2
      %v3173 = vor.u32 %v3171, %v3172
      %v3174 = vsel %vm1534, %v3170, %v3173
      %v3175 = vrot.slane %v2664, 1
      %v3176 = vrot.slane %v2666, 2
      %v3177 = vor.u32 %v3175, %v3176
      %v3178 = vrot.slane %v2675, 1
      %v3179 = vrot.slane %v2671, 2
      %v3180 = vor.u32 %v3178, %v3179
      %v3181 = vsel %vm1534, %v3177, %v3180
      %v3182 = vrot.slane %v2679, 1
      %v3183 = vrot.slane %v2681, 2
      %v3184 = vor.u32 %v3182, %v3183
      %v3185 = vrot.slane %v2690, 1
      %v3186 = vrot.slane %v2686, 2
      %v3187 = vor.u32 %v3185, %v3186
      %v3188 = vsel %vm1534, %v3184, %v3187
      %v3189 = vrot.slane %v2694, 1
      %v3190 = vrot.slane %v2696, 2
      %v3191 = vor.u32 %v3189, %v3190
      %v3192 = vrot.slane %v2705, 1
      %v3193 = vrot.slane %v2701, 2
      %v3194 = vor.u32 %v3192, %v3193
      %v3195 = vsel %vm1534, %v3191, %v3194
      %v3196 = vrot.slane %v2709, 1
      %v3197 = vrot.slane %v2711, 2
      %v3198 = vor.u32 %v3196, %v3197
      %v3199 = vrot.slane %v2720, 1
      %v3200 = vrot.slane %v2716, 2
      %v3201 = vor.u32 %v3199, %v3200
      %v3202 = vsel %vm1534, %v3198, %v3201
      %v3203 = vrot.slane %v2724, 1
      %v3204 = vrot.slane %v2726, 2
      %v3205 = vor.u32 %v3203, %v3204
      %v3206 = vrot.slane %v2735, 1
      %v3207 = vrot.slane %v2731, 2
      %v3208 = vor.u32 %v3206, %v3207
      %v3209 = vsel %vm1534, %v3205, %v3208
      %v3210 = vrot.slane %v2739, 1
      %v3211 = vrot.slane %v2741, 2
      %v3212 = vor.u32 %v3210, %v3211
      %v3213 = vrot.slane %v2750, 1
      %v3214 = vrot.slane %v2746, 2
      %v3215 = vor.u32 %v3213, %v3214
      %v3216 = vsel %vm1534, %v3212, %v3215
      %v3217 = vrot.slane %v2754, 1
      %v3218 = vrot.slane %v2756, 2
      %v3219 = vor.u32 %v3217, %v3218
      %v3220 = vrot.slane %v2765, 1
      %v3221 = vrot.slane %v2761, 2
      %v3222 = vor.u32 %v3220, %v3221
      %v3223 = vsel %vm1534, %v3219, %v3222
      %v3224 = vrot.slane %v2769, 1
      %v3225 = vrot.slane %v2771, 2
      %v3226 = vor.u32 %v3224, %v3225
      %v3227 = vrot.slane %v2780, 1
      %v3228 = vrot.slane %v2776, 2
      %v3229 = vor.u32 %v3227, %v3228
      %v3230 = vsel %vm1534, %v3226, %v3229
      %v3231 = vrot.slane %v2784, 1
      %v3232 = vrot.slane %v2786, 2
      %v3233 = vor.u32 %v3231, %v3232
      %v3234 = vrot.slane %v2795, 1
      %v3235 = vrot.slane %v2791, 2
      %v3236 = vor.u32 %v3234, %v3235
      %v3237 = vsel %vm1534, %v3233, %v3236
      %v3238 = vrot.slane %v2799, 1
      %v3239 = vrot.slane %v2801, 2
      %v3240 = vor.u32 %v3238, %v3239
      %v3241 = vrot.slane %v2810, 1
      %v3242 = vrot.slane %v2806, 2
      %v3243 = vor.u32 %v3241, %v3242
      %v3244 = vsel %vm1534, %v3240, %v3243
      %v3245 = vrot.slane %v2814, 1
      %v3246 = vrot.slane %v2816, 2
      %v3247 = vor.u32 %v3245, %v3246
      %v3248 = vrot.slane %v2825, 1
      %v3249 = vrot.slane %v2821, 2
      %v3250 = vor.u32 %v3248, %v3249
      %v3251 = vsel %vm1534, %v3247, %v3250
      %v3252 = vrot.slane %v2829, 1
      %v3253 = vrot.slane %v2831, 2
      %v3254 = vor.u32 %v3252, %v3253
      %v3255 = vrot.slane %v2840, 1
      %v3256 = vrot.slane %v2836, 2
      %v3257 = vor.u32 %v3255, %v3256
      %v3258 = vsel %vm1534, %v3254, %v3257
      %v3259 = vrot.slane %v2844, 1
      %v3260 = vrot.slane %v2846, 2
      %v3261 = vor.u32 %v3259, %v3260
      %v3262 = vrot.slane %v2855, 1
      %v3263 = vrot.slane %v2851, 2
      %v3264 = vor.u32 %v3262, %v3263
      %v3265 = vsel %vm1534, %v3261, %v3264
      %v3266 = vrot.slane %v2859, 1
      %v3267 = vrot.slane %v2861, 2
      %v3268 = vor.u32 %v3266, %v3267
      %v3269 = vrot.slane %v2870, 1
      %v3270 = vrot.slane %v2866, 2
      %v3271 = vor.u32 %v3269, %v3270
      %v3272 = vsel %vm1534, %v3268, %v3271
      %v3313 = vmax.bf16 %v3093, %v3139
      %v3314 = vmax.bf16 %v3094, %v3138
      %v3315 = vmax.bf16 %v3095, %v3146
      %v3316 = vmax.bf16 %v3096, %v3145
      %v3317 = vmax.bf16 %v3097, %v3153
      %v3318 = vmax.bf16 %v3098, %v3152
      %v3319 = vmax.bf16 %v3099, %v3160
      %v3320 = vmax.bf16 %v3100, %v3159
      %v3321 = vmax.bf16 %v3101, %v3167
      %v3322 = vmax.bf16 %v3102, %v3166
      %v3323 = vmax.bf16 %v3103, %v3174
      %v3324 = vmax.bf16 %v3104, %v3173
      %v3325 = vmax.bf16 %v3105, %v3181
      %v3326 = vmax.bf16 %v3106, %v3180
      %v3327 = vmax.bf16 %v3107, %v3188
      %v3328 = vmax.bf16 %v3108, %v3187
      %v3329 = vmax.bf16 %v3109, %v3195
      %v3330 = vmax.bf16 %v3110, %v3194
      %v3331 = vmax.bf16 %v3111, %v3202
      %v3332 = vmax.bf16 %v3112, %v3201
      %v3333 = vmax.bf16 %v3113, %v3209
      %v3334 = vmax.bf16 %v3114, %v3208
      %v3335 = vmax.bf16 %v3115, %v3216
      %v3336 = vmax.bf16 %v3116, %v3215
      %v3337 = vmax.bf16 %v3117, %v3223
      %v3338 = vmax.bf16 %v3118, %v3222
      %v3339 = vmax.bf16 %v3119, %v3230
      %v3340 = vmax.bf16 %v3120, %v3229
      %v3341 = vmax.bf16 %v3121, %v3237
      %v3342 = vmax.bf16 %v3122, %v3236
      %v3343 = vmax.bf16 %v3123, %v3244
      %v3344 = vmax.bf16 %v3124, %v3243
      %v3345 = vmax.bf16 %v3125, %v3251
      %v3346 = vmax.bf16 %v3126, %v3250
      %v3347 = vmax.bf16 %v3127, %v3258
      %v3348 = vmax.bf16 %v3128, %v3257
      %v3349 = vmax.bf16 %v3129, %v3265
      %v3350 = vmax.bf16 %v3130, %v3264
      %v3351 = vmax.bf16 %v3131, %v3272
      %v3352 = vmax.bf16 %v3132, %v3271
      %v3353 = vrot.slane %v2497, 2
      %v3354 = vrot.slane %v2498, 2
      %v3355 = vsel %vm1763, %v3353, %v3354
      %v3356 = vrot.slane %v2535, 2
      %v3357 = vrot.slane %v2536, 2
      %v3358 = vsel %vm1763, %v3356, %v3357
      %v3359 = vrot.slane %v2537, 2
      %v3360 = vrot.slane %v2538, 2
      %v3361 = vsel %vm1763, %v3359, %v3360
      %v3362 = vrot.slane %v2539, 2
      %v3363 = vrot.slane %v2540, 2
      %v3364 = vsel %vm1763, %v3362, %v3363
      %v3365 = vrot.slane %v2541, 2
      %v3366 = vrot.slane %v2542, 2
      %v3367 = vsel %vm1763, %v3365, %v3366
      %v3368 = vrot.slane %v2543, 2
      %v3369 = vrot.slane %v2544, 2
      %v3370 = vsel %vm1763, %v3368, %v3369
      %v3371 = vrot.slane %v2545, 2
      %v3372 = vrot.slane %v2546, 2
      %v3373 = vsel %vm1763, %v3371, %v3372
      %v3374 = vrot.slane %v2547, 2
      %v3375 = vrot.slane %v2548, 2
      %v3376 = vsel %vm1763, %v3374, %v3375
      %v3377 = vrot.slane %v2549, 2
      %v3378 = vrot.slane %v2550, 2
      %v3379 = vsel %vm1763, %v3377, %v3378
      %v3380 = vrot.slane %v2551, 2
      %v3381 = vrot.slane %v2552, 2
      %v3382 = vsel %vm1763, %v3380, %v3381
      %v3383 = vrot.slane %v2553, 2
      %v3384 = vrot.slane %v2554, 2
      %v3385 = vsel %vm1763, %v3383, %v3384
      %v3386 = vrot.slane %v2555, 2
      %v3387 = vrot.slane %v2556, 2
      %v3388 = vsel %vm1763, %v3386, %v3387
      %v3389 = vrot.slane %v2557, 2
      %v3390 = vrot.slane %v2558, 2
      %v3391 = vsel %vm1763, %v3389, %v3390
      %v3392 = vrot.slane %v2559, 2
      %v3393 = vrot.slane %v2560, 2
      %v3394 = vsel %vm1763, %v3392, %v3393
      %v3395 = vrot.slane %v2561, 2
      %v3396 = vrot.slane %v2562, 2
      %v3397 = vsel %vm1763, %v3395, %v3396
      %v3398 = vrot.slane %v2563, 2
      %v3399 = vrot.slane %v2564, 2
      %v3400 = vsel %vm1763, %v3398, %v3399
      %v3401 = vrot.slane %v2565, 2
      %v3402 = vrot.slane %v2566, 2
      %v3403 = vsel %vm1763, %v3401, %v3402
      %v3404 = vrot.slane %v2567, 2
      %v3405 = vrot.slane %v2568, 2
      %v3406 = vsel %vm1763, %v3404, %v3405
      %v3407 = vrot.slane %v2569, 2
      %v3408 = vrot.slane %v2570, 2
      %v3409 = vsel %vm1763, %v3407, %v3408
      %v3410 = vrot.slane %v2571, 2
      %v3411 = vrot.slane %v2572, 2
      %v3412 = vsel %vm1763, %v3410, %v3411
      %v3453 = vmax.bf16 %v3313, %v3355
      %v3454 = vmax.bf16 %v3314, %v3354
      %v3455 = vmax.bf16 %v3315, %v3358
      %v3456 = vmax.bf16 %v3316, %v3357
      %v3457 = vmax.bf16 %v3317, %v3361
      %v3458 = vmax.bf16 %v3318, %v3360
      %v3459 = vmax.bf16 %v3319, %v3364
      %v3460 = vmax.bf16 %v3320, %v3363
      %v3461 = vmax.bf16 %v3321, %v3367
      %v3462 = vmax.bf16 %v3322, %v3366
      %v3463 = vmax.bf16 %v3323, %v3370
      %v3464 = vmax.bf16 %v3324, %v3369
      %v3465 = vmax.bf16 %v3325, %v3373
      %v3466 = vmax.bf16 %v3326, %v3372
      %v3467 = vmax.bf16 %v3327, %v3376
      %v3468 = vmax.bf16 %v3328, %v3375
      %v3469 = vmax.bf16 %v3329, %v3379
      %v3470 = vmax.bf16 %v3330, %v3378
      %v3471 = vmax.bf16 %v3331, %v3382
      %v3472 = vmax.bf16 %v3332, %v3381
      %v3473 = vmax.bf16 %v3333, %v3385
      %v3474 = vmax.bf16 %v3334, %v3384
      %v3475 = vmax.bf16 %v3335, %v3388
      %v3476 = vmax.bf16 %v3336, %v3387
      %v3477 = vmax.bf16 %v3337, %v3391
      %v3478 = vmax.bf16 %v3338, %v3390
      %v3479 = vmax.bf16 %v3339, %v3394
      %v3480 = vmax.bf16 %v3340, %v3393
      %v3481 = vmax.bf16 %v3341, %v3397
      %v3482 = vmax.bf16 %v3342, %v3396
      %v3483 = vmax.bf16 %v3343, %v3400
      %v3484 = vmax.bf16 %v3344, %v3399
      %v3485 = vmax.bf16 %v3345, %v3403
      %v3486 = vmax.bf16 %v3346, %v3402
      %v3487 = vmax.bf16 %v3347, %v3406
      %v3488 = vmax.bf16 %v3348, %v3405
      %v3489 = vmax.bf16 %v3349, %v3409
      %v3490 = vmax.bf16 %v3350, %v3408
      %v3491 = vmax.bf16 %v3351, %v3412
      %v3492 = vmax.bf16 %v3352, %v3411
      %v3525 = vrot.slane %v3457, 1
      %v3526 = vrot.slane %v3458, 1
      %v3527 = vsel %vm1387, %v3525, %v3526
      %v3528 = vrot.slane %v3459, 1
      %v3529 = vrot.slane %v3460, 1
      %v3530 = vsel %vm1387, %v3528, %v3529
      %v3531 = vrot.slane %v3461, 1
      %v3532 = vrot.slane %v3462, 1
      %v3533 = vsel %vm1387, %v3531, %v3532
      %v3534 = vrot.slane %v3463, 1
      %v3535 = vrot.slane %v3464, 1
      %v3536 = vsel %vm1387, %v3534, %v3535
      %v3537 = vrot.slane %v3465, 1
      %v3538 = vrot.slane %v3466, 1
      %v3539 = vsel %vm1387, %v3537, %v3538
      %v3540 = vrot.slane %v3467, 1
      %v3541 = vrot.slane %v3468, 1
      %v3542 = vsel %vm1387, %v3540, %v3541
      %v3543 = vrot.slane %v3469, 1
      %v3544 = vrot.slane %v3470, 1
      %v3545 = vsel %vm1387, %v3543, %v3544
      %v3546 = vrot.slane %v3471, 1
      %v3547 = vrot.slane %v3472, 1
      %v3548 = vsel %vm1387, %v3546, %v3547
      %v3549 = vrot.slane %v3473, 1
      %v3550 = vrot.slane %v3474, 1
      %v3551 = vsel %vm1387, %v3549, %v3550
      %v3552 = vrot.slane %v3475, 1
      %v3553 = vrot.slane %v3476, 1
      %v3554 = vsel %vm1387, %v3552, %v3553
      %v3555 = vrot.slane %v3477, 1
      %v3556 = vrot.slane %v3478, 1
      %v3557 = vsel %vm1387, %v3555, %v3556
      %v3558 = vrot.slane %v3479, 1
      %v3559 = vrot.slane %v3480, 1
      %v3560 = vsel %vm1387, %v3558, %v3559
      %v3561 = vrot.slane %v3481, 1
      %v3562 = vrot.slane %v3482, 1
      %v3563 = vsel %vm1387, %v3561, %v3562
      %v3564 = vrot.slane %v3483, 1
      %v3565 = vrot.slane %v3484, 1
      %v3566 = vsel %vm1387, %v3564, %v3565
      %v3567 = vrot.slane %v3485, 1
      %v3568 = vrot.slane %v3486, 1
      %v3569 = vsel %vm1387, %v3567, %v3568
      %v3570 = vrot.slane %v3487, 1
      %v3571 = vrot.slane %v3488, 1
      %v3572 = vsel %vm1387, %v3570, %v3571
      %v3573 = vld [vmem:[%s3 + $0x4] sm:$0x3]
      %v3575 = vsel %vm1995, %v3527, 0
      %v3578 = vsel %vm1995, %v3530, 0
      %v3581 = vsel %vm1995, %v3533, 0
      %v3584 = vsel %vm1995, %v3536, 0
      %v3587 = vsel %vm1995, %v3539, 0
      %v3590 = vsel %vm1995, %v3542, 0
      %v3593 = vsel %vm1995, %v3545, 0
      %v3596 = vsel %vm1995, %v3548, 0
      %v3599 = vsel %vm1995, %v3551, 0
      %v3602 = vsel %vm1995, %v3554, 0
      %v3605 = vsel %vm1995, %v3557, 0
      %v3608 = vsel %vm1995, %v3560, 0
      %v3611 = vsel %vm1995, %v3563, 0
      %v3614 = vsel %vm1995, %v3566, 0
      %v3617 = vsel %vm1995, %v3569, 0
      %v3620 = vsel %vm1995, %v3572, 0
      %v3623 = vsel %vm2044, %v3573, 0
      %3625 = vmatprep.subr.bf16.mxu0 0
      %3626 = vmatpush1.bf16.msra.mxu0 %v3623
      %3627 = vmatprep.subr.bf16.mxu0 0
      %3628 = vmatpush1.bf16.msra.mxu0 0
      %3629 = vmatprep.subr.bf16.mxu0 0
      %3630 = vmatpush1.bf16.msra.mxu0 0
      %3631 = vmatprep.subr.bf16.mxu0 0
      %3632 = vmatpush1.bf16.msra.mxu0 0
      %3633 = vmatprep.subr.bf16.mxu0 0
      %3634 = vmatpush1.bf16.msra.mxu0 0
      %3635 = vmatprep.subr.bf16.mxu0 0
      %3636 = vmatpush1.bf16.msra.mxu0 0
      %3637 = vmatprep.subr.bf16.mxu0 0
      %3638 = vmatpush1.bf16.msra.mxu0 0
      %3639 = vmatprep.subr.bf16.mxu0 0
      %3640 = vmatpush1.bf16.msra.mxu0 0
      %3641 = vmatprep.subr.bf16.mxu0 0
      %3642 = vmatpush1.bf16.msra.mxu0 0
      %3643 = vmatprep.subr.bf16.mxu0 0
      %3644 = vmatpush1.bf16.msra.mxu0 0
      %3645 = vmatprep.subr.bf16.mxu0 0
      %3646 = vmatpush1.bf16.msra.mxu0 0
      %3647 = vmatprep.subr.bf16.mxu0 0
      %3648 = vmatpush1.bf16.msra.mxu0 0
      %3649 = vmatprep.subr.bf16.mxu0 0
      %3650 = vmatpush1.bf16.msra.mxu0 0
      %3651 = vmatprep.subr.bf16.mxu0 0
      %3652 = vmatpush1.bf16.msra.mxu0 0
      %3653 = vmatprep.subr.bf16.mxu0 0
      %3654 = vmatpush1.bf16.msra.mxu0 0
      %3655 = vmatprep.subr.bf16.mxu0 0
      %3656 = vmatpush1.bf16.msra.mxu0 0
      %3657 = vmatprep.mubr.bf16.mxu0 0
      %3658 = vmatmul.mubr.bf16.gmra.mrb[0].mxu0 %v3575
      %v3659 = vpop.f32.mrb[0].mxu0
      %v3660 = vadd.f32 0.0, %v3659
      %v3661 = vpop.f32.mrb[0].mxu0
      %v3662 = vpop.f32.mrb[0].mxu0
      %v3663 = vadd.f32 0.0, %v3662
      %v3664 = vpop.f32.mrb[0].mxu0
      %3665 = vmatprep.mubr.bf16.mxu0 0
      %3666 = vmatmul.mubr.bf16.gmra.mrb[0].mxu0 %v3578
      %v3667 = vpop.f32.mrb[0].mxu0
      %v3668 = vadd.f32 0.0, %v3667
      %v3669 = vpop.f32.mrb[0].mxu0
      %v3670 = vpop.f32.mrb[0].mxu0
      %v3671 = vadd.f32 0.0, %v3670
      %v3672 = vpop.f32.mrb[0].mxu0
      %3673 = vmatprep.mubr.bf16.mxu0 0
      %3674 = vmatmul.mubr.bf16.gmra.mrb[0].mxu0 %v3581
      %v3675 = vpop.f32.mrb[0].mxu0
      %v3676 = vadd.f32 0.0, %v3675
      %v3677 = vpop.f32.mrb[0].mxu0
      %v3678 = vpop.f32.mrb[0].mxu0
      %v3679 = vadd.f32 0.0, %v3678
      %v3680 = vpop.f32.mrb[0].mxu0
      %3681 = vmatprep.mubr.bf16.mxu0 0
      %3682 = vmatmul.mubr.bf16.gmra.mrb[0].mxu0 %v3584
      %v3683 = vpop.f32.mrb[0].mxu0
      %v3684 = vadd.f32 0.0, %v3683
      %v3685 = vpop.f32.mrb[0].mxu0
      %v3686 = vpop.f32.mrb[0].mxu0
      %v3687 = vadd.f32 0.0, %v3686
      %v3688 = vpop.f32.mrb[0].mxu0
      %3689 = vmatprep.mubr.bf16.mxu0 0
      %3690 = vmatmul.mubr.bf16.gmra.mrb[0].mxu0 %v3587
      %v3691 = vpop.f32.mrb[0].mxu0
      %v3692 = vadd.f32 0.0, %v3691
      %v3693 = vpop.f32.mrb[0].mxu0
      %v3694 = vpop.f32.mrb[0].mxu0
      %v3695 = vadd.f32 0.0, %v3694
      %v3696 = vpop.f32.mrb[0].mxu0
      %3697 = vmatprep.mubr.bf16.mxu0 0
      %3698 = vmatmul.mubr.bf16.gmra.mrb[0].mxu0 %v3590
      %v3699 = vpop.f32.mrb[0].mxu0
      %v3700 = vadd.f32 0.0, %v3699
      %v3701 = vpop.f32.mrb[0].mxu0
      %v3702 = vpop.f32.mrb[0].mxu0
      %v3703 = vadd.f32 0.0, %v3702
      %v3704 = vpop.f32.mrb[0].mxu0
      %3705 = vmatprep.mubr.bf16.mxu0 0
      %3706 = vmatmul.mubr.bf16.gmra.mrb[0].mxu0 %v3593
      %v3707 = vpop.f32.mrb[0].mxu0
      %v3708 = vadd.f32 0.0, %v3707
      %v3709 = vpop.f32.mrb[0].mxu0
      %v3710 = vpop.f32.mrb[0].mxu0
      %v3711 = vadd.f32 0.0, %v3710
      %v3712 = vpop.f32.mrb[0].mxu0
      %3713 = vmatprep.mubr.bf16.mxu0 0
      %3714 = vmatmul.mubr.bf16.gmra.mrb[0].mxu0 %v3596
      %v3715 = vpop.f32.mrb[0].mxu0
      %v3716 = vadd.f32 0.0, %v3715
      %v3717 = vpop.f32.mrb[0].mxu0
      %v3718 = vpop.f32.mrb[0].mxu0
      %v3719 = vadd.f32 0.0, %v3718
      %v3720 = vpop.f32.mrb[0].mxu0
      %3721 = vmatprep.mubr.bf16.mxu0 0
      %3722 = vmatmul.mubr.bf16.gmra.mrb[0].mxu0 %v3599
      %v3723 = vpop.f32.mrb[0].mxu0
      %v3724 = vadd.f32 0.0, %v3723
      %v3725 = vpop.f32.mrb[0].mxu0
      %v3726 = vpop.f32.mrb[0].mxu0
      %v3727 = vadd.f32 0.0, %v3726
      %v3728 = vpop.f32.mrb[0].mxu0
      %3729 = vmatprep.mubr.bf16.mxu0 0
      %3730 = vmatmul.mubr.bf16.gmra.mrb[0].mxu0 %v3602
      %v3731 = vpop.f32.mrb[0].mxu0
      %v3732 = vadd.f32 0.0, %v3731
      %v3733 = vpop.f32.mrb[0].mxu0
      %v3734 = vpop.f32.mrb[0].mxu0
      %v3735 = vadd.f32 0.0, %v3734
      %v3736 = vpop.f32.mrb[0].mxu0
      %3737 = vmatprep.mubr.bf16.mxu0 0
      %3738 = vmatmul.mubr.bf16.gmra.mrb[0].mxu0 %v3605
      %v3739 = vpop.f32.mrb[0].mxu0
      %v3740 = vadd.f32 0.0, %v3739
      %v3741 = vpop.f32.mrb[0].mxu0
      %v3742 = vpop.f32.mrb[0].mxu0
      %v3743 = vadd.f32 0.0, %v3742
      %v3744 = vpop.f32.mrb[0].mxu0
      %3745 = vmatprep.mubr.bf16.mxu0 0
      %3746 = vmatmul.mubr.bf16.gmra.mrb[0].mxu0 %v3608
      %v3747 = vpop.f32.mrb[0].mxu0
      %v3748 = vadd.f32 0.0, %v3747
      %v3749 = vpop.f32.mrb[0].mxu0
      %v3750 = vpop.f32.mrb[0].mxu0
      %v3751 = vadd.f32 0.0, %v3750
      %v3752 = vpop.f32.mrb[0].mxu0
      %3753 = vmatprep.mubr.bf16.mxu0 0
      %3754 = vmatmul.mubr.bf16.gmra.mrb[0].mxu0 %v3611
      %v3755 = vpop.f32.mrb[0].mxu0
      %v3756 = vadd.f32 0.0, %v3755
      %v3757 = vpop.f32.mrb[0].mxu0
      %v3758 = vpop.f32.mrb[0].mxu0
      %v3759 = vadd.f32 0.0, %v3758
      %v3760 = vpop.f32.mrb[0].mxu0
      %3761 = vmatprep.mubr.bf16.mxu0 0
      %3762 = vmatmul.mubr.bf16.gmra.mrb[0].mxu0 %v3614
      %v3763 = vpop.f32.mrb[0].mxu0
      %v3764 = vadd.f32 0.0, %v3763
      %v3765 = vpop.f32.mrb[0].mxu0
      %v3766 = vpop.f32.mrb[0].mxu0
      %v3767 = vadd.f32 0.0, %v3766
      %v3768 = vpop.f32.mrb[0].mxu0
      %3769 = vmatprep.mubr.bf16.mxu0 0
      %3770 = vmatmul.mubr.bf16.gmra.mrb[0].mxu0 %v3617
      %v3771 = vpop.f32.mrb[0].mxu0
      %v3772 = vadd.f32 0.0, %v3771
      %v3773 = vpop.f32.mrb[0].mxu0
      %v3774 = vpop.f32.mrb[0].mxu0
      %v3775 = vadd.f32 0.0, %v3774
      %v3776 = vpop.f32.mrb[0].mxu0
      %3777 = vmatprep.mubr.bf16.mxu0 0
      %3778 = vmatmul.mubr.bf16.gmra.mrb[0].mxu0 %v3620
      %v3779 = vpop.f32.mrb[0].mxu0
      %v3780 = vadd.f32 0.0, %v3779
      %v3781 = vpop.f32.mrb[0].mxu0
      %v3782 = vpop.f32.mrb[0].mxu0
      %v3783 = vadd.f32 0.0, %v3782
      %v3784 = vpop.f32.mrb[0].mxu0
      %3785 = vdwg.mxu0
      %v3786 = vadd.f32 %v2295, %v3660
      %v3787 = vadd.f32 %v2298, %v3663
      %v3788 = vadd.f32 %v2303, %v3668
      %v3789 = vadd.f32 %v2306, %v3671
      %v3790 = vadd.f32 %v2311, %v3676
      %v3791 = vadd.f32 %v2314, %v3679
      %v3792 = vadd.f32 %v2319, %v3684
      %v3793 = vadd.f32 %v2322, %v3687
      %v3794 = vadd.f32 %v2327, %v3692
      %v3795 = vadd.f32 %v2330, %v3695
      %v3796 = vadd.f32 %v2335, %v3700
      %v3797 = vadd.f32 %v2338, %v3703
      %v3798 = vadd.f32 %v2343, %v3708
      %v3799 = vadd.f32 %v2346, %v3711
      %v3800 = vadd.f32 %v2351, %v3716
      %v3801 = vadd.f32 %v2354, %v3719
      %v3802 = vadd.f32 %v2359, %v3724
      %v3803 = vadd.f32 %v2362, %v3727
      %v3804 = vadd.f32 %v2367, %v3732
      %v3805 = vadd.f32 %v2370, %v3735
      %v3806 = vadd.f32 %v2375, %v3740
      %v3807 = vadd.f32 %v2378, %v3743
      %v3808 = vadd.f32 %v2383, %v3748
      %v3809 = vadd.f32 %v2386, %v3751
      %v3810 = vadd.f32 %v2391, %v3756
      %v3811 = vadd.f32 %v2394, %v3759
      %v3812 = vadd.f32 %v2399, %v3764
      %v3813 = vadd.f32 %v2402, %v3767
      %v3814 = vadd.f32 %v2407, %v3772
      %v3815 = vadd.f32 %v2410, %v3775
      %v3816 = vadd.f32 %v2415, %v3780
      %v3817 = vadd.f32 %v2418, %v3783
      %v3818 = vmax.bf16 %v3453, %v3455
      %v3819 = vmax.bf16 %v3454, %v3456
      %v3820 = vmax.bf16 %v3455, %v3457
      %v3821 = vmax.bf16 %v3456, %v3458
      %v3822 = vmax.bf16 %v3457, %v3459
      %v3823 = vmax.bf16 %v3458, %v3460
      %v3824 = vmax.bf16 %v3459, %v3461
      %v3825 = vmax.bf16 %v3460, %v3462
      %v3826 = vmax.bf16 %v3461, %v3463
      %v3827 = vmax.bf16 %v3462, %v3464
      %v3828 = vmax.bf16 %v3463, %v3465
      %v3829 = vmax.bf16 %v3464, %v3466
      %v3830 = vmax.bf16 %v3465, %v3467
      %v3831 = vmax.bf16 %v3466, %v3468
      %v3832 = vmax.bf16 %v3467, %v3469
      %v3833 = vmax.bf16 %v3468, %v3470
      %v3834 = vmax.bf16 %v3469, %v3471
      %v3835 = vmax.bf16 %v3470, %v3472
      %v3836 = vmax.bf16 %v3471, %v3473
      %v3837 = vmax.bf16 %v3472, %v3474
      %v3838 = vmax.bf16 %v3473, %v3475
      %v3839 = vmax.bf16 %v3474, %v3476
      %v3840 = vmax.bf16 %v3475, %v3477
      %v3841 = vmax.bf16 %v3476, %v3478
      %v3842 = vmax.bf16 %v3477, %v3479
      %v3843 = vmax.bf16 %v3478, %v3480
      %v3844 = vmax.bf16 %v3479, %v3481
      %v3845 = vmax.bf16 %v3480, %v3482
      %v3846 = vmax.bf16 %v3481, %v3483
      %v3847 = vmax.bf16 %v3482, %v3484
      %v3848 = vmax.bf16 %v3483, %v3485
      %v3849 = vmax.bf16 %v3484, %v3486
      %v3850 = vmax.bf16 %v3818, %v3457
      %v3851 = vmax.bf16 %v3819, %v3458
      %v3852 = vmax.bf16 %v3820, %v3459
      %v3853 = vmax.bf16 %v3821, %v3460
      %v3854 = vmax.bf16 %v3822, %v3461
      %v3855 = vmax.bf16 %v3823, %v3462
      %v3856 = vmax.bf16 %v3824, %v3463
      %v3857 = vmax.bf16 %v3825, %v3464
      %v3858 = vmax.bf16 %v3826, %v3465
      %v3859 = vmax.bf16 %v3827, %v3466
      %v3860 = vmax.bf16 %v3828, %v3467
      %v3861 = vmax.bf16 %v3829, %v3468
      %v3862 = vmax.bf16 %v3830, %v3469
      %v3863 = vmax.bf16 %v3831, %v3470
      %v3864 = vmax.bf16 %v3832, %v3471
      %v3865 = vmax.bf16 %v3833, %v3472
      %v3866 = vmax.bf16 %v3834, %v3473
      %v3867 = vmax.bf16 %v3835, %v3474
      %v3868 = vmax.bf16 %v3836, %v3475
      %v3869 = vmax.bf16 %v3837, %v3476
      %v3870 = vmax.bf16 %v3838, %v3477
      %v3871 = vmax.bf16 %v3839, %v3478
      %v3872 = vmax.bf16 %v3840, %v3479
      %v3873 = vmax.bf16 %v3841, %v3480
      %v3874 = vmax.bf16 %v3842, %v3481
      %v3875 = vmax.bf16 %v3843, %v3482
      %v3876 = vmax.bf16 %v3844, %v3483
      %v3877 = vmax.bf16 %v3845, %v3484
      %v3878 = vmax.bf16 %v3846, %v3485
      %v3879 = vmax.bf16 %v3847, %v3486
      %v3880 = vmax.bf16 %v3848, %v3487
      %v3881 = vmax.bf16 %v3849, %v3488
      %v3882 = vmax.bf16 %v3850, %v3459
      %v3883 = vmax.bf16 %v3851, %v3460
      %v3884 = vmax.bf16 %v3852, %v3461
      %v3885 = vmax.bf16 %v3853, %v3462
      %v3886 = vmax.bf16 %v3854, %v3463
      %v3887 = vmax.bf16 %v3855, %v3464
      %v3888 = vmax.bf16 %v3856, %v3465
      %v3889 = vmax.bf16 %v3857, %v3466
      %v3890 = vmax.bf16 %v3858, %v3467
      %v3891 = vmax.bf16 %v3859, %v3468
      %v3892 = vmax.bf16 %v3860, %v3469
      %v3893 = vmax.bf16 %v3861, %v3470
      %v3894 = vmax.bf16 %v3862, %v3471
      %v3895 = vmax.bf16 %v3863, %v3472
      %v3896 = vmax.bf16 %v3864, %v3473
      %v3897 = vmax.bf16 %v3865, %v3474
      %v3898 = vmax.bf16 %v3866, %v3475
      %v3899 = vmax.bf16 %v3867, %v3476
      %v3900 = vmax.bf16 %v3868, %v3477
      %v3901 = vmax.bf16 %v3869, %v3478
      %v3902 = vmax.bf16 %v3870, %v3479
      %v3903 = vmax.bf16 %v3871, %v3480
      %v3904 = vmax.bf16 %v3872, %v3481
      %v3905 = vmax.bf16 %v3873, %v3482
      %v3906 = vmax.bf16 %v3874, %v3483
      %v3907 = vmax.bf16 %v3875, %v3484
      %v3908 = vmax.bf16 %v3876, %v3485
      %v3909 = vmax.bf16 %v3877, %v3486
      %v3910 = vmax.bf16 %v3878, %v3487
      %v3911 = vmax.bf16 %v3879, %v3488
      %v3912 = vmax.bf16 %v3880, %v3489
      %v3913 = vmax.bf16 %v3881, %v3490
      %v3914 = vmax.bf16 %v3882, %v3461
      %v3915 = vmax.bf16 %v3883, %v3462
      %v3916 = vmax.bf16 %v3884, %v3463
      %v3917 = vmax.bf16 %v3885, %v3464
      %v3918 = vmax.bf16 %v3886, %v3465
      %v3919 = vmax.bf16 %v3887, %v3466
      %v3920 = vmax.bf16 %v3888, %v3467
      %v3921 = vmax.bf16 %v3889, %v3468
      %v3922 = vmax.bf16 %v3890, %v3469
      %v3923 = vmax.bf16 %v3891, %v3470
      %v3924 = vmax.bf16 %v3892, %v3471
      %v3925 = vmax.bf16 %v3893, %v3472
      %v3926 = vmax.bf16 %v3894, %v3473
      %v3927 = vmax.bf16 %v3895, %v3474
      %v3928 = vmax.bf16 %v3896, %v3475
      %v3929 = vmax.bf16 %v3897, %v3476
      %v3930 = vmax.bf16 %v3898, %v3477
      %v3931 = vmax.bf16 %v3899, %v3478
      %v3932 = vmax.bf16 %v3900, %v3479
      %v3933 = vmax.bf16 %v3901, %v3480
      %v3934 = vmax.bf16 %v3902, %v3481
      %v3935 = vmax.bf16 %v3903, %v3482
      %v3936 = vmax.bf16 %v3904, %v3483
      %v3937 = vmax.bf16 %v3905, %v3484
      %v3938 = vmax.bf16 %v3906, %v3485
      %v3939 = vmax.bf16 %v3907, %v3486
      %v3940 = vmax.bf16 %v3908, %v3487
      %v3941 = vmax.bf16 %v3909, %v3488
      %v3942 = vmax.bf16 %v3910, %v3489
      %v3943 = vmax.bf16 %v3911, %v3490
      %v3944 = vmax.bf16 %v3912, %v3491
      %v3945 = vmax.bf16 %v3913, %v3492
      %v3947 = vshrl.u32 %v3914, 16
      %v3949 = vshll.u32 %v3914, 16
      %v3951 = vrot.slane %v3949, 1
      %v3952 = vor.u32 %v3947, %v3951
      %v3954 = vshll.u32 %v3915, 16
      %v3956 = vrot.slane %v3954, 1
      %v3957 = vsel %vm960, %v3952, %v3956
      %v3959 = vshrl.u32 %v3916, 16
      %v3961 = vshll.u32 %v3916, 16
      %v3963 = vrot.slane %v3961, 1
      %v3964 = vor.u32 %v3959, %v3963
      %v3966 = vshll.u32 %v3917, 16
      %v3968 = vrot.slane %v3966, 1
      %v3969 = vsel %vm960, %v3964, %v3968
      %v3971 = vshrl.u32 %v3918, 16
      %v3973 = vshll.u32 %v3918, 16
      %v3975 = vrot.slane %v3973, 1
      %v3976 = vor.u32 %v3971, %v3975
      %v3978 = vshll.u32 %v3919, 16
      %v3980 = vrot.slane %v3978, 1
      %v3981 = vsel %vm960, %v3976, %v3980
      %v3983 = vshrl.u32 %v3920, 16
      %v3985 = vshll.u32 %v3920, 16
      %v3987 = vrot.slane %v3985, 1
      %v3988 = vor.u32 %v3983, %v3987
      %v3990 = vshll.u32 %v3921, 16
      %v3992 = vrot.slane %v3990, 1
      %v3993 = vsel %vm960, %v3988, %v3992
      %v3995 = vshrl.u32 %v3922, 16
      %v3997 = vshll.u32 %v3922, 16
      %v3999 = vrot.slane %v3997, 1
      %v4000 = vor.u32 %v3995, %v3999
      %v4002 = vshll.u32 %v3923, 16
      %v4004 = vrot.slane %v4002, 1
      %v4005 = vsel %vm960, %v4000, %v4004
      %v4007 = vshrl.u32 %v3924, 16
      %v4009 = vshll.u32 %v3924, 16
      %v4011 = vrot.slane %v4009, 1
      %v4012 = vor.u32 %v4007, %v4011
      %v4014 = vshll.u32 %v3925, 16
      %v4016 = vrot.slane %v4014, 1
      %v4017 = vsel %vm960, %v4012, %v4016
      %v4019 = vshrl.u32 %v3926, 16
      %v4021 = vshll.u32 %v3926, 16
      %v4023 = vrot.slane %v4021, 1
      %v4024 = vor.u32 %v4019, %v4023
      %v4026 = vshll.u32 %v3927, 16
      %v4028 = vrot.slane %v4026, 1
      %v4029 = vsel %vm960, %v4024, %v4028
      %v4031 = vshrl.u32 %v3928, 16
      %v4033 = vshll.u32 %v3928, 16
      %v4035 = vrot.slane %v4033, 1
      %v4036 = vor.u32 %v4031, %v4035
      %v4038 = vshll.u32 %v3929, 16
      %v4040 = vrot.slane %v4038, 1
      %v4041 = vsel %vm960, %v4036, %v4040
      %v4043 = vshrl.u32 %v3930, 16
      %v4045 = vshll.u32 %v3930, 16
      %v4047 = vrot.slane %v4045, 1
      %v4048 = vor.u32 %v4043, %v4047
      %v4050 = vshll.u32 %v3931, 16
      %v4052 = vrot.slane %v4050, 1
      %v4053 = vsel %vm960, %v4048, %v4052
      %v4055 = vshrl.u32 %v3932, 16
      %v4057 = vshll.u32 %v3932, 16
      %v4059 = vrot.slane %v4057, 1
      %v4060 = vor.u32 %v4055, %v4059
      %v4062 = vshll.u32 %v3933, 16
      %v4064 = vrot.slane %v4062, 1
      %v4065 = vsel %vm960, %v4060, %v4064
      %v4067 = vshrl.u32 %v3934, 16
      %v4069 = vshll.u32 %v3934, 16
      %v4071 = vrot.slane %v4069, 1
      %v4072 = vor.u32 %v4067, %v4071
      %v4074 = vshll.u32 %v3935, 16
      %v4076 = vrot.slane %v4074, 1
      %v4077 = vsel %vm960, %v4072, %v4076
      %v4079 = vshrl.u32 %v3936, 16
      %v4081 = vshll.u32 %v3936, 16
      %v4083 = vrot.slane %v4081, 1
      %v4084 = vor.u32 %v4079, %v4083
      %v4086 = vshll.u32 %v3937, 16
      %v4088 = vrot.slane %v4086, 1
      %v4089 = vsel %vm960, %v4084, %v4088
      %v4091 = vshrl.u32 %v3938, 16
      %v4093 = vshll.u32 %v3938, 16
      %v4095 = vrot.slane %v4093, 1
      %v4096 = vor.u32 %v4091, %v4095
      %v4098 = vshll.u32 %v3939, 16
      %v4100 = vrot.slane %v4098, 1
      %v4101 = vsel %vm960, %v4096, %v4100
      %v4103 = vshrl.u32 %v3940, 16
      %v4105 = vshll.u32 %v3940, 16
      %v4107 = vrot.slane %v4105, 1
      %v4108 = vor.u32 %v4103, %v4107
      %v4110 = vshll.u32 %v3941, 16
      %v4112 = vrot.slane %v4110, 1
      %v4113 = vsel %vm960, %v4108, %v4112
      %v4115 = vshrl.u32 %v3942, 16
      %v4117 = vshll.u32 %v3942, 16
      %v4119 = vrot.slane %v4117, 1
      %v4120 = vor.u32 %v4115, %v4119
      %v4122 = vshll.u32 %v3943, 16
      %v4124 = vrot.slane %v4122, 1
      %v4125 = vsel %vm960, %v4120, %v4124
      %v4127 = vshrl.u32 %v3944, 16
      %v4129 = vshll.u32 %v3944, 16
      %v4131 = vrot.slane %v4129, 1
      %v4132 = vor.u32 %v4127, %v4131
      %v4134 = vshll.u32 %v3945, 16
      %v4136 = vrot.slane %v4134, 1
      %v4137 = vsel %vm960, %v4132, %v4136
      %v4154 = vmax.bf16 %v3914, %v3957
      %v4155 = vmax.bf16 %v3916, %v3969
      %v4156 = vmax.bf16 %v3918, %v3981
      %v4157 = vmax.bf16 %v3920, %v3993
      %v4158 = vmax.bf16 %v3922, %v4005
      %v4159 = vmax.bf16 %v3924, %v4017
      %v4160 = vmax.bf16 %v3926, %v4029
      %v4161 = vmax.bf16 %v3928, %v4041
      %v4162 = vmax.bf16 %v3930, %v4053
      %v4163 = vmax.bf16 %v3932, %v4065
      %v4164 = vmax.bf16 %v3934, %v4077
      %v4165 = vmax.bf16 %v3936, %v4089
      %v4166 = vmax.bf16 %v3938, %v4101
      %v4167 = vmax.bf16 %v3940, %v4113
      %v4168 = vmax.bf16 %v3942, %v4125
      %v4169 = vmax.bf16 %v3944, %v4137
      %v4202 = vrot.slane %v3914, 1
      %v4203 = vrot.slane %v3915, 1
      %v4204 = vsel %vm1387, %v4202, %v4203
      %v4205 = vrot.slane %v3916, 1
      %v4206 = vrot.slane %v3917, 1
      %v4207 = vsel %vm1387, %v4205, %v4206
      %v4208 = vrot.slane %v3918, 1
      %v4209 = vrot.slane %v3919, 1
      %v4210 = vsel %vm1387, %v4208, %v4209
      %v4211 = vrot.slane %v3920, 1
      %v4212 = vrot.slane %v3921, 1
      %v4213 = vsel %vm1387, %v4211, %v4212
      %v4214 = vrot.slane %v3922, 1
      %v4215 = vrot.slane %v3923, 1
      %v4216 = vsel %vm1387, %v4214, %v4215
      %v4217 = vrot.slane %v3924, 1
      %v4218 = vrot.slane %v3925, 1
      %v4219 = vsel %vm1387, %v4217, %v4218
      %v4220 = vrot.slane %v3926, 1
      %v4221 = vrot.slane %v3927, 1
      %v4222 = vsel %vm1387, %v4220, %v4221
      %v4223 = vrot.slane %v3928, 1
      %v4224 = vrot.slane %v3929, 1
      %v4225 = vsel %vm1387, %v4223, %v4224
      %v4226 = vrot.slane %v3930, 1
      %v4227 = vrot.slane %v3931, 1
      %v4228 = vsel %vm1387, %v4226, %v4227
      %v4229 = vrot.slane %v3932, 1
      %v4230 = vrot.slane %v3933, 1
      %v4231 = vsel %vm1387, %v4229, %v4230
      %v4232 = vrot.slane %v3934, 1
      %v4233 = vrot.slane %v3935, 1
      %v4234 = vsel %vm1387, %v4232, %v4233
      %v4235 = vrot.slane %v3936, 1
      %v4236 = vrot.slane %v3937, 1
      %v4237 = vsel %vm1387, %v4235, %v4236
      %v4238 = vrot.slane %v3938, 1
      %v4239 = vrot.slane %v3939, 1
      %v4240 = vsel %vm1387, %v4238, %v4239
      %v4241 = vrot.slane %v3940, 1
      %v4242 = vrot.slane %v3941, 1
      %v4243 = vsel %vm1387, %v4241, %v4242
      %v4244 = vrot.slane %v3942, 1
      %v4245 = vrot.slane %v3943, 1
      %v4246 = vsel %vm1387, %v4244, %v4245
      %v4247 = vrot.slane %v3944, 1
      %v4248 = vrot.slane %v3945, 1
      %v4249 = vsel %vm1387, %v4247, %v4248
      %v4266 = vmax.bf16 %v4154, %v4204
      %v4267 = vmax.bf16 %v4155, %v4207
      %v4268 = vmax.bf16 %v4156, %v4210
      %v4269 = vmax.bf16 %v4157, %v4213
      %v4270 = vmax.bf16 %v4158, %v4216
      %v4271 = vmax.bf16 %v4159, %v4219
      %v4272 = vmax.bf16 %v4160, %v4222
      %v4273 = vmax.bf16 %v4161, %v4225
      %v4274 = vmax.bf16 %v4162, %v4228
      %v4275 = vmax.bf16 %v4163, %v4231
      %v4276 = vmax.bf16 %v4164, %v4234
      %v4277 = vmax.bf16 %v4165, %v4237
      %v4278 = vmax.bf16 %v4166, %v4240
      %v4279 = vmax.bf16 %v4167, %v4243
      %v4280 = vmax.bf16 %v4168, %v4246
      %v4281 = vmax.bf16 %v4169, %v4249
      %v4282 = vrot.slane %v3947, 1
      %v4283 = vrot.slane %v3949, 2
      %v4284 = vor.u32 %v4282, %v4283
      %v4285 = vshrl.u32 %v3915, 16
      %v4287 = vrot.slane %v4285, 1
      %v4288 = vrot.slane %v3954, 2
      %v4289 = vor.u32 %v4287, %v4288
      %v4290 = vsel %vm1534, %v4284, %v4289
      %v4291 = vrot.slane %v3959, 1
      %v4292 = vrot.slane %v3961, 2
      %v4293 = vor.u32 %v4291, %v4292
      %v4294 = vshrl.u32 %v3917, 16
      %v4296 = vrot.slane %v4294, 1
      %v4297 = vrot.slane %v3966, 2
      %v4298 = vor.u32 %v4296, %v4297
      %v4299 = vsel %vm1534, %v4293, %v4298
      %v4300 = vrot.slane %v3971, 1
      %v4301 = vrot.slane %v3973, 2
      %v4302 = vor.u32 %v4300, %v4301
      %v4303 = vshrl.u32 %v3919, 16
      %v4305 = vrot.slane %v4303, 1
      %v4306 = vrot.slane %v3978, 2
      %v4307 = vor.u32 %v4305, %v4306
      %v4308 = vsel %vm1534, %v4302, %v4307
      %v4309 = vrot.slane %v3983, 1
      %v4310 = vrot.slane %v3985, 2
      %v4311 = vor.u32 %v4309, %v4310
      %v4312 = vshrl.u32 %v3921, 16
      %v4314 = vrot.slane %v4312, 1
      %v4315 = vrot.slane %v3990, 2
      %v4316 = vor.u32 %v4314, %v4315
      %v4317 = vsel %vm1534, %v4311, %v4316
      %v4318 = vrot.slane %v3995, 1
      %v4319 = vrot.slane %v3997, 2
      %v4320 = vor.u32 %v4318, %v4319
      %v4321 = vshrl.u32 %v3923, 16
      %v4323 = vrot.slane %v4321, 1
      %v4324 = vrot.slane %v4002, 2
      %v4325 = vor.u32 %v4323, %v4324
      %v4326 = vsel %vm1534, %v4320, %v4325
      %v4327 = vrot.slane %v4007, 1
      %v4328 = vrot.slane %v4009, 2
      %v4329 = vor.u32 %v4327, %v4328
      %v4330 = vshrl.u32 %v3925, 16
      %v4332 = vrot.slane %v4330, 1
      %v4333 = vrot.slane %v4014, 2
      %v4334 = vor.u32 %v4332, %v4333
      %v4335 = vsel %vm1534, %v4329, %v4334
      %v4336 = vrot.slane %v4019, 1
      %v4337 = vrot.slane %v4021, 2
      %v4338 = vor.u32 %v4336, %v4337
      %v4339 = vshrl.u32 %v3927, 16
      %v4341 = vrot.slane %v4339, 1
      %v4342 = vrot.slane %v4026, 2
      %v4343 = vor.u32 %v4341, %v4342
      %v4344 = vsel %vm1534, %v4338, %v4343
      %v4345 = vrot.slane %v4031, 1
      %v4346 = vrot.slane %v4033, 2
      %v4347 = vor.u32 %v4345, %v4346
      %v4348 = vshrl.u32 %v3929, 16
      %v4350 = vrot.slane %v4348, 1
      %v4351 = vrot.slane %v4038, 2
      %v4352 = vor.u32 %v4350, %v4351
      %v4353 = vsel %vm1534, %v4347, %v4352
      %v4354 = vrot.slane %v4043, 1
      %v4355 = vrot.slane %v4045, 2
      %v4356 = vor.u32 %v4354, %v4355
      %v4357 = vshrl.u32 %v3931, 16
      %v4359 = vrot.slane %v4357, 1
      %v4360 = vrot.slane %v4050, 2
      %v4361 = vor.u32 %v4359, %v4360
      %v4362 = vsel %vm1534, %v4356, %v4361
      %v4363 = vrot.slane %v4055, 1
      %v4364 = vrot.slane %v4057, 2
      %v4365 = vor.u32 %v4363, %v4364
      %v4366 = vshrl.u32 %v3933, 16
      %v4368 = vrot.slane %v4366, 1
      %v4369 = vrot.slane %v4062, 2
      %v4370 = vor.u32 %v4368, %v4369
      %v4371 = vsel %vm1534, %v4365, %v4370
      %v4372 = vrot.slane %v4067, 1
      %v4373 = vrot.slane %v4069, 2
      %v4374 = vor.u32 %v4372, %v4373
      %v4375 = vshrl.u32 %v3935, 16
      %v4377 = vrot.slane %v4375, 1
      %v4378 = vrot.slane %v4074, 2
      %v4379 = vor.u32 %v4377, %v4378
      %v4380 = vsel %vm1534, %v4374, %v4379
      %v4381 = vrot.slane %v4079, 1
      %v4382 = vrot.slane %v4081, 2
      %v4383 = vor.u32 %v4381, %v4382
      %v4384 = vshrl.u32 %v3937, 16
      %v4386 = vrot.slane %v4384, 1
      %v4387 = vrot.slane %v4086, 2
      %v4388 = vor.u32 %v4386, %v4387
      %v4389 = vsel %vm1534, %v4383, %v4388
      %v4390 = vrot.slane %v4091, 1
      %v4391 = vrot.slane %v4093, 2
      %v4392 = vor.u32 %v4390, %v4391
      %v4393 = vshrl.u32 %v3939, 16
      %v4395 = vrot.slane %v4393, 1
      %v4396 = vrot.slane %v4098, 2
      %v4397 = vor.u32 %v4395, %v4396
      %v4398 = vsel %vm1534, %v4392, %v4397
      %v4399 = vrot.slane %v4103, 1
      %v4400 = vrot.slane %v4105, 2
      %v4401 = vor.u32 %v4399, %v4400
      %v4402 = vshrl.u32 %v3941, 16
      %v4404 = vrot.slane %v4402, 1
      %v4405 = vrot.slane %v4110, 2
      %v4406 = vor.u32 %v4404, %v4405
      %v4407 = vsel %vm1534, %v4401, %v4406
      %v4408 = vrot.slane %v4115, 1
      %v4409 = vrot.slane %v4117, 2
      %v4410 = vor.u32 %v4408, %v4409
      %v4411 = vshrl.u32 %v3943, 16
      %v4413 = vrot.slane %v4411, 1
      %v4414 = vrot.slane %v4122, 2
      %v4415 = vor.u32 %v4413, %v4414
      %v4416 = vsel %vm1534, %v4410, %v4415
      %v4417 = vrot.slane %v4127, 1
      %v4418 = vrot.slane %v4129, 2
      %v4419 = vor.u32 %v4417, %v4418
      %v4420 = vshrl.u32 %v3945, 16
      %v4422 = vrot.slane %v4420, 1
      %v4423 = vrot.slane %v4134, 2
      %v4424 = vor.u32 %v4422, %v4423
      %v4425 = vsel %vm1534, %v4419, %v4424
      %v4442 = vmax.bf16 %v4266, %v4290
      %v4443 = vmax.bf16 %v4267, %v4299
      %v4444 = vmax.bf16 %v4268, %v4308
      %v4445 = vmax.bf16 %v4269, %v4317
      %v4446 = vmax.bf16 %v4270, %v4326
      %v4447 = vmax.bf16 %v4271, %v4335
      %v4448 = vmax.bf16 %v4272, %v4344
      %v4449 = vmax.bf16 %v4273, %v4353
      %v4450 = vmax.bf16 %v4274, %v4362
      %v4451 = vmax.bf16 %v4275, %v4371
      %v4452 = vmax.bf16 %v4276, %v4380
      %v4453 = vmax.bf16 %v4277, %v4389
      %v4454 = vmax.bf16 %v4278, %v4398
      %v4455 = vmax.bf16 %v4279, %v4407
      %v4456 = vmax.bf16 %v4280, %v4416
      %v4457 = vmax.bf16 %v4281, %v4425
      %v4458 = vrot.slane %v3914, 2
      %v4459 = vrot.slane %v3915, 2
      %v4460 = vsel %vm1763, %v4458, %v4459
      %v4461 = vrot.slane %v3916, 2
      %v4462 = vrot.slane %v3917, 2
      %v4463 = vsel %vm1763, %v4461, %v4462
      %v4464 = vrot.slane %v3918, 2
      %v4465 = vrot.slane %v3919, 2
      %v4466 = vsel %vm1763, %v4464, %v4465
      %v4467 = vrot.slane %v3920, 2
      %v4468 = vrot.slane %v3921, 2
      %v4469 = vsel %vm1763, %v4467, %v4468
      %v4470 = vrot.slane %v3922, 2
      %v4471 = vrot.slane %v3923, 2
      %v4472 = vsel %vm1763, %v4470, %v4471
      %v4473 = vrot.slane %v3924, 2
      %v4474 = vrot.slane %v3925, 2
      %v4475 = vsel %vm1763, %v4473, %v4474
      %v4476 = vrot.slane %v3926, 2
      %v4477 = vrot.slane %v3927, 2
      %v4478 = vsel %vm1763, %v4476, %v4477
      %v4479 = vrot.slane %v3928, 2
      %v4480 = vrot.slane %v3929, 2
      %v4481 = vsel %vm1763, %v4479, %v4480
      %v4482 = vrot.slane %v3930, 2
      %v4483 = vrot.slane %v3931, 2
      %v4484 = vsel %vm1763, %v4482, %v4483
      %v4485 = vrot.slane %v3932, 2
      %v4486 = vrot.slane %v3933, 2
      %v4487 = vsel %vm1763, %v4485, %v4486
      %v4488 = vrot.slane %v3934, 2
      %v4489 = vrot.slane %v3935, 2
      %v4490 = vsel %vm1763, %v4488, %v4489
      %v4491 = vrot.slane %v3936, 2
      %v4492 = vrot.slane %v3937, 2
      %v4493 = vsel %vm1763, %v4491, %v4492
      %v4494 = vrot.slane %v3938, 2
      %v4495 = vrot.slane %v3939, 2
      %v4496 = vsel %vm1763, %v4494, %v4495
      %v4497 = vrot.slane %v3940, 2
      %v4498 = vrot.slane %v3941, 2
      %v4499 = vsel %vm1763, %v4497, %v4498
      %v4500 = vrot.slane %v3942, 2
      %v4501 = vrot.slane %v3943, 2
      %v4502 = vsel %vm1763, %v4500, %v4501
      %v4503 = vrot.slane %v3944, 2
      %v4504 = vrot.slane %v3945, 2
      %v4505 = vsel %vm1763, %v4503, %v4504
      %v4522 = vmax.bf16 %v4442, %v4460
      %v4523 = vmax.bf16 %v4443, %v4463
      %v4524 = vmax.bf16 %v4444, %v4466
      %v4525 = vmax.bf16 %v4445, %v4469
      %v4526 = vmax.bf16 %v4446, %v4472
      %v4527 = vmax.bf16 %v4447, %v4475
      %v4528 = vmax.bf16 %v4448, %v4478
      %v4529 = vmax.bf16 %v4449, %v4481
      %v4530 = vmax.bf16 %v4450, %v4484
      %v4531 = vmax.bf16 %v4451, %v4487
      %v4532 = vmax.bf16 %v4452, %v4490
      %v4533 = vmax.bf16 %v4453, %v4493
      %v4534 = vmax.bf16 %v4454, %v4496
      %v4535 = vmax.bf16 %v4455, %v4499
      %v4536 = vmax.bf16 %v4456, %v4502
      %v4537 = vmax.bf16 %v4457, %v4505
      %v4538 = vld [vmem:[%s3 + $0x4] sm:$0xc]
      %v4540 = vunpack.c.l.b16 %v4538
      %v4541 = vpack.c.b16 %v4540, %v4540
      %v4542 = vrot.slane %v4541, 2
      %v4544 = vsel %vm1995, %v4522, 0
      %v4547 = vsel %vm1995, %v4523, 0
      %v4550 = vsel %vm1995, %v4524, 0
      %v4553 = vsel %vm1995, %v4525, 0
      %v4556 = vsel %vm1995, %v4526, 0
      %v4559 = vsel %vm1995, %v4527, 0
      %v4562 = vsel %vm1995, %v4528, 0
      %v4565 = vsel %vm1995, %v4529, 0
      %v4568 = vsel %vm1995, %v4530, 0
      %v4571 = vsel %vm1995, %v4531, 0
      %v4574 = vsel %vm1995, %v4532, 0
      %v4577 = vsel %vm1995, %v4533, 0
      %v4580 = vsel %vm1995, %v4534, 0
      %v4583 = vsel %vm1995, %v4535, 0
      %v4586 = vsel %vm1995, %v4536, 0
      %v4589 = vsel %vm1995, %v4537, 0
      %v4592 = vsel %vm2044, %v4542, 0
      %4594 = vmatprep.subr.bf16.mxu0 0
      %4595 = vmatpush1.bf16.msra.mxu0 %v4592
      %4596 = vmatprep.subr.bf16.mxu0 0
      %4597 = vmatpush1.bf16.msra.mxu0 0
      %4598 = vmatprep.subr.bf16.mxu0 0
      %4599 = vmatpush1.bf16.msra.mxu0 0
      %4600 = vmatprep.subr.bf16.mxu0 0
      %4601 = vmatpush1.bf16.msra.mxu0 0
      %4602 = vmatprep.subr.bf16.mxu0 0
      %4603 = vmatpush1.bf16.msra.mxu0 0
      %4604 = vmatprep.subr.bf16.mxu0 0
      %4605 = vmatpush1.bf16.msra.mxu0 0
      %4606 = vmatprep.subr.bf16.mxu0 0
      %4607 = vmatpush1.bf16.msra.mxu0 0
      %4608 = vmatprep.subr.bf16.mxu0 0
      %4609 = vmatpush1.bf16.msra.mxu0 0
      %4610 = vmatprep.subr.bf16.mxu0 0
      %4611 = vmatpush1.bf16.msra.mxu0 0
      %4612 = vmatprep.subr.bf16.mxu0 0
      %4613 = vmatpush1.bf16.msra.mxu0 0
      %4614 = vmatprep.subr.bf16.mxu0 0
      %4615 = vmatpush1.bf16.msra.mxu0 0
      %4616 = vmatprep.subr.bf16.mxu0 0
      %4617 = vmatpush1.bf16.msra.mxu0 0
      %4618 = vmatprep.subr.bf16.mxu0 0
      %4619 = vmatpush1.bf16.msra.mxu0 0
      %4620 = vmatprep.subr.bf16.mxu0 0
      %4621 = vmatpush1.bf16.msra.mxu0 0
      %4622 = vmatprep.subr.bf16.mxu0 0
      %4623 = vmatpush1.bf16.msra.mxu0 0
      %4624 = vmatprep.subr.bf16.mxu0 0
      %4625 = vmatpush1.bf16.msra.mxu0 0
      %4626 = vmatprep.mubr.bf16.mxu0 0
      %4627 = vmatmul.mubr.bf16.gmra.mrb[0].mxu0 %v4544
      %v4628 = vpop.f32.mrb[0].mxu0
      %v4629 = vadd.f32 0.0, %v4628
      %v4630 = vpop.f32.mrb[0].mxu0
      %v4631 = vpop.f32.mrb[0].mxu0
      %v4632 = vadd.f32 0.0, %v4631
      %v4633 = vpop.f32.mrb[0].mxu0
      %4634 = vmatprep.mubr.bf16.mxu0 0
      %4635 = vmatmul.mubr.bf16.gmra.mrb[0].mxu0 %v4547
      %v4636 = vpop.f32.mrb[0].mxu0
      %v4637 = vadd.f32 0.0, %v4636
      %v4638 = vpop.f32.mrb[0].mxu0
      %v4639 = vpop.f32.mrb[0].mxu0
      %v4640 = vadd.f32 0.0, %v4639
      %v4641 = vpop.f32.mrb[0].mxu0
      %4642 = vmatprep.mubr.bf16.mxu0 0
      %4643 = vmatmul.mubr.bf16.gmra.mrb[0].mxu0 %v4550
      %v4644 = vpop.f32.mrb[0].mxu0
      %v4645 = vadd.f32 0.0, %v4644
      %v4646 = vpop.f32.mrb[0].mxu0
      %v4647 = vpop.f32.mrb[0].mxu0
      %v4648 = vadd.f32 0.0, %v4647
      %v4649 = vpop.f32.mrb[0].mxu0
      %4650 = vmatprep.mubr.bf16.mxu0 0
      %4651 = vmatmul.mubr.bf16.gmra.mrb[0].mxu0 %v4553
      %v4652 = vpop.f32.mrb[0].mxu0
      %v4653 = vadd.f32 0.0, %v4652
      %v4654 = vpop.f32.mrb[0].mxu0
      %v4655 = vpop.f32.mrb[0].mxu0
      %v4656 = vadd.f32 0.0, %v4655
      %v4657 = vpop.f32.mrb[0].mxu0
      %4658 = vmatprep.mubr.bf16.mxu0 0
      %4659 = vmatmul.mubr.bf16.gmra.mrb[0].mxu0 %v4556
      %v4660 = vpop.f32.mrb[0].mxu0
      %v4661 = vadd.f32 0.0, %v4660
      %v4662 = vpop.f32.mrb[0].mxu0
      %v4663 = vpop.f32.mrb[0].mxu0
      %v4664 = vadd.f32 0.0, %v4663
      %v4665 = vpop.f32.mrb[0].mxu0
      %4666 = vmatprep.mubr.bf16.mxu0 0
      %4667 = vmatmul.mubr.bf16.gmra.mrb[0].mxu0 %v4559
      %v4668 = vpop.f32.mrb[0].mxu0
      %v4669 = vadd.f32 0.0, %v4668
      %v4670 = vpop.f32.mrb[0].mxu0
      %v4671 = vpop.f32.mrb[0].mxu0
      %v4672 = vadd.f32 0.0, %v4671
      %v4673 = vpop.f32.mrb[0].mxu0
      %4674 = vmatprep.mubr.bf16.mxu0 0
      %4675 = vmatmul.mubr.bf16.gmra.mrb[0].mxu0 %v4562
      %v4676 = vpop.f32.mrb[0].mxu0
      %v4677 = vadd.f32 0.0, %v4676
      %v4678 = vpop.f32.mrb[0].mxu0
      %v4679 = vpop.f32.mrb[0].mxu0
      %v4680 = vadd.f32 0.0, %v4679
      %v4681 = vpop.f32.mrb[0].mxu0
      %4682 = vmatprep.mubr.bf16.mxu0 0
      %4683 = vmatmul.mubr.bf16.gmra.mrb[0].mxu0 %v4565
      %v4684 = vpop.f32.mrb[0].mxu0
      %v4685 = vadd.f32 0.0, %v4684
      %v4686 = vpop.f32.mrb[0].mxu0
      %v4687 = vpop.f32.mrb[0].mxu0
      %v4688 = vadd.f32 0.0, %v4687
      %v4689 = vpop.f32.mrb[0].mxu0
      %4690 = vmatprep.mubr.bf16.mxu0 0
      %4691 = vmatmul.mubr.bf16.gmra.mrb[0].mxu0 %v4568
      %v4692 = vpop.f32.mrb[0].mxu0
      %v4693 = vadd.f32 0.0, %v4692
      %v4694 = vpop.f32.mrb[0].mxu0
      %v4695 = vpop.f32.mrb[0].mxu0
      %v4696 = vadd.f32 0.0, %v4695
      %v4697 = vpop.f32.mrb[0].mxu0
      %4698 = vmatprep.mubr.bf16.mxu0 0
      %4699 = vmatmul.mubr.bf16.gmra.mrb[0].mxu0 %v4571
      %v4700 = vpop.f32.mrb[0].mxu0
      %v4701 = vadd.f32 0.0, %v4700
      %v4702 = vpop.f32.mrb[0].mxu0
      %v4703 = vpop.f32.mrb[0].mxu0
      %v4704 = vadd.f32 0.0, %v4703
      %v4705 = vpop.f32.mrb[0].mxu0
      %4706 = vmatprep.mubr.bf16.mxu0 0
      %4707 = vmatmul.mubr.bf16.gmra.mrb[0].mxu0 %v4574
      %v4708 = vpop.f32.mrb[0].mxu0
      %v4709 = vadd.f32 0.0, %v4708
      %v4710 = vpop.f32.mrb[0].mxu0
      %v4711 = vpop.f32.mrb[0].mxu0
      %v4712 = vadd.f32 0.0, %v4711
      %v4713 = vpop.f32.mrb[0].mxu0
      %4714 = vmatprep.mubr.bf16.mxu0 0
      %4715 = vmatmul.mubr.bf16.gmra.mrb[0].mxu0 %v4577
      %v4716 = vpop.f32.mrb[0].mxu0
      %v4717 = vadd.f32 0.0, %v4716
      %v4718 = vpop.f32.mrb[0].mxu0
      %v4719 = vpop.f32.mrb[0].mxu0
      %v4720 = vadd.f32 0.0, %v4719
      %v4721 = vpop.f32.mrb[0].mxu0
      %4722 = vmatprep.mubr.bf16.mxu0 0
      %4723 = vmatmul.mubr.bf16.gmra.mrb[0].mxu0 %v4580
      %v4724 = vpop.f32.mrb[0].mxu0
      %v4725 = vadd.f32 0.0, %v4724
      %v4726 = vpop.f32.mrb[0].mxu0
      %v4727 = vpop.f32.mrb[0].mxu0
      %v4728 = vadd.f32 0.0, %v4727
      %v4729 = vpop.f32.mrb[0].mxu0
      %4730 = vmatprep.mubr.bf16.mxu0 0
      %4731 = vmatmul.mubr.bf16.gmra.mrb[0].mxu0 %v4583
      %v4732 = vpop.f32.mrb[0].mxu0
      %v4733 = vadd.f32 0.0, %v4732
      %v4734 = vpop.f32.mrb[0].mxu0
      %v4735 = vpop.f32.mrb[0].mxu0
      %v4736 = vadd.f32 0.0, %v4735
      %v4737 = vpop.f32.mrb[0].mxu0
      %4738 = vmatprep.mubr.bf16.mxu0 0
      %4739 = vmatmul.mubr.bf16.gmra.mrb[0].mxu0 %v4586
      %v4740 = vpop.f32.mrb[0].mxu0
      %v4741 = vadd.f32 0.0, %v4740
      %v4742 = vpop.f32.mrb[0].mxu0
      %v4743 = vpop.f32.mrb[0].mxu0
      %v4744 = vadd.f32 0.0, %v4743
      %v4745 = vpop.f32.mrb[0].mxu0
      %4746 = vmatprep.mubr.bf16.mxu0 0
      %4747 = vmatmul.mubr.bf16.gmra.mrb[0].mxu0 %v4589
      %v4748 = vpop.f32.mrb[0].mxu0
      %v4749 = vadd.f32 0.0, %v4748
      %v4750 = vpop.f32.mrb[0].mxu0
      %v4751 = vpop.f32.mrb[0].mxu0
      %v4752 = vadd.f32 0.0, %v4751
      %v4753 = vpop.f32.mrb[0].mxu0
      %4754 = vdwg.mxu0
      %v4755 = vadd.f32 %v3786, %v4629
      %v4756 = vadd.f32 %v3787, %v4632
      %v4757 = vadd.f32 %v3788, %v4637
      %v4758 = vadd.f32 %v3789, %v4640
      %v4759 = vadd.f32 %v3790, %v4645
      %v4760 = vadd.f32 %v3791, %v4648
      %v4761 = vadd.f32 %v3792, %v4653
      %v4762 = vadd.f32 %v3793, %v4656
      %v4763 = vadd.f32 %v3794, %v4661
      %v4764 = vadd.f32 %v3795, %v4664
      %v4765 = vadd.f32 %v3796, %v4669
      %v4766 = vadd.f32 %v3797, %v4672
      %v4767 = vadd.f32 %v3798, %v4677
      %v4768 = vadd.f32 %v3799, %v4680
      %v4769 = vadd.f32 %v3800, %v4685
      %v4770 = vadd.f32 %v3801, %v4688
      %v4771 = vadd.f32 %v3802, %v4693
      %v4772 = vadd.f32 %v3803, %v4696
      %v4773 = vadd.f32 %v3804, %v4701
      %v4774 = vadd.f32 %v3805, %v4704
      %v4775 = vadd.f32 %v3806, %v4709
      %v4776 = vadd.f32 %v3807, %v4712
      %v4777 = vadd.f32 %v3808, %v4717
      %v4778 = vadd.f32 %v3809, %v4720
      %v4779 = vadd.f32 %v3810, %v4725
      %v4780 = vadd.f32 %v3811, %v4728
      %v4781 = vadd.f32 %v3812, %v4733
      %v4782 = vadd.f32 %v3813, %v4736
      %v4783 = vadd.f32 %v3814, %v4741
      %v4784 = vadd.f32 %v3815, %v4744
      %v4785 = vadd.f32 %v3816, %v4749
      %v4786 = vadd.f32 %v3817, %v4752
      %v4787 = vld [vmem:[%s4] sm:$0x1]
      %v4789 = vlaneseq
      %v4790 = vshrl.u32 %v4789, 7
      %v4791 = vsub.s32 0, %v4790
      %v4792 = vrot.slane %v4787, %v4791
      %v4794 = vadd.f32 %v4755, %v4792
      %v4795 = vadd.f32 %v4756, %v4792
      %v4796 = vadd.f32 %v4757, %v4792
      %v4797 = vadd.f32 %v4758, %v4792
      %v4798 = vadd.f32 %v4759, %v4792
      %v4799 = vadd.f32 %v4760, %v4792
      %v4800 = vadd.f32 %v4761, %v4792
      %v4801 = vadd.f32 %v4762, %v4792
      %v4802 = vadd.f32 %v4763, %v4792
      %v4803 = vadd.f32 %v4764, %v4792
      %v4804 = vadd.f32 %v4765, %v4792
      %v4805 = vadd.f32 %v4766, %v4792
      %v4806 = vadd.f32 %v4767, %v4792
      %v4807 = vadd.f32 %v4768, %v4792
      %v4808 = vadd.f32 %v4769, %v4792
      %v4809 = vadd.f32 %v4770, %v4792
      %v4810 = vadd.f32 %v4771, %v4792
      %v4811 = vadd.f32 %v4772, %v4792
      %v4812 = vadd.f32 %v4773, %v4792
      %v4813 = vadd.f32 %v4774, %v4792
      %v4814 = vadd.f32 %v4775, %v4792
      %v4815 = vadd.f32 %v4776, %v4792
      %v4816 = vadd.f32 %v4777, %v4792
      %v4817 = vadd.f32 %v4778, %v4792
      %v4818 = vadd.f32 %v4779, %v4792
      %v4819 = vadd.f32 %v4780, %v4792
      %v4820 = vadd.f32 %v4781, %v4792
      %v4821 = vadd.f32 %v4782, %v4792
      %v4822 = vadd.f32 %v4783, %v4792
      %v4823 = vadd.f32 %v4784, %v4792
      %v4824 = vadd.f32 %v4785, %v4792
      %v4825 = vadd.f32 %v4786, %v4792
      %v4826 = vxor.u32 %v4794, 2147483648
      %v4827 = vxor.u32 %v4795, 2147483648
      %v4828 = vxor.u32 %v4796, 2147483648
      %v4829 = vxor.u32 %v4797, 2147483648
      %v4830 = vxor.u32 %v4798, 2147483648
      %v4831 = vxor.u32 %v4799, 2147483648
      %v4832 = vxor.u32 %v4800, 2147483648
      %v4833 = vxor.u32 %v4801, 2147483648
      %v4834 = vxor.u32 %v4802, 2147483648
      %v4835 = vxor.u32 %v4803, 2147483648
      %v4836 = vxor.u32 %v4804, 2147483648
      %v4837 = vxor.u32 %v4805, 2147483648
      %v4838 = vxor.u32 %v4806, 2147483648
      %v4839 = vxor.u32 %v4807, 2147483648
      %v4840 = vxor.u32 %v4808, 2147483648
      %v4841 = vxor.u32 %v4809, 2147483648
      %v4842 = vxor.u32 %v4810, 2147483648
      %v4843 = vxor.u32 %v4811, 2147483648
      %v4844 = vxor.u32 %v4812, 2147483648
      %v4845 = vxor.u32 %v4813, 2147483648
      %v4846 = vxor.u32 %v4814, 2147483648
      %v4847 = vxor.u32 %v4815, 2147483648
      %v4848 = vxor.u32 %v4816, 2147483648
      %v4849 = vxor.u32 %v4817, 2147483648
      %v4850 = vxor.u32 %v4818, 2147483648
      %v4851 = vxor.u32 %v4819, 2147483648
      %v4852 = vxor.u32 %v4820, 2147483648
      %v4853 = vxor.u32 %v4821, 2147483648
      %v4854 = vxor.u32 %v4822, 2147483648
      %v4855 = vxor.u32 %v4823, 2147483648
      %v4856 = vxor.u32 %v4824, 2147483648
      %v4857 = vxor.u32 %v4825, 2147483648
      %v4858 = vmul.f32 %v4826, 1.442695
      %v4859 = vpow.pop %v4858
      %v4860 = vmul.f32 %v4827, 1.442695
      %v4861 = vpow.pop %v4860
      %v4862 = vmul.f32 %v4828, 1.442695
      %v4863 = vpow.pop %v4862
      %v4864 = vmul.f32 %v4829, 1.442695
      %v4865 = vpow.pop %v4864
      %v4866 = vmul.f32 %v4830, 1.442695
      %v4867 = vpow.pop %v4866
      %v4868 = vmul.f32 %v4831, 1.442695
      %v4869 = vpow.pop %v4868
      %v4870 = vmul.f32 %v4832, 1.442695
      %v4871 = vpow.pop %v4870
      %v4872 = vmul.f32 %v4833, 1.442695
      %v4873 = vpow.pop %v4872
      %v4874 = vmul.f32 %v4834, 1.442695
      %v4875 = vpow.pop %v4874
      %v4876 = vmul.f32 %v4835, 1.442695
      %v4877 = vpow.pop %v4876
      %v4878 = vmul.f32 %v4836, 1.442695
      %v4879 = vpow.pop %v4878
      %v4880 = vmul.f32 %v4837, 1.442695
      %v4881 = vpow.pop %v4880
      %v4882 = vmul.f32 %v4838, 1.442695
      %v4883 = vpow.pop %v4882
      %v4884 = vmul.f32 %v4839, 1.442695
      %v4885 = vpow.pop %v4884
      %v4886 = vmul.f32 %v4840, 1.442695
      %v4887 = vpow.pop %v4886
      %v4888 = vmul.f32 %v4841, 1.442695
      %v4889 = vpow.pop %v4888
      %v4890 = vmul.f32 %v4842, 1.442695
      %v4891 = vpow.pop %v4890
      %v4892 = vmul.f32 %v4843, 1.442695
      %v4893 = vpow.pop %v4892
      %v4894 = vmul.f32 %v4844, 1.442695
      %v4895 = vpow.pop %v4894
      %v4896 = vmul.f32 %v4845, 1.442695
      %v4897 = vpow.pop %v4896
      %v4898 = vmul.f32 %v4846, 1.442695
      %v4899 = vpow.pop %v4898
      %v4900 = vmul.f32 %v4847, 1.442695
      %v4901 = vpow.pop %v4900
      %v4902 = vmul.f32 %v4848, 1.442695
      %v4903 = vpow.pop %v4902
      %v4904 = vmul.f32 %v4849, 1.442695
      %v4905 = vpow.pop %v4904
      %v4906 = vmul.f32 %v4850, 1.442695
      %v4907 = vpow.pop %v4906
      %v4908 = vmul.f32 %v4851, 1.442695
      %v4909 = vpow.pop %v4908
      %v4910 = vmul.f32 %v4852, 1.442695
      %v4911 = vpow.pop %v4910
      %v4912 = vmul.f32 %v4853, 1.442695
      %v4913 = vpow.pop %v4912
      %v4914 = vmul.f32 %v4854, 1.442695
      %v4915 = vpow.pop %v4914
      %v4916 = vmul.f32 %v4855, 1.442695
      %v4917 = vpow.pop %v4916
      %v4918 = vmul.f32 %v4856, 1.442695
      %v4919 = vpow.pop %v4918
      %v4920 = vmul.f32 %v4857, 1.442695
      %v4921 = vpow.pop %v4920
      %v4922 = vadd.f32 %v4859, 1.0
      %v4923 = vadd.f32 %v4861, 1.0
      %v4924 = vadd.f32 %v4863, 1.0
      %v4925 = vadd.f32 %v4865, 1.0
      %v4926 = vadd.f32 %v4867, 1.0
      %v4927 = vadd.f32 %v4869, 1.0
      %v4928 = vadd.f32 %v4871, 1.0
      %v4929 = vadd.f32 %v4873, 1.0
      %v4930 = vadd.f32 %v4875, 1.0
      %v4931 = vadd.f32 %v4877, 1.0
      %v4932 = vadd.f32 %v4879, 1.0
      %v4933 = vadd.f32 %v4881, 1.0
      %v4934 = vadd.f32 %v4883, 1.0
      %v4935 = vadd.f32 %v4885, 1.0
      %v4936 = vadd.f32 %v4887, 1.0
      %v4937 = vadd.f32 %v4889, 1.0
      %v4938 = vadd.f32 %v4891, 1.0
      %v4939 = vadd.f32 %v4893, 1.0
      %v4940 = vadd.f32 %v4895, 1.0
      %v4941 = vadd.f32 %v4897, 1.0
      %v4942 = vadd.f32 %v4899, 1.0
      %v4943 = vadd.f32 %v4901, 1.0
      %v4944 = vadd.f32 %v4903, 1.0
      %v4945 = vadd.f32 %v4905, 1.0
      %v4946 = vadd.f32 %v4907, 1.0
      %v4947 = vadd.f32 %v4909, 1.0
      %v4948 = vadd.f32 %v4911, 1.0
      %v4949 = vadd.f32 %v4913, 1.0
      %v4950 = vadd.f32 %v4915, 1.0
      %v4951 = vadd.f32 %v4917, 1.0
      %v4952 = vadd.f32 %v4919, 1.0
      %v4953 = vadd.f32 %v4921, 1.0
      %v4954 = vrcp.pop %v4922
      %v4955 = vmul.f32 1.0, %v4954
      %v4956 = vrcp.pop %v4923
      %v4957 = vmul.f32 1.0, %v4956
      %v4958 = vrcp.pop %v4924
      %v4959 = vmul.f32 1.0, %v4958
      %v4960 = vrcp.pop %v4925
      %v4961 = vmul.f32 1.0, %v4960
      %v4962 = vrcp.pop %v4926
      %v4963 = vmul.f32 1.0, %v4962
      %v4964 = vrcp.pop %v4927
      %v4965 = vmul.f32 1.0, %v4964
      %v4966 = vrcp.pop %v4928
      %v4967 = vmul.f32 1.0, %v4966
      %v4968 = vrcp.pop %v4929
      %v4969 = vmul.f32 1.0, %v4968
      %v4970 = vrcp.pop %v4930
      %v4971 = vmul.f32 1.0, %v4970
      %v4972 = vrcp.pop %v4931
      %v4973 = vmul.f32 1.0, %v4972
      %v4974 = vrcp.pop %v4932
      %v4975 = vmul.f32 1.0, %v4974
      %v4976 = vrcp.pop %v4933
      %v4977 = vmul.f32 1.0, %v4976
      %v4978 = vrcp.pop %v4934
      %v4979 = vmul.f32 1.0, %v4978
      %v4980 = vrcp.pop %v4935
      %v4981 = vmul.f32 1.0, %v4980
      %v4982 = vrcp.pop %v4936
      %v4983 = vmul.f32 1.0, %v4982
      %v4984 = vrcp.pop %v4937
      %v4985 = vmul.f32 1.0, %v4984
      %v4986 = vrcp.pop %v4938
      %v4987 = vmul.f32 1.0, %v4986
      %v4988 = vrcp.pop %v4939
      %v4989 = vmul.f32 1.0, %v4988
      %v4990 = vrcp.pop %v4940
      %v4991 = vmul.f32 1.0, %v4990
      %v4992 = vrcp.pop %v4941
      %v4993 = vmul.f32 1.0, %v4992
      %v4994 = vrcp.pop %v4942
      %v4995 = vmul.f32 1.0, %v4994
      %v4996 = vrcp.pop %v4943
      %v4997 = vmul.f32 1.0, %v4996
      %v4998 = vrcp.pop %v4944
      %v4999 = vmul.f32 1.0, %v4998
      %v5000 = vrcp.pop %v4945
      %v5001 = vmul.f32 1.0, %v5000
      %v5002 = vrcp.pop %v4946
      %v5003 = vmul.f32 1.0, %v5002
      %v5004 = vrcp.pop %v4947
      %v5005 = vmul.f32 1.0, %v5004
      %v5006 = vrcp.pop %v4948
      %v5007 = vmul.f32 1.0, %v5006
      %v5008 = vrcp.pop %v4949
      %v5009 = vmul.f32 1.0, %v5008
      %v5010 = vrcp.pop %v4950
      %v5011 = vmul.f32 1.0, %v5010
      %v5012 = vrcp.pop %v4951
      %v5013 = vmul.f32 1.0, %v5012
      %v5014 = vrcp.pop %v4952
      %v5015 = vmul.f32 1.0, %v5014
      %v5016 = vrcp.pop %v4953
      %v5017 = vmul.f32 1.0, %v5016
      %v5018 = vmul.f32 %v4794, %v4955
      %v5019 = vmul.f32 %v4795, %v4957
      %v5020 = vmul.f32 %v4796, %v4959
      %v5021 = vmul.f32 %v4797, %v4961
      %v5022 = vmul.f32 %v4798, %v4963
      %v5023 = vmul.f32 %v4799, %v4965
      %v5024 = vmul.f32 %v4800, %v4967
      %v5025 = vmul.f32 %v4801, %v4969
      %v5026 = vmul.f32 %v4802, %v4971
      %v5027 = vmul.f32 %v4803, %v4973
      %v5028 = vmul.f32 %v4804, %v4975
      %v5029 = vmul.f32 %v4805, %v4977
      %v5030 = vmul.f32 %v4806, %v4979
      %v5031 = vmul.f32 %v4807, %v4981
      %v5032 = vmul.f32 %v4808, %v4983
      %v5033 = vmul.f32 %v4809, %v4985
      %v5034 = vmul.f32 %v4810, %v4987
      %v5035 = vmul.f32 %v4811, %v4989
      %v5036 = vmul.f32 %v4812, %v4991
      %v5037 = vmul.f32 %v4813, %v4993
      %v5038 = vmul.f32 %v4814, %v4995
      %v5039 = vmul.f32 %v4815, %v4997
      %v5040 = vmul.f32 %v4816, %v4999
      %v5041 = vmul.f32 %v4817, %v5001
      %v5042 = vmul.f32 %v4818, %v5003
      %v5043 = vmul.f32 %v4819, %v5005
      %v5044 = vmul.f32 %v4820, %v5007
      %v5045 = vmul.f32 %v4821, %v5009
      %v5046 = vmul.f32 %v4822, %v5011
      %v5047 = vmul.f32 %v4823, %v5013
      %v5048 = vmul.f32 %v4824, %v5015
      %v5049 = vmul.f32 %v4825, %v5017
      %v5050 = vpack.c.bf16 %v5019, %v5018
      %v5051 = vpack.c.bf16 %v5021, %v5020
      %v5052 = vpack.c.bf16 %v5023, %v5022
      %v5053 = vpack.c.bf16 %v5025, %v5024
      %v5054 = vpack.c.bf16 %v5027, %v5026
      %v5055 = vpack.c.bf16 %v5029, %v5028
      %v5056 = vpack.c.bf16 %v5031, %v5030
      %v5057 = vpack.c.bf16 %v5033, %v5032
      %v5058 = vpack.c.bf16 %v5035, %v5034
      %v5059 = vpack.c.bf16 %v5037, %v5036
      %v5060 = vpack.c.bf16 %v5039, %v5038
      %v5061 = vpack.c.bf16 %v5041, %v5040
      %v5062 = vpack.c.bf16 %v5043, %v5042
      %v5063 = vpack.c.bf16 %v5045, %v5044
      %v5064 = vpack.c.bf16 %v5047, %v5046
      %v5065 = vpack.c.bf16 %v5049, %v5048
      %v5082 = vunpack.c.l.b16 %v5050
      %v5083 = vunpack.c.h.b16 %v5050
      %v5084 = vunpack.c.l.b16 %v5051
      %v5085 = vunpack.c.h.b16 %v5051
      %v5086 = vunpack.c.l.b16 %v5052
      %v5087 = vunpack.c.h.b16 %v5052
      %v5088 = vunpack.c.l.b16 %v5053
      %v5089 = vunpack.c.h.b16 %v5053
      %v5090 = vunpack.c.l.b16 %v5054
      %v5091 = vunpack.c.h.b16 %v5054
      %v5092 = vunpack.c.l.b16 %v5055
      %v5093 = vunpack.c.h.b16 %v5055
      %v5094 = vunpack.c.l.b16 %v5056
      %v5095 = vunpack.c.h.b16 %v5056
      %v5096 = vunpack.c.l.b16 %v5057
      %v5097 = vunpack.c.h.b16 %v5057
      %v5098 = vunpack.c.l.b16 %v5058
      %v5099 = vunpack.c.h.b16 %v5058
      %v5100 = vunpack.c.l.b16 %v5059
      %v5101 = vunpack.c.h.b16 %v5059
      %v5102 = vunpack.c.l.b16 %v5060
      %v5103 = vunpack.c.h.b16 %v5060
      %v5104 = vunpack.c.l.b16 %v5061
      %v5105 = vunpack.c.h.b16 %v5061
      %v5106 = vunpack.c.l.b16 %v5062
      %v5107 = vunpack.c.h.b16 %v5062
      %v5108 = vunpack.c.l.b16 %v5063
      %v5109 = vunpack.c.h.b16 %v5063
      %v5110 = vunpack.c.l.b16 %v5064
      %v5111 = vunpack.c.h.b16 %v5064
      %v5112 = vunpack.c.l.b16 %v5065
      %v5113 = vunpack.c.h.b16 %v5065
      %v5114 = vpack.c.b16 %v5082, %v5082
      %v5115 = vpack.c.b16 %v5083, %v5083
      %v5116 = vpack.c.b16 %v5084, %v5084
      %v5117 = vpack.c.b16 %v5085, %v5085
      %v5118 = vpack.c.b16 %v5086, %v5086
      %v5119 = vpack.c.b16 %v5087, %v5087
      %v5120 = vpack.c.b16 %v5088, %v5088
      %v5121 = vpack.c.b16 %v5089, %v5089
      %v5122 = vpack.c.b16 %v5090, %v5090
      %v5123 = vpack.c.b16 %v5091, %v5091
      %v5124 = vpack.c.b16 %v5092, %v5092
      %v5125 = vpack.c.b16 %v5093, %v5093
      %v5126 = vpack.c.b16 %v5094, %v5094
      %v5127 = vpack.c.b16 %v5095, %v5095
      %v5128 = vpack.c.b16 %v5096, %v5096
      %v5129 = vpack.c.b16 %v5097, %v5097
      %v5130 = vpack.c.b16 %v5098, %v5098
      %v5131 = vpack.c.b16 %v5099, %v5099
      %v5132 = vpack.c.b16 %v5100, %v5100
      %v5133 = vpack.c.b16 %v5101, %v5101
      %v5134 = vpack.c.b16 %v5102, %v5102
      %v5135 = vpack.c.b16 %v5103, %v5103
      %v5136 = vpack.c.b16 %v5104, %v5104
      %v5137 = vpack.c.b16 %v5105, %v5105
      %v5138 = vpack.c.b16 %v5106, %v5106
      %v5139 = vpack.c.b16 %v5107, %v5107
      %v5140 = vpack.c.b16 %v5108, %v5108
      %v5141 = vpack.c.b16 %v5109, %v5109
      %v5142 = vpack.c.b16 %v5110, %v5110
      %v5143 = vpack.c.b16 %v5111, %v5111
      %v5144 = vpack.c.b16 %v5112, %v5112
      %v5145 = vpack.c.b16 %v5113, %v5113
      %vm5178 = vcmask 60416
      %5179 = vst.msk [vmem:[%s224] sm:$0xf] %vm5178, %v5114
      %5180 = vst.msk [vmem:[%s224 + $0x4] sm:$0xf] %vm5178, %v5115
      %5181 = vst.msk [vmem:[%s224 + $0x8] sm:$0xf] %vm5178, %v5116
      %5182 = vst.msk [vmem:[%s224 + $0xc] sm:$0xf] %vm5178, %v5117
      %5183 = vst.msk [vmem:[%s224 + $0x10] sm:$0xf] %vm5178, %v5118
      %5184 = vst.msk [vmem:[%s224 + $0x14] sm:$0xf] %vm5178, %v5119
      %5185 = vst.msk [vmem:[%s224 + $0x18] sm:$0xf] %vm5178, %v5120
      %5186 = vst.msk [vmem:[%s224 + $0x1c] sm:$0xf] %vm5178, %v5121
      %5187 = vst.msk [vmem:[%s224 + $0x20] sm:$0xf] %vm5178, %v5122
      %5188 = vst.msk [vmem:[%s224 + $0x24] sm:$0xf] %vm5178, %v5123
      %5189 = vst.msk [vmem:[%s224 + $0x28] sm:$0xf] %vm5178, %v5124
      %5190 = vst.msk [vmem:[%s224 + $0x2c] sm:$0xf] %vm5178, %v5125
      %5191 = vst.msk [vmem:[%s224 + $0x30] sm:$0xf] %vm5178, %v5126
      %5192 = vst.msk [vmem:[%s224 + $0x34] sm:$0xf] %vm5178, %v5127
      %5193 = vst.msk [vmem:[%s224 + $0x38] sm:$0xf] %vm5178, %v5128
      %5194 = vst.msk [vmem:[%s224 + $0x3c] sm:$0xf] %vm5178, %v5129
      %5195 = vst.msk [vmem:[%s224 + $0x40] sm:$0xf] %vm5178, %v5130
      %5196 = vst.msk [vmem:[%s224 + $0x44] sm:$0xf] %vm5178, %v5131
      %5197 = vst.msk [vmem:[%s224 + $0x48] sm:$0xf] %vm5178, %v5132
      %5198 = vst.msk [vmem:[%s224 + $0x4c] sm:$0xf] %vm5178, %v5133
      %5199 = vst.msk [vmem:[%s224 + $0x50] sm:$0xf] %vm5178, %v5134
      %5200 = vst.msk [vmem:[%s224 + $0x54] sm:$0xf] %vm5178, %v5135
      %5201 = vst.msk [vmem:[%s224 + $0x58] sm:$0xf] %vm5178, %v5136
      %5202 = vst.msk [vmem:[%s224 + $0x5c] sm:$0xf] %vm5178, %v5137
      %5203 = vst.msk [vmem:[%s224 + $0x60] sm:$0xf] %vm5178, %v5138
      %5204 = vst.msk [vmem:[%s224 + $0x64] sm:$0xf] %vm5178, %v5139
      %5205 = vst.msk [vmem:[%s224 + $0x68] sm:$0xf] %vm5178, %v5140
      %5206 = vst.msk [vmem:[%s224 + $0x6c] sm:$0xf] %vm5178, %v5141
      %5207 = vst.msk [vmem:[%s224 + $0x70] sm:$0xf] %vm5178, %v5142
      %5208 = vst.msk [vmem:[%s224 + $0x74] sm:$0xf] %vm5178, %v5143
      %5209 = vst.msk [vmem:[%s224 + $0x78] sm:$0xf] %vm5178, %v5144
      %5210 = vst.msk [vmem:[%s224 + $0x7c] sm:$0xf] %vm5178, %v5145
      %p5211 = scmp.lt.s32.totalorder %s16, 1
      %s5212 = scalar_select %p5211, %s16, 1
      %s5213 = smul.addr %s5212, 32
      %s5214 = smul.addr %s5213, 4
      %s5215 = scalar_lea.vmem %s5, %s5214
      // Predicated region
      $region41: #{tpu_custom_call.1} parent=39 // pred_check
        %p5216 = pneg %p144
      $region42: #{tpu_custom_call.1} parent=39 // pred_check_branch
        %5218 = sbr.rel (%p5216) target = $region44
      $region43: #{tpu_custom_call.1} parent=39 // pred_region
        _
      $region44: #{tpu_custom_call.1} parent=39 // pred_fallthru
        _
    $region40: #{tpu_custom_call.1} parent=5 // pred_fallthru
      _
    %p5219 = scmp.le.s32.totalorder 2, %s11
    // Predicated region
    $region45: #{tpu_custom_call.1} parent=5 // pred_check
      %p5220 = pneg %p5219
    $region46: #{tpu_custom_call.1} parent=5 // pred_check_branch
      %5222 = sbr.rel (%p5220) target = $region48
    $region47: #{tpu_custom_call.1} parent=5 // pred_region
      %s5223 = ssub.s32 %s11, 2
      // Predicated region
      $region49: #{tpu_custom_call.1} parent=47 // pred_check
        %p5224 = pneg %p150
      $region50: #{tpu_custom_call.1} parent=47 // pred_check_branch
        %5226 = sbr.rel (%p5224) target = $region52
      $region51: #{tpu_custom_call.1} parent=47 // pred_region
        %p5227 = scmp.lt.s32.totalorder %s17, 1
        %s5228 = scalar_select %p5227, %s17, 1
        %s5229 = smul.addr %s5228, 32
        %s5230 = smul.addr %s5229, 4
        %s5231 = scalar_lea.vmem %s5, %s5230
      $region52: #{tpu_custom_call.1} parent=47 // pred_fallthru
        _
    $region48: #{tpu_custom_call.1} parent=5 // pred_fallthru
      _
  $region6: #{tpu_custom_call.1} parent=0 // loop_footer
    %s15 = sadd.s32 1, %s11
  $region7: #{tpu_custom_call.1} parent=0 // loop_footer_branch
    %10 = sbr.rel target = $region3
  $region8: #{tpu_custom_call.1} parent=0 // loop_exit
    _

</llo_original>
